<compile_context>
chip_gen: v6e
topology: v6e:2x2x1
jax: 0.10.0
libtpu: 0.0.40
codegen_flags: <defaults>
</compile_context>

<pallas_src>
import functools

import jax
import jax.numpy as jnp
from jax.experimental import pallas as pl
from jax.experimental.pallas import tpu as pltpu


def _round_up(x, m):
    return (x + m - 1) // m * m


# ---------------------------------------------------------------------------
# Pallas kernel 1: M/N/K-tiled matmul with fused bias add (+ optional ReLU).
# ---------------------------------------------------------------------------
def _matmul_bias_kernel(a_ref, w_ref, b_ref, o_ref, acc_ref, *, relu):
    @pl.when(pl.program_id(2) == 0)
    def _():
        acc_ref[...] = jnp.zeros_like(acc_ref)

    acc_ref[...] += jnp.dot(a_ref[...], w_ref[...],
                            preferred_element_type=jnp.float32)

    @pl.when(pl.program_id(2) == pl.num_programs(2) - 1)
    def _():
        out = acc_ref[...] + b_ref[...]
        if relu:
            out = jnp.maximum(out, 0.0)
        o_ref[...] = out.astype(o_ref.dtype)


def _pick_k_tiling(K):
    """Adaptive K tile: small K -> single step; big K -> minimal zero pad."""
    kp8 = _round_up(K, 8)
    if kp8 <= 512:
        return kp8, kp8
    best_tk, best_pad = 512, _round_up(K, 512) - K
    for cand in (256, 128):
        pad = _round_up(K, cand) - K
        if pad < best_pad:
            best_tk, best_pad = cand, pad
    return best_tk, _round_up(K, best_tk)


def matmul_bias(a, w, b, *, relu, out_dtype=jnp.bfloat16):
    """o = relu?(a @ w + b).  a:(M,K)  w:(K,N)  b:(N,).  bf16 MXU, f32 accum."""
    M, K = a.shape
    K2, N = w.shape
    assert K == K2

    TK, Kp = _pick_k_tiling(K)
    TM = min(256, _round_up(M, 8))
    Mp = _round_up(M, TM)
    Np = _round_up(N, 128)
    TN = min(256, Np)

    a = a.astype(jnp.bfloat16)
    w = w.astype(jnp.bfloat16)
    if (Mp, Kp) != (M, K):
        a = jnp.pad(a, ((0, Mp - M), (0, Kp - K)))
    if (Kp, Np) != (K, N):
        w = jnp.pad(w, ((0, Kp - K), (0, Np - N)))
    b = jnp.pad(b.astype(jnp.float32), (0, Np - N)).reshape(1, Np)

    out = pl.pallas_call(
        functools.partial(_matmul_bias_kernel, relu=relu),
        out_shape=jax.ShapeDtypeStruct((Mp, Np), out_dtype),
        grid=(Mp // TM, Np // TN, Kp // TK),
        in_specs=[
            pl.BlockSpec((TM, TK), lambda i, j, k: (i, k)),
            pl.BlockSpec((TK, TN), lambda i, j, k: (k, j)),
            pl.BlockSpec((1, TN), lambda i, j, k: (0, j)),
        ],
        out_specs=pl.BlockSpec((TM, TN), lambda i, j, k: (i, j)),
        scratch_shapes=[pltpu.VMEM((TM, TN), jnp.float32)],
        compiler_params=pltpu.CompilerParams(
            dimension_semantics=("parallel", "parallel", "arbitrary"),
            vmem_limit_bytes=48 << 20,
        ),
    )(a, w, b)
    return out[:M, :N]


# ---------------------------------------------------------------------------
# Pallas kernel 2: MaxPool3d(k=2, s=2, p=1), single read of the padded tensor.
# ---------------------------------------------------------------------------
def _maxpool_kernel(x_ref, o_ref, *, C):
    x = x_ref[...]                                      # (TB, 2, TH, 2, Wo, 2C)
    m = jnp.maximum(x[:, 0], x[:, 1])                   # D pair (leading dim)
    m = jnp.maximum(m[:, :, 0], m[:, :, 1])             # H pair (leading dim)
    o_ref[...] = jnp.maximum(m[..., :C], m[..., C:])    # W pair (lane slice)


def maxpool3d_k2s2p1(x):
    """x: (N, D, H, W, C) NDHWC.  MaxPool3d(kernel=2, stride=2, padding=1)."""
    N, D, H, W, C = x.shape
    Do, Ho, Wo = D // 2 + 1, H // 2 + 1, W // 2 + 1
    # -inf padding (PyTorch max-pool padding semantics); padded dims sized to
    # exactly 2 * output-dim so the 2x2x2 windows tile the padded tensor.
    xp = jnp.pad(
        x,
        ((0, 0), (1, 2 * Do - 1 - D), (1, 2 * Ho - 1 - H),
         (1, 2 * Wo - 1 - W), (0, 0)),
        constant_values=-jnp.inf)
    # Free (contiguous) reshape: group window pairs; merge the W pair with the
    # channel axis so the last dim is 2*C >= 128 (lane-dense loads).
    R = N * Do
    xr = xp.reshape(R, 2, Ho, 2, Wo, 2 * C)

    # Tile so one input block stays <= ~2 MiB independent of problem size.
    unit = 2 * 2 * Wo * 2 * C * x.dtype.itemsize       # bytes per (tb=1, th=1)
    max_rows = max(1, (2 << 20) // unit)
    TH = min(Ho, max_rows)
    TB = min(R, max(1, max_rows // TH))

    out = pl.pallas_call(
        functools.partial(_maxpool_kernel, C=C),
        out_shape=jax.ShapeDtypeStruct((R, Ho, Wo, C), x.dtype),
        grid=(pl.cdiv(R, TB), pl.cdiv(Ho, TH)),
        in_specs=[pl.BlockSpec((TB, 2, TH, 2, Wo, 2 * C),
                               lambda i, h: (i, 0, h, 0, 0, 0))],
        out_specs=pl.BlockSpec((TB, TH, Wo, C), lambda i, h: (i, h, 0, 0)),
        compiler_params=pltpu.CompilerParams(
            dimension_semantics=("parallel", "parallel"),
            vmem_limit_bytes=48 << 20,
        ),
    )(xr)
    return out.reshape(N, Do, Ho, Wo, C)


# ---------------------------------------------------------------------------
# Conv3d(k=3, pad=1) + ReLU via im2col (glue, bf16) + Pallas matmul (hot path).
# ---------------------------------------------------------------------------
def conv3d_relu(x, w2, b):
    """x: (N, D, H, W, Cin) NDHWC bf16.  w2: (Cin*27, Cout) pre-reshaped bf16."""
    N, D, H, W, Cin = x.shape
    Cout = w2.shape[1]
    xp = jnp.pad(x, ((0, 0), (1, 1), (1, 1), (1, 1), (0, 0)))
    patches = []
    for kd in range(3):
        for kh in range(3):
            for kw in range(3):
                patches.append(xp[:, kd:kd + D, kh:kh + H, kw:kw + W, :])
    # (N, D, H, W, Cin, 27): column index = c*27 + (kd*9 + kh*3 + kw), matching
    # the PyTorch Conv3d weight flattening w.reshape(Cout, Cin*27).
    pat = jnp.stack(patches, axis=-1)
    a = pat.reshape(N * D * H * W, Cin * 27)
    o = matmul_bias(a, w2, b, relu=True, out_dtype=jnp.bfloat16)
    return o.reshape(N, D, H, W, Cout)


# ---------------------------------------------------------------------------
# Full model forward (matches CNN3D_VGG.forward).
# ---------------------------------------------------------------------------
CONV_CHANNELS = [64, 128, 256, 512]


def cnn3d_vgg_forward(x_ncdhw, params):
    x = jnp.transpose(x_ncdhw, (0, 2, 3, 4, 1)).astype(jnp.bfloat16)  # NDHWC
    for (w2, b) in params["convs"]:
        x = conv3d_relu(x, w2, b)
        x = maxpool3d_k2s2p1(x)
    n = x.shape[0]
    # PyTorch flattens in NCDHW order: x.view(batch, -1)
    x_flat = jnp.transpose(x, (0, 4, 1, 2, 3)).reshape(n, -1)
    wfc_t, bfc = params["fc"]
    return matmul_bias(x_flat, wfc_t, bfc, relu=False, out_dtype=jnp.float32)


def init_params(key, in_channel, num_features, flat_features):
    """Weights initialized in PyTorch layout, then pre-processed once for the
    kernels: conv w (Cout,Cin,3,3,3) -> (Cin*27, Cout) bf16; fc w pre-transposed."""
    params = {"convs": []}
    cin = in_channel
    for cout in CONV_CHANNELS:
        key, k1, k2 = jax.random.split(key, 3)
        fan_in = cin * 27
        w = jax.random.normal(k1, (cout, cin, 3, 3, 3), jnp.float32) / jnp.sqrt(
            jnp.float32(fan_in))
        b = 0.01 * jax.random.normal(k2, (cout,), jnp.float32)
        w2 = w.reshape(cout, cin * 27).T.astype(jnp.bfloat16)   # (Cin*27, Cout)
        params["convs"].append((w2, b))
        cin = cout
    key, k1, k2 = jax.random.split(key, 3)
    # NOTE: the PyTorch module hardcodes in_features=295936 for its full-size
    # input; here the fc is sized from the small synthetic input instead.
    wfc = jax.random.normal(k1, (num_features, flat_features),
                            jnp.float32) / jnp.sqrt(jnp.float32(flat_features))
    bfc = 0.01 * jax.random.normal(k2, (num_features,), jnp.float32)
    params["fc"] = (wfc.T.astype(jnp.bfloat16), bfc)   # stored pre-transposed
    return params


if __name__ == "__main__":
    key = jax.random.PRNGKey(0)
    N, Cin, D, H, W = 2, 1, 8, 8, 8          # in_channel must be 1
    num_features = 32

    # Trace spatial dims through the 4 conv(+pad=1) + pool(k2,s2,p1) blocks.
    d, h, w_ = D, H, W
    for _ in range(len(CONV_CHANNELS)):
        d, h, w_ = d // 2 + 1, h // 2 + 1, w_ // 2 + 1
    flat_features = CONV_CHANNELS[-1] * d * h * w_

    key, kx = jax.random.split(key)
    x = jax.random.normal(kx, (N, Cin, D, H, W), jnp.float32)
    params = init_params(key, Cin, num_features, flat_features)

    fwd = jax.jit(lambda inp: cnn3d_vgg_forward(inp, params))
    y = fwd(x)
    jax.block_until_ready(y)
    assert y.shape == (N, num_features), y.shape
    assert bool(jnp.all(jnp.isfinite(y)))
    print("KERNEL_OK")
</pallas_src>

<mosaic_0001>
module attributes {stable_mosaic.version = 11 : i64} {
  func.func @_matmul_bias_kernel(%arg0: i32, %arg1: i32, %arg2: i32, %arg3: memref<256x32xbf16, #tpu.memory_space<vmem>>, %arg4: memref<32x128xbf16, #tpu.memory_space<vmem>>, %arg5: memref<1x128xf32, #tpu.memory_space<vmem>>, %arg6: memref<256x128xbf16, #tpu.memory_space<vmem>>, %arg7: memref<256x128xf32, #tpu.memory_space<vmem>>) attributes {dimension_semantics = [#tpu.dimension_semantics<parallel>, #tpu.dimension_semantics<parallel>, #tpu.dimension_semantics<arbitrary>], iteration_bounds = array<i64: 4, 1, 1>, scalar_prefetch = 0 : i64, scratch_operands = 1 : i64, tpu.core_type = #tpu.core_type<tc>, window_params = [{transform_indices = @transform_0, window_bounds = array<i64: 256, 32>}, {transform_indices = @transform_1, window_bounds = array<i64: 32, 128>}, {transform_indices = @transform_2, window_bounds = array<i64: 1, 128>}, {transform_indices = @transform_3, window_bounds = array<i64: 256, 128>}]} {
    %c0_i32 = arith.constant 0 : i32
    %0 = arith.cmpi eq, %arg2, %c0_i32 : i32
    %1 = arith.extui %0 : i1 to i32
    %c0_i32_0 = arith.constant 0 : i32
    %2 = arith.cmpi ne, %1, %c0_i32_0 : i32
    scf.if %2 {
      %cst_10 = arith.constant 0.000000e+00 : f32
      %12 = vector.broadcast %cst_10 : f32 to vector<256x128xf32>
      %c0_11 = arith.constant 0 : index
      %c0_12 = arith.constant 0 : index
      %13 = vector.load %arg7[%c0_11, %c0_12] : memref<256x128xf32, #tpu.memory_space<vmem>>, vector<256x128xf32>
      tpu.vector_store %arg7[%c0_11, %c0_12], %12 {strides = array<i32>} : memref<256x128xf32, #tpu.memory_space<vmem>>, vector<256x128xf32>,
    } else {
    }
    %c0 = arith.constant 0 : index
    %c0_1 = arith.constant 0 : index
    %3 = vector.load %arg7[%c0, %c0_1] : memref<256x128xf32, #tpu.memory_space<vmem>>, vector<256x128xf32>
    %c0_2 = arith.constant 0 : index
    %c0_3 = arith.constant 0 : index
    %4 = vector.load %arg3[%c0_2, %c0_3] : memref<256x32xbf16, #tpu.memory_space<vmem>>, vector<256x32xbf16>
    %c0_4 = arith.constant 0 : index
    %c0_5 = arith.constant 0 : index
    %5 = vector.load %arg4[%c0_4, %c0_5] : memref<32x128xbf16, #tpu.memory_space<vmem>>, vector<32x128xbf16>
    %cst = arith.constant dense<0.000000e+00> : vector<256x128xf32>
    %6 = tpu.matmul %4, %5, %cst {dimension_numbers = #tpu.dot_dimension_numbers<[1], [0], [0], [1], [0, 0, 1, 1], [], []>} : vector<256x32xbf16>, vector<32x128xbf16>, vector<256x128xf32> -> vector<256x128xf32>
    %7 = arith.addf %3, %6 : vector<256x128xf32>
    %c0_6 = arith.constant 0 : index
    %c0_7 = arith.constant 0 : index
    %8 = vector.load %arg7[%c0_6, %c0_7] : memref<256x128xf32, #tpu.memory_space<vmem>>, vector<256x128xf32>
    tpu.vector_store %arg7[%c0_6, %c0_7], %7 {strides = array<i32>} : memref<256x128xf32, #tpu.memory_space<vmem>>, vector<256x128xf32>,
    %c0_i32_8 = arith.constant 0 : i32
    %9 = arith.cmpi eq, %arg2, %c0_i32_8 : i32
    %10 = arith.extui %9 : i1 to i32
    %c0_i32_9 = arith.constant 0 : i32
    %11 = arith.cmpi ne, %10, %c0_i32_9 : i32
    scf.if %11 {
      %c0_10 = arith.constant 0 : index
      %c0_11 = arith.constant 0 : index
      %12 = vector.load %arg7[%c0_10, %c0_11] : memref<256x128xf32, #tpu.memory_space<vmem>>, vector<256x128xf32>
      %c0_12 = arith.constant 0 : index
      %c0_13 = arith.constant 0 : index
      %13 = vector.load %arg5[%c0_12, %c0_13] : memref<1x128xf32, #tpu.memory_space<vmem>>, vector<1x128xf32>
      %14 = vector.broadcast %13 : vector<1x128xf32> to vector<256x128xf32>
      %15 = arith.addf %12, %14 : vector<256x128xf32>
      %cst_14 = arith.constant 0.000000e+00 : f32
      %16 = vector.broadcast %cst_14 : f32 to vector<256x128xf32>
      %17 = arith.maximumf %15, %16 : vector<256x128xf32>
      %18 = arith.truncf %17 : vector<256x128xf32> to vector<256x128xbf16>
      %c0_15 = arith.constant 0 : index
      %c0_16 = arith.constant 0 : index
      %19 = vector.load %arg6[%c0_15, %c0_16] : memref<256x128xbf16, #tpu.memory_space<vmem>>, vector<256x128xbf16>
      tpu.vector_store %arg6[%c0_15, %c0_16], %18 {strides = array<i32>} : memref<256x128xbf16, #tpu.memory_space<vmem>>, vector<256x128xbf16>,
    } else {
    }
    return
  }
  func.func @transform_0(%arg0: i32, %arg1: i32, %arg2: i32) -> (i32, i32) {
    %c0_i32 = arith.constant 0 : i32
    return %arg0, %arg2 : i32, i32
  }
  func.func @transform_1(%arg0: i32, %arg1: i32, %arg2: i32) -> (i32, i32) {
    %c0_i32 = arith.constant 0 : i32
    return %arg2, %arg1 : i32, i32
  }
  func.func @transform_2(%arg0: i32, %arg1: i32, %arg2: i32) -> (i32, i32) {
    %c0_i32 = arith.constant 0 : i32
    %c0_i32_0 = arith.constant 0 : i32
    return %c0_i32, %arg1 : i32, i32
  }
  func.func @transform_3(%arg0: i32, %arg1: i32, %arg2: i32) -> (i32, i32) {
    %c0_i32 = arith.constant 0 : i32
    return %arg0, %arg1 : i32, i32
  }
}

module attributes {stable_mosaic.version = 11 : i64} {
  func.func @_maxpool_kernel(%arg0: i32, %arg1: i32, %arg2: memref<10x2x5x2x5x128xbf16, #tpu.memory_space<vmem>>, %arg3: memref<10x5x5x64xbf16, #tpu.memory_space<vmem>>) attributes {dimension_semantics = [#tpu.dimension_semantics<parallel>, #tpu.dimension_semantics<parallel>], iteration_bounds = array<i64: 1, 1>, scalar_prefetch = 0 : i64, scratch_operands = 0 : i64, tpu.core_type = #tpu.core_type<tc>, window_params = [{transform_indices = @transform_0, window_bounds = array<i64: 10, 2, 5, 2, 5, 128>}, {transform_indices = @transform_1, window_bounds = array<i64: 10, 5, 5, 64>}]} {
    %c0 = arith.constant 0 : index
    %c0_0 = arith.constant 0 : index
    %c0_1 = arith.constant 0 : index
    %c0_2 = arith.constant 0 : index
    %c0_3 = arith.constant 0 : index
    %c0_4 = arith.constant 0 : index
    %0 = vector.load %arg2[%c0, %c0_0, %c0_1, %c0_2, %c0_3, %c0_4] : memref<10x2x5x2x5x128xbf16, #tpu.memory_space<vmem>>, vector<10x2x5x2x5x128xbf16>
    %1 = vector.extract_strided_slice %0 {offsets = [0, 0, 0, 0, 0, 0], sizes = [10, 1, 5, 2, 5, 128], strides = [1, 1, 1, 1, 1, 1]} : vector<10x2x5x2x5x128xbf16> to vector<10x1x5x2x5x128xbf16>
    %2 = vector.shape_cast %1 : vector<10x1x5x2x5x128xbf16> to vector<10x5x2x5x128xbf16>
    %3 = vector.extract_strided_slice %0 {offsets = [0, 1, 0, 0, 0, 0], sizes = [10, 1, 5, 2, 5, 128], strides = [1, 1, 1, 1, 1, 1]} : vector<10x2x5x2x5x128xbf16> to vector<10x1x5x2x5x128xbf16>
    %4 = vector.shape_cast %3 : vector<10x1x5x2x5x128xbf16> to vector<10x5x2x5x128xbf16>
    %5 = arith.maximumf %2, %4 : vector<10x5x2x5x128xbf16>
    %6 = vector.extract_strided_slice %5 {offsets = [0, 0, 0, 0, 0], sizes = [10, 5, 1, 5, 128], strides = [1, 1, 1, 1, 1]} : vector<10x5x2x5x128xbf16> to vector<10x5x1x5x128xbf16>
    %7 = vector.shape_cast %6 : vector<10x5x1x5x128xbf16> to vector<10x5x5x128xbf16>
    %8 = vector.extract_strided_slice %5 {offsets = [0, 0, 1, 0, 0], sizes = [10, 5, 1, 5, 128], strides = [1, 1, 1, 1, 1]} : vector<10x5x2x5x128xbf16> to vector<10x5x1x5x128xbf16>
    %9 = vector.shape_cast %8 : vector<10x5x1x5x128xbf16> to vector<10x5x5x128xbf16>
    %10 = arith.maximumf %7, %9 : vector<10x5x5x128xbf16>
    %11 = vector.extract_strided_slice %10 {offsets = [0, 0, 0, 0], sizes = [10, 5, 5, 64], strides = [1, 1, 1, 1]} : vector<10x5x5x128xbf16> to vector<10x5x5x64xbf16>
    %12 = vector.extract_strided_slice %10 {offsets = [0, 0, 0, 64], sizes = [10, 5, 5, 64], strides = [1, 1, 1, 1]} : vector<10x5x5x128xbf16> to vector<10x5x5x64xbf16>
    %13 = arith.maximumf %11, %12 : vector<10x5x5x64xbf16>
    %c0_5 = arith.constant 0 : index
    %c0_6 = arith.constant 0 : index
    %c0_7 = arith.constant 0 : index
    %c0_8 = arith.constant 0 : index
    %14 = vector.load %arg3[%c0_5, %c0_6, %c0_7, %c0_8] : memref<10x5x5x64xbf16, #tpu.memory_space<vmem>>, vector<10x5x5x64xbf16>
    tpu.vector_store %arg3[%c0_5, %c0_6, %c0_7, %c0_8], %13 {strides = array<i32>} : memref<10x5x5x64xbf16, #tpu.memory_space<vmem>>, vector<10x5x5x64xbf16>,
    return
  }
  func.func @transform_0(%arg0: i32, %arg1: i32) -> (i32, i32, i32, i32, i32, i32) {
    %c0_i32 = arith.constant 0 : i32
    %c0_i32_0 = arith.constant 0 : i32
    %c0_i32_1 = arith.constant 0 : i32
    %c0_i32_2 = arith.constant 0 : i32
    %c0_i32_3 = arith.constant 0 : i32
    return %arg0, %c0_i32, %arg1, %c0_i32_0, %c0_i32_1, %c0_i32_2 : i32, i32, i32, i32, i32, i32
  }
  func.func @transform_1(%arg0: i32, %arg1: i32) -> (i32, i32, i32, i32) {
    %c0_i32 = arith.constant 0 : i32
    %c0_i32_0 = arith.constant 0 : i32
    %c0_i32_1 = arith.constant 0 : i32
    return %arg0, %arg1, %c0_i32, %c0_i32_0 : i32, i32, i32, i32
  }
}

module attributes {stable_mosaic.version = 11 : i64} {
  func.func @_matmul_bias_kernel(%arg0: i32, %arg1: i32, %arg2: i32, %arg3: memref<256x256xbf16, #tpu.memory_space<vmem>>, %arg4: memref<256x128xbf16, #tpu.memory_space<vmem>>, %arg5: memref<1x128xf32, #tpu.memory_space<vmem>>, %arg6: memref<256x128xbf16, #tpu.memory_space<vmem>>, %arg7: memref<256x128xf32, #tpu.memory_space<vmem>>) attributes {dimension_semantics = [#tpu.dimension_semantics<parallel>, #tpu.dimension_semantics<parallel>, #tpu.dimension_semantics<arbitrary>], iteration_bounds = array<i64: 1, 1, 7>, scalar_prefetch = 0 : i64, scratch_operands = 1 : i64, tpu.core_type = #tpu.core_type<tc>, window_params = [{transform_indices = @transform_0, window_bounds = array<i64: 256, 256>}, {transform_indices = @transform_1, window_bounds = array<i64: 256, 128>}, {transform_indices = @transform_2, window_bounds = array<i64: 1, 128>}, {transform_indices = @transform_3, window_bounds = array<i64: 256, 128>}]} {
    %c0_i32 = arith.constant 0 : i32
    %0 = arith.cmpi eq, %arg2, %c0_i32 : i32
    %1 = arith.extui %0 : i1 to i32
    %c0_i32_0 = arith.constant 0 : i32
    %2 = arith.cmpi ne, %1, %c0_i32_0 : i32
    scf.if %2 {
      %cst_9 = arith.constant 0.000000e+00 : f32
      %12 = vector.broadcast %cst_9 : f32 to vector<256x128xf32>
      %c0_10 = arith.constant 0 : index
      %c0_11 = arith.constant 0 : index
      %13 = vector.load %arg7[%c0_10, %c0_11] : memref<256x128xf32, #tpu.memory_space<vmem>>, vector<256x128xf32>
      tpu.vector_store %arg7[%c0_10, %c0_11], %12 {strides = array<i32>} : memref<256x128xf32, #tpu.memory_space<vmem>>, vector<256x128xf32>,
    } else {
    }
    %c0 = arith.constant 0 : index
    %c0_1 = arith.constant 0 : index
    %3 = vector.load %arg7[%c0, %c0_1] : memref<256x128xf32, #tpu.memory_space<vmem>>, vector<256x128xf32>
    %c0_2 = arith.constant 0 : index
    %c0_3 = arith.constant 0 : index
    %4 = vector.load %arg3[%c0_2, %c0_3] : memref<256x256xbf16, #tpu.memory_space<vmem>>, vector<256x256xbf16>
    %c0_4 = arith.constant 0 : index
    %c0_5 = arith.constant 0 : index
    %5 = vector.load %arg4[%c0_4, %c0_5] : memref<256x128xbf16, #tpu.memory_space<vmem>>, vector<256x128xbf16>
    %cst = arith.constant dense<0.000000e+00> : vector<256x128xf32>
    %6 = tpu.matmul %4, %5, %cst {dimension_numbers = #tpu.dot_dimension_numbers<[1], [0], [0], [1], [0, 0, 1, 1], [], []>} : vector<256x256xbf16>, vector<256x128xbf16>, vector<256x128xf32> -> vector<256x128xf32>
    %7 = arith.addf %3, %6 : vector<256x128xf32>
    %c0_6 = arith.constant 0 : index
    %c0_7 = arith.constant 0 : index
    %8 = vector.load %arg7[%c0_6, %c0_7] : memref<256x128xf32, #tpu.memory_space<vmem>>, vector<256x128xf32>
    tpu.vector_store %arg7[%c0_6, %c0_7], %7 {strides = array<i32>} : memref<256x128xf32, #tpu.memory_space<vmem>>, vector<256x128xf32>,
    %c6_i32 = arith.constant 6 : i32
    %9 = arith.cmpi eq, %arg2, %c6_i32 : i32
    %10 = arith.extui %9 : i1 to i32
    %c0_i32_8 = arith.constant 0 : i32
    %11 = arith.cmpi ne, %10, %c0_i32_8 : i32
    scf.if %11 {
      %c0_9 = arith.constant 0 : index
      %c0_10 = arith.constant 0 : index
      %12 = vector.load %arg7[%c0_9, %c0_10] : memref<256x128xf32, #tpu.memory_space<vmem>>, vector<256x128xf32>
      %c0_11 = arith.constant 0 : index
      %c0_12 = arith.constant 0 : index
      %13 = vector.load %arg5[%c0_11, %c0_12] : memref<1x128xf32, #tpu.memory_space<vmem>>, vector<1x128xf32>
      %14 = vector.broadcast %13 : vector<1x128xf32> to vector<256x128xf32>
      %15 = arith.addf %12, %14 : vector<256x128xf32>
      %cst_13 = arith.constant 0.000000e+00 : f32
      %16 = vector.broadcast %cst_13 : f32 to vector<256x128xf32>
      %17 = arith.maximumf %15, %16 : vector<256x128xf32>
      %18 = arith.truncf %17 : vector<256x128xf32> to vector<256x128xbf16>
      %c0_14 = arith.constant 0 : index
      %c0_15 = arith.constant 0 : index
      %19 = vector.load %arg6[%c0_14, %c0_15] : memref<256x128xbf16, #tpu.memory_space<vmem>>, vector<256x128xbf16>
      tpu.vector_store %arg6[%c0_14, %c0_15], %18 {strides = array<i32>} : memref<256x128xbf16, #tpu.memory_space<vmem>>, vector<256x128xbf16>,
    } else {
    }
    return
  }
  func.func @transform_0(%arg0: i32, %arg1: i32, %arg2: i32) -> (i32, i32) {
    %c0_i32 = arith.constant 0 : i32
    return %arg0, %arg2 : i32, i32
  }
  func.func @transform_1(%arg0: i32, %arg1: i32, %arg2: i32) -> (i32, i32) {
    %c0_i32 = arith.constant 0 : i32
    return %arg2, %arg1 : i32, i32
  }
  func.func @transform_2(%arg0: i32, %arg1: i32, %arg2: i32) -> (i32, i32) {
    %c0_i32 = arith.constant 0 : i32
    %c0_i32_0 = arith.constant 0 : i32
    return %c0_i32, %arg1 : i32, i32
  }
  func.func @transform_3(%arg0: i32, %arg1: i32, %arg2: i32) -> (i32, i32) {
    %c0_i32 = arith.constant 0 : i32
    return %arg0, %arg1 : i32, i32
  }
}

module attributes {stable_mosaic.version = 11 : i64} {
  func.func @_maxpool_kernel(%arg0: i32, %arg1: i32, %arg2: memref<6x2x3x2x3x256xbf16, #tpu.memory_space<vmem>>, %arg3: memref<6x3x3x128xbf16, #tpu.memory_space<vmem>>) attributes {dimension_semantics = [#tpu.dimension_semantics<parallel>, #tpu.dimension_semantics<parallel>], iteration_bounds = array<i64: 1, 1>, scalar_prefetch = 0 : i64, scratch_operands = 0 : i64, tpu.core_type = #tpu.core_type<tc>, window_params = [{transform_indices = @transform_0, window_bounds = array<i64: 6, 2, 3, 2, 3, 256>}, {transform_indices = @transform_1, window_bounds = array<i64: 6, 3, 3, 128>}]} {
    %c0 = arith.constant 0 : index
    %c0_0 = arith.constant 0 : index
    %c0_1 = arith.constant 0 : index
    %c0_2 = arith.constant 0 : index
    %c0_3 = arith.constant 0 : index
    %c0_4 = arith.constant 0 : index
    %0 = vector.load %arg2[%c0, %c0_0, %c0_1, %c0_2, %c0_3, %c0_4] : memref<6x2x3x2x3x256xbf16, #tpu.memory_space<vmem>>, vector<6x2x3x2x3x256xbf16>
    %1 = vector.extract_strided_slice %0 {offsets = [0, 0, 0, 0, 0, 0], sizes = [6, 1, 3, 2, 3, 256], strides = [1, 1, 1, 1, 1, 1]} : vector<6x2x3x2x3x256xbf16> to vector<6x1x3x2x3x256xbf16>
    %2 = vector.shape_cast %1 : vector<6x1x3x2x3x256xbf16> to vector<6x3x2x3x256xbf16>
    %3 = vector.extract_strided_slice %0 {offsets = [0, 1, 0, 0, 0, 0], sizes = [6, 1, 3, 2, 3, 256], strides = [1, 1, 1, 1, 1, 1]} : vector<6x2x3x2x3x256xbf16> to vector<6x1x3x2x3x256xbf16>
    %4 = vector.shape_cast %3 : vector<6x1x3x2x3x256xbf16> to vector<6x3x2x3x256xbf16>
    %5 = arith.maximumf %2, %4 : vector<6x3x2x3x256xbf16>
    %6 = vector.extract_strided_slice %5 {offsets = [0, 0, 0, 0, 0], sizes = [6, 3, 1, 3, 256], strides = [1, 1, 1, 1, 1]} : vector<6x3x2x3x256xbf16> to vector<6x3x1x3x256xbf16>
    %7 = vector.shape_cast %6 : vector<6x3x1x3x256xbf16> to vector<6x3x3x256xbf16>
    %8 = vector.extract_strided_slice %5 {offsets = [0, 0, 1, 0, 0], sizes = [6, 3, 1, 3, 256], strides = [1, 1, 1, 1, 1]} : vector<6x3x2x3x256xbf16> to vector<6x3x1x3x256xbf16>
    %9 = vector.shape_cast %8 : vector<6x3x1x3x256xbf16> to vector<6x3x3x256xbf16>
    %10 = arith.maximumf %7, %9 : vector<6x3x3x256xbf16>
    %11 = vector.extract_strided_slice %10 {offsets = [0, 0, 0, 0], sizes = [6, 3, 3, 128], strides = [1, 1, 1, 1]} : vector<6x3x3x256xbf16> to vector<6x3x3x128xbf16>
    %12 = vector.extract_strided_slice %10 {offsets = [0, 0, 0, 128], sizes = [6, 3, 3, 128], strides = [1, 1, 1, 1]} : vector<6x3x3x256xbf16> to vector<6x3x3x128xbf16>
    %13 = arith.maximumf %11, %12 : vector<6x3x3x128xbf16>
    %c0_5 = arith.constant 0 : index
    %c0_6 = arith.constant 0 : index
    %c0_7 = arith.constant 0 : index
    %c0_8 = arith.constant 0 : index
    %14 = vector.load %arg3[%c0_5, %c0_6, %c0_7, %c0_8] : memref<6x3x3x128xbf16, #tpu.memory_space<vmem>>, vector<6x3x3x128xbf16>
    tpu.vector_store %arg3[%c0_5, %c0_6, %c0_7, %c0_8], %13 {strides = array<i32>} : memref<6x3x3x128xbf16, #tpu.memory_space<vmem>>, vector<6x3x3x128xbf16>,
    return
  }
  func.func @transform_0(%arg0: i32, %arg1: i32) -> (i32, i32, i32, i32, i32, i32) {
    %c0_i32 = arith.constant 0 : i32
    %c0_i32_0 = arith.constant 0 : i32
    %c0_i32_1 = arith.constant 0 : i32
    %c0_i32_2 = arith.constant 0 : i32
    %c0_i32_3 = arith.constant 0 : i32
    return %arg0, %c0_i32, %arg1, %c0_i32_0, %c0_i32_1, %c0_i32_2 : i32, i32, i32, i32, i32, i32
  }
  func.func @transform_1(%arg0: i32, %arg1: i32) -> (i32, i32, i32, i32) {
    %c0_i32 = arith.constant 0 : i32
    %c0_i32_0 = arith.constant 0 : i32
    %c0_i32_1 = arith.constant 0 : i32
    return %arg0, %arg1, %c0_i32, %c0_i32_0 : i32, i32, i32, i32
  }
}

module attributes {stable_mosaic.version = 11 : i64} {
  func.func @_matmul_bias_kernel(%arg0: i32, %arg1: i32, %arg2: i32, %arg3: memref<56x128xbf16, #tpu.memory_space<vmem>>, %arg4: memref<128x256xbf16, #tpu.memory_space<vmem>>, %arg5: memref<1x256xf32, #tpu.memory_space<vmem>>, %arg6: memref<56x256xbf16, #tpu.memory_space<vmem>>, %arg7: memref<56x256xf32, #tpu.memory_space<vmem>>) attributes {dimension_semantics = [#tpu.dimension_semantics<parallel>, #tpu.dimension_semantics<parallel>, #tpu.dimension_semantics<arbitrary>], iteration_bounds = array<i64: 1, 1, 27>, scalar_prefetch = 0 : i64, scratch_operands = 1 : i64, tpu.core_type = #tpu.core_type<tc>, window_params = [{transform_indices = @transform_0, window_bounds = array<i64: 56, 128>}, {transform_indices = @transform_1, window_bounds = array<i64: 128, 256>}, {transform_indices = @transform_2, window_bounds = array<i64: 1, 256>}, {transform_indices = @transform_3, window_bounds = array<i64: 56, 256>}]} {
    %c0_i32 = arith.constant 0 : i32
    %0 = arith.cmpi eq, %arg2, %c0_i32 : i32
    %1 = arith.extui %0 : i1 to i32
    %c0_i32_0 = arith.constant 0 : i32
    %2 = arith.cmpi ne, %1, %c0_i32_0 : i32
    scf.if %2 {
      %cst_9 = arith.constant 0.000000e+00 : f32
      %12 = vector.broadcast %cst_9 : f32 to vector<56x256xf32>
      %c0_10 = arith.constant 0 : index
      %c0_11 = arith.constant 0 : index
      %13 = vector.load %arg7[%c0_10, %c0_11] : memref<56x256xf32, #tpu.memory_space<vmem>>, vector<56x256xf32>
      tpu.vector_store %arg7[%c0_10, %c0_11], %12 {strides = array<i32>} : memref<56x256xf32, #tpu.memory_space<vmem>>, vector<56x256xf32>,
    } else {
    }
    %c0 = arith.constant 0 : index
    %c0_1 = arith.constant 0 : index
    %3 = vector.load %arg7[%c0, %c0_1] : memref<56x256xf32, #tpu.memory_space<vmem>>, vector<56x256xf32>
    %c0_2 = arith.constant 0 : index
    %c0_3 = arith.constant 0 : index
    %4 = vector.load %arg3[%c0_2, %c0_3] : memref<56x128xbf16, #tpu.memory_space<vmem>>, vector<56x128xbf16>
    %c0_4 = arith.constant 0 : index
    %c0_5 = arith.constant 0 : index
    %5 = vector.load %arg4[%c0_4, %c0_5] : memref<128x256xbf16, #tpu.memory_space<vmem>>, vector<128x256xbf16>
    %cst = arith.constant dense<0.000000e+00> : vector<56x256xf32>
    %6 = tpu.matmul %4, %5, %cst {dimension_numbers = #tpu.dot_dimension_numbers<[1], [0], [0], [1], [0, 0, 1, 1], [], []>} : vector<56x128xbf16>, vector<128x256xbf16>, vector<56x256xf32> -> vector<56x256xf32>
    %7 = arith.addf %3, %6 : vector<56x256xf32>
    %c0_6 = arith.constant 0 : index
    %c0_7 = arith.constant 0 : index
    %8 = vector.load %arg7[%c0_6, %c0_7] : memref<56x256xf32, #tpu.memory_space<vmem>>, vector<56x256xf32>
    tpu.vector_store %arg7[%c0_6, %c0_7], %7 {strides = array<i32>} : memref<56x256xf32, #tpu.memory_space<vmem>>, vector<56x256xf32>,
    %c26_i32 = arith.constant 26 : i32
    %9 = arith.cmpi eq, %arg2, %c26_i32 : i32
    %10 = arith.extui %9 : i1 to i32
    %c0_i32_8 = arith.constant 0 : i32
    %11 = arith.cmpi ne, %10, %c0_i32_8 : i32
    scf.if %11 {
      %c0_9 = arith.constant 0 : index
      %c0_10 = arith.constant 0 : index
      %12 = vector.load %arg7[%c0_9, %c0_10] : memref<56x256xf32, #tpu.memory_space<vmem>>, vector<56x256xf32>
      %c0_11 = arith.constant 0 : index
      %c0_12 = arith.constant 0 : index
      %13 = vector.load %arg5[%c0_11, %c0_12] : memref<1x256xf32, #tpu.memory_space<vmem>>, vector<1x256xf32>
      %14 = vector.broadcast %13 : vector<1x256xf32> to vector<56x256xf32>
      %15 = arith.addf %12, %14 : vector<56x256xf32>
      %cst_13 = arith.constant 0.000000e+00 : f32
      %16 = vector.broadcast %cst_13 : f32 to vector<56x256xf32>
      %17 = arith.maximumf %15, %16 : vector<56x256xf32>
      %18 = arith.truncf %17 : vector<56x256xf32> to vector<56x256xbf16>
      %c0_14 = arith.constant 0 : index
      %c0_15 = arith.constant 0 : index
      %19 = vector.load %arg6[%c0_14, %c0_15] : memref<56x256xbf16, #tpu.memory_space<vmem>>, vector<56x256xbf16>
      tpu.vector_store %arg6[%c0_14, %c0_15], %18 {strides = array<i32>} : memref<56x256xbf16, #tpu.memory_space<vmem>>, vector<56x256xbf16>,
    } else {
    }
    return
  }
  func.func @transform_0(%arg0: i32, %arg1: i32, %arg2: i32) -> (i32, i32) {
    %c0_i32 = arith.constant 0 : i32
    return %arg0, %arg2 : i32, i32
  }
  func.func @transform_1(%arg0: i32, %arg1: i32, %arg2: i32) -> (i32, i32) {
    %c0_i32 = arith.constant 0 : i32
    return %arg2, %arg1 : i32, i32
  }
  func.func @transform_2(%arg0: i32, %arg1: i32, %arg2: i32) -> (i32, i32) {
    %c0_i32 = arith.constant 0 : i32
    %c0_i32_0 = arith.constant 0 : i32
    return %c0_i32, %arg1 : i32, i32
  }
  func.func @transform_3(%arg0: i32, %arg1: i32, %arg2: i32) -> (i32, i32) {
    %c0_i32 = arith.constant 0 : i32
    return %arg0, %arg1 : i32, i32
  }
}

module attributes {stable_mosaic.version = 11 : i64} {
  func.func @_maxpool_kernel(%arg0: i32, %arg1: i32, %arg2: memref<4x2x2x2x2x512xbf16, #tpu.memory_space<vmem>>, %arg3: memref<4x2x2x256xbf16, #tpu.memory_space<vmem>>) attributes {dimension_semantics = [#tpu.dimension_semantics<parallel>, #tpu.dimension_semantics<parallel>], iteration_bounds = array<i64: 1, 1>, scalar_prefetch = 0 : i64, scratch_operands = 0 : i64, tpu.core_type = #tpu.core_type<tc>, window_params = [{transform_indices = @transform_0, window_bounds = array<i64: 4, 2, 2, 2, 2, 512>}, {transform_indices = @transform_1, window_bounds = array<i64: 4, 2, 2, 256>}]} {
    %c0 = arith.constant 0 : index
    %c0_0 = arith.constant 0 : index
    %c0_1 = arith.constant 0 : index
    %c0_2 = arith.constant 0 : index
    %c0_3 = arith.constant 0 : index
    %c0_4 = arith.constant 0 : index
    %0 = vector.load %arg2[%c0, %c0_0, %c0_1, %c0_2, %c0_3, %c0_4] : memref<4x2x2x2x2x512xbf16, #tpu.memory_space<vmem>>, vector<4x2x2x2x2x512xbf16>
    %1 = vector.extract_strided_slice %0 {offsets = [0, 0, 0, 0, 0, 0], sizes = [4, 1, 2, 2, 2, 512], strides = [1, 1, 1, 1, 1, 1]} : vector<4x2x2x2x2x512xbf16> to vector<4x1x2x2x2x512xbf16>
    %2 = vector.shape_cast %1 : vector<4x1x2x2x2x512xbf16> to vector<4x2x2x2x512xbf16>
    %3 = vector.extract_strided_slice %0 {offsets = [0, 1, 0, 0, 0, 0], sizes = [4, 1, 2, 2, 2, 512], strides = [1, 1, 1, 1, 1, 1]} : vector<4x2x2x2x2x512xbf16> to vector<4x1x2x2x2x512xbf16>
    %4 = vector.shape_cast %3 : vector<4x1x2x2x2x512xbf16> to vector<4x2x2x2x512xbf16>
    %5 = arith.maximumf %2, %4 : vector<4x2x2x2x512xbf16>
    %6 = vector.extract_strided_slice %5 {offsets = [0, 0, 0, 0, 0], sizes = [4, 2, 1, 2, 512], strides = [1, 1, 1, 1, 1]} : vector<4x2x2x2x512xbf16> to vector<4x2x1x2x512xbf16>
    %7 = vector.shape_cast %6 : vector<4x2x1x2x512xbf16> to vector<4x2x2x512xbf16>
    %8 = vector.extract_strided_slice %5 {offsets = [0, 0, 1, 0, 0], sizes = [4, 2, 1, 2, 512], strides = [1, 1, 1, 1, 1]} : vector<4x2x2x2x512xbf16> to vector<4x2x1x2x512xbf16>
    %9 = vector.shape_cast %8 : vector<4x2x1x2x512xbf16> to vector<4x2x2x512xbf16>
    %10 = arith.maximumf %7, %9 : vector<4x2x2x512xbf16>
    %11 = vector.extract_strided_slice %10 {offsets = [0, 0, 0, 0], sizes = [4, 2, 2, 256], strides = [1, 1, 1, 1]} : vector<4x2x2x512xbf16> to vector<4x2x2x256xbf16>
    %12 = vector.extract_strided_slice %10 {offsets = [0, 0, 0, 256], sizes = [4, 2, 2, 256], strides = [1, 1, 1, 1]} : vector<4x2x2x512xbf16> to vector<4x2x2x256xbf16>
    %13 = arith.maximumf %11, %12 : vector<4x2x2x256xbf16>
    %c0_5 = arith.constant 0 : index
    %c0_6 = arith.constant 0 : index
    %c0_7 = arith.constant 0 : index
    %c0_8 = arith.constant 0 : index
    %14 = vector.load %arg3[%c0_5, %c0_6, %c0_7, %c0_8] : memref<4x2x2x256xbf16, #tpu.memory_space<vmem>>, vector<4x2x2x256xbf16>
    tpu.vector_store %arg3[%c0_5, %c0_6, %c0_7, %c0_8], %13 {strides = array<i32>} : memref<4x2x2x256xbf16, #tpu.memory_space<vmem>>, vector<4x2x2x256xbf16>,
    return
  }
  func.func @transform_0(%arg0: i32, %arg1: i32) -> (i32, i32, i32, i32, i32, i32) {
    %c0_i32 = arith.constant 0 : i32
    %c0_i32_0 = arith.constant 0 : i32
    %c0_i32_1 = arith.constant 0 : i32
    %c0_i32_2 = arith.constant 0 : i32
    %c0_i32_3 = arith.constant 0 : i32
    return %arg0, %c0_i32, %arg1, %c0_i32_0, %c0_i32_1, %c0_i32_2 : i32, i32, i32, i32, i32, i32
  }
  func.func @transform_1(%arg0: i32, %arg1: i32) -> (i32, i32, i32, i32) {
    %c0_i32 = arith.constant 0 : i32
    %c0_i32_0 = arith.constant 0 : i32
    %c0_i32_1 = arith.constant 0 : i32
    return %arg0, %arg1, %c0_i32, %c0_i32_0 : i32, i32, i32, i32
  }
}

module attributes {stable_mosaic.version = 11 : i64} {
  func.func @_matmul_bias_kernel(%arg0: i32, %arg1: i32, %arg2: i32, %arg3: memref<16x256xbf16, #tpu.memory_space<vmem>>, %arg4: memref<256x256xbf16, #tpu.memory_space<vmem>>, %arg5: memref<1x256xf32, #tpu.memory_space<vmem>>, %arg6: memref<16x256xbf16, #tpu.memory_space<vmem>>, %arg7: memref<16x256xf32, #tpu.memory_space<vmem>>) attributes {dimension_semantics = [#tpu.dimension_semantics<parallel>, #tpu.dimension_semantics<parallel>, #tpu.dimension_semantics<arbitrary>], iteration_bounds = array<i64: 1, 2, 27>, scalar_prefetch = 0 : i64, scratch_operands = 1 : i64, tpu.core_type = #tpu.core_type<tc>, window_params = [{transform_indices = @transform_0, window_bounds = array<i64: 16, 256>}, {transform_indices = @transform_1, window_bounds = array<i64: 256, 256>}, {transform_indices = @transform_2, window_bounds = array<i64: 1, 256>}, {transform_indices = @transform_3, window_bounds = array<i64: 16, 256>}]} {
    %c0_i32 = arith.constant 0 : i32
    %0 = arith.cmpi eq, %arg2, %c0_i32 : i32
    %1 = arith.extui %0 : i1 to i32
    %c0_i32_0 = arith.constant 0 : i32
    %2 = arith.cmpi ne, %1, %c0_i32_0 : i32
    scf.if %2 {
      %cst_9 = arith.constant 0.000000e+00 : f32
      %12 = vector.broadcast %cst_9 : f32 to vector<16x256xf32>
      %c0_10 = arith.constant 0 : index
      %c0_11 = arith.constant 0 : index
      %13 = vector.load %arg7[%c0_10, %c0_11] : memref<16x256xf32, #tpu.memory_space<vmem>>, vector<16x256xf32>
      tpu.vector_store %arg7[%c0_10, %c0_11], %12 {strides = array<i32>} : memref<16x256xf32, #tpu.memory_space<vmem>>, vector<16x256xf32>,
    } else {
    }
    %c0 = arith.constant 0 : index
    %c0_1 = arith.constant 0 : index
    %3 = vector.load %arg7[%c0, %c0_1] : memref<16x256xf32, #tpu.memory_space<vmem>>, vector<16x256xf32>
    %c0_2 = arith.constant 0 : index
    %c0_3 = arith.constant 0 : index
    %4 = vector.load %arg3[%c0_2, %c0_3] : memref<16x256xbf16, #tpu.memory_space<vmem>>, vector<16x256xbf16>
    %c0_4 = arith.constant 0 : index
    %c0_5 = arith.constant 0 : index
    %5 = vector.load %arg4[%c0_4, %c0_5] : memref<256x256xbf16, #tpu.memory_space<vmem>>, vector<256x256xbf16>
    %cst = arith.constant dense<0.000000e+00> : vector<16x256xf32>
    %6 = tpu.matmul %4, %5, %cst {dimension_numbers = #tpu.dot_dimension_numbers<[1], [0], [0], [1], [0, 0, 1, 1], [], []>} : vector<16x256xbf16>, vector<256x256xbf16>, vector<16x256xf32> -> vector<16x256xf32>
    %7 = arith.addf %3, %6 : vector<16x256xf32>
    %c0_6 = arith.constant 0 : index
    %c0_7 = arith.constant 0 : index
    %8 = vector.load %arg7[%c0_6, %c0_7] : memref<16x256xf32, #tpu.memory_space<vmem>>, vector<16x256xf32>
    tpu.vector_store %arg7[%c0_6, %c0_7], %7 {strides = array<i32>} : memref<16x256xf32, #tpu.memory_space<vmem>>, vector<16x256xf32>,
    %c26_i32 = arith.constant 26 : i32
    %9 = arith.cmpi eq, %arg2, %c26_i32 : i32
    %10 = arith.extui %9 : i1 to i32
    %c0_i32_8 = arith.constant 0 : i32
    %11 = arith.cmpi ne, %10, %c0_i32_8 : i32
    scf.if %11 {
      %c0_9 = arith.constant 0 : index
      %c0_10 = arith.constant 0 : index
      %12 = vector.load %arg7[%c0_9, %c0_10] : memref<16x256xf32, #tpu.memory_space<vmem>>, vector<16x256xf32>
      %c0_11 = arith.constant 0 : index
      %c0_12 = arith.constant 0 : index
      %13 = vector.load %arg5[%c0_11, %c0_12] : memref<1x256xf32, #tpu.memory_space<vmem>>, vector<1x256xf32>
      %14 = vector.broadcast %13 : vector<1x256xf32> to vector<16x256xf32>
      %15 = arith.addf %12, %14 : vector<16x256xf32>
      %cst_13 = arith.constant 0.000000e+00 : f32
      %16 = vector.broadcast %cst_13 : f32 to vector<16x256xf32>
      %17 = arith.maximumf %15, %16 : vector<16x256xf32>
      %18 = arith.truncf %17 : vector<16x256xf32> to vector<16x256xbf16>
      %c0_14 = arith.constant 0 : index
      %c0_15 = arith.constant 0 : index
      %19 = vector.load %arg6[%c0_14, %c0_15] : memref<16x256xbf16, #tpu.memory_space<vmem>>, vector<16x256xbf16>
      tpu.vector_store %arg6[%c0_14, %c0_15], %18 {strides = array<i32>} : memref<16x256xbf16, #tpu.memory_space<vmem>>, vector<16x256xbf16>,
    } else {
    }
    return
  }
  func.func @transform_0(%arg0: i32, %arg1: i32, %arg2: i32) -> (i32, i32) {
    %c0_i32 = arith.constant 0 : i32
    return %arg0, %arg2 : i32, i32
  }
  func.func @transform_1(%arg0: i32, %arg1: i32, %arg2: i32) -> (i32, i32) {
    %c0_i32 = arith.constant 0 : i32
    return %arg2, %arg1 : i32, i32
  }
  func.func @transform_2(%arg0: i32, %arg1: i32, %arg2: i32) -> (i32, i32) {
    %c0_i32 = arith.constant 0 : i32
    %c0_i32_0 = arith.constant 0 : i32
    return %c0_i32, %arg1 : i32, i32
  }
  func.func @transform_3(%arg0: i32, %arg1: i32, %arg2: i32) -> (i32, i32) {
    %c0_i32 = arith.constant 0 : i32
    return %arg0, %arg1 : i32, i32
  }
}

module attributes {stable_mosaic.version = 11 : i64} {
  func.func @_maxpool_kernel(%arg0: i32, %arg1: i32, %arg2: memref<4x2x2x2x2x1024xbf16, #tpu.memory_space<vmem>>, %arg3: memref<4x2x2x512xbf16, #tpu.memory_space<vmem>>) attributes {dimension_semantics = [#tpu.dimension_semantics<parallel>, #tpu.dimension_semantics<parallel>], iteration_bounds = array<i64: 1, 1>, scalar_prefetch = 0 : i64, scratch_operands = 0 : i64, tpu.core_type = #tpu.core_type<tc>, window_params = [{transform_indices = @transform_0, window_bounds = array<i64: 4, 2, 2, 2, 2, 1024>}, {transform_indices = @transform_1, window_bounds = array<i64: 4, 2, 2, 512>}]} {
    %c0 = arith.constant 0 : index
    %c0_0 = arith.constant 0 : index
    %c0_1 = arith.constant 0 : index
    %c0_2 = arith.constant 0 : index
    %c0_3 = arith.constant 0 : index
    %c0_4 = arith.constant 0 : index
    %0 = vector.load %arg2[%c0, %c0_0, %c0_1, %c0_2, %c0_3, %c0_4] : memref<4x2x2x2x2x1024xbf16, #tpu.memory_space<vmem>>, vector<4x2x2x2x2x1024xbf16>
    %1 = vector.extract_strided_slice %0 {offsets = [0, 0, 0, 0, 0, 0], sizes = [4, 1, 2, 2, 2, 1024], strides = [1, 1, 1, 1, 1, 1]} : vector<4x2x2x2x2x1024xbf16> to vector<4x1x2x2x2x1024xbf16>
    %2 = vector.shape_cast %1 : vector<4x1x2x2x2x1024xbf16> to vector<4x2x2x2x1024xbf16>
    %3 = vector.extract_strided_slice %0 {offsets = [0, 1, 0, 0, 0, 0], sizes = [4, 1, 2, 2, 2, 1024], strides = [1, 1, 1, 1, 1, 1]} : vector<4x2x2x2x2x1024xbf16> to vector<4x1x2x2x2x1024xbf16>
    %4 = vector.shape_cast %3 : vector<4x1x2x2x2x1024xbf16> to vector<4x2x2x2x1024xbf16>
    %5 = arith.maximumf %2, %4 : vector<4x2x2x2x1024xbf16>
    %6 = vector.extract_strided_slice %5 {offsets = [0, 0, 0, 0, 0], sizes = [4, 2, 1, 2, 1024], strides = [1, 1, 1, 1, 1]} : vector<4x2x2x2x1024xbf16> to vector<4x2x1x2x1024xbf16>
    %7 = vector.shape_cast %6 : vector<4x2x1x2x1024xbf16> to vector<4x2x2x1024xbf16>
    %8 = vector.extract_strided_slice %5 {offsets = [0, 0, 1, 0, 0], sizes = [4, 2, 1, 2, 1024], strides = [1, 1, 1, 1, 1]} : vector<4x2x2x2x1024xbf16> to vector<4x2x1x2x1024xbf16>
    %9 = vector.shape_cast %8 : vector<4x2x1x2x1024xbf16> to vector<4x2x2x1024xbf16>
    %10 = arith.maximumf %7, %9 : vector<4x2x2x1024xbf16>
    %11 = vector.extract_strided_slice %10 {offsets = [0, 0, 0, 0], sizes = [4, 2, 2, 512], strides = [1, 1, 1, 1]} : vector<4x2x2x1024xbf16> to vector<4x2x2x512xbf16>
    %12 = vector.extract_strided_slice %10 {offsets = [0, 0, 0, 512], sizes = [4, 2, 2, 512], strides = [1, 1, 1, 1]} : vector<4x2x2x1024xbf16> to vector<4x2x2x512xbf16>
    %13 = arith.maximumf %11, %12 : vector<4x2x2x512xbf16>
    %c0_5 = arith.constant 0 : index
    %c0_6 = arith.constant 0 : index
    %c0_7 = arith.constant 0 : index
    %c0_8 = arith.constant 0 : index
    %14 = vector.load %arg3[%c0_5, %c0_6, %c0_7, %c0_8] : memref<4x2x2x512xbf16, #tpu.memory_space<vmem>>, vector<4x2x2x512xbf16>
    tpu.vector_store %arg3[%c0_5, %c0_6, %c0_7, %c0_8], %13 {strides = array<i32>} : memref<4x2x2x512xbf16, #tpu.memory_space<vmem>>, vector<4x2x2x512xbf16>,
    return
  }
  func.func @transform_0(%arg0: i32, %arg1: i32) -> (i32, i32, i32, i32, i32, i32) {
    %c0_i32 = arith.constant 0 : i32
    %c0_i32_0 = arith.constant 0 : i32
    %c0_i32_1 = arith.constant 0 : i32
    %c0_i32_2 = arith.constant 0 : i32
    %c0_i32_3 = arith.constant 0 : i32
    return %arg0, %c0_i32, %arg1, %c0_i32_0, %c0_i32_1, %c0_i32_2 : i32, i32, i32, i32, i32, i32
  }
  func.func @transform_1(%arg0: i32, %arg1: i32) -> (i32, i32, i32, i32) {
    %c0_i32 = arith.constant 0 : i32
    %c0_i32_0 = arith.constant 0 : i32
    %c0_i32_1 = arith.constant 0 : i32
    return %arg0, %arg1, %c0_i32, %c0_i32_0 : i32, i32, i32, i32
  }
}

module attributes {stable_mosaic.version = 11 : i64} {
  func.func @_matmul_bias_kernel(%arg0: i32, %arg1: i32, %arg2: i32, %arg3: memref<8x512xbf16, #tpu.memory_space<vmem>>, %arg4: memref<512x128xbf16, #tpu.memory_space<vmem>>, %arg5: memref<1x128xf32, #tpu.memory_space<vmem>>, %arg6: memref<8x128xf32, #tpu.memory_space<vmem>>, %arg7: memref<8x128xf32, #tpu.memory_space<vmem>>) attributes {dimension_semantics = [#tpu.dimension_semantics<parallel>, #tpu.dimension_semantics<parallel>, #tpu.dimension_semantics<arbitrary>], iteration_bounds = array<i64: 1, 1, 8>, scalar_prefetch = 0 : i64, scratch_operands = 1 : i64, tpu.core_type = #tpu.core_type<tc>, window_params = [{transform_indices = @transform_0, window_bounds = array<i64: 8, 512>}, {transform_indices = @transform_1, window_bounds = array<i64: 512, 128>}, {transform_indices = @transform_2, window_bounds = array<i64: 1, 128>}, {transform_indices = @transform_3, window_bounds = array<i64: 8, 128>}]} {
    %c0_i32 = arith.constant 0 : i32
    %0 = arith.cmpi eq, %arg2, %c0_i32 : i32
    %1 = arith.extui %0 : i1 to i32
    %c0_i32_0 = arith.constant 0 : i32
    %2 = arith.cmpi ne, %1, %c0_i32_0 : i32
    scf.if %2 {
      %cst_9 = arith.constant 0.000000e+00 : f32
      %12 = vector.broadcast %cst_9 : f32 to vector<8x128xf32>
      %c0_10 = arith.constant 0 : index
      %c0_11 = arith.constant 0 : index
      %13 = vector.load %arg7[%c0_10, %c0_11] : memref<8x128xf32, #tpu.memory_space<vmem>>, vector<8x128xf32>
      tpu.vector_store %arg7[%c0_10, %c0_11], %12 {strides = array<i32>} : memref<8x128xf32, #tpu.memory_space<vmem>>, vector<8x128xf32>,
    } else {
    }
    %c0 = arith.constant 0 : index
    %c0_1 = arith.constant 0 : index
    %3 = vector.load %arg7[%c0, %c0_1] : memref<8x128xf32, #tpu.memory_space<vmem>>, vector<8x128xf32>
    %c0_2 = arith.constant 0 : index
    %c0_3 = arith.constant 0 : index
    %4 = vector.load %arg3[%c0_2, %c0_3] : memref<8x512xbf16, #tpu.memory_space<vmem>>, vector<8x512xbf16>
    %c0_4 = arith.constant 0 : index
    %c0_5 = arith.constant 0 : index
    %5 = vector.load %arg4[%c0_4, %c0_5] : memref<512x128xbf16, #tpu.memory_space<vmem>>, vector<512x128xbf16>
    %cst = arith.constant dense<0.000000e+00> : vector<8x128xf32>
    %6 = tpu.matmul %4, %5, %cst {dimension_numbers = #tpu.dot_dimension_numbers<[1], [0], [0], [1], [0, 0, 1, 1], [], []>} : vector<8x512xbf16>, vector<512x128xbf16>, vector<8x128xf32> -> vector<8x128xf32>
    %7 = arith.addf %3, %6 : vector<8x128xf32>
    %c0_6 = arith.constant 0 : index
    %c0_7 = arith.constant 0 : index
    %8 = vector.load %arg7[%c0_6, %c0_7] : memref<8x128xf32, #tpu.memory_space<vmem>>, vector<8x128xf32>
    tpu.vector_store %arg7[%c0_6, %c0_7], %7 {strides = array<i32>} : memref<8x128xf32, #tpu.memory_space<vmem>>, vector<8x128xf32>,
    %c7_i32 = arith.constant 7 : i32
    %9 = arith.cmpi eq, %arg2, %c7_i32 : i32
    %10 = arith.extui %9 : i1 to i32
    %c0_i32_8 = arith.constant 0 : i32
    %11 = arith.cmpi ne, %10, %c0_i32_8 : i32
    scf.if %11 {
      %c0_9 = arith.constant 0 : index
      %c0_10 = arith.constant 0 : index
      %12 = vector.load %arg7[%c0_9, %c0_10] : memref<8x128xf32, #tpu.memory_space<vmem>>, vector<8x128xf32>
      %c0_11 = arith.constant 0 : index
      %c0_12 = arith.constant 0 : index
      %13 = vector.load %arg5[%c0_11, %c0_12] : memref<1x128xf32, #tpu.memory_space<vmem>>, vector<1x128xf32>
      %14 = vector.broadcast %13 : vector<1x128xf32> to vector<8x128xf32>
      %15 = arith.addf %12, %14 : vector<8x128xf32>
      %c0_13 = arith.constant 0 : index
      %c0_14 = arith.constant 0 : index
      %16 = vector.load %arg6[%c0_13, %c0_14] : memref<8x128xf32, #tpu.memory_space<vmem>>, vector<8x128xf32>
      tpu.vector_store %arg6[%c0_13, %c0_14], %15 {strides = array<i32>} : memref<8x128xf32, #tpu.memory_space<vmem>>, vector<8x128xf32>,
    } else {
    }
    return
  }
  func.func @transform_0(%arg0: i32, %arg1: i32, %arg2: i32) -> (i32, i32) {
    %c0_i32 = arith.constant 0 : i32
    return %arg0, %arg2 : i32, i32
  }
  func.func @transform_1(%arg0: i32, %arg1: i32, %arg2: i32) -> (i32, i32) {
    %c0_i32 = arith.constant 0 : i32
    return %arg2, %arg1 : i32, i32
  }
  func.func @transform_2(%arg0: i32, %arg1: i32, %arg2: i32) -> (i32, i32) {
    %c0_i32 = arith.constant 0 : i32
    %c0_i32_0 = arith.constant 0 : i32
    return %c0_i32, %arg1 : i32, i32
  }
  func.func @transform_3(%arg0: i32, %arg1: i32, %arg2: i32) -> (i32, i32) {
    %c0_i32 = arith.constant 0 : i32
    return %arg0, %arg1 : i32, i32
  }
}

</mosaic_0001>

<llo_original>
// kernel: _lambda_.9
$region0: #{_lambda_.9}
  #allocation0 [shape = 'u32[]', space=smem, size = 0x4, offset = 0x4, fixed_abs, tag = 'smem constant byte address 0x4 - core index']
  #allocation1 [shape = 'u32[144,128]{1,0:T(1,128)}', space=vmem, size = 0x12000, scoped, tag = 'internal scratch']
  #allocation2 [shape = 'f32[256,128]{1,0:T(8,128)}', space=vmem, size = 0x20000, scoped, tag = 'scratch operand']
  %s0 = inlined_call_operand.vmem [shape: bf16[1024,32], index: 0, kind: input, shape index: {}]
  %s1 = inlined_call_operand.vmem [shape: bf16[32,128], index: 1, kind: input, shape index: {}]
  %s2 = inlined_call_operand.vmem [shape: f32[1,128], index: 2, kind: input, shape index: {}]
  %s3 = inlined_call_operand.vmem [shape: bf16[1024,128], index: 3, kind: output, shape index: {}]
  %s4 = sld [smem:[#allocation0]]
  $region53: #{_lambda_.9} parent=0
    _
  %s6 = ssub.s32 1, %s4
  %s7 = scalar_select 0, %s6, %s4
  loop: start=0, step=1, limit=6
  $region2: #{_lambda_.9} parent=0 // loop_pre_header
    _
  $region3: #{_lambda_.9} parent=0 // loop_header
    %s9 = sphi 0, %s13
    %p10 = scmp.ge.s32.totalorder %s9, 6
    %s16 = sphi 0, %s35
    %s17 = sphi 0, %s31
    %s18 = sphi 0, %s27
    %s19 = sphi 0, %s16
    %s20 = sphi 0, %s17
    %s21 = sphi 0, %s18
    %s22 = sphi 0, %s19
    %s23 = sphi 0, %s20
    %s24 = sphi 0, %s21
    %s40 = sphi 0, %s42
    %s43 = sphi 0, %s40
    %s44 = sphi 0, %s43
    %s60 = sphi 0, %s44
    %s68 = sphi 0, %s70
    %s71 = sphi 0, %s68
    %s72 = sphi 0, %s71
    %s88 = sphi 0, %s72
    %s94 = sphi 0, %s96
    %s97 = sphi 0, %s94
    %s98 = sphi 0, %s97
    %s114 = sphi 0, %s98
    %s122 = sphi 0, %s124
    %s125 = sphi 0, %s122
    %s126 = sphi 0, %s125
    %s142 = sphi 0, %s126
  $region4: #{_lambda_.9} parent=0 // loop_header_branch
    %12 = sbr.rel (%p10) target = $region8
  $region5: #{_lambda_.9} parent=0 // loop_body
    %s14 = ssub.s32 %s9, 1
    %s15 = ssub.s32 %s9, 2
    %s25 = sadd.s32 1, %s18
    %p26 = scmp.ge.s32.totalorder %s25, 1
    %s27 = scalar_select %p26, 0, %s25
    %s28 = sadd.s32 1, %s17
    %s29 = scalar_select %p26, %s28, %s17
    %p30 = scmp.ge.s32.totalorder %s29, 1
    %s31 = scalar_select %p30, 0, %s29
    %s32 = sadd.s32 1, %s16
    %s33 = scalar_select %p30, %s32, %s16
    %p34 = scmp.ge.s32.totalorder %s33, 4
    %s35 = scalar_select %p34, 0, %s33
    %s36 = ssub.s32 %s16, %s35
    %s37 = ssub.s32 %s18, %s27
    %s38 = sor.u32 %s36, %s37
    %p39 = scmp.eq.s32.totalorder %s38, 0
    %s41 = sadd.s32 %s40, 1
    %s42 = scalar_select %p39, %s40, %s41
    %p45 = pneg %p39
    %p46 = scmp.eq.s32.totalorder %s9, 3
    %p47 = por %p45, %p46
    %p48 = scmp.ne.s32.totalorder %s40, %s43
    %p49 = scmp.eq.s32.totalorder %s9, 0
    %p50 = por %p48, %p49
    %p51 = scmp.ne.s32.totalorder %s40, %s43
    %p52 = scmp.eq.s32.totalorder %s14, 3
    %p53 = por %p51, %p52
    %p54 = scmp.ne.s32.totalorder %s43, %s44
    %p55 = scmp.eq.s32.totalorder %s14, 0
    %p56 = por %p54, %p55
    %p57 = scmp.ne.s32.totalorder %s43, %s44
    %p58 = scmp.eq.s32.totalorder %s15, 3
    %p59 = por %p57, %p58
    %p61 = scmp.ne.s32.totalorder %s44, %s60
    %p62 = scmp.eq.s32.totalorder %s15, 0
    %p63 = por %p61, %p62
    %s64 = ssub.s32 %s18, %s27
    %s65 = ssub.s32 %s17, %s31
    %s66 = sor.u32 %s64, %s65
    %p67 = scmp.eq.s32.totalorder %s66, 0
    %s69 = sadd.s32 %s68, 1
    %s70 = scalar_select %p67, %s68, %s69
    %p73 = pneg %p67
    %p74 = scmp.eq.s32.totalorder %s9, 3
    %p75 = por %p73, %p74
    %p76 = scmp.ne.s32.totalorder %s68, %s71
    %p77 = scmp.eq.s32.totalorder %s9, 0
    %p78 = por %p76, %p77
    %p79 = scmp.ne.s32.totalorder %s68, %s71
    %p80 = scmp.eq.s32.totalorder %s14, 3
    %p81 = por %p79, %p80
    %p82 = scmp.ne.s32.totalorder %s71, %s72
    %p83 = scmp.eq.s32.totalorder %s14, 0
    %p84 = por %p82, %p83
    %p85 = scmp.ne.s32.totalorder %s71, %s72
    %p86 = scmp.eq.s32.totalorder %s15, 3
    %p87 = por %p85, %p86
    %p89 = scmp.ne.s32.totalorder %s72, %s88
    %p90 = scmp.eq.s32.totalorder %s15, 0
    %p91 = por %p89, %p90
    %s92 = ssub.s32 %s17, %s31
    %p93 = scmp.eq.s32.totalorder %s92, 0
    %s95 = sadd.s32 %s94, 1
    %s96 = scalar_select %p93, %s94, %s95
    %p99 = pneg %p93
    %p100 = scmp.eq.s32.totalorder %s9, 3
    %p101 = por %p99, %p100
    %p102 = scmp.ne.s32.totalorder %s94, %s97
    %p103 = scmp.eq.s32.totalorder %s9, 0
    %p104 = por %p102, %p103
    %p105 = scmp.ne.s32.totalorder %s94, %s97
    %p106 = scmp.eq.s32.totalorder %s14, 3
    %p107 = por %p105, %p106
    %p108 = scmp.ne.s32.totalorder %s97, %s98
    %p109 = scmp.eq.s32.totalorder %s14, 0
    %p110 = por %p108, %p109
    %p111 = scmp.ne.s32.totalorder %s97, %s98
    %p112 = scmp.eq.s32.totalorder %s15, 3
    %p113 = por %p111, %p112
    %p115 = scmp.ne.s32.totalorder %s98, %s114
    %p116 = scmp.eq.s32.totalorder %s15, 0
    %p117 = por %p115, %p116
    %s118 = ssub.s32 %s16, %s35
    %s119 = ssub.s32 %s17, %s31
    %s120 = sor.u32 %s118, %s119
    %p121 = scmp.eq.s32.totalorder %s120, 0
    %s123 = sadd.s32 %s122, 1
    %s124 = scalar_select %p121, %s122, %s123
    %p127 = pneg %p121
    %p128 = scmp.eq.s32.totalorder %s9, 3
    %p129 = por %p127, %p128
    %p130 = scmp.ne.s32.totalorder %s122, %s125
    %p131 = scmp.eq.s32.totalorder %s9, 0
    %p132 = por %p130, %p131
    %p133 = scmp.ne.s32.totalorder %s122, %s125
    %p134 = scmp.eq.s32.totalorder %s14, 3
    %p135 = por %p133, %p134
    %p136 = scmp.ne.s32.totalorder %s125, %s126
    %p137 = scmp.eq.s32.totalorder %s14, 0
    %p138 = por %p136, %p137
    %p139 = scmp.ne.s32.totalorder %s125, %s126
    %p140 = scmp.eq.s32.totalorder %s15, 3
    %p141 = por %p139, %p140
    %p143 = scmp.ne.s32.totalorder %s126, %s142
    %p144 = scmp.eq.s32.totalorder %s15, 0
    %p145 = por %p143, %p144
    %p146 = scmp.le.s32.totalorder 1, %s9
    %p147 = scmp.lt.s32.totalorder %s9, 5
    %p148 = pnand %p146, %p147
    %p149 = pneg %p148
    // Predicated region
    $region9: #{_lambda_.9} parent=5 // pred_check
      _
    $region10: #{_lambda_.9} parent=5 // pred_check_branch
      %151 = sbr.rel (%p148) target = $region12
    $region11: #{_lambda_.9} parent=5 // pred_region
      %s152 = ssub.s32 %s9, 1
      // Predicated region
      $region13: #{_lambda_.9} parent=11 // pred_check
        %p153 = pneg %p84
      $region14: #{_lambda_.9} parent=11 // pred_check_branch
        %155 = sbr.rel (%p153) target = $region16
      $region15: #{_lambda_.9} parent=11 // pred_region
        %s156 = smul.u32 4, %s21
        %p157 = scmp.lt.s32.totalorder %s156, 3
        %s158 = scalar_select %p157, %s156, 3
        %p159 = scmp.lt.s32.totalorder %s20, 0
        %s160 = scalar_select %p159, %s20, 0
        %s161 = sadd.s32 %s160, %s158
        %s162 = smul.addr %s161, 4
        %s163 = scalar_lea.vmem %s1, %s162
        %s164 = smul.u32 4, %s21
      $region16: #{_lambda_.9} parent=11 // pred_fallthru
        _
      // Predicated region
      $region17: #{_lambda_.9} parent=11 // pred_check
        %p165 = pneg %p110
      $region18: #{_lambda_.9} parent=11 // pred_check_branch
        %167 = sbr.rel (%p165) target = $region20
      $region19: #{_lambda_.9} parent=11 // pred_region
        %p168 = scmp.lt.s32.totalorder %s20, 0
        %s169 = scalar_select %p168, %s20, 0
        %s170 = scalar_lea.vmem %s2, %s169
      $region20: #{_lambda_.9} parent=11 // pred_fallthru
        _
    $region12: #{_lambda_.9} parent=5 // pred_fallthru
      _
    %p171 = scmp.lt.s32.totalorder %s9, 4
    // Predicated region
    $region21: #{_lambda_.9} parent=5 // pred_check
      %p172 = pneg %p171
    $region22: #{_lambda_.9} parent=5 // pred_check_branch
      %174 = sbr.rel (%p172) target = $region24
    $region23: #{_lambda_.9} parent=5 // pred_region
      // Predicated region
      $region25: #{_lambda_.9} parent=23 // pred_check
        %p175 = pneg %p50
      $region26: #{_lambda_.9} parent=23 // pred_check_branch
        %177 = sbr.rel (%p175) target = $region28
      $region27: #{_lambda_.9} parent=23 // pred_region
        %s178 = smul.u32 32, %s16
        %p179 = scmp.lt.s32.totalorder %s178, 127
        %s180 = scalar_select %p179, %s178, 127
        %p181 = scmp.lt.s32.totalorder %s18, 0
        %s182 = scalar_select %p181, %s18, 0
        %s183 = sadd.s32 %s182, %s180
        %s184 = smul.addr %s183, 4
        %s185 = scalar_lea.vmem %s0, %s184
        %s186 = smul.u32 32, %s16
      $region28: #{_lambda_.9} parent=23 // pred_fallthru
        _
    $region24: #{_lambda_.9} parent=5 // pred_fallthru
      _
    %p187 = scmp.le.s32.totalorder 1, %s9
    %p188 = scmp.lt.s32.totalorder %s9, 5
    %p189 = pnand %p187, %p188
    %p190 = pneg %p189
    // Predicated region
    $region29: #{_lambda_.9} parent=5 // pred_check
      _
    $region30: #{_lambda_.9} parent=5 // pred_check_branch
      %192 = sbr.rel (%p189) target = $region32
    $region31: #{_lambda_.9} parent=5 // pred_region
      %s193 = ssub.s32 %s9, 1
      %s194 = smul.u32 32, %s19
      %p195 = scmp.lt.s32.totalorder %s194, 127
      %s196 = scalar_select %p195, %s194, 127
      %p197 = scmp.lt.s32.totalorder %s21, 0
      %s198 = scalar_select %p197, %s21, 0
      %s199 = sadd.s32 %s198, %s196
      %s200 = smul.addr %s199, 4
      %s201 = scalar_lea.vmem %s0, %s200
      %p202 = pneg %p56
      %p203 = pneg %p53
      %s204 = smul.u32 4, %s21
      %p205 = scmp.lt.s32.totalorder %s204, 3
      %s206 = scalar_select %p205, %s204, 3
      %p207 = scmp.lt.s32.totalorder %s20, 0
      %s208 = scalar_select %p207, %s20, 0
      %s209 = sadd.s32 %s208, %s206
      %s210 = smul.addr %s209, 4
      %s211 = scalar_lea.vmem %s1, %s210
      %p212 = pneg %p84
      %p213 = pneg %p81
      %p214 = scmp.lt.s32.totalorder %s20, 0
      %s215 = scalar_select %p214, %s20, 0
      %s216 = scalar_lea.vmem %s2, %s215
      %p217 = pneg %p110
      %p218 = pneg %p107
      %p219 = pneg %p138
      %p220 = pneg %p135
      %s221 = smul.u32 32, %s19
      %p222 = scmp.lt.s32.totalorder %s221, 127
      %s223 = scalar_select %p222, %s221, 127
      %p224 = scmp.lt.s32.totalorder %s20, 0
      %s225 = scalar_select %p224, %s20, 0
      %s226 = sadd.s32 %s225, %s223
      %s227 = smul.addr %s226, 4
      %s228 = scalar_lea.vmem %s3, %s227
      %s229 = smul.u32 32, %s19
      %p230 = scmp.lt.s32.totalorder %s229, 127
      %s231 = scalar_select %p230, %s229, 127
      %p232 = scmp.lt.s32.totalorder %s21, 0
      %s233 = scalar_select %p232, %s21, 0
      %s234 = sadd.s32 %s233, %s231
      %s235 = smul.addr %s234, 4
      %s236 = scalar_lea.vmem %s0, %s235
      %s237 = smul.u32 32, %s19
      %s238 = smul.u32 4, %s21
      %p239 = scmp.lt.s32.totalorder %s238, 3
      %s240 = scalar_select %p239, %s238, 3
      %p241 = scmp.lt.s32.totalorder %s20, 0
      %s242 = scalar_select %p241, %s20, 0
      %s243 = sadd.s32 %s242, %s240
      %s244 = smul.addr %s243, 4
      %s245 = scalar_lea.vmem %s1, %s244
      %s246 = smul.u32 4, %s21
      %p247 = scmp.lt.s32.totalorder %s20, 0
      %s248 = scalar_select %p247, %s20, 0
      %s249 = scalar_lea.vmem %s2, %s248
      %s250 = smul.u32 32, %s19
      %p251 = scmp.lt.s32.totalorder %s250, 127
      %s252 = scalar_select %p251, %s250, 127
      %p253 = scmp.lt.s32.totalorder %s20, 0
      %s254 = scalar_select %p253, %s20, 0
      %s255 = sadd.s32 %s254, %s252
      %s256 = smul.addr %s255, 4
      %s257 = scalar_lea.vmem %s3, %s256
      %s258 = smul.u32 32, %s19
      %p260 = scmp.eq.s32.totalorder %s21, 0
      // Predicated region
      $region33: #{_lambda_.9} parent=31 // pred_check
        %p261 = pneg %p260
      $region34: #{_lambda_.9} parent=31 // pred_check_branch
        %263 = sbr.rel (%p261) target = $region36
      $region35: #{_lambda_.9} parent=31 // pred_region
        %264 = vst [vmem:[#allocation2] sm:$0xff] 0.0
        %265 = vst [vmem:[#allocation2 + $0x8] sm:$0xff] 0.0
        %266 = vst [vmem:[#allocation2 + $0x10] sm:$0xff] 0.0
        %267 = vst [vmem:[#allocation2 + $0x18] sm:$0xff] 0.0
        %268 = vst [vmem:[#allocation2 + $0x20] sm:$0xff] 0.0
        %269 = vst [vmem:[#allocation2 + $0x28] sm:$0xff] 0.0
        %270 = vst [vmem:[#allocation2 + $0x30] sm:$0xff] 0.0
        %271 = vst [vmem:[#allocation2 + $0x38] sm:$0xff] 0.0
        %272 = vst [vmem:[#allocation2 + $0x40] sm:$0xff] 0.0
        %273 = vst [vmem:[#allocation2 + $0x48] sm:$0xff] 0.0
        %274 = vst [vmem:[#allocation2 + $0x50] sm:$0xff] 0.0
        %275 = vst [vmem:[#allocation2 + $0x58] sm:$0xff] 0.0
        %276 = vst [vmem:[#allocation2 + $0x60] sm:$0xff] 0.0
        %277 = vst [vmem:[#allocation2 + $0x68] sm:$0xff] 0.0
        %278 = vst [vmem:[#allocation2 + $0x70] sm:$0xff] 0.0
        %279 = vst [vmem:[#allocation2 + $0x78] sm:$0xff] 0.0
        %280 = vst [vmem:[#allocation2 + $0x80] sm:$0xff] 0.0
        %281 = vst [vmem:[#allocation2 + $0x88] sm:$0xff] 0.0
        %282 = vst [vmem:[#allocation2 + $0x90] sm:$0xff] 0.0
        %283 = vst [vmem:[#allocation2 + $0x98] sm:$0xff] 0.0
        %284 = vst [vmem:[#allocation2 + $0xa0] sm:$0xff] 0.0
        %285 = vst [vmem:[#allocation2 + $0xa8] sm:$0xff] 0.0
        %286 = vst [vmem:[#allocation2 + $0xb0] sm:$0xff] 0.0
        %287 = vst [vmem:[#allocation2 + $0xb8] sm:$0xff] 0.0
        %288 = vst [vmem:[#allocation2 + $0xc0] sm:$0xff] 0.0
        %289 = vst [vmem:[#allocation2 + $0xc8] sm:$0xff] 0.0
        %290 = vst [vmem:[#allocation2 + $0xd0] sm:$0xff] 0.0
        %291 = vst [vmem:[#allocation2 + $0xd8] sm:$0xff] 0.0
        %292 = vst [vmem:[#allocation2 + $0xe0] sm:$0xff] 0.0
        %293 = vst [vmem:[#allocation2 + $0xe8] sm:$0xff] 0.0
        %294 = vst [vmem:[#allocation2 + $0xf0] sm:$0xff] 0.0
        %295 = vst [vmem:[#allocation2 + $0xf8] sm:$0xff] 0.0
      $region36: #{_lambda_.9} parent=31 // pred_fallthru
        _
      %v296 = vld [vmem:[#allocation2] sm:$0xff]
      %v297 = vld [vmem:[#allocation2 + $0x8] sm:$0xff]
      %v298 = vld [vmem:[#allocation2 + $0x10] sm:$0xff]
      %v299 = vld [vmem:[#allocation2 + $0x18] sm:$0xff]
      %v300 = vld [vmem:[#allocation2 + $0x20] sm:$0xff]
      %v301 = vld [vmem:[#allocation2 + $0x28] sm:$0xff]
      %v302 = vld [vmem:[#allocation2 + $0x30] sm:$0xff]
      %v303 = vld [vmem:[#allocation2 + $0x38] sm:$0xff]
      %v304 = vld [vmem:[#allocation2 + $0x40] sm:$0xff]
      %v305 = vld [vmem:[#allocation2 + $0x48] sm:$0xff]
      %v306 = vld [vmem:[#allocation2 + $0x50] sm:$0xff]
      %v307 = vld [vmem:[#allocation2 + $0x58] sm:$0xff]
      %v308 = vld [vmem:[#allocation2 + $0x60] sm:$0xff]
      %v309 = vld [vmem:[#allocation2 + $0x68] sm:$0xff]
      %v310 = vld [vmem:[#allocation2 + $0x70] sm:$0xff]
      %v311 = vld [vmem:[#allocation2 + $0x78] sm:$0xff]
      %v312 = vld [vmem:[#allocation2 + $0x80] sm:$0xff]
      %v313 = vld [vmem:[#allocation2 + $0x88] sm:$0xff]
      %v314 = vld [vmem:[#allocation2 + $0x90] sm:$0xff]
      %v315 = vld [vmem:[#allocation2 + $0x98] sm:$0xff]
      %v316 = vld [vmem:[#allocation2 + $0xa0] sm:$0xff]
      %v317 = vld [vmem:[#allocation2 + $0xa8] sm:$0xff]
      %v318 = vld [vmem:[#allocation2 + $0xb0] sm:$0xff]
      %v319 = vld [vmem:[#allocation2 + $0xb8] sm:$0xff]
      %v320 = vld [vmem:[#allocation2 + $0xc0] sm:$0xff]
      %v321 = vld [vmem:[#allocation2 + $0xc8] sm:$0xff]
      %v322 = vld [vmem:[#allocation2 + $0xd0] sm:$0xff]
      %v323 = vld [vmem:[#allocation2 + $0xd8] sm:$0xff]
      %v324 = vld [vmem:[#allocation2 + $0xe0] sm:$0xff]
      %v325 = vld [vmem:[#allocation2 + $0xe8] sm:$0xff]
      %v326 = vld [vmem:[#allocation2 + $0xf0] sm:$0xff]
      %v327 = vld [vmem:[#allocation2 + $0xf8] sm:$0xff]
      %v328 = vld [vmem:[%s236] sm:$0xf]
      %v329 = vld [vmem:[%s236 + $0x4] sm:$0xf]
      %v330 = vld [vmem:[%s236 + $0x8] sm:$0xf]
      %v331 = vld [vmem:[%s236 + $0xc] sm:$0xf]
      %v332 = vld [vmem:[%s236 + $0x10] sm:$0xf]
      %v333 = vld [vmem:[%s236 + $0x14] sm:$0xf]
      %v334 = vld [vmem:[%s236 + $0x18] sm:$0xf]
      %v335 = vld [vmem:[%s236 + $0x1c] sm:$0xf]
      %v336 = vld [vmem:[%s236 + $0x20] sm:$0xf]
      %v337 = vld [vmem:[%s236 + $0x24] sm:$0xf]
      %v338 = vld [vmem:[%s236 + $0x28] sm:$0xf]
      %v339 = vld [vmem:[%s236 + $0x2c] sm:$0xf]
      %v340 = vld [vmem:[%s236 + $0x30] sm:$0xf]
      %v341 = vld [vmem:[%s236 + $0x34] sm:$0xf]
      %v342 = vld [vmem:[%s236 + $0x38] sm:$0xf]
      %v343 = vld [vmem:[%s236 + $0x3c] sm:$0xf]
      %v344 = vld [vmem:[%s236 + $0x40] sm:$0xf]
      %v345 = vld [vmem:[%s236 + $0x44] sm:$0xf]
      %v346 = vld [vmem:[%s236 + $0x48] sm:$0xf]
      %v347 = vld [vmem:[%s236 + $0x4c] sm:$0xf]
      %v348 = vld [vmem:[%s236 + $0x50] sm:$0xf]
      %v349 = vld [vmem:[%s236 + $0x54] sm:$0xf]
      %v350 = vld [vmem:[%s236 + $0x58] sm:$0xf]
      %v351 = vld [vmem:[%s236 + $0x5c] sm:$0xf]
      %v352 = vld [vmem:[%s236 + $0x60] sm:$0xf]
      %v353 = vld [vmem:[%s236 + $0x64] sm:$0xf]
      %v354 = vld [vmem:[%s236 + $0x68] sm:$0xf]
      %v355 = vld [vmem:[%s236 + $0x6c] sm:$0xf]
      %v356 = vld [vmem:[%s236 + $0x70] sm:$0xf]
      %v357 = vld [vmem:[%s236 + $0x74] sm:$0xf]
      %v358 = vld [vmem:[%s236 + $0x78] sm:$0xf]
      %v359 = vld [vmem:[%s236 + $0x7c] sm:$0xf]
      %v360 = vld [vmem:[%s245] sm:$0xf]
      %v361 = vld [vmem:[%s245 + $0x4] sm:$0xf]
      %v362 = vld [vmem:[%s245 + $0x8] sm:$0xf]
      %v363 = vld [vmem:[%s245 + $0xc] sm:$0xf]
      %v396 = vunpack.c.l.b16 %v328
      %v397 = vunpack.c.l.b16 %v329
      %v398 = vunpack.c.l.b16 %v330
      %v399 = vunpack.c.l.b16 %v331
      %v400 = vunpack.c.l.b16 %v332
      %v401 = vunpack.c.l.b16 %v333
      %v402 = vunpack.c.l.b16 %v334
      %v403 = vunpack.c.l.b16 %v335
      %v404 = vunpack.c.l.b16 %v336
      %v405 = vunpack.c.l.b16 %v337
      %v406 = vunpack.c.l.b16 %v338
      %v407 = vunpack.c.l.b16 %v339
      %v408 = vunpack.c.l.b16 %v340
      %v409 = vunpack.c.l.b16 %v341
      %v410 = vunpack.c.l.b16 %v342
      %v411 = vunpack.c.l.b16 %v343
      %v412 = vunpack.c.l.b16 %v344
      %v413 = vunpack.c.l.b16 %v345
      %v414 = vunpack.c.l.b16 %v346
      %v415 = vunpack.c.l.b16 %v347
      %v416 = vunpack.c.l.b16 %v348
      %v417 = vunpack.c.l.b16 %v349
      %v418 = vunpack.c.l.b16 %v350
      %v419 = vunpack.c.l.b16 %v351
      %v420 = vunpack.c.l.b16 %v352
      %v421 = vunpack.c.l.b16 %v353
      %v422 = vunpack.c.l.b16 %v354
      %v423 = vunpack.c.l.b16 %v355
      %v424 = vunpack.c.l.b16 %v356
      %v425 = vunpack.c.l.b16 %v357
      %v426 = vunpack.c.l.b16 %v358
      %v427 = vunpack.c.l.b16 %v359
      %v428 = vpack.c.b16 %v397, %v396
      %v429 = vpack.c.b16 %v399, %v398
      %v430 = vpack.c.b16 %v401, %v400
      %v431 = vpack.c.b16 %v403, %v402
      %v432 = vpack.c.b16 %v405, %v404
      %v433 = vpack.c.b16 %v407, %v406
      %v434 = vpack.c.b16 %v409, %v408
      %v435 = vpack.c.b16 %v411, %v410
      %v436 = vpack.c.b16 %v413, %v412
      %v437 = vpack.c.b16 %v415, %v414
      %v438 = vpack.c.b16 %v417, %v416
      %v439 = vpack.c.b16 %v419, %v418
      %v440 = vpack.c.b16 %v421, %v420
      %v441 = vpack.c.b16 %v423, %v422
      %v442 = vpack.c.b16 %v425, %v424
      %v443 = vpack.c.b16 %v427, %v426
      %v448 = vunpack.c.l.b16 %v360
      %v449 = vunpack.c.l.b16 %v361
      %v450 = vunpack.c.l.b16 %v362
      %v451 = vunpack.c.l.b16 %v363
      %v452 = vpack.c.b16 %v449, %v448
      %v453 = vpack.c.b16 %v451, %v450
      %vm456 = vcmask 261120
      %v458 = vsel %vm456, %v428, 0
      %v461 = vsel %vm456, %v429, 0
      %v464 = vsel %vm456, %v430, 0
      %v467 = vsel %vm456, %v431, 0
      %v470 = vsel %vm456, %v432, 0
      %v473 = vsel %vm456, %v433, 0
      %v476 = vsel %vm456, %v434, 0
      %v479 = vsel %vm456, %v435, 0
      %v482 = vsel %vm456, %v436, 0
      %v485 = vsel %vm456, %v437, 0
      %v488 = vsel %vm456, %v438, 0
      %v491 = vsel %vm456, %v439, 0
      %v494 = vsel %vm456, %v440, 0
      %v497 = vsel %vm456, %v441, 0
      %v500 = vsel %vm456, %v442, 0
      %v503 = vsel %vm456, %v443, 0
      %505 = vmatprep.subr.bf16.mxu0 0
      %506 = vmatpush1.bf16.msra.mxu0 0
      %507 = vmatprep.subr.bf16.mxu0 0
      %508 = vmatpush1.bf16.msra.mxu0 0
      %509 = vmatprep.subr.bf16.mxu0 0
      %510 = vmatpush1.bf16.msra.mxu0 0
      %511 = vmatprep.subr.bf16.mxu0 0
      %512 = vmatpush1.bf16.msra.mxu0 0
      %513 = vmatprep.subr.bf16.mxu0 0
      %514 = vmatpush1.bf16.msra.mxu0 0
      %515 = vmatprep.subr.bf16.mxu0 0
      %516 = vmatpush1.bf16.msra.mxu0 0
      %517 = vmatprep.subr.bf16.mxu0 0
      %518 = vmatpush1.bf16.msra.mxu0 %v453
      %519 = vmatprep.subr.bf16.mxu0 0
      %520 = vmatpush1.bf16.msra.mxu0 %v452
      %521 = vmatprep.subr.bf16.mxu0 0
      %522 = vmatpush2.bf16.msra.mxu0 0
      %523 = vmatprep.subr.bf16.mxu0 0
      %524 = vmatpush2.bf16.msra.mxu0 0
      %525 = vmatprep.subr.bf16.mxu0 0
      %526 = vmatpush2.bf16.msra.mxu0 0
      %527 = vmatprep.subr.bf16.mxu0 0
      %528 = vmatpush2.bf16.msra.mxu0 0
      %529 = vmatprep.subr.bf16.mxu0 0
      %530 = vmatpush2.bf16.msra.mxu0 0
      %531 = vmatprep.subr.bf16.mxu0 0
      %532 = vmatpush2.bf16.msra.mxu0 0
      %533 = vmatprep.subr.bf16.mxu0 0
      %534 = vmatpush2.bf16.msra.mxu0 0
      %535 = vmatprep.subr.bf16.mxu0 0
      %536 = vmatpush2.bf16.msra.mxu0 0
      %537 = vmatprep.mubr.bf16.mxu0 0
      %538 = vmatmul.mubr.bf16.gmra.mxu0 %v458
      %v539 = vpop.f32.mrf.mxu0
      %v540 = vadd.f32 0.0, %v539
      %v541 = vpop.f32.mrf.mxu0
      %v542 = vpop.f32.mrf.mxu0
      %v543 = vadd.f32 0.0, %v542
      %v544 = vpop.f32.mrf.mxu0
      %545 = vmatprep.mubr.bf16.mxu0 0
      %546 = vmatmul.mubr.bf16.gmra.mxu0 %v461
      %v547 = vpop.f32.mrf.mxu0
      %v548 = vadd.f32 0.0, %v547
      %v549 = vpop.f32.mrf.mxu0
      %v550 = vpop.f32.mrf.mxu0
      %v551 = vadd.f32 0.0, %v550
      %v552 = vpop.f32.mrf.mxu0
      %553 = vmatprep.mubr.bf16.mxu0 0
      %554 = vmatmul.mubr.bf16.gmra.mxu0 %v464
      %v555 = vpop.f32.mrf.mxu0
      %v556 = vadd.f32 0.0, %v555
      %v557 = vpop.f32.mrf.mxu0
      %v558 = vpop.f32.mrf.mxu0
      %v559 = vadd.f32 0.0, %v558
      %v560 = vpop.f32.mrf.mxu0
      %561 = vmatprep.mubr.bf16.mxu0 0
      %562 = vmatmul.mubr.bf16.gmra.mxu0 %v467
      %v563 = vpop.f32.mrf.mxu0
      %v564 = vadd.f32 0.0, %v563
      %v565 = vpop.f32.mrf.mxu0
      %v566 = vpop.f32.mrf.mxu0
      %v567 = vadd.f32 0.0, %v566
      %v568 = vpop.f32.mrf.mxu0
      %569 = vmatprep.mubr.bf16.mxu0 0
      %570 = vmatmul.mubr.bf16.gmra.mxu0 %v470
      %v571 = vpop.f32.mrf.mxu0
      %v572 = vadd.f32 0.0, %v571
      %v573 = vpop.f32.mrf.mxu0
      %v574 = vpop.f32.mrf.mxu0
      %v575 = vadd.f32 0.0, %v574
      %v576 = vpop.f32.mrf.mxu0
      %577 = vmatprep.mubr.bf16.mxu0 0
      %578 = vmatmul.mubr.bf16.gmra.mxu0 %v473
      %v579 = vpop.f32.mrf.mxu0
      %v580 = vadd.f32 0.0, %v579
      %v581 = vpop.f32.mrf.mxu0
      %v582 = vpop.f32.mrf.mxu0
      %v583 = vadd.f32 0.0, %v582
      %v584 = vpop.f32.mrf.mxu0
      %585 = vmatprep.mubr.bf16.mxu0 0
      %586 = vmatmul.mubr.bf16.gmra.mxu0 %v476
      %v587 = vpop.f32.mrf.mxu0
      %v588 = vadd.f32 0.0, %v587
      %v589 = vpop.f32.mrf.mxu0
      %v590 = vpop.f32.mrf.mxu0
      %v591 = vadd.f32 0.0, %v590
      %v592 = vpop.f32.mrf.mxu0
      %593 = vmatprep.mubr.bf16.mxu0 0
      %594 = vmatmul.mubr.bf16.gmra.mxu0 %v479
      %v595 = vpop.f32.mrf.mxu0
      %v596 = vadd.f32 0.0, %v595
      %v597 = vpop.f32.mrf.mxu0
      %v598 = vpop.f32.mrf.mxu0
      %v599 = vadd.f32 0.0, %v598
      %v600 = vpop.f32.mrf.mxu0
      %601 = vmatprep.mubr.bf16.mxu0 0
      %602 = vmatmul.mubr.bf16.gmra.mxu0 %v482
      %v603 = vpop.f32.mrf.mxu0
      %v604 = vadd.f32 0.0, %v603
      %v605 = vpop.f32.mrf.mxu0
      %v606 = vpop.f32.mrf.mxu0
      %v607 = vadd.f32 0.0, %v606
      %v608 = vpop.f32.mrf.mxu0
      %609 = vmatprep.mubr.bf16.mxu0 0
      %610 = vmatmul.mubr.bf16.gmra.mxu0 %v485
      %v611 = vpop.f32.mrf.mxu0
      %v612 = vadd.f32 0.0, %v611
      %v613 = vpop.f32.mrf.mxu0
      %v614 = vpop.f32.mrf.mxu0
      %v615 = vadd.f32 0.0, %v614
      %v616 = vpop.f32.mrf.mxu0
      %617 = vmatprep.mubr.bf16.mxu0 0
      %618 = vmatmul.mubr.bf16.gmra.mxu0 %v488
      %v619 = vpop.f32.mrf.mxu0
      %v620 = vadd.f32 0.0, %v619
      %v621 = vpop.f32.mrf.mxu0
      %v622 = vpop.f32.mrf.mxu0
      %v623 = vadd.f32 0.0, %v622
      %v624 = vpop.f32.mrf.mxu0
      %625 = vmatprep.mubr.bf16.mxu0 0
      %626 = vmatmul.mubr.bf16.gmra.mxu0 %v491
      %v627 = vpop.f32.mrf.mxu0
      %v628 = vadd.f32 0.0, %v627
      %v629 = vpop.f32.mrf.mxu0
      %v630 = vpop.f32.mrf.mxu0
      %v631 = vadd.f32 0.0, %v630
      %v632 = vpop.f32.mrf.mxu0
      %633 = vmatprep.mubr.bf16.mxu0 0
      %634 = vmatmul.mubr.bf16.gmra.mxu0 %v494
      %v635 = vpop.f32.mrf.mxu0
      %v636 = vadd.f32 0.0, %v635
      %v637 = vpop.f32.mrf.mxu0
      %v638 = vpop.f32.mrf.mxu0
      %v639 = vadd.f32 0.0, %v638
      %v640 = vpop.f32.mrf.mxu0
      %641 = vmatprep.mubr.bf16.mxu0 0
      %642 = vmatmul.mubr.bf16.gmra.mxu0 %v497
      %v643 = vpop.f32.mrf.mxu0
      %v644 = vadd.f32 0.0, %v643
      %v645 = vpop.f32.mrf.mxu0
      %v646 = vpop.f32.mrf.mxu0
      %v647 = vadd.f32 0.0, %v646
      %v648 = vpop.f32.mrf.mxu0
      %649 = vmatprep.mubr.bf16.mxu0 0
      %650 = vmatmul.mubr.bf16.gmra.mxu0 %v500
      %v651 = vpop.f32.mrf.mxu0
      %v652 = vadd.f32 0.0, %v651
      %v653 = vpop.f32.mrf.mxu0
      %v654 = vpop.f32.mrf.mxu0
      %v655 = vadd.f32 0.0, %v654
      %v656 = vpop.f32.mrf.mxu0
      %657 = vmatprep.mubr.bf16.mxu0 0
      %658 = vmatmul.mubr.bf16.gmra.mxu0 %v503
      %v659 = vpop.f32.mrf.mxu0
      %v660 = vadd.f32 0.0, %v659
      %v661 = vpop.f32.mrf.mxu0
      %v662 = vpop.f32.mrf.mxu0
      %v663 = vadd.f32 0.0, %v662
      %v664 = vpop.f32.mrf.mxu0
      %665 = vdwg.mxu0
      %v666 = vadd.f32 %v296, %v540
      %v667 = vadd.f32 %v297, %v543
      %v668 = vadd.f32 %v298, %v548
      %v669 = vadd.f32 %v299, %v551
      %v670 = vadd.f32 %v300, %v556
      %v671 = vadd.f32 %v301, %v559
      %v672 = vadd.f32 %v302, %v564
      %v673 = vadd.f32 %v303, %v567
      %v674 = vadd.f32 %v304, %v572
      %v675 = vadd.f32 %v305, %v575
      %v676 = vadd.f32 %v306, %v580
      %v677 = vadd.f32 %v307, %v583
      %v678 = vadd.f32 %v308, %v588
      %v679 = vadd.f32 %v309, %v591
      %v680 = vadd.f32 %v310, %v596
      %v681 = vadd.f32 %v311, %v599
      %v682 = vadd.f32 %v312, %v604
      %v683 = vadd.f32 %v313, %v607
      %v684 = vadd.f32 %v314, %v612
      %v685 = vadd.f32 %v315, %v615
      %v686 = vadd.f32 %v316, %v620
      %v687 = vadd.f32 %v317, %v623
      %v688 = vadd.f32 %v318, %v628
      %v689 = vadd.f32 %v319, %v631
      %v690 = vadd.f32 %v320, %v636
      %v691 = vadd.f32 %v321, %v639
      %v692 = vadd.f32 %v322, %v644
      %v693 = vadd.f32 %v323, %v647
      %v694 = vadd.f32 %v324, %v652
      %v695 = vadd.f32 %v325, %v655
      %v696 = vadd.f32 %v326, %v660
      %v697 = vadd.f32 %v327, %v663
      %698 = vst [vmem:[#allocation2] sm:$0xff] %v666
      %699 = vst [vmem:[#allocation2 + $0x8] sm:$0xff] %v667
      %700 = vst [vmem:[#allocation2 + $0x10] sm:$0xff] %v668
      %701 = vst [vmem:[#allocation2 + $0x18] sm:$0xff] %v669
      %702 = vst [vmem:[#allocation2 + $0x20] sm:$0xff] %v670
      %703 = vst [vmem:[#allocation2 + $0x28] sm:$0xff] %v671
      %704 = vst [vmem:[#allocation2 + $0x30] sm:$0xff] %v672
      %705 = vst [vmem:[#allocation2 + $0x38] sm:$0xff] %v673
      %706 = vst [vmem:[#allocation2 + $0x40] sm:$0xff] %v674
      %707 = vst [vmem:[#allocation2 + $0x48] sm:$0xff] %v675
      %708 = vst [vmem:[#allocation2 + $0x50] sm:$0xff] %v676
      %709 = vst [vmem:[#allocation2 + $0x58] sm:$0xff] %v677
      %710 = vst [vmem:[#allocation2 + $0x60] sm:$0xff] %v678
      %711 = vst [vmem:[#allocation2 + $0x68] sm:$0xff] %v679
      %712 = vst [vmem:[#allocation2 + $0x70] sm:$0xff] %v680
      %713 = vst [vmem:[#allocation2 + $0x78] sm:$0xff] %v681
      %714 = vst [vmem:[#allocation2 + $0x80] sm:$0xff] %v682
      %715 = vst [vmem:[#allocation2 + $0x88] sm:$0xff] %v683
      %716 = vst [vmem:[#allocation2 + $0x90] sm:$0xff] %v684
      %717 = vst [vmem:[#allocation2 + $0x98] sm:$0xff] %v685
      %718 = vst [vmem:[#allocation2 + $0xa0] sm:$0xff] %v686
      %719 = vst [vmem:[#allocation2 + $0xa8] sm:$0xff] %v687
      %720 = vst [vmem:[#allocation2 + $0xb0] sm:$0xff] %v688
      %721 = vst [vmem:[#allocation2 + $0xb8] sm:$0xff] %v689
      %722 = vst [vmem:[#allocation2 + $0xc0] sm:$0xff] %v690
      %723 = vst [vmem:[#allocation2 + $0xc8] sm:$0xff] %v691
      %724 = vst [vmem:[#allocation2 + $0xd0] sm:$0xff] %v692
      %725 = vst [vmem:[#allocation2 + $0xd8] sm:$0xff] %v693
      %726 = vst [vmem:[#allocation2 + $0xe0] sm:$0xff] %v694
      %727 = vst [vmem:[#allocation2 + $0xe8] sm:$0xff] %v695
      %728 = vst [vmem:[#allocation2 + $0xf0] sm:$0xff] %v696
      %729 = vst [vmem:[#allocation2 + $0xf8] sm:$0xff] %v697
      // Predicated region
      $region37: #{_lambda_.9} parent=31 // pred_check
        %p730 = pneg %p260
      $region38: #{_lambda_.9} parent=31 // pred_check_branch
        %732 = sbr.rel (%p730) target = $region40
      $region39: #{_lambda_.9} parent=31 // pred_region
        %v733 = vld [vmem:[#allocation2] sm:$0xff]
        %v734 = vld [vmem:[#allocation2 + $0x8] sm:$0xff]
        %v735 = vld [vmem:[#allocation2 + $0x10] sm:$0xff]
        %v736 = vld [vmem:[#allocation2 + $0x18] sm:$0xff]
        %v737 = vld [vmem:[#allocation2 + $0x20] sm:$0xff]
        %v738 = vld [vmem:[#allocation2 + $0x28] sm:$0xff]
        %v739 = vld [vmem:[#allocation2 + $0x30] sm:$0xff]
        %v740 = vld [vmem:[#allocation2 + $0x38] sm:$0xff]
        %v741 = vld [vmem:[#allocation2 + $0x40] sm:$0xff]
        %v742 = vld [vmem:[#allocation2 + $0x48] sm:$0xff]
        %v743 = vld [vmem:[#allocation2 + $0x50] sm:$0xff]
        %v744 = vld [vmem:[#allocation2 + $0x58] sm:$0xff]
        %v745 = vld [vmem:[#allocation2 + $0x60] sm:$0xff]
        %v746 = vld [vmem:[#allocation2 + $0x68] sm:$0xff]
        %v747 = vld [vmem:[#allocation2 + $0x70] sm:$0xff]
        %v748 = vld [vmem:[#allocation2 + $0x78] sm:$0xff]
        %v749 = vld [vmem:[#allocation2 + $0x80] sm:$0xff]
        %v750 = vld [vmem:[#allocation2 + $0x88] sm:$0xff]
        %v751 = vld [vmem:[#allocation2 + $0x90] sm:$0xff]
        %v752 = vld [vmem:[#allocation2 + $0x98] sm:$0xff]
        %v753 = vld [vmem:[#allocation2 + $0xa0] sm:$0xff]
        %v754 = vld [vmem:[#allocation2 + $0xa8] sm:$0xff]
        %v755 = vld [vmem:[#allocation2 + $0xb0] sm:$0xff]
        %v756 = vld [vmem:[#allocation2 + $0xb8] sm:$0xff]
        %v757 = vld [vmem:[#allocation2 + $0xc0] sm:$0xff]
        %v758 = vld [vmem:[#allocation2 + $0xc8] sm:$0xff]
        %v759 = vld [vmem:[#allocation2 + $0xd0] sm:$0xff]
        %v760 = vld [vmem:[#allocation2 + $0xd8] sm:$0xff]
        %v761 = vld [vmem:[#allocation2 + $0xe0] sm:$0xff]
        %v762 = vld [vmem:[#allocation2 + $0xe8] sm:$0xff]
        %v763 = vld [vmem:[#allocation2 + $0xf0] sm:$0xff]
        %v764 = vld [vmem:[#allocation2 + $0xf8] sm:$0xff]
        %v765 = vld [vmem:[%s249] sm:$0x1]
        %v767 = vlaneseq
        %v768 = vshrl.u32 %v767, 7
        %v769 = vsub.s32 0, %v768
        %v770 = vrot.slane %v765, %v769
        %v772 = vadd.f32 %v733, %v770
        %v773 = vadd.f32 %v734, %v770
        %v774 = vadd.f32 %v735, %v770
        %v775 = vadd.f32 %v736, %v770
        %v776 = vadd.f32 %v737, %v770
        %v777 = vadd.f32 %v738, %v770
        %v778 = vadd.f32 %v739, %v770
        %v779 = vadd.f32 %v740, %v770
        %v780 = vadd.f32 %v741, %v770
        %v781 = vadd.f32 %v742, %v770
        %v782 = vadd.f32 %v743, %v770
        %v783 = vadd.f32 %v744, %v770
        %v784 = vadd.f32 %v745, %v770
        %v785 = vadd.f32 %v746, %v770
        %v786 = vadd.f32 %v747, %v770
        %v787 = vadd.f32 %v748, %v770
        %v788 = vadd.f32 %v749, %v770
        %v789 = vadd.f32 %v750, %v770
        %v790 = vadd.f32 %v751, %v770
        %v791 = vadd.f32 %v752, %v770
        %v792 = vadd.f32 %v753, %v770
        %v793 = vadd.f32 %v754, %v770
        %v794 = vadd.f32 %v755, %v770
        %v795 = vadd.f32 %v756, %v770
        %v796 = vadd.f32 %v757, %v770
        %v797 = vadd.f32 %v758, %v770
        %v798 = vadd.f32 %v759, %v770
        %v799 = vadd.f32 %v760, %v770
        %v800 = vadd.f32 %v761, %v770
        %v801 = vadd.f32 %v762, %v770
        %v802 = vadd.f32 %v763, %v770
        %v803 = vadd.f32 %v764, %v770
        %v804 = vmax.f32 %v772, 0.0
        %v805 = vmax.f32 %v773, 0.0
        %v806 = vmax.f32 %v774, 0.0
        %v807 = vmax.f32 %v775, 0.0
        %v808 = vmax.f32 %v776, 0.0
        %v809 = vmax.f32 %v777, 0.0
        %v810 = vmax.f32 %v778, 0.0
        %v811 = vmax.f32 %v779, 0.0
        %v812 = vmax.f32 %v780, 0.0
        %v813 = vmax.f32 %v781, 0.0
        %v814 = vmax.f32 %v782, 0.0
        %v815 = vmax.f32 %v783, 0.0
        %v816 = vmax.f32 %v784, 0.0
        %v817 = vmax.f32 %v785, 0.0
        %v818 = vmax.f32 %v786, 0.0
        %v819 = vmax.f32 %v787, 0.0
        %v820 = vmax.f32 %v788, 0.0
        %v821 = vmax.f32 %v789, 0.0
        %v822 = vmax.f32 %v790, 0.0
        %v823 = vmax.f32 %v791, 0.0
        %v824 = vmax.f32 %v792, 0.0
        %v825 = vmax.f32 %v793, 0.0
        %v826 = vmax.f32 %v794, 0.0
        %v827 = vmax.f32 %v795, 0.0
        %v828 = vmax.f32 %v796, 0.0
        %v829 = vmax.f32 %v797, 0.0
        %v830 = vmax.f32 %v798, 0.0
        %v831 = vmax.f32 %v799, 0.0
        %v832 = vmax.f32 %v800, 0.0
        %v833 = vmax.f32 %v801, 0.0
        %v834 = vmax.f32 %v802, 0.0
        %v835 = vmax.f32 %v803, 0.0
        %v836 = vpack.c.bf16 %v805, %v804
        %v837 = vpack.c.bf16 %v807, %v806
        %v838 = vpack.c.bf16 %v809, %v808
        %v839 = vpack.c.bf16 %v811, %v810
        %v840 = vpack.c.bf16 %v813, %v812
        %v841 = vpack.c.bf16 %v815, %v814
        %v842 = vpack.c.bf16 %v817, %v816
        %v843 = vpack.c.bf16 %v819, %v818
        %v844 = vpack.c.bf16 %v821, %v820
        %v845 = vpack.c.bf16 %v823, %v822
        %v846 = vpack.c.bf16 %v825, %v824
        %v847 = vpack.c.bf16 %v827, %v826
        %v848 = vpack.c.bf16 %v829, %v828
        %v849 = vpack.c.bf16 %v831, %v830
        %v850 = vpack.c.bf16 %v833, %v832
        %v851 = vpack.c.bf16 %v835, %v834
        %v868 = vunpack.c.l.b16 %v836
        %v869 = vunpack.c.h.b16 %v836
        %v870 = vunpack.c.l.b16 %v837
        %v871 = vunpack.c.h.b16 %v837
        %v872 = vunpack.c.l.b16 %v838
        %v873 = vunpack.c.h.b16 %v838
        %v874 = vunpack.c.l.b16 %v839
        %v875 = vunpack.c.h.b16 %v839
        %v876 = vunpack.c.l.b16 %v840
        %v877 = vunpack.c.h.b16 %v840
        %v878 = vunpack.c.l.b16 %v841
        %v879 = vunpack.c.h.b16 %v841
        %v880 = vunpack.c.l.b16 %v842
        %v881 = vunpack.c.h.b16 %v842
        %v882 = vunpack.c.l.b16 %v843
        %v883 = vunpack.c.h.b16 %v843
        %v884 = vunpack.c.l.b16 %v844
        %v885 = vunpack.c.h.b16 %v844
        %v886 = vunpack.c.l.b16 %v845
        %v887 = vunpack.c.h.b16 %v845
        %v888 = vunpack.c.l.b16 %v846
        %v889 = vunpack.c.h.b16 %v846
        %v890 = vunpack.c.l.b16 %v847
        %v891 = vunpack.c.h.b16 %v847
        %v892 = vunpack.c.l.b16 %v848
        %v893 = vunpack.c.h.b16 %v848
        %v894 = vunpack.c.l.b16 %v849
        %v895 = vunpack.c.h.b16 %v849
        %v896 = vunpack.c.l.b16 %v850
        %v897 = vunpack.c.h.b16 %v850
        %v898 = vunpack.c.l.b16 %v851
        %v899 = vunpack.c.h.b16 %v851
        %v900 = vpack.c.b16 %v868, %v868
        %v901 = vpack.c.b16 %v869, %v869
        %v902 = vpack.c.b16 %v870, %v870
        %v903 = vpack.c.b16 %v871, %v871
        %v904 = vpack.c.b16 %v872, %v872
        %v905 = vpack.c.b16 %v873, %v873
        %v906 = vpack.c.b16 %v874, %v874
        %v907 = vpack.c.b16 %v875, %v875
        %v908 = vpack.c.b16 %v876, %v876
        %v909 = vpack.c.b16 %v877, %v877
        %v910 = vpack.c.b16 %v878, %v878
        %v911 = vpack.c.b16 %v879, %v879
        %v912 = vpack.c.b16 %v880, %v880
        %v913 = vpack.c.b16 %v881, %v881
        %v914 = vpack.c.b16 %v882, %v882
        %v915 = vpack.c.b16 %v883, %v883
        %v916 = vpack.c.b16 %v884, %v884
        %v917 = vpack.c.b16 %v885, %v885
        %v918 = vpack.c.b16 %v886, %v886
        %v919 = vpack.c.b16 %v887, %v887
        %v920 = vpack.c.b16 %v888, %v888
        %v921 = vpack.c.b16 %v889, %v889
        %v922 = vpack.c.b16 %v890, %v890
        %v923 = vpack.c.b16 %v891, %v891
        %v924 = vpack.c.b16 %v892, %v892
        %v925 = vpack.c.b16 %v893, %v893
        %v926 = vpack.c.b16 %v894, %v894
        %v927 = vpack.c.b16 %v895, %v895
        %v928 = vpack.c.b16 %v896, %v896
        %v929 = vpack.c.b16 %v897, %v897
        %v930 = vpack.c.b16 %v898, %v898
        %v931 = vpack.c.b16 %v899, %v899
        %964 = vst [vmem:[%s257] sm:$0xf] %v900
        %965 = vst [vmem:[%s257 + $0x4] sm:$0xf] %v901
        %966 = vst [vmem:[%s257 + $0x8] sm:$0xf] %v902
        %967 = vst [vmem:[%s257 + $0xc] sm:$0xf] %v903
        %968 = vst [vmem:[%s257 + $0x10] sm:$0xf] %v904
        %969 = vst [vmem:[%s257 + $0x14] sm:$0xf] %v905
        %970 = vst [vmem:[%s257 + $0x18] sm:$0xf] %v906
        %971 = vst [vmem:[%s257 + $0x1c] sm:$0xf] %v907
        %972 = vst [vmem:[%s257 + $0x20] sm:$0xf] %v908
        %973 = vst [vmem:[%s257 + $0x24] sm:$0xf] %v909
        %974 = vst [vmem:[%s257 + $0x28] sm:$0xf] %v910
        %975 = vst [vmem:[%s257 + $0x2c] sm:$0xf] %v911
        %976 = vst [vmem:[%s257 + $0x30] sm:$0xf] %v912
        %977 = vst [vmem:[%s257 + $0x34] sm:$0xf] %v913
        %978 = vst [vmem:[%s257 + $0x38] sm:$0xf] %v914
        %979 = vst [vmem:[%s257 + $0x3c] sm:$0xf] %v915
        %980 = vst [vmem:[%s257 + $0x40] sm:$0xf] %v916
        %981 = vst [vmem:[%s257 + $0x44] sm:$0xf] %v917
        %982 = vst [vmem:[%s257 + $0x48] sm:$0xf] %v918
        %983 = vst [vmem:[%s257 + $0x4c] sm:$0xf] %v919
        %984 = vst [vmem:[%s257 + $0x50] sm:$0xf] %v920
        %985 = vst [vmem:[%s257 + $0x54] sm:$0xf] %v921
        %986 = vst [vmem:[%s257 + $0x58] sm:$0xf] %v922
        %987 = vst [vmem:[%s257 + $0x5c] sm:$0xf] %v923
        %988 = vst [vmem:[%s257 + $0x60] sm:$0xf] %v924
        %989 = vst [vmem:[%s257 + $0x64] sm:$0xf] %v925
        %990 = vst [vmem:[%s257 + $0x68] sm:$0xf] %v926
        %991 = vst [vmem:[%s257 + $0x6c] sm:$0xf] %v927
        %992 = vst [vmem:[%s257 + $0x70] sm:$0xf] %v928
        %993 = vst [vmem:[%s257 + $0x74] sm:$0xf] %v929
        %994 = vst [vmem:[%s257 + $0x78] sm:$0xf] %v930
        %995 = vst [vmem:[%s257 + $0x7c] sm:$0xf] %v931
      $region40: #{_lambda_.9} parent=31 // pred_fallthru
        _
      %s996 = smul.u32 32, %s19
      %p997 = scmp.lt.s32.totalorder %s996, 127
      %s998 = scalar_select %p997, %s996, 127
      %p999 = scmp.lt.s32.totalorder %s20, 0
      %s1000 = scalar_select %p999, %s20, 0
      %s1001 = sadd.s32 %s1000, %s998
      %s1002 = smul.addr %s1001, 4
      %s1003 = scalar_lea.vmem %s3, %s1002
      // Predicated region
      $region41: #{_lambda_.9} parent=31 // pred_check
        %p1004 = pneg %p135
      $region42: #{_lambda_.9} parent=31 // pred_check_branch
        %1006 = sbr.rel (%p1004) target = $region44
      $region43: #{_lambda_.9} parent=31 // pred_region
        %s1007 = smul.u32 32, %s19
      $region44: #{_lambda_.9} parent=31 // pred_fallthru
        _
    $region32: #{_lambda_.9} parent=5 // pred_fallthru
      _
    %p1008 = scmp.le.s32.totalorder 2, %s9
    // Predicated region
    $region45: #{_lambda_.9} parent=5 // pred_check
      %p1009 = pneg %p1008
    $region46: #{_lambda_.9} parent=5 // pred_check_branch
      %1011 = sbr.rel (%p1009) target = $region48
    $region47: #{_lambda_.9} parent=5 // pred_region
      %s1012 = ssub.s32 %s9, 2
      // Predicated region
      $region49: #{_lambda_.9} parent=47 // pred_check
        %p1013 = pneg %p141
      $region50: #{_lambda_.9} parent=47 // pred_check_branch
        %1015 = sbr.rel (%p1013) target = $region52
      $region51: #{_lambda_.9} parent=47 // pred_region
        %s1016 = smul.u32 32, %s22
        %p1017 = scmp.lt.s32.totalorder %s1016, 127
        %s1018 = scalar_select %p1017, %s1016, 127
        %p1019 = scmp.lt.s32.totalorder %s23, 0
        %s1020 = scalar_select %p1019, %s23, 0
        %s1021 = sadd.s32 %s1020, %s1018
        %s1022 = smul.addr %s1021, 4
        %s1023 = scalar_lea.vmem %s3, %s1022
      $region52: #{_lambda_.9} parent=47 // pred_fallthru
        _
    $region48: #{_lambda_.9} parent=5 // pred_fallthru
      _
  $region6: #{_lambda_.9} parent=0 // loop_footer
    %s13 = sadd.s32 1, %s9
  $region7: #{_lambda_.9} parent=0 // loop_footer_branch
    %8 = sbr.rel target = $region3
  $region8: #{_lambda_.9} parent=0 // loop_exit
    _

// kernel: _lambda_.10
$region0: #{_lambda_.10}
  #allocation0 [shape = 'u32[]', space=smem, size = 0x4, offset = 0x4, fixed_abs, tag = 'smem constant byte address 0x4 - core index']
  #allocation1 [shape = 'u32[144,128]{1,0:T(1,128)}', space=vmem, size = 0x12000, scoped, tag = 'internal scratch']
  %s0 = inlined_call_operand.vmem [shape: bf16[10,2,5,2,5,128], index: 0, kind: input, shape index: {}]
  %s1 = inlined_call_operand.vmem [shape: bf16[10,5,5,64], index: 1, kind: output, shape index: {}]
  %s2 = sld [smem:[#allocation0]]
  $region14: #{_lambda_.10} parent=0
    _
  %s4 = ssub.s32 1, %s2
  %s5 = scalar_select 0, %s4, %s2
  // Predicated region
  $region2: #{_lambda_.10} parent=0 // pred_check
    _
  $region3: #{_lambda_.10} parent=0 // pred_check_branch
    %7 = sbr.rel (0) target = $region5
  $region4: #{_lambda_.10} parent=0 // pred_region
    _
  $region5: #{_lambda_.10} parent=0 // pred_fallthru
    _
  %v8 = vld [vmem:[%s0] sm:$0x7]
  %v9 = vld [vmem:[%s0 + $0x4] sm:$0x7]
  %v10 = vld [vmem:[%s0 + $0x8] sm:$0x7]
  %v11 = vld [vmem:[%s0 + $0xc] sm:$0x7]
  %v12 = vld [vmem:[%s0 + $0x10] sm:$0x7]
  %v13 = vld [vmem:[%s0 + $0x14] sm:$0x7]
  %v14 = vld [vmem:[%s0 + $0x18] sm:$0x7]
  %v15 = vld [vmem:[%s0 + $0x1c] sm:$0x7]
  %v16 = vld [vmem:[%s0 + $0x20] sm:$0x7]
  %v17 = vld [vmem:[%s0 + $0x24] sm:$0x7]
  %v18 = vld [vmem:[%s0 + $0x28] sm:$0x7]
  %v19 = vld [vmem:[%s0 + $0x2c] sm:$0x7]
  %v20 = vld [vmem:[%s0 + $0x30] sm:$0x7]
  %v21 = vld [vmem:[%s0 + $0x34] sm:$0x7]
  %v22 = vld [vmem:[%s0 + $0x38] sm:$0x7]
  %v23 = vld [vmem:[%s0 + $0x3c] sm:$0x7]
  %v24 = vld [vmem:[%s0 + $0x40] sm:$0x7]
  %v25 = vld [vmem:[%s0 + $0x44] sm:$0x7]
  %v26 = vld [vmem:[%s0 + $0x48] sm:$0x7]
  %v27 = vld [vmem:[%s0 + $0x4c] sm:$0x7]
  %v28 = vld [vmem:[%s0 + $0x50] sm:$0x7]
  %v29 = vld [vmem:[%s0 + $0x54] sm:$0x7]
  %v30 = vld [vmem:[%s0 + $0x58] sm:$0x7]
  %v31 = vld [vmem:[%s0 + $0x5c] sm:$0x7]
  %v32 = vld [vmem:[%s0 + $0x60] sm:$0x7]
  %v33 = vld [vmem:[%s0 + $0x64] sm:$0x7]
  %v34 = vld [vmem:[%s0 + $0x68] sm:$0x7]
  %v35 = vld [vmem:[%s0 + $0x6c] sm:$0x7]
  %v36 = vld [vmem:[%s0 + $0x70] sm:$0x7]
  %v37 = vld [vmem:[%s0 + $0x74] sm:$0x7]
  %v38 = vld [vmem:[%s0 + $0x78] sm:$0x7]
  %v39 = vld [vmem:[%s0 + $0x7c] sm:$0x7]
  %v40 = vld [vmem:[%s0 + $0x80] sm:$0x7]
  %v41 = vld [vmem:[%s0 + $0x84] sm:$0x7]
  %v42 = vld [vmem:[%s0 + $0x88] sm:$0x7]
  %v43 = vld [vmem:[%s0 + $0x8c] sm:$0x7]
  %v44 = vld [vmem:[%s0 + $0x90] sm:$0x7]
  %v45 = vld [vmem:[%s0 + $0x94] sm:$0x7]
  %v46 = vld [vmem:[%s0 + $0x98] sm:$0x7]
  %v47 = vld [vmem:[%s0 + $0x9c] sm:$0x7]
  %v48 = vld [vmem:[%s0 + $0xa0] sm:$0x7]
  %v49 = vld [vmem:[%s0 + $0xa4] sm:$0x7]
  %v50 = vld [vmem:[%s0 + $0xa8] sm:$0x7]
  %v51 = vld [vmem:[%s0 + $0xac] sm:$0x7]
  %v52 = vld [vmem:[%s0 + $0xb0] sm:$0x7]
  %v53 = vld [vmem:[%s0 + $0xb4] sm:$0x7]
  %v54 = vld [vmem:[%s0 + $0xb8] sm:$0x7]
  %v55 = vld [vmem:[%s0 + $0xbc] sm:$0x7]
  %v56 = vld [vmem:[%s0 + $0xc0] sm:$0x7]
  %v57 = vld [vmem:[%s0 + $0xc4] sm:$0x7]
  %v58 = vld [vmem:[%s0 + $0xc8] sm:$0x7]
  %v59 = vld [vmem:[%s0 + $0xcc] sm:$0x7]
  %v60 = vld [vmem:[%s0 + $0xd0] sm:$0x7]
  %v61 = vld [vmem:[%s0 + $0xd4] sm:$0x7]
  %v62 = vld [vmem:[%s0 + $0xd8] sm:$0x7]
  %v63 = vld [vmem:[%s0 + $0xdc] sm:$0x7]
  %v64 = vld [vmem:[%s0 + $0xe0] sm:$0x7]
  %v65 = vld [vmem:[%s0 + $0xe4] sm:$0x7]
  %v66 = vld [vmem:[%s0 + $0xe8] sm:$0x7]
  %v67 = vld [vmem:[%s0 + $0xec] sm:$0x7]
  %v68 = vld [vmem:[%s0 + $0xf0] sm:$0x7]
  %v69 = vld [vmem:[%s0 + $0xf4] sm:$0x7]
  %v70 = vld [vmem:[%s0 + $0xf8] sm:$0x7]
  %v71 = vld [vmem:[%s0 + $0xfc] sm:$0x7]
  %v72 = vld [vmem:[%s0 + $0x100] sm:$0x7]
  %v73 = vld [vmem:[%s0 + $0x104] sm:$0x7]
  %v74 = vld [vmem:[%s0 + $0x108] sm:$0x7]
  %v75 = vld [vmem:[%s0 + $0x10c] sm:$0x7]
  %v76 = vld [vmem:[%s0 + $0x110] sm:$0x7]
  %v77 = vld [vmem:[%s0 + $0x114] sm:$0x7]
  %v78 = vld [vmem:[%s0 + $0x118] sm:$0x7]
  %v79 = vld [vmem:[%s0 + $0x11c] sm:$0x7]
  %v80 = vld [vmem:[%s0 + $0x120] sm:$0x7]
  %v81 = vld [vmem:[%s0 + $0x124] sm:$0x7]
  %v82 = vld [vmem:[%s0 + $0x128] sm:$0x7]
  %v83 = vld [vmem:[%s0 + $0x12c] sm:$0x7]
  %v84 = vld [vmem:[%s0 + $0x130] sm:$0x7]
  %v85 = vld [vmem:[%s0 + $0x134] sm:$0x7]
  %v86 = vld [vmem:[%s0 + $0x138] sm:$0x7]
  %v87 = vld [vmem:[%s0 + $0x13c] sm:$0x7]
  %v88 = vld [vmem:[%s0 + $0x140] sm:$0x7]
  %v89 = vld [vmem:[%s0 + $0x144] sm:$0x7]
  %v90 = vld [vmem:[%s0 + $0x148] sm:$0x7]
  %v91 = vld [vmem:[%s0 + $0x14c] sm:$0x7]
  %v92 = vld [vmem:[%s0 + $0x150] sm:$0x7]
  %v93 = vld [vmem:[%s0 + $0x154] sm:$0x7]
  %v94 = vld [vmem:[%s0 + $0x158] sm:$0x7]
  %v95 = vld [vmem:[%s0 + $0x15c] sm:$0x7]
  %v96 = vld [vmem:[%s0 + $0x160] sm:$0x7]
  %v97 = vld [vmem:[%s0 + $0x164] sm:$0x7]
  %v98 = vld [vmem:[%s0 + $0x168] sm:$0x7]
  %v99 = vld [vmem:[%s0 + $0x16c] sm:$0x7]
  %v100 = vld [vmem:[%s0 + $0x170] sm:$0x7]
  %v101 = vld [vmem:[%s0 + $0x174] sm:$0x7]
  %v102 = vld [vmem:[%s0 + $0x178] sm:$0x7]
  %v103 = vld [vmem:[%s0 + $0x17c] sm:$0x7]
  %v104 = vld [vmem:[%s0 + $0x180] sm:$0x7]
  %v105 = vld [vmem:[%s0 + $0x184] sm:$0x7]
  %v106 = vld [vmem:[%s0 + $0x188] sm:$0x7]
  %v107 = vld [vmem:[%s0 + $0x18c] sm:$0x7]
  %v108 = vld [vmem:[%s0 + $0x190] sm:$0x7]
  %v109 = vld [vmem:[%s0 + $0x194] sm:$0x7]
  %v110 = vld [vmem:[%s0 + $0x198] sm:$0x7]
  %v111 = vld [vmem:[%s0 + $0x19c] sm:$0x7]
  %v112 = vld [vmem:[%s0 + $0x1a0] sm:$0x7]
  %v113 = vld [vmem:[%s0 + $0x1a4] sm:$0x7]
  %v114 = vld [vmem:[%s0 + $0x1a8] sm:$0x7]
  %v115 = vld [vmem:[%s0 + $0x1ac] sm:$0x7]
  %v116 = vld [vmem:[%s0 + $0x1b0] sm:$0x7]
  %v117 = vld [vmem:[%s0 + $0x1b4] sm:$0x7]
  %v118 = vld [vmem:[%s0 + $0x1b8] sm:$0x7]
  %v119 = vld [vmem:[%s0 + $0x1bc] sm:$0x7]
  %v120 = vld [vmem:[%s0 + $0x1c0] sm:$0x7]
  %v121 = vld [vmem:[%s0 + $0x1c4] sm:$0x7]
  %v122 = vld [vmem:[%s0 + $0x1c8] sm:$0x7]
  %v123 = vld [vmem:[%s0 + $0x1cc] sm:$0x7]
  %v124 = vld [vmem:[%s0 + $0x1d0] sm:$0x7]
  %v125 = vld [vmem:[%s0 + $0x1d4] sm:$0x7]
  %v126 = vld [vmem:[%s0 + $0x1d8] sm:$0x7]
  %v127 = vld [vmem:[%s0 + $0x1dc] sm:$0x7]
  %v128 = vld [vmem:[%s0 + $0x1e0] sm:$0x7]
  %v129 = vld [vmem:[%s0 + $0x1e4] sm:$0x7]
  %v130 = vld [vmem:[%s0 + $0x1e8] sm:$0x7]
  %v131 = vld [vmem:[%s0 + $0x1ec] sm:$0x7]
  %v132 = vld [vmem:[%s0 + $0x1f0] sm:$0x7]
  %v133 = vld [vmem:[%s0 + $0x1f4] sm:$0x7]
  %v134 = vld [vmem:[%s0 + $0x1f8] sm:$0x7]
  %v135 = vld [vmem:[%s0 + $0x1fc] sm:$0x7]
  %v136 = vld [vmem:[%s0 + $0x200] sm:$0x7]
  %v137 = vld [vmem:[%s0 + $0x204] sm:$0x7]
  %v138 = vld [vmem:[%s0 + $0x208] sm:$0x7]
  %v139 = vld [vmem:[%s0 + $0x20c] sm:$0x7]
  %v140 = vld [vmem:[%s0 + $0x210] sm:$0x7]
  %v141 = vld [vmem:[%s0 + $0x214] sm:$0x7]
  %v142 = vld [vmem:[%s0 + $0x218] sm:$0x7]
  %v143 = vld [vmem:[%s0 + $0x21c] sm:$0x7]
  %v144 = vld [vmem:[%s0 + $0x220] sm:$0x7]
  %v145 = vld [vmem:[%s0 + $0x224] sm:$0x7]
  %v146 = vld [vmem:[%s0 + $0x228] sm:$0x7]
  %v147 = vld [vmem:[%s0 + $0x22c] sm:$0x7]
  %v148 = vld [vmem:[%s0 + $0x230] sm:$0x7]
  %v149 = vld [vmem:[%s0 + $0x234] sm:$0x7]
  %v150 = vld [vmem:[%s0 + $0x238] sm:$0x7]
  %v151 = vld [vmem:[%s0 + $0x23c] sm:$0x7]
  %v152 = vld [vmem:[%s0 + $0x240] sm:$0x7]
  %v153 = vld [vmem:[%s0 + $0x244] sm:$0x7]
  %v154 = vld [vmem:[%s0 + $0x248] sm:$0x7]
  %v155 = vld [vmem:[%s0 + $0x24c] sm:$0x7]
  %v156 = vld [vmem:[%s0 + $0x250] sm:$0x7]
  %v157 = vld [vmem:[%s0 + $0x254] sm:$0x7]
  %v158 = vld [vmem:[%s0 + $0x258] sm:$0x7]
  %v159 = vld [vmem:[%s0 + $0x25c] sm:$0x7]
  %v160 = vld [vmem:[%s0 + $0x260] sm:$0x7]
  %v161 = vld [vmem:[%s0 + $0x264] sm:$0x7]
  %v162 = vld [vmem:[%s0 + $0x268] sm:$0x7]
  %v163 = vld [vmem:[%s0 + $0x26c] sm:$0x7]
  %v164 = vld [vmem:[%s0 + $0x270] sm:$0x7]
  %v165 = vld [vmem:[%s0 + $0x274] sm:$0x7]
  %v166 = vld [vmem:[%s0 + $0x278] sm:$0x7]
  %v167 = vld [vmem:[%s0 + $0x27c] sm:$0x7]
  %v168 = vld [vmem:[%s0 + $0x280] sm:$0x7]
  %v169 = vld [vmem:[%s0 + $0x284] sm:$0x7]
  %v170 = vld [vmem:[%s0 + $0x288] sm:$0x7]
  %v171 = vld [vmem:[%s0 + $0x28c] sm:$0x7]
  %v172 = vld [vmem:[%s0 + $0x290] sm:$0x7]
  %v173 = vld [vmem:[%s0 + $0x294] sm:$0x7]
  %v174 = vld [vmem:[%s0 + $0x298] sm:$0x7]
  %v175 = vld [vmem:[%s0 + $0x29c] sm:$0x7]
  %v176 = vld [vmem:[%s0 + $0x2a0] sm:$0x7]
  %v177 = vld [vmem:[%s0 + $0x2a4] sm:$0x7]
  %v178 = vld [vmem:[%s0 + $0x2a8] sm:$0x7]
  %v179 = vld [vmem:[%s0 + $0x2ac] sm:$0x7]
  %v180 = vld [vmem:[%s0 + $0x2b0] sm:$0x7]
  %v181 = vld [vmem:[%s0 + $0x2b4] sm:$0x7]
  %v182 = vld [vmem:[%s0 + $0x2b8] sm:$0x7]
  %v183 = vld [vmem:[%s0 + $0x2bc] sm:$0x7]
  %v184 = vld [vmem:[%s0 + $0x2c0] sm:$0x7]
  %v185 = vld [vmem:[%s0 + $0x2c4] sm:$0x7]
  %v186 = vld [vmem:[%s0 + $0x2c8] sm:$0x7]
  %v187 = vld [vmem:[%s0 + $0x2cc] sm:$0x7]
  %v188 = vld [vmem:[%s0 + $0x2d0] sm:$0x7]
  %v189 = vld [vmem:[%s0 + $0x2d4] sm:$0x7]
  %v190 = vld [vmem:[%s0 + $0x2d8] sm:$0x7]
  %v191 = vld [vmem:[%s0 + $0x2dc] sm:$0x7]
  %v192 = vld [vmem:[%s0 + $0x2e0] sm:$0x7]
  %v193 = vld [vmem:[%s0 + $0x2e4] sm:$0x7]
  %v194 = vld [vmem:[%s0 + $0x2e8] sm:$0x7]
  %v195 = vld [vmem:[%s0 + $0x2ec] sm:$0x7]
  %v196 = vld [vmem:[%s0 + $0x2f0] sm:$0x7]
  %v197 = vld [vmem:[%s0 + $0x2f4] sm:$0x7]
  %v198 = vld [vmem:[%s0 + $0x2f8] sm:$0x7]
  %v199 = vld [vmem:[%s0 + $0x2fc] sm:$0x7]
  %v200 = vld [vmem:[%s0 + $0x300] sm:$0x7]
  %v201 = vld [vmem:[%s0 + $0x304] sm:$0x7]
  %v202 = vld [vmem:[%s0 + $0x308] sm:$0x7]
  %v203 = vld [vmem:[%s0 + $0x30c] sm:$0x7]
  %v204 = vld [vmem:[%s0 + $0x310] sm:$0x7]
  %v205 = vld [vmem:[%s0 + $0x314] sm:$0x7]
  %v206 = vld [vmem:[%s0 + $0x318] sm:$0x7]
  %v207 = vld [vmem:[%s0 + $0x31c] sm:$0x7]
  %v208 = vmax.bf16 %v8, %v18
  %v209 = vmax.bf16 %v9, %v19
  %v210 = vmax.bf16 %v10, %v20
  %v211 = vmax.bf16 %v11, %v21
  %v212 = vmax.bf16 %v12, %v22
  %v213 = vmax.bf16 %v13, %v23
  %v214 = vmax.bf16 %v14, %v24
  %v215 = vmax.bf16 %v15, %v25
  %v216 = vmax.bf16 %v16, %v26
  %v217 = vmax.bf16 %v17, %v27
  %v218 = vmax.bf16 %v28, %v38
  %v219 = vmax.bf16 %v29, %v39
  %v220 = vmax.bf16 %v30, %v40
  %v221 = vmax.bf16 %v31, %v41
  %v222 = vmax.bf16 %v32, %v42
  %v223 = vmax.bf16 %v33, %v43
  %v224 = vmax.bf16 %v34, %v44
  %v225 = vmax.bf16 %v35, %v45
  %v226 = vmax.bf16 %v36, %v46
  %v227 = vmax.bf16 %v37, %v47
  %v228 = vmax.bf16 %v48, %v58
  %v229 = vmax.bf16 %v49, %v59
  %v230 = vmax.bf16 %v50, %v60
  %v231 = vmax.bf16 %v51, %v61
  %v232 = vmax.bf16 %v52, %v62
  %v233 = vmax.bf16 %v53, %v63
  %v234 = vmax.bf16 %v54, %v64
  %v235 = vmax.bf16 %v55, %v65
  %v236 = vmax.bf16 %v56, %v66
  %v237 = vmax.bf16 %v57, %v67
  %v238 = vmax.bf16 %v68, %v78
  %v239 = vmax.bf16 %v69, %v79
  %v240 = vmax.bf16 %v70, %v80
  %v241 = vmax.bf16 %v71, %v81
  %v242 = vmax.bf16 %v72, %v82
  %v243 = vmax.bf16 %v73, %v83
  %v244 = vmax.bf16 %v74, %v84
  %v245 = vmax.bf16 %v75, %v85
  %v246 = vmax.bf16 %v76, %v86
  %v247 = vmax.bf16 %v77, %v87
  %v248 = vmax.bf16 %v88, %v98
  %v249 = vmax.bf16 %v89, %v99
  %v250 = vmax.bf16 %v90, %v100
  %v251 = vmax.bf16 %v91, %v101
  %v252 = vmax.bf16 %v92, %v102
  %v253 = vmax.bf16 %v93, %v103
  %v254 = vmax.bf16 %v94, %v104
  %v255 = vmax.bf16 %v95, %v105
  %v256 = vmax.bf16 %v96, %v106
  %v257 = vmax.bf16 %v97, %v107
  %v258 = vmax.bf16 %v108, %v118
  %v259 = vmax.bf16 %v109, %v119
  %v260 = vmax.bf16 %v110, %v120
  %v261 = vmax.bf16 %v111, %v121
  %v262 = vmax.bf16 %v112, %v122
  %v263 = vmax.bf16 %v113, %v123
  %v264 = vmax.bf16 %v114, %v124
  %v265 = vmax.bf16 %v115, %v125
  %v266 = vmax.bf16 %v116, %v126
  %v267 = vmax.bf16 %v117, %v127
  %v268 = vmax.bf16 %v128, %v138
  %v269 = vmax.bf16 %v129, %v139
  %v270 = vmax.bf16 %v130, %v140
  %v271 = vmax.bf16 %v131, %v141
  %v272 = vmax.bf16 %v132, %v142
  %v273 = vmax.bf16 %v133, %v143
  %v274 = vmax.bf16 %v134, %v144
  %v275 = vmax.bf16 %v135, %v145
  %v276 = vmax.bf16 %v136, %v146
  %v277 = vmax.bf16 %v137, %v147
  %v278 = vmax.bf16 %v148, %v158
  %v279 = vmax.bf16 %v149, %v159
  %v280 = vmax.bf16 %v150, %v160
  %v281 = vmax.bf16 %v151, %v161
  %v282 = vmax.bf16 %v152, %v162
  %v283 = vmax.bf16 %v153, %v163
  %v284 = vmax.bf16 %v154, %v164
  %v285 = vmax.bf16 %v155, %v165
  %v286 = vmax.bf16 %v156, %v166
  %v287 = vmax.bf16 %v157, %v167
  %v288 = vmax.bf16 %v168, %v178
  %v289 = vmax.bf16 %v169, %v179
  %v290 = vmax.bf16 %v170, %v180
  %v291 = vmax.bf16 %v171, %v181
  %v292 = vmax.bf16 %v172, %v182
  %v293 = vmax.bf16 %v173, %v183
  %v294 = vmax.bf16 %v174, %v184
  %v295 = vmax.bf16 %v175, %v185
  %v296 = vmax.bf16 %v176, %v186
  %v297 = vmax.bf16 %v177, %v187
  %v298 = vmax.bf16 %v188, %v198
  %v299 = vmax.bf16 %v189, %v199
  %v300 = vmax.bf16 %v190, %v200
  %v301 = vmax.bf16 %v191, %v201
  %v302 = vmax.bf16 %v192, %v202
  %v303 = vmax.bf16 %v193, %v203
  %v304 = vmax.bf16 %v194, %v204
  %v305 = vmax.bf16 %v195, %v205
  %v306 = vmax.bf16 %v196, %v206
  %v307 = vmax.bf16 %v197, %v207
  %v308 = vmax.bf16 %v208, %v209
  %v309 = vmax.bf16 %v210, %v211
  %v310 = vmax.bf16 %v212, %v213
  %v311 = vmax.bf16 %v214, %v215
  %v312 = vmax.bf16 %v216, %v217
  %v313 = vmax.bf16 %v218, %v219
  %v314 = vmax.bf16 %v220, %v221
  %v315 = vmax.bf16 %v222, %v223
  %v316 = vmax.bf16 %v224, %v225
  %v317 = vmax.bf16 %v226, %v227
  %v318 = vmax.bf16 %v228, %v229
  %v319 = vmax.bf16 %v230, %v231
  %v320 = vmax.bf16 %v232, %v233
  %v321 = vmax.bf16 %v234, %v235
  %v322 = vmax.bf16 %v236, %v237
  %v323 = vmax.bf16 %v238, %v239
  %v324 = vmax.bf16 %v240, %v241
  %v325 = vmax.bf16 %v242, %v243
  %v326 = vmax.bf16 %v244, %v245
  %v327 = vmax.bf16 %v246, %v247
  %v328 = vmax.bf16 %v248, %v249
  %v329 = vmax.bf16 %v250, %v251
  %v330 = vmax.bf16 %v252, %v253
  %v331 = vmax.bf16 %v254, %v255
  %v332 = vmax.bf16 %v256, %v257
  %v333 = vmax.bf16 %v258, %v259
  %v334 = vmax.bf16 %v260, %v261
  %v335 = vmax.bf16 %v262, %v263
  %v336 = vmax.bf16 %v264, %v265
  %v337 = vmax.bf16 %v266, %v267
  %v338 = vmax.bf16 %v268, %v269
  %v339 = vmax.bf16 %v270, %v271
  %v340 = vmax.bf16 %v272, %v273
  %v341 = vmax.bf16 %v274, %v275
  %v342 = vmax.bf16 %v276, %v277
  %v343 = vmax.bf16 %v278, %v279
  %v344 = vmax.bf16 %v280, %v281
  %v345 = vmax.bf16 %v282, %v283
  %v346 = vmax.bf16 %v284, %v285
  %v347 = vmax.bf16 %v286, %v287
  %v348 = vmax.bf16 %v288, %v289
  %v349 = vmax.bf16 %v290, %v291
  %v350 = vmax.bf16 %v292, %v293
  %v351 = vmax.bf16 %v294, %v295
  %v352 = vmax.bf16 %v296, %v297
  %v353 = vmax.bf16 %v298, %v299
  %v354 = vmax.bf16 %v300, %v301
  %v355 = vmax.bf16 %v302, %v303
  %v356 = vmax.bf16 %v304, %v305
  %v357 = vmax.bf16 %v306, %v307
  %408 = vrot.lane.b32.xlu0 %v308, 64
  %v409 = vpop.permute.xlu0 %408
  %410 = vrot.lane.b32.xlu0 %v309, 64
  %v411 = vpop.permute.xlu0 %410
  %412 = vrot.lane.b32.xlu0 %v310, 64
  %v413 = vpop.permute.xlu0 %412
  %414 = vrot.lane.b32.xlu0 %v311, 64
  %v415 = vpop.permute.xlu0 %414
  %416 = vrot.lane.b32.xlu0 %v312, 64
  %v417 = vpop.permute.xlu0 %416
  %418 = vrot.lane.b32.xlu0 %v313, 64
  %v419 = vpop.permute.xlu0 %418
  %420 = vrot.lane.b32.xlu0 %v314, 64
  %v421 = vpop.permute.xlu0 %420
  %422 = vrot.lane.b32.xlu0 %v315, 64
  %v423 = vpop.permute.xlu0 %422
  %424 = vrot.lane.b32.xlu0 %v316, 64
  %v425 = vpop.permute.xlu0 %424
  %426 = vrot.lane.b32.xlu0 %v317, 64
  %v427 = vpop.permute.xlu0 %426
  %428 = vrot.lane.b32.xlu0 %v318, 64
  %v429 = vpop.permute.xlu0 %428
  %430 = vrot.lane.b32.xlu0 %v319, 64
  %v431 = vpop.permute.xlu0 %430
  %432 = vrot.lane.b32.xlu0 %v320, 64
  %v433 = vpop.permute.xlu0 %432
  %434 = vrot.lane.b32.xlu0 %v321, 64
  %v435 = vpop.permute.xlu0 %434
  %436 = vrot.lane.b32.xlu0 %v322, 64
  %v437 = vpop.permute.xlu0 %436
  %438 = vrot.lane.b32.xlu0 %v323, 64
  %v439 = vpop.permute.xlu0 %438
  %440 = vrot.lane.b32.xlu0 %v324, 64
  %v441 = vpop.permute.xlu0 %440
  %442 = vrot.lane.b32.xlu0 %v325, 64
  %v443 = vpop.permute.xlu0 %442
  %444 = vrot.lane.b32.xlu0 %v326, 64
  %v445 = vpop.permute.xlu0 %444
  %446 = vrot.lane.b32.xlu0 %v327, 64
  %v447 = vpop.permute.xlu0 %446
  %448 = vrot.lane.b32.xlu0 %v328, 64
  %v449 = vpop.permute.xlu0 %448
  %450 = vrot.lane.b32.xlu0 %v329, 64
  %v451 = vpop.permute.xlu0 %450
  %452 = vrot.lane.b32.xlu0 %v330, 64
  %v453 = vpop.permute.xlu0 %452
  %454 = vrot.lane.b32.xlu0 %v331, 64
  %v455 = vpop.permute.xlu0 %454
  %456 = vrot.lane.b32.xlu0 %v332, 64
  %v457 = vpop.permute.xlu0 %456
  %458 = vrot.lane.b32.xlu0 %v333, 64
  %v459 = vpop.permute.xlu0 %458
  %460 = vrot.lane.b32.xlu0 %v334, 64
  %v461 = vpop.permute.xlu0 %460
  %462 = vrot.lane.b32.xlu0 %v335, 64
  %v463 = vpop.permute.xlu0 %462
  %464 = vrot.lane.b32.xlu0 %v336, 64
  %v465 = vpop.permute.xlu0 %464
  %466 = vrot.lane.b32.xlu0 %v337, 64
  %v467 = vpop.permute.xlu0 %466
  %468 = vrot.lane.b32.xlu0 %v338, 64
  %v469 = vpop.permute.xlu0 %468
  %470 = vrot.lane.b32.xlu0 %v339, 64
  %v471 = vpop.permute.xlu0 %470
  %472 = vrot.lane.b32.xlu0 %v340, 64
  %v473 = vpop.permute.xlu0 %472
  %474 = vrot.lane.b32.xlu0 %v341, 64
  %v475 = vpop.permute.xlu0 %474
  %476 = vrot.lane.b32.xlu0 %v342, 64
  %v477 = vpop.permute.xlu0 %476
  %478 = vrot.lane.b32.xlu0 %v343, 64
  %v479 = vpop.permute.xlu0 %478
  %480 = vrot.lane.b32.xlu0 %v344, 64
  %v481 = vpop.permute.xlu0 %480
  %482 = vrot.lane.b32.xlu0 %v345, 64
  %v483 = vpop.permute.xlu0 %482
  %484 = vrot.lane.b32.xlu0 %v346, 64
  %v485 = vpop.permute.xlu0 %484
  %486 = vrot.lane.b32.xlu0 %v347, 64
  %v487 = vpop.permute.xlu0 %486
  %488 = vrot.lane.b32.xlu0 %v348, 64
  %v489 = vpop.permute.xlu0 %488
  %490 = vrot.lane.b32.xlu0 %v349, 64
  %v491 = vpop.permute.xlu0 %490
  %492 = vrot.lane.b32.xlu0 %v350, 64
  %v493 = vpop.permute.xlu0 %492
  %494 = vrot.lane.b32.xlu0 %v351, 64
  %v495 = vpop.permute.xlu0 %494
  %496 = vrot.lane.b32.xlu0 %v352, 64
  %v497 = vpop.permute.xlu0 %496
  %498 = vrot.lane.b32.xlu0 %v353, 64
  %v499 = vpop.permute.xlu0 %498
  %500 = vrot.lane.b32.xlu0 %v354, 64
  %v501 = vpop.permute.xlu0 %500
  %502 = vrot.lane.b32.xlu0 %v355, 64
  %v503 = vpop.permute.xlu0 %502
  %504 = vrot.lane.b32.xlu0 %v356, 64
  %v505 = vpop.permute.xlu0 %504
  %506 = vrot.lane.b32.xlu0 %v357, 64
  %v507 = vpop.permute.xlu0 %506
  %v558 = vmax.bf16 %v308, %v409
  %v559 = vmax.bf16 %v309, %v411
  %v560 = vmax.bf16 %v310, %v413
  %v561 = vmax.bf16 %v311, %v415
  %v562 = vmax.bf16 %v312, %v417
  %v563 = vmax.bf16 %v313, %v419
  %v564 = vmax.bf16 %v314, %v421
  %v565 = vmax.bf16 %v315, %v423
  %v566 = vmax.bf16 %v316, %v425
  %v567 = vmax.bf16 %v317, %v427
  %v568 = vmax.bf16 %v318, %v429
  %v569 = vmax.bf16 %v319, %v431
  %v570 = vmax.bf16 %v320, %v433
  %v571 = vmax.bf16 %v321, %v435
  %v572 = vmax.bf16 %v322, %v437
  %v573 = vmax.bf16 %v323, %v439
  %v574 = vmax.bf16 %v324, %v441
  %v575 = vmax.bf16 %v325, %v443
  %v576 = vmax.bf16 %v326, %v445
  %v577 = vmax.bf16 %v327, %v447
  %v578 = vmax.bf16 %v328, %v449
  %v579 = vmax.bf16 %v329, %v451
  %v580 = vmax.bf16 %v330, %v453
  %v581 = vmax.bf16 %v331, %v455
  %v582 = vmax.bf16 %v332, %v457
  %v583 = vmax.bf16 %v333, %v459
  %v584 = vmax.bf16 %v334, %v461
  %v585 = vmax.bf16 %v335, %v463
  %v586 = vmax.bf16 %v336, %v465
  %v587 = vmax.bf16 %v337, %v467
  %v588 = vmax.bf16 %v338, %v469
  %v589 = vmax.bf16 %v339, %v471
  %v590 = vmax.bf16 %v340, %v473
  %v591 = vmax.bf16 %v341, %v475
  %v592 = vmax.bf16 %v342, %v477
  %v593 = vmax.bf16 %v343, %v479
  %v594 = vmax.bf16 %v344, %v481
  %v595 = vmax.bf16 %v345, %v483
  %v596 = vmax.bf16 %v346, %v485
  %v597 = vmax.bf16 %v347, %v487
  %v598 = vmax.bf16 %v348, %v489
  %v599 = vmax.bf16 %v349, %v491
  %v600 = vmax.bf16 %v350, %v493
  %v601 = vmax.bf16 %v351, %v495
  %v602 = vmax.bf16 %v352, %v497
  %v603 = vmax.bf16 %v353, %v499
  %v604 = vmax.bf16 %v354, %v501
  %v605 = vmax.bf16 %v355, %v503
  %v606 = vmax.bf16 %v356, %v505
  %v607 = vmax.bf16 %v357, %v507
  %vm608 = vcmask 518144
  %vm609 = vsmask.f32 2304
  %vm610 = vmand %vm608, %vm609
  %v611 = vld [vmem:[%s1] sm:$0x7]
  %v612 = vsel %vm610, %v558, %v611
  %613 = vst [vmem:[%s1] sm:$0x7] %v612
  %v614 = vld [vmem:[%s1 + $0x4] sm:$0x7]
  %v615 = vsel %vm610, %v559, %v614
  %616 = vst [vmem:[%s1 + $0x4] sm:$0x7] %v615
  %v617 = vld [vmem:[%s1 + $0x8] sm:$0x7]
  %v618 = vsel %vm610, %v560, %v617
  %619 = vst [vmem:[%s1 + $0x8] sm:$0x7] %v618
  %v620 = vld [vmem:[%s1 + $0xc] sm:$0x7]
  %v621 = vsel %vm610, %v561, %v620
  %622 = vst [vmem:[%s1 + $0xc] sm:$0x7] %v621
  %v623 = vld [vmem:[%s1 + $0x10] sm:$0x7]
  %v624 = vsel %vm610, %v562, %v623
  %625 = vst [vmem:[%s1 + $0x10] sm:$0x7] %v624
  %v626 = vld [vmem:[%s1 + $0x14] sm:$0x7]
  %v627 = vsel %vm610, %v563, %v626
  %628 = vst [vmem:[%s1 + $0x14] sm:$0x7] %v627
  %v629 = vld [vmem:[%s1 + $0x18] sm:$0x7]
  %v630 = vsel %vm610, %v564, %v629
  %631 = vst [vmem:[%s1 + $0x18] sm:$0x7] %v630
  %v632 = vld [vmem:[%s1 + $0x1c] sm:$0x7]
  %v633 = vsel %vm610, %v565, %v632
  %634 = vst [vmem:[%s1 + $0x1c] sm:$0x7] %v633
  %v635 = vld [vmem:[%s1 + $0x20] sm:$0x7]
  %v636 = vsel %vm610, %v566, %v635
  %637 = vst [vmem:[%s1 + $0x20] sm:$0x7] %v636
  %v638 = vld [vmem:[%s1 + $0x24] sm:$0x7]
  %v639 = vsel %vm610, %v567, %v638
  %640 = vst [vmem:[%s1 + $0x24] sm:$0x7] %v639
  %v641 = vld [vmem:[%s1 + $0x28] sm:$0x7]
  %v642 = vsel %vm610, %v568, %v641
  %643 = vst [vmem:[%s1 + $0x28] sm:$0x7] %v642
  %v644 = vld [vmem:[%s1 + $0x2c] sm:$0x7]
  %v645 = vsel %vm610, %v569, %v644
  %646 = vst [vmem:[%s1 + $0x2c] sm:$0x7] %v645
  %v647 = vld [vmem:[%s1 + $0x30] sm:$0x7]
  %v648 = vsel %vm610, %v570, %v647
  %649 = vst [vmem:[%s1 + $0x30] sm:$0x7] %v648
  %v650 = vld [vmem:[%s1 + $0x34] sm:$0x7]
  %v651 = vsel %vm610, %v571, %v650
  %652 = vst [vmem:[%s1 + $0x34] sm:$0x7] %v651
  %v653 = vld [vmem:[%s1 + $0x38] sm:$0x7]
  %v654 = vsel %vm610, %v572, %v653
  %655 = vst [vmem:[%s1 + $0x38] sm:$0x7] %v654
  %v656 = vld [vmem:[%s1 + $0x3c] sm:$0x7]
  %v657 = vsel %vm610, %v573, %v656
  %658 = vst [vmem:[%s1 + $0x3c] sm:$0x7] %v657
  %v659 = vld [vmem:[%s1 + $0x40] sm:$0x7]
  %v660 = vsel %vm610, %v574, %v659
  %661 = vst [vmem:[%s1 + $0x40] sm:$0x7] %v660
  %v662 = vld [vmem:[%s1 + $0x44] sm:$0x7]
  %v663 = vsel %vm610, %v575, %v662
  %664 = vst [vmem:[%s1 + $0x44] sm:$0x7] %v663
  %v665 = vld [vmem:[%s1 + $0x48] sm:$0x7]
  %v666 = vsel %vm610, %v576, %v665
  %667 = vst [vmem:[%s1 + $0x48] sm:$0x7] %v666
  %v668 = vld [vmem:[%s1 + $0x4c] sm:$0x7]
  %v669 = vsel %vm610, %v577, %v668
  %670 = vst [vmem:[%s1 + $0x4c] sm:$0x7] %v669
  %v671 = vld [vmem:[%s1 + $0x50] sm:$0x7]
  %v672 = vsel %vm610, %v578, %v671
  %673 = vst [vmem:[%s1 + $0x50] sm:$0x7] %v672
  %v674 = vld [vmem:[%s1 + $0x54] sm:$0x7]
  %v675 = vsel %vm610, %v579, %v674
  %676 = vst [vmem:[%s1 + $0x54] sm:$0x7] %v675
  %v677 = vld [vmem:[%s1 + $0x58] sm:$0x7]
  %v678 = vsel %vm610, %v580, %v677
  %679 = vst [vmem:[%s1 + $0x58] sm:$0x7] %v678
  %v680 = vld [vmem:[%s1 + $0x5c] sm:$0x7]
  %v681 = vsel %vm610, %v581, %v680
  %682 = vst [vmem:[%s1 + $0x5c] sm:$0x7] %v681
  %v683 = vld [vmem:[%s1 + $0x60] sm:$0x7]
  %v684 = vsel %vm610, %v582, %v683
  %685 = vst [vmem:[%s1 + $0x60] sm:$0x7] %v684
  %v686 = vld [vmem:[%s1 + $0x64] sm:$0x7]
  %v687 = vsel %vm610, %v583, %v686
  %688 = vst [vmem:[%s1 + $0x64] sm:$0x7] %v687
  %v689 = vld [vmem:[%s1 + $0x68] sm:$0x7]
  %v690 = vsel %vm610, %v584, %v689
  %691 = vst [vmem:[%s1 + $0x68] sm:$0x7] %v690
  %v692 = vld [vmem:[%s1 + $0x6c] sm:$0x7]
  %v693 = vsel %vm610, %v585, %v692
  %694 = vst [vmem:[%s1 + $0x6c] sm:$0x7] %v693
  %v695 = vld [vmem:[%s1 + $0x70] sm:$0x7]
  %v696 = vsel %vm610, %v586, %v695
  %697 = vst [vmem:[%s1 + $0x70] sm:$0x7] %v696
  %v698 = vld [vmem:[%s1 + $0x74] sm:$0x7]
  %v699 = vsel %vm610, %v587, %v698
  %700 = vst [vmem:[%s1 + $0x74] sm:$0x7] %v699
  %v701 = vld [vmem:[%s1 + $0x78] sm:$0x7]
  %v702 = vsel %vm610, %v588, %v701
  %703 = vst [vmem:[%s1 + $0x78] sm:$0x7] %v702
  %v704 = vld [vmem:[%s1 + $0x7c] sm:$0x7]
  %v705 = vsel %vm610, %v589, %v704
  %706 = vst [vmem:[%s1 + $0x7c] sm:$0x7] %v705
  %v707 = vld [vmem:[%s1 + $0x80] sm:$0x7]
  %v708 = vsel %vm610, %v590, %v707
  %709 = vst [vmem:[%s1 + $0x80] sm:$0x7] %v708
  %v710 = vld [vmem:[%s1 + $0x84] sm:$0x7]
  %v711 = vsel %vm610, %v591, %v710
  %712 = vst [vmem:[%s1 + $0x84] sm:$0x7] %v711
  %v713 = vld [vmem:[%s1 + $0x88] sm:$0x7]
  %v714 = vsel %vm610, %v592, %v713
  %715 = vst [vmem:[%s1 + $0x88] sm:$0x7] %v714
  %v716 = vld [vmem:[%s1 + $0x8c] sm:$0x7]
  %v717 = vsel %vm610, %v593, %v716
  %718 = vst [vmem:[%s1 + $0x8c] sm:$0x7] %v717
  %v719 = vld [vmem:[%s1 + $0x90] sm:$0x7]
  %v720 = vsel %vm610, %v594, %v719
  %721 = vst [vmem:[%s1 + $0x90] sm:$0x7] %v720
  %v722 = vld [vmem:[%s1 + $0x94] sm:$0x7]
  %v723 = vsel %vm610, %v595, %v722
  %724 = vst [vmem:[%s1 + $0x94] sm:$0x7] %v723
  %v725 = vld [vmem:[%s1 + $0x98] sm:$0x7]
  %v726 = vsel %vm610, %v596, %v725
  %727 = vst [vmem:[%s1 + $0x98] sm:$0x7] %v726
  %v728 = vld [vmem:[%s1 + $0x9c] sm:$0x7]
  %v729 = vsel %vm610, %v597, %v728
  %730 = vst [vmem:[%s1 + $0x9c] sm:$0x7] %v729
  %v731 = vld [vmem:[%s1 + $0xa0] sm:$0x7]
  %v732 = vsel %vm610, %v598, %v731
  %733 = vst [vmem:[%s1 + $0xa0] sm:$0x7] %v732
  %v734 = vld [vmem:[%s1 + $0xa4] sm:$0x7]
  %v735 = vsel %vm610, %v599, %v734
  %736 = vst [vmem:[%s1 + $0xa4] sm:$0x7] %v735
  %v737 = vld [vmem:[%s1 + $0xa8] sm:$0x7]
  %v738 = vsel %vm610, %v600, %v737
  %739 = vst [vmem:[%s1 + $0xa8] sm:$0x7] %v738
  %v740 = vld [vmem:[%s1 + $0xac] sm:$0x7]
  %v741 = vsel %vm610, %v601, %v740
  %742 = vst [vmem:[%s1 + $0xac] sm:$0x7] %v741
  %v743 = vld [vmem:[%s1 + $0xb0] sm:$0x7]
  %v744 = vsel %vm610, %v602, %v743
  %745 = vst [vmem:[%s1 + $0xb0] sm:$0x7] %v744
  %v746 = vld [vmem:[%s1 + $0xb4] sm:$0x7]
  %v747 = vsel %vm610, %v603, %v746
  %748 = vst [vmem:[%s1 + $0xb4] sm:$0x7] %v747
  %v749 = vld [vmem:[%s1 + $0xb8] sm:$0x7]
  %v750 = vsel %vm610, %v604, %v749
  %751 = vst [vmem:[%s1 + $0xb8] sm:$0x7] %v750
  %v752 = vld [vmem:[%s1 + $0xbc] sm:$0x7]
  %v753 = vsel %vm610, %v605, %v752
  %754 = vst [vmem:[%s1 + $0xbc] sm:$0x7] %v753
  %v755 = vld [vmem:[%s1 + $0xc0] sm:$0x7]
  %v756 = vsel %vm610, %v606, %v755
  %757 = vst [vmem:[%s1 + $0xc0] sm:$0x7] %v756
  %v758 = vld [vmem:[%s1 + $0xc4] sm:$0x7]
  %v759 = vsel %vm610, %v607, %v758
  %760 = vst [vmem:[%s1 + $0xc4] sm:$0x7] %v759
  // Predicated region
  $region6: #{_lambda_.10} parent=0 // pred_check
    _
  $region7: #{_lambda_.10} parent=0 // pred_check_branch
    %762 = sbr.rel (0) target = $region9
  $region8: #{_lambda_.10} parent=0 // pred_region
    _
  $region9: #{_lambda_.10} parent=0 // pred_fallthru
    _
  // Predicated region
  $region10: #{_lambda_.10} parent=0 // pred_check
    _
  $region11: #{_lambda_.10} parent=0 // pred_check_branch
    %764 = sbr.rel (0) target = $region13
  $region12: #{_lambda_.10} parent=0 // pred_region
    _
  $region13: #{_lambda_.10} parent=0 // pred_fallthru
    _

// kernel: _lambda_.11
$region0: #{_lambda_.11}
  #allocation0 [shape = 'u32[]', space=smem, size = 0x4, offset = 0x4, fixed_abs, tag = 'smem constant byte address 0x4 - core index']
  #allocation1 [shape = 'u32[144,128]{1,0:T(1,128)}', space=vmem, size = 0x12000, scoped, tag = 'internal scratch']
  #allocation2 [shape = 'f32[256,128]{1,0:T(8,128)}', space=vmem, size = 0x20000, scoped, tag = 'scratch operand']
  %s0 = inlined_call_operand.vmem [shape: bf16[256,1792], index: 0, kind: input, shape index: {}]
  %s1 = inlined_call_operand.vmem [shape: bf16[1792,128], index: 1, kind: input, shape index: {}]
  %s2 = inlined_call_operand.vmem [shape: f32[1,128], index: 2, kind: input, shape index: {}]
  %s3 = inlined_call_operand.vmem [shape: bf16[256,128], index: 3, kind: output, shape index: {}]
  %s4 = sld [smem:[#allocation0]]
  $region91: #{_lambda_.11} parent=0
    _
  %s6 = ssub.s32 1, %s4
  %s7 = scalar_select 0, %s6, %s4
  $region1: #{_lambda_.11} parent=0
    #allocation3 [shape = 'u8[262144]{0}', space=vmem, size = 0x40000, scoped, tag = 'input window, operand 0']
    loop: start=0, step=1, limit=9
    $region2: #{_lambda_.11} parent=1 // loop_pre_header
      _
    $region3: #{_lambda_.11} parent=1 // loop_header
      %s9 = sphi 0, %s13
      %p10 = scmp.ge.s32.totalorder %s9, 9
      %s16 = sphi 0, %s35
      %s17 = sphi 0, %s31
      %s18 = sphi 0, %s27
      %s19 = sphi 0, %s16
      %s20 = sphi 0, %s17
      %s21 = sphi 0, %s18
      %s22 = sphi 0, %s19
      %s23 = sphi 0, %s20
      %s24 = sphi 0, %s21
      %s40 = sphi 0, %s42
      %s43 = sphi 0, %s40
      %s44 = sphi 0, %s43
      %s60 = sphi 0, %s44
      %s68 = sphi 0, %s70
      %s71 = sphi 0, %s68
      %s72 = sphi 0, %s71
      %s88 = sphi 0, %s72
      %s94 = sphi 0, %s96
      %s97 = sphi 0, %s94
      %s98 = sphi 0, %s97
      %s114 = sphi 0, %s98
      %s122 = sphi 0, %s124
      %s125 = sphi 0, %s122
      %s126 = sphi 0, %s125
      %s142 = sphi 0, %s126
    $region4: #{_lambda_.11} parent=1 // loop_header_branch
      %12 = sbr.rel (%p10) target = $region8
    $region5: #{_lambda_.11} parent=1 // loop_body
      %s14 = ssub.s32 %s9, 1
      %s15 = ssub.s32 %s9, 2
      %s25 = sadd.s32 1, %s18
      %p26 = scmp.ge.s32.totalorder %s25, 7
      %s27 = scalar_select %p26, 0, %s25
      %s28 = sadd.s32 1, %s17
      %s29 = scalar_select %p26, %s28, %s17
      %p30 = scmp.ge.s32.totalorder %s29, 1
      %s31 = scalar_select %p30, 0, %s29
      %s32 = sadd.s32 1, %s16
      %s33 = scalar_select %p30, %s32, %s16
      %p34 = scmp.ge.s32.totalorder %s33, 1
      %s35 = scalar_select %p34, 0, %s33
      %s36 = ssub.s32 %s16, %s35
      %s37 = ssub.s32 %s18, %s27
      %s38 = sor.u32 %s36, %s37
      %p39 = scmp.eq.s32.totalorder %s38, 0
      %s41 = sadd.s32 %s40, 1
      %s42 = scalar_select %p39, %s40, %s41
      %p45 = pneg %p39
      %p46 = scmp.eq.s32.totalorder %s9, 6
      %p47 = por %p45, %p46
      %p48 = scmp.ne.s32.totalorder %s40, %s43
      %p49 = scmp.eq.s32.totalorder %s9, 0
      %p50 = por %p48, %p49
      %p51 = scmp.ne.s32.totalorder %s40, %s43
      %p52 = scmp.eq.s32.totalorder %s14, 6
      %p53 = por %p51, %p52
      %p54 = scmp.ne.s32.totalorder %s43, %s44
      %p55 = scmp.eq.s32.totalorder %s14, 0
      %p56 = por %p54, %p55
      %p57 = scmp.ne.s32.totalorder %s43, %s44
      %p58 = scmp.eq.s32.totalorder %s15, 6
      %p59 = por %p57, %p58
      %p61 = scmp.ne.s32.totalorder %s44, %s60
      %p62 = scmp.eq.s32.totalorder %s15, 0
      %p63 = por %p61, %p62
      %s64 = ssub.s32 %s18, %s27
      %s65 = ssub.s32 %s17, %s31
      %s66 = sor.u32 %s64, %s65
      %p67 = scmp.eq.s32.totalorder %s66, 0
      %s69 = sadd.s32 %s68, 1
      %s70 = scalar_select %p67, %s68, %s69
      %p73 = pneg %p67
      %p74 = scmp.eq.s32.totalorder %s9, 6
      %p75 = por %p73, %p74
      %p76 = scmp.ne.s32.totalorder %s68, %s71
      %p77 = scmp.eq.s32.totalorder %s9, 0
      %p78 = por %p76, %p77
      %p79 = scmp.ne.s32.totalorder %s68, %s71
      %p80 = scmp.eq.s32.totalorder %s14, 6
      %p81 = por %p79, %p80
      %p82 = scmp.ne.s32.totalorder %s71, %s72
      %p83 = scmp.eq.s32.totalorder %s14, 0
      %p84 = por %p82, %p83
      %p85 = scmp.ne.s32.totalorder %s71, %s72
      %p86 = scmp.eq.s32.totalorder %s15, 6
      %p87 = por %p85, %p86
      %p89 = scmp.ne.s32.totalorder %s72, %s88
      %p90 = scmp.eq.s32.totalorder %s15, 0
      %p91 = por %p89, %p90
      %s92 = ssub.s32 %s17, %s31
      %p93 = scmp.eq.s32.totalorder %s92, 0
      %s95 = sadd.s32 %s94, 1
      %s96 = scalar_select %p93, %s94, %s95
      %p99 = pneg %p93
      %p100 = scmp.eq.s32.totalorder %s9, 6
      %p101 = por %p99, %p100
      %p102 = scmp.ne.s32.totalorder %s94, %s97
      %p103 = scmp.eq.s32.totalorder %s9, 0
      %p104 = por %p102, %p103
      %p105 = scmp.ne.s32.totalorder %s94, %s97
      %p106 = scmp.eq.s32.totalorder %s14, 6
      %p107 = por %p105, %p106
      %p108 = scmp.ne.s32.totalorder %s97, %s98
      %p109 = scmp.eq.s32.totalorder %s14, 0
      %p110 = por %p108, %p109
      %p111 = scmp.ne.s32.totalorder %s97, %s98
      %p112 = scmp.eq.s32.totalorder %s15, 6
      %p113 = por %p111, %p112
      %p115 = scmp.ne.s32.totalorder %s98, %s114
      %p116 = scmp.eq.s32.totalorder %s15, 0
      %p117 = por %p115, %p116
      %s118 = ssub.s32 %s16, %s35
      %s119 = ssub.s32 %s17, %s31
      %s120 = sor.u32 %s118, %s119
      %p121 = scmp.eq.s32.totalorder %s120, 0
      %s123 = sadd.s32 %s122, 1
      %s124 = scalar_select %p121, %s122, %s123
      %p127 = pneg %p121
      %p128 = scmp.eq.s32.totalorder %s9, 6
      %p129 = por %p127, %p128
      %p130 = scmp.ne.s32.totalorder %s122, %s125
      %p131 = scmp.eq.s32.totalorder %s9, 0
      %p132 = por %p130, %p131
      %p133 = scmp.ne.s32.totalorder %s122, %s125
      %p134 = scmp.eq.s32.totalorder %s14, 6
      %p135 = por %p133, %p134
      %p136 = scmp.ne.s32.totalorder %s125, %s126
      %p137 = scmp.eq.s32.totalorder %s14, 0
      %p138 = por %p136, %p137
      %p139 = scmp.ne.s32.totalorder %s125, %s126
      %p140 = scmp.eq.s32.totalorder %s15, 6
      %p141 = por %p139, %p140
      %p143 = scmp.ne.s32.totalorder %s126, %s142
      %p144 = scmp.eq.s32.totalorder %s15, 0
      %p145 = por %p143, %p144
      %p146 = scmp.le.s32.totalorder 1, %s9
      %p147 = scmp.lt.s32.totalorder %s9, 8
      %p148 = pnand %p146, %p147
      %p149 = pneg %p148
      // Predicated region
      $region9: #{_lambda_.11} parent=5 // pred_check
        _
      $region10: #{_lambda_.11} parent=5 // pred_check_branch
        %151 = sbr.rel (%p148) target = $region12
      $region11: #{_lambda_.11} parent=5 // pred_region
        %s152 = ssub.s32 %s9, 1
        // Predicated region
        $region13: #{_lambda_.11} parent=11 // pred_check
          %p153 = pneg %p110
        $region14: #{_lambda_.11} parent=11 // pred_check_branch
          %155 = sbr.rel (%p153) target = $region16
        $region15: #{_lambda_.11} parent=11 // pred_region
          %p156 = scmp.lt.s32.totalorder %s20, 0
          %s157 = scalar_select %p156, %s20, 0
          %s158 = scalar_lea.vmem %s2, %s157
        $region16: #{_lambda_.11} parent=11 // pred_fallthru
          _
      $region12: #{_lambda_.11} parent=5 // pred_fallthru
        _
      %p159 = scmp.lt.s32.totalorder %s9, 7
      // Predicated region
      $region17: #{_lambda_.11} parent=5 // pred_check
        %p160 = pneg %p159
      $region18: #{_lambda_.11} parent=5 // pred_check_branch
        %162 = sbr.rel (%p160) target = $region20
      $region19: #{_lambda_.11} parent=5 // pred_region
        // Predicated region
        $region21: #{_lambda_.11} parent=19 // pred_check
          %p163 = pneg %p50
        $region22: #{_lambda_.11} parent=19 // pred_check_branch
          %165 = sbr.rel (%p163) target = $region24
        $region23: #{_lambda_.11} parent=19 // pred_region
          %s166 = sand.u32 %s40, 1
          %s167 = sand.u32 %s40, 1
          %s168 = smul.addr %s167, 256
          %s169 = scalar_lea.vmem [#allocation3], %s168
          %s170 = smul.u32 32, %s16
          %s171 = smul.u32 2, %s18
          %s172 = smul.addr %s170, 14
          %s173 = sadd.s32 %s171, %s172
          %s174 = smul.addr %s173, 4
          %s175 = scalar_lea.vmem %s0, %s174
          // Predicated region
          $region25: #{_lambda_.11} parent=23 // pred_check
            _
          $region26: #{_lambda_.11} parent=23 // pred_check_branch
            %177 = sbr.rel (0) target = $region28
          $region27: #{_lambda_.11} parent=23 // pred_region
            // Predicated region
            $region29: #{_lambda_.11} parent=27 // pred_check
              _
            $region30: #{_lambda_.11} parent=27 // pred_check_branch
              %179 = sbr.rel (0) target = $region32
            $region31: #{_lambda_.11} parent=27 // pred_region
              // Predicated region
              $region44: #{_lambda_.11} parent=31 // pred_check
                _
              $region45: #{_lambda_.11} parent=31 // pred_check_branch
                %257 = sbr.rel (0) target = $region47
              $region46: #{_lambda_.11} parent=31 // pred_region
                loop: start=0, step=1, limit=1
                $region48: #{_lambda_.11} parent=46 // loop_pre_header
                  _
                $region49: #{_lambda_.11} parent=46 // loop_header
                  %s259 = sphi 0, %s263
                  %p260 = scmp.ge.s32.totalorder %s259, 1
                  %s264 = sphi %s175, %s175
                  %s265 = sphi %s169, %s169
                $region50: #{_lambda_.11} parent=46 // loop_header_branch
                  %262 = sbr.rel (%p260) target = $region54
                $region51: #{_lambda_.11} parent=46 // loop_body
                  %v266 = vld [vmem:[%s264] sm:$0xff]
                  %267 = vst [vmem:[%s265] sm:$0xff] %v266
                  %v268 = vld [vmem:[%s264 + $0x38] sm:$0xff]
                  %269 = vst [vmem:[%s265 + $0x8] sm:$0xff] %v268
                  %v270 = vld [vmem:[%s264 + $0x70] sm:$0xff]
                  %271 = vst [vmem:[%s265 + $0x10] sm:$0xff] %v270
                  %v272 = vld [vmem:[%s264 + $0xa8] sm:$0xff]
                  %273 = vst [vmem:[%s265 + $0x18] sm:$0xff] %v272
                  %v274 = vld [vmem:[%s264 + $0xe0] sm:$0xff]
                  %275 = vst [vmem:[%s265 + $0x20] sm:$0xff] %v274
                  %v276 = vld [vmem:[%s264 + $0x118] sm:$0xff]
                  %277 = vst [vmem:[%s265 + $0x28] sm:$0xff] %v276
                  %v278 = vld [vmem:[%s264 + $0x150] sm:$0xff]
                  %279 = vst [vmem:[%s265 + $0x30] sm:$0xff] %v278
                  %v280 = vld [vmem:[%s264 + $0x188] sm:$0xff]
                  %281 = vst [vmem:[%s265 + $0x38] sm:$0xff] %v280
                  %v282 = vld [vmem:[%s264 + $0x1c0] sm:$0xff]
                  %283 = vst [vmem:[%s265 + $0x40] sm:$0xff] %v282
                  %v284 = vld [vmem:[%s264 + $0x1f8] sm:$0xff]
                  %285 = vst [vmem:[%s265 + $0x48] sm:$0xff] %v284
                  %v286 = vld [vmem:[%s264 + $0x230] sm:$0xff]
                  %287 = vst [vmem:[%s265 + $0x50] sm:$0xff] %v286
                  %v288 = vld [vmem:[%s264 + $0x268] sm:$0xff]
                  %289 = vst [vmem:[%s265 + $0x58] sm:$0xff] %v288
                  %v290 = vld [vmem:[%s264 + $0x2a0] sm:$0xff]
                  %291 = vst [vmem:[%s265 + $0x60] sm:$0xff] %v290
                  %v292 = vld [vmem:[%s264 + $0x2d8] sm:$0xff]
                  %293 = vst [vmem:[%s265 + $0x68] sm:$0xff] %v292
                  %v294 = vld [vmem:[%s264 + $0x310] sm:$0xff]
                  %295 = vst [vmem:[%s265 + $0x70] sm:$0xff] %v294
                  %v296 = vld [vmem:[%s264 + $0x348] sm:$0xff]
                  %297 = vst [vmem:[%s265 + $0x78] sm:$0xff] %v296
                  %v298 = vld [vmem:[%s264 + $0x380] sm:$0xff]
                  %299 = vst [vmem:[%s265 + $0x80] sm:$0xff] %v298
                  %v300 = vld [vmem:[%s264 + $0x3b8] sm:$0xff]
                  %301 = vst [vmem:[%s265 + $0x88] sm:$0xff] %v300
                  %v302 = vld [vmem:[%s264 + $0x3f0] sm:$0xff]
                  %303 = vst [vmem:[%s265 + $0x90] sm:$0xff] %v302
                  %v304 = vld [vmem:[%s264 + $0x428] sm:$0xff]
                  %305 = vst [vmem:[%s265 + $0x98] sm:$0xff] %v304
                  %v306 = vld [vmem:[%s264 + $0x460] sm:$0xff]
                  %307 = vst [vmem:[%s265 + $0xa0] sm:$0xff] %v306
                  %v308 = vld [vmem:[%s264 + $0x498] sm:$0xff]
                  %309 = vst [vmem:[%s265 + $0xa8] sm:$0xff] %v308
                  %v310 = vld [vmem:[%s264 + $0x4d0] sm:$0xff]
                  %311 = vst [vmem:[%s265 + $0xb0] sm:$0xff] %v310
                  %v312 = vld [vmem:[%s264 + $0x508] sm:$0xff]
                  %313 = vst [vmem:[%s265 + $0xb8] sm:$0xff] %v312
                  %v314 = vld [vmem:[%s264 + $0x540] sm:$0xff]
                  %315 = vst [vmem:[%s265 + $0xc0] sm:$0xff] %v314
                  %v316 = vld [vmem:[%s264 + $0x578] sm:$0xff]
                  %317 = vst [vmem:[%s265 + $0xc8] sm:$0xff] %v316
                  %v318 = vld [vmem:[%s264 + $0x5b0] sm:$0xff]
                  %319 = vst [vmem:[%s265 + $0xd0] sm:$0xff] %v318
                  %v320 = vld [vmem:[%s264 + $0x5e8] sm:$0xff]
                  %321 = vst [vmem:[%s265 + $0xd8] sm:$0xff] %v320
                  %v322 = vld [vmem:[%s264 + $0x620] sm:$0xff]
                  %323 = vst [vmem:[%s265 + $0xe0] sm:$0xff] %v322
                  %v324 = vld [vmem:[%s264 + $0x658] sm:$0xff]
                  %325 = vst [vmem:[%s265 + $0xe8] sm:$0xff] %v324
                  %v326 = vld [vmem:[%s264 + $0x690] sm:$0xff]
                  %327 = vst [vmem:[%s265 + $0xf0] sm:$0xff] %v326
                  %v328 = vld [vmem:[%s264 + $0x6c8] sm:$0xff]
                  %329 = vst [vmem:[%s265 + $0xf8] sm:$0xff] %v328
                $region52: #{_lambda_.11} parent=46 // loop_footer
                  %s263 = sadd.s32 1, %s259
                $region53: #{_lambda_.11} parent=46 // loop_footer_branch
                  %258 = sbr.rel target = $region49
                $region54: #{_lambda_.11} parent=46 // loop_exit
                  _
              $region47: #{_lambda_.11} parent=31 // pred_fallthru
                _
              // Predicated region
              $region55: #{_lambda_.11} parent=31 // pred_check
                _
              $region56: #{_lambda_.11} parent=31 // pred_check_branch
                %331 = sbr.rel target = $region58
              $region57: #{_lambda_.11} parent=31 // pred_region
                _
              $region58: #{_lambda_.11} parent=31 // pred_fallthru
                _
            $region32: #{_lambda_.11} parent=27 // pred_fallthru
              _
            // Predicated region
            $region33: #{_lambda_.11} parent=27 // pred_check
              _
            $region34: #{_lambda_.11} parent=27 // pred_check_branch
              %181 = sbr.rel target = $region36
            $region35: #{_lambda_.11} parent=27 // pred_region
              %s183 = ssub.s32 256, 1
              loop: start=0, step=1, limit=1
              $region37: #{_lambda_.11} parent=35 // loop_pre_header
                _
              $region38: #{_lambda_.11} parent=35 // loop_header
                %s185 = sphi 0, %s189
                %p186 = scmp.ge.s32.totalorder %s185, 1
                %s190 = sphi %s175, %s175
                %s191 = sphi %s169, %s169
              $region39: #{_lambda_.11} parent=35 // loop_header_branch
                %188 = sbr.rel (%p186) target = $region43
              $region40: #{_lambda_.11} parent=35 // loop_body
                %v192 = vld [vmem:[%s190] sm:%s183]
                %193 = vst [vmem:[%s191] sm:%s183] %v192
                %v194 = vld [vmem:[%s190 + $0x38] sm:%s183]
                %195 = vst [vmem:[%s191 + $0x8] sm:%s183] %v194
                %v196 = vld [vmem:[%s190 + $0x70] sm:%s183]
                %197 = vst [vmem:[%s191 + $0x10] sm:%s183] %v196
                %v198 = vld [vmem:[%s190 + $0xa8] sm:%s183]
                %199 = vst [vmem:[%s191 + $0x18] sm:%s183] %v198
                %v200 = vld [vmem:[%s190 + $0xe0] sm:%s183]
                %201 = vst [vmem:[%s191 + $0x20] sm:%s183] %v200
                %v202 = vld [vmem:[%s190 + $0x118] sm:%s183]
                %203 = vst [vmem:[%s191 + $0x28] sm:%s183] %v202
                %v204 = vld [vmem:[%s190 + $0x150] sm:%s183]
                %205 = vst [vmem:[%s191 + $0x30] sm:%s183] %v204
                %v206 = vld [vmem:[%s190 + $0x188] sm:%s183]
                %207 = vst [vmem:[%s191 + $0x38] sm:%s183] %v206
                %v208 = vld [vmem:[%s190 + $0x1c0] sm:%s183]
                %209 = vst [vmem:[%s191 + $0x40] sm:%s183] %v208
                %v210 = vld [vmem:[%s190 + $0x1f8] sm:%s183]
                %211 = vst [vmem:[%s191 + $0x48] sm:%s183] %v210
                %v212 = vld [vmem:[%s190 + $0x230] sm:%s183]
                %213 = vst [vmem:[%s191 + $0x50] sm:%s183] %v212
                %v214 = vld [vmem:[%s190 + $0x268] sm:%s183]
                %215 = vst [vmem:[%s191 + $0x58] sm:%s183] %v214
                %v216 = vld [vmem:[%s190 + $0x2a0] sm:%s183]
                %217 = vst [vmem:[%s191 + $0x60] sm:%s183] %v216
                %v218 = vld [vmem:[%s190 + $0x2d8] sm:%s183]
                %219 = vst [vmem:[%s191 + $0x68] sm:%s183] %v218
                %v220 = vld [vmem:[%s190 + $0x310] sm:%s183]
                %221 = vst [vmem:[%s191 + $0x70] sm:%s183] %v220
                %v222 = vld [vmem:[%s190 + $0x348] sm:%s183]
                %223 = vst [vmem:[%s191 + $0x78] sm:%s183] %v222
                %v224 = vld [vmem:[%s190 + $0x380] sm:%s183]
                %225 = vst [vmem:[%s191 + $0x80] sm:%s183] %v224
                %v226 = vld [vmem:[%s190 + $0x3b8] sm:%s183]
                %227 = vst [vmem:[%s191 + $0x88] sm:%s183] %v226
                %v228 = vld [vmem:[%s190 + $0x3f0] sm:%s183]
                %229 = vst [vmem:[%s191 + $0x90] sm:%s183] %v228
                %v230 = vld [vmem:[%s190 + $0x428] sm:%s183]
                %231 = vst [vmem:[%s191 + $0x98] sm:%s183] %v230
                %v232 = vld [vmem:[%s190 + $0x460] sm:%s183]
                %233 = vst [vmem:[%s191 + $0xa0] sm:%s183] %v232
                %v234 = vld [vmem:[%s190 + $0x498] sm:%s183]
                %235 = vst [vmem:[%s191 + $0xa8] sm:%s183] %v234
                %v236 = vld [vmem:[%s190 + $0x4d0] sm:%s183]
                %237 = vst [vmem:[%s191 + $0xb0] sm:%s183] %v236
                %v238 = vld [vmem:[%s190 + $0x508] sm:%s183]
                %239 = vst [vmem:[%s191 + $0xb8] sm:%s183] %v238
                %v240 = vld [vmem:[%s190 + $0x540] sm:%s183]
                %241 = vst [vmem:[%s191 + $0xc0] sm:%s183] %v240
                %v242 = vld [vmem:[%s190 + $0x578] sm:%s183]
                %243 = vst [vmem:[%s191 + $0xc8] sm:%s183] %v242
                %v244 = vld [vmem:[%s190 + $0x5b0] sm:%s183]
                %245 = vst [vmem:[%s191 + $0xd0] sm:%s183] %v244
                %v246 = vld [vmem:[%s190 + $0x5e8] sm:%s183]
                %247 = vst [vmem:[%s191 + $0xd8] sm:%s183] %v246
                %v248 = vld [vmem:[%s190 + $0x620] sm:%s183]
                %249 = vst [vmem:[%s191 + $0xe0] sm:%s183] %v248
                %v250 = vld [vmem:[%s190 + $0x658] sm:%s183]
                %251 = vst [vmem:[%s191 + $0xe8] sm:%s183] %v250
                %v252 = vld [vmem:[%s190 + $0x690] sm:%s183]
                %253 = vst [vmem:[%s191 + $0xf0] sm:%s183] %v252
                %v254 = vld [vmem:[%s190 + $0x6c8] sm:%s183]
                %255 = vst [vmem:[%s191 + $0xf8] sm:%s183] %v254
              $region41: #{_lambda_.11} parent=35 // loop_footer
                %s189 = sadd.s32 1, %s185
              $region42: #{_lambda_.11} parent=35 // loop_footer_branch
                %184 = sbr.rel target = $region38
              $region43: #{_lambda_.11} parent=35 // loop_exit
                _
            $region36: #{_lambda_.11} parent=27 // pred_fallthru
              _
          $region28: #{_lambda_.11} parent=23 // pred_fallthru
            _
          %332 = vnop
        $region24: #{_lambda_.11} parent=19 // pred_fallthru
          _
        // Predicated region
        $region59: #{_lambda_.11} parent=19 // pred_check
          %p333 = pneg %p78
        $region60: #{_lambda_.11} parent=19 // pred_check_branch
          %335 = sbr.rel (%p333) target = $region62
        $region61: #{_lambda_.11} parent=19 // pred_region
          %s336 = smul.u32 32, %s18
          %p337 = scmp.lt.s32.totalorder %s336, 223
          %s338 = scalar_select %p337, %s336, 223
          %p339 = scmp.lt.s32.totalorder %s17, 0
          %s340 = scalar_select %p339, %s17, 0
          %s341 = sadd.s32 %s340, %s338
          %s342 = smul.addr %s341, 4
          %s343 = scalar_lea.vmem %s1, %s342
          %s344 = smul.u32 32, %s18
        $region62: #{_lambda_.11} parent=19 // pred_fallthru
          _
      $region20: #{_lambda_.11} parent=5 // pred_fallthru
        _
      %p345 = scmp.le.s32.totalorder 1, %s9
      %p346 = scmp.lt.s32.totalorder %s9, 8
      %p347 = pnand %p345, %p346
      %p348 = pneg %p347
      // Predicated region
      $region63: #{_lambda_.11} parent=5 // pred_check
        _
      $region64: #{_lambda_.11} parent=5 // pred_check_branch
        %350 = sbr.rel (%p347) target = $region66
      $region65: #{_lambda_.11} parent=5 // pred_region
        %s351 = ssub.s32 %s9, 1
        %s352 = sand.u32 %s43, 1
        %s353 = sand.u32 %s43, 1
        %s354 = smul.addr %s353, 256
        %s355 = scalar_lea.vmem [#allocation3], %s354
        // Predicated region
        $region67: #{_lambda_.11} parent=65 // pred_check
          %p356 = pneg %p56
        $region68: #{_lambda_.11} parent=65 // pred_check_branch
          %358 = sbr.rel (%p356) target = $region70
        $region69: #{_lambda_.11} parent=65 // pred_region
          _
        $region70: #{_lambda_.11} parent=65 // pred_fallthru
          _
        %s359 = sand.u32 %s43, 1
        %s360 = sand.u32 %s43, 1
        %s361 = smul.addr %s360, 256
        %s362 = scalar_lea.vmem [#allocation3], %s361
        %p363 = pneg %p56
        %p364 = pneg %p53
        %s365 = smul.u32 32, %s21
        %p366 = scmp.lt.s32.totalorder %s365, 223
        %s367 = scalar_select %p366, %s365, 223
        %p368 = scmp.lt.s32.totalorder %s20, 0
        %s369 = scalar_select %p368, %s20, 0
        %s370 = sadd.s32 %s369, %s367
        %s371 = smul.addr %s370, 4
        %s372 = scalar_lea.vmem %s1, %s371
        %p373 = pneg %p84
        %p374 = pneg %p81
        %p375 = scmp.lt.s32.totalorder %s20, 0
        %s376 = scalar_select %p375, %s20, 0
        %s377 = scalar_lea.vmem %s2, %s376
        %p378 = pneg %p110
        %p379 = pneg %p107
        %p380 = pneg %p138
        %p381 = pneg %p135
        %s382 = smul.u32 32, %s19
        %p383 = scmp.lt.s32.totalorder %s382, 31
        %s384 = scalar_select %p383, %s382, 31
        %p385 = scmp.lt.s32.totalorder %s20, 0
        %s386 = scalar_select %p385, %s20, 0
        %s387 = sadd.s32 %s386, %s384
        %s388 = smul.addr %s387, 4
        %s389 = scalar_lea.vmem %s3, %s388
        %s390 = smul.u32 32, %s19
        %s391 = smul.u32 2, %s21
        %s392 = smul.u32 32, %s21
        %p393 = scmp.lt.s32.totalorder %s392, 223
        %s394 = scalar_select %p393, %s392, 223
        %p395 = scmp.lt.s32.totalorder %s20, 0
        %s396 = scalar_select %p395, %s20, 0
        %s397 = sadd.s32 %s396, %s394
        %s398 = smul.addr %s397, 4
        %s399 = scalar_lea.vmem %s1, %s398
        %s400 = smul.u32 32, %s21
        %p401 = scmp.lt.s32.totalorder %s20, 0
        %s402 = scalar_select %p401, %s20, 0
        %s403 = scalar_lea.vmem %s2, %s402
        %s404 = smul.u32 32, %s19
        %p405 = scmp.lt.s32.totalorder %s404, 31
        %s406 = scalar_select %p405, %s404, 31
        %p407 = scmp.lt.s32.totalorder %s20, 0
        %s408 = scalar_select %p407, %s20, 0
        %s409 = sadd.s32 %s408, %s406
        %s410 = smul.addr %s409, 4
        %s411 = scalar_lea.vmem %s3, %s410
        %s412 = smul.u32 32, %s19
        %p414 = scmp.eq.s32.totalorder %s21, 0
        // Predicated region
        $region71: #{_lambda_.11} parent=65 // pred_check
          %p415 = pneg %p414
        $region72: #{_lambda_.11} parent=65 // pred_check_branch
          %417 = sbr.rel (%p415) target = $region74
        $region73: #{_lambda_.11} parent=65 // pred_region
          %418 = vst [vmem:[#allocation2] sm:$0xff] 0.0
          %419 = vst [vmem:[#allocation2 + $0x8] sm:$0xff] 0.0
          %420 = vst [vmem:[#allocation2 + $0x10] sm:$0xff] 0.0
          %421 = vst [vmem:[#allocation2 + $0x18] sm:$0xff] 0.0
          %422 = vst [vmem:[#allocation2 + $0x20] sm:$0xff] 0.0
          %423 = vst [vmem:[#allocation2 + $0x28] sm:$0xff] 0.0
          %424 = vst [vmem:[#allocation2 + $0x30] sm:$0xff] 0.0
          %425 = vst [vmem:[#allocation2 + $0x38] sm:$0xff] 0.0
          %426 = vst [vmem:[#allocation2 + $0x40] sm:$0xff] 0.0
          %427 = vst [vmem:[#allocation2 + $0x48] sm:$0xff] 0.0
          %428 = vst [vmem:[#allocation2 + $0x50] sm:$0xff] 0.0
          %429 = vst [vmem:[#allocation2 + $0x58] sm:$0xff] 0.0
          %430 = vst [vmem:[#allocation2 + $0x60] sm:$0xff] 0.0
          %431 = vst [vmem:[#allocation2 + $0x68] sm:$0xff] 0.0
          %432 = vst [vmem:[#allocation2 + $0x70] sm:$0xff] 0.0
          %433 = vst [vmem:[#allocation2 + $0x78] sm:$0xff] 0.0
          %434 = vst [vmem:[#allocation2 + $0x80] sm:$0xff] 0.0
          %435 = vst [vmem:[#allocation2 + $0x88] sm:$0xff] 0.0
          %436 = vst [vmem:[#allocation2 + $0x90] sm:$0xff] 0.0
          %437 = vst [vmem:[#allocation2 + $0x98] sm:$0xff] 0.0
          %438 = vst [vmem:[#allocation2 + $0xa0] sm:$0xff] 0.0
          %439 = vst [vmem:[#allocation2 + $0xa8] sm:$0xff] 0.0
          %440 = vst [vmem:[#allocation2 + $0xb0] sm:$0xff] 0.0
          %441 = vst [vmem:[#allocation2 + $0xb8] sm:$0xff] 0.0
          %442 = vst [vmem:[#allocation2 + $0xc0] sm:$0xff] 0.0
          %443 = vst [vmem:[#allocation2 + $0xc8] sm:$0xff] 0.0
          %444 = vst [vmem:[#allocation2 + $0xd0] sm:$0xff] 0.0
          %445 = vst [vmem:[#allocation2 + $0xd8] sm:$0xff] 0.0
          %446 = vst [vmem:[#allocation2 + $0xe0] sm:$0xff] 0.0
          %447 = vst [vmem:[#allocation2 + $0xe8] sm:$0xff] 0.0
          %448 = vst [vmem:[#allocation2 + $0xf0] sm:$0xff] 0.0
          %449 = vst [vmem:[#allocation2 + $0xf8] sm:$0xff] 0.0
        $region74: #{_lambda_.11} parent=65 // pred_fallthru
          _
        %v450 = vld [vmem:[#allocation2] sm:$0xff]
        %v451 = vld [vmem:[#allocation2 + $0x8] sm:$0xff]
        %v452 = vld [vmem:[#allocation2 + $0x10] sm:$0xff]
        %v453 = vld [vmem:[#allocation2 + $0x18] sm:$0xff]
        %v454 = vld [vmem:[#allocation2 + $0x20] sm:$0xff]
        %v455 = vld [vmem:[#allocation2 + $0x28] sm:$0xff]
        %v456 = vld [vmem:[#allocation2 + $0x30] sm:$0xff]
        %v457 = vld [vmem:[#allocation2 + $0x38] sm:$0xff]
        %v458 = vld [vmem:[#allocation2 + $0x40] sm:$0xff]
        %v459 = vld [vmem:[#allocation2 + $0x48] sm:$0xff]
        %v460 = vld [vmem:[#allocation2 + $0x50] sm:$0xff]
        %v461 = vld [vmem:[#allocation2 + $0x58] sm:$0xff]
        %v462 = vld [vmem:[#allocation2 + $0x60] sm:$0xff]
        %v463 = vld [vmem:[#allocation2 + $0x68] sm:$0xff]
        %v464 = vld [vmem:[#allocation2 + $0x70] sm:$0xff]
        %v465 = vld [vmem:[#allocation2 + $0x78] sm:$0xff]
        %v466 = vld [vmem:[#allocation2 + $0x80] sm:$0xff]
        %v467 = vld [vmem:[#allocation2 + $0x88] sm:$0xff]
        %v468 = vld [vmem:[#allocation2 + $0x90] sm:$0xff]
        %v469 = vld [vmem:[#allocation2 + $0x98] sm:$0xff]
        %v470 = vld [vmem:[#allocation2 + $0xa0] sm:$0xff]
        %v471 = vld [vmem:[#allocation2 + $0xa8] sm:$0xff]
        %v472 = vld [vmem:[#allocation2 + $0xb0] sm:$0xff]
        %v473 = vld [vmem:[#allocation2 + $0xb8] sm:$0xff]
        %v474 = vld [vmem:[#allocation2 + $0xc0] sm:$0xff]
        %v475 = vld [vmem:[#allocation2 + $0xc8] sm:$0xff]
        %v476 = vld [vmem:[#allocation2 + $0xd0] sm:$0xff]
        %v477 = vld [vmem:[#allocation2 + $0xd8] sm:$0xff]
        %v478 = vld [vmem:[#allocation2 + $0xe0] sm:$0xff]
        %v479 = vld [vmem:[#allocation2 + $0xe8] sm:$0xff]
        %v480 = vld [vmem:[#allocation2 + $0xf0] sm:$0xff]
        %v481 = vld [vmem:[#allocation2 + $0xf8] sm:$0xff]
        %v482 = vld [vmem:[%s355] sm:$0xff]
        %v483 = vld [vmem:[%s355 + $0x8] sm:$0xff]
        %v484 = vld [vmem:[%s355 + $0x10] sm:$0xff]
        %v485 = vld [vmem:[%s355 + $0x18] sm:$0xff]
        %v486 = vld [vmem:[%s355 + $0x20] sm:$0xff]
        %v487 = vld [vmem:[%s355 + $0x28] sm:$0xff]
        %v488 = vld [vmem:[%s355 + $0x30] sm:$0xff]
        %v489 = vld [vmem:[%s355 + $0x38] sm:$0xff]
        %v490 = vld [vmem:[%s355 + $0x40] sm:$0xff]
        %v491 = vld [vmem:[%s355 + $0x48] sm:$0xff]
        %v492 = vld [vmem:[%s355 + $0x50] sm:$0xff]
        %v493 = vld [vmem:[%s355 + $0x58] sm:$0xff]
        %v494 = vld [vmem:[%s355 + $0x60] sm:$0xff]
        %v495 = vld [vmem:[%s355 + $0x68] sm:$0xff]
        %v496 = vld [vmem:[%s355 + $0x70] sm:$0xff]
        %v497 = vld [vmem:[%s355 + $0x78] sm:$0xff]
        %v498 = vld [vmem:[%s355 + $0x80] sm:$0xff]
        %v499 = vld [vmem:[%s355 + $0x88] sm:$0xff]
        %v500 = vld [vmem:[%s355 + $0x90] sm:$0xff]
        %v501 = vld [vmem:[%s355 + $0x98] sm:$0xff]
        %v502 = vld [vmem:[%s355 + $0xa0] sm:$0xff]
        %v503 = vld [vmem:[%s355 + $0xa8] sm:$0xff]
        %v504 = vld [vmem:[%s355 + $0xb0] sm:$0xff]
        %v505 = vld [vmem:[%s355 + $0xb8] sm:$0xff]
        %v506 = vld [vmem:[%s355 + $0xc0] sm:$0xff]
        %v507 = vld [vmem:[%s355 + $0xc8] sm:$0xff]
        %v508 = vld [vmem:[%s355 + $0xd0] sm:$0xff]
        %v509 = vld [vmem:[%s355 + $0xd8] sm:$0xff]
        %v510 = vld [vmem:[%s355 + $0xe0] sm:$0xff]
        %v511 = vld [vmem:[%s355 + $0xe8] sm:$0xff]
        %v512 = vld [vmem:[%s355 + $0xf0] sm:$0xff]
        %v513 = vld [vmem:[%s355 + $0xf8] sm:$0xff]
        %v514 = vld [vmem:[%s399] sm:$0xf]
        %v515 = vld [vmem:[%s399 + $0x4] sm:$0xf]
        %v516 = vld [vmem:[%s399 + $0x8] sm:$0xf]
        %v517 = vld [vmem:[%s399 + $0xc] sm:$0xf]
        %v518 = vld [vmem:[%s399 + $0x10] sm:$0xf]
        %v519 = vld [vmem:[%s399 + $0x14] sm:$0xf]
        %v520 = vld [vmem:[%s399 + $0x18] sm:$0xf]
        %v521 = vld [vmem:[%s399 + $0x1c] sm:$0xf]
        %v522 = vld [vmem:[%s399 + $0x20] sm:$0xf]
        %v523 = vld [vmem:[%s399 + $0x24] sm:$0xf]
        %v524 = vld [vmem:[%s399 + $0x28] sm:$0xf]
        %v525 = vld [vmem:[%s399 + $0x2c] sm:$0xf]
        %v526 = vld [vmem:[%s399 + $0x30] sm:$0xf]
        %v527 = vld [vmem:[%s399 + $0x34] sm:$0xf]
        %v528 = vld [vmem:[%s399 + $0x38] sm:$0xf]
        %v529 = vld [vmem:[%s399 + $0x3c] sm:$0xf]
        %v530 = vld [vmem:[%s399 + $0x40] sm:$0xf]
        %v531 = vld [vmem:[%s399 + $0x44] sm:$0xf]
        %v532 = vld [vmem:[%s399 + $0x48] sm:$0xf]
        %v533 = vld [vmem:[%s399 + $0x4c] sm:$0xf]
        %v534 = vld [vmem:[%s399 + $0x50] sm:$0xf]
        %v535 = vld [vmem:[%s399 + $0x54] sm:$0xf]
        %v536 = vld [vmem:[%s399 + $0x58] sm:$0xf]
        %v537 = vld [vmem:[%s399 + $0x5c] sm:$0xf]
        %v538 = vld [vmem:[%s399 + $0x60] sm:$0xf]
        %v539 = vld [vmem:[%s399 + $0x64] sm:$0xf]
        %v540 = vld [vmem:[%s399 + $0x68] sm:$0xf]
        %v541 = vld [vmem:[%s399 + $0x6c] sm:$0xf]
        %v542 = vld [vmem:[%s399 + $0x70] sm:$0xf]
        %v543 = vld [vmem:[%s399 + $0x74] sm:$0xf]
        %v544 = vld [vmem:[%s399 + $0x78] sm:$0xf]
        %v545 = vld [vmem:[%s399 + $0x7c] sm:$0xf]
        %v578 = vunpack.c.l.b16 %v482
        %v579 = vunpack.c.h.b16 %v482
        %v580 = vunpack.c.l.b16 %v483
        %v581 = vunpack.c.h.b16 %v483
        %v582 = vunpack.c.l.b16 %v484
        %v583 = vunpack.c.h.b16 %v484
        %v584 = vunpack.c.l.b16 %v485
        %v585 = vunpack.c.h.b16 %v485
        %v586 = vunpack.c.l.b16 %v486
        %v587 = vunpack.c.h.b16 %v486
        %v588 = vunpack.c.l.b16 %v487
        %v589 = vunpack.c.h.b16 %v487
        %v590 = vunpack.c.l.b16 %v488
        %v591 = vunpack.c.h.b16 %v488
        %v592 = vunpack.c.l.b16 %v489
        %v593 = vunpack.c.h.b16 %v489
        %v594 = vunpack.c.l.b16 %v490
        %v595 = vunpack.c.h.b16 %v490
        %v596 = vunpack.c.l.b16 %v491
        %v597 = vunpack.c.h.b16 %v491
        %v598 = vunpack.c.l.b16 %v492
        %v599 = vunpack.c.h.b16 %v492
        %v600 = vunpack.c.l.b16 %v493
        %v601 = vunpack.c.h.b16 %v493
        %v602 = vunpack.c.l.b16 %v494
        %v603 = vunpack.c.h.b16 %v494
        %v604 = vunpack.c.l.b16 %v495
        %v605 = vunpack.c.h.b16 %v495
        %v606 = vunpack.c.l.b16 %v496
        %v607 = vunpack.c.h.b16 %v496
        %v608 = vunpack.c.l.b16 %v497
        %v609 = vunpack.c.h.b16 %v497
        %v610 = vunpack.c.l.b16 %v498
        %v611 = vunpack.c.h.b16 %v498
        %v612 = vunpack.c.l.b16 %v499
        %v613 = vunpack.c.h.b16 %v499
        %v614 = vunpack.c.l.b16 %v500
        %v615 = vunpack.c.h.b16 %v500
        %v616 = vunpack.c.l.b16 %v501
        %v617 = vunpack.c.h.b16 %v501
        %v618 = vunpack.c.l.b16 %v502
        %v619 = vunpack.c.h.b16 %v502
        %v620 = vunpack.c.l.b16 %v503
        %v621 = vunpack.c.h.b16 %v503
        %v622 = vunpack.c.l.b16 %v504
        %v623 = vunpack.c.h.b16 %v504
        %v624 = vunpack.c.l.b16 %v505
        %v625 = vunpack.c.h.b16 %v505
        %v626 = vunpack.c.l.b16 %v506
        %v627 = vunpack.c.h.b16 %v506
        %v628 = vunpack.c.l.b16 %v507
        %v629 = vunpack.c.h.b16 %v507
        %v630 = vunpack.c.l.b16 %v508
        %v631 = vunpack.c.h.b16 %v508
        %v632 = vunpack.c.l.b16 %v509
        %v633 = vunpack.c.h.b16 %v509
        %v634 = vunpack.c.l.b16 %v510
        %v635 = vunpack.c.h.b16 %v510
        %v636 = vunpack.c.l.b16 %v511
        %v637 = vunpack.c.h.b16 %v511
        %v638 = vunpack.c.l.b16 %v512
        %v639 = vunpack.c.h.b16 %v512
        %v640 = vunpack.c.l.b16 %v513
        %v641 = vunpack.c.h.b16 %v513
        %v642 = vpack.c.b16 %v580, %v578
        %v643 = vpack.c.b16 %v581, %v579
        %v644 = vpack.c.b16 %v584, %v582
        %v645 = vpack.c.b16 %v585, %v583
        %v646 = vpack.c.b16 %v588, %v586
        %v647 = vpack.c.b16 %v589, %v587
        %v648 = vpack.c.b16 %v592, %v590
        %v649 = vpack.c.b16 %v593, %v591
        %v650 = vpack.c.b16 %v596, %v594
        %v651 = vpack.c.b16 %v597, %v595
        %v652 = vpack.c.b16 %v600, %v598
        %v653 = vpack.c.b16 %v601, %v599
        %v654 = vpack.c.b16 %v604, %v602
        %v655 = vpack.c.b16 %v605, %v603
        %v656 = vpack.c.b16 %v608, %v606
        %v657 = vpack.c.b16 %v609, %v607
        %v658 = vpack.c.b16 %v612, %v610
        %v659 = vpack.c.b16 %v613, %v611
        %v660 = vpack.c.b16 %v616, %v614
        %v661 = vpack.c.b16 %v617, %v615
        %v662 = vpack.c.b16 %v620, %v618
        %v663 = vpack.c.b16 %v621, %v619
        %v664 = vpack.c.b16 %v624, %v622
        %v665 = vpack.c.b16 %v625, %v623
        %v666 = vpack.c.b16 %v628, %v626
        %v667 = vpack.c.b16 %v629, %v627
        %v668 = vpack.c.b16 %v632, %v630
        %v669 = vpack.c.b16 %v633, %v631
        %v670 = vpack.c.b16 %v636, %v634
        %v671 = vpack.c.b16 %v637, %v635
        %v672 = vpack.c.b16 %v640, %v638
        %v673 = vpack.c.b16 %v641, %v639
        %v738 = vunpack.c.l.b16 %v514
        %v739 = vunpack.c.l.b16 %v515
        %v740 = vunpack.c.l.b16 %v516
        %v741 = vunpack.c.l.b16 %v517
        %v742 = vunpack.c.l.b16 %v518
        %v743 = vunpack.c.l.b16 %v519
        %v744 = vunpack.c.l.b16 %v520
        %v745 = vunpack.c.l.b16 %v521
        %v746 = vunpack.c.l.b16 %v522
        %v747 = vunpack.c.l.b16 %v523
        %v748 = vunpack.c.l.b16 %v524
        %v749 = vunpack.c.l.b16 %v525
        %v750 = vunpack.c.l.b16 %v526
        %v751 = vunpack.c.l.b16 %v527
        %v752 = vunpack.c.l.b16 %v528
        %v753 = vunpack.c.l.b16 %v529
        %v754 = vunpack.c.l.b16 %v530
        %v755 = vunpack.c.l.b16 %v531
        %v756 = vunpack.c.l.b16 %v532
        %v757 = vunpack.c.l.b16 %v533
        %v758 = vunpack.c.l.b16 %v534
        %v759 = vunpack.c.l.b16 %v535
        %v760 = vunpack.c.l.b16 %v536
        %v761 = vunpack.c.l.b16 %v537
        %v762 = vunpack.c.l.b16 %v538
        %v763 = vunpack.c.l.b16 %v539
        %v764 = vunpack.c.l.b16 %v540
        %v765 = vunpack.c.l.b16 %v541
        %v766 = vunpack.c.l.b16 %v542
        %v767 = vunpack.c.l.b16 %v543
        %v768 = vunpack.c.l.b16 %v544
        %v769 = vunpack.c.l.b16 %v545
        %v770 = vpack.c.b16 %v739, %v738
        %v771 = vpack.c.b16 %v741, %v740
        %v772 = vpack.c.b16 %v743, %v742
        %v773 = vpack.c.b16 %v745, %v744
        %v774 = vpack.c.b16 %v747, %v746
        %v775 = vpack.c.b16 %v749, %v748
        %v776 = vpack.c.b16 %v751, %v750
        %v777 = vpack.c.b16 %v753, %v752
        %v778 = vpack.c.b16 %v755, %v754
        %v779 = vpack.c.b16 %v757, %v756
        %v780 = vpack.c.b16 %v759, %v758
        %v781 = vpack.c.b16 %v761, %v760
        %v782 = vpack.c.b16 %v763, %v762
        %v783 = vpack.c.b16 %v765, %v764
        %v784 = vpack.c.b16 %v767, %v766
        %v785 = vpack.c.b16 %v769, %v768
        %802 = vmatprep.subr.bf16.mxu0 0
        %803 = vmatpush1.bf16.msra.mxu0 %v777
        %804 = vmatprep.subr.bf16.mxu0 0
        %805 = vmatpush1.bf16.msra.mxu0 %v776
        %806 = vmatprep.subr.bf16.mxu0 0
        %807 = vmatpush1.bf16.msra.mxu0 %v775
        %808 = vmatprep.subr.bf16.mxu0 0
        %809 = vmatpush1.bf16.msra.mxu0 %v774
        %810 = vmatprep.subr.bf16.mxu0 0
        %811 = vmatpush1.bf16.msra.mxu0 %v773
        %812 = vmatprep.subr.bf16.mxu0 0
        %813 = vmatpush1.bf16.msra.mxu0 %v772
        %814 = vmatprep.subr.bf16.mxu0 0
        %815 = vmatpush1.bf16.msra.mxu0 %v771
        %816 = vmatprep.subr.bf16.mxu0 0
        %817 = vmatpush1.bf16.msra.mxu0 %v770
        %818 = vmatprep.subr.bf16.mxu0 0
        %819 = vmatpush2.bf16.msra.mxu0 %v785
        %820 = vmatprep.subr.bf16.mxu0 0
        %821 = vmatpush2.bf16.msra.mxu0 %v784
        %822 = vmatprep.subr.bf16.mxu0 0
        %823 = vmatpush2.bf16.msra.mxu0 %v783
        %824 = vmatprep.subr.bf16.mxu0 0
        %825 = vmatpush2.bf16.msra.mxu0 %v782
        %826 = vmatprep.subr.bf16.mxu0 0
        %827 = vmatpush2.bf16.msra.mxu0 %v781
        %828 = vmatprep.subr.bf16.mxu0 0
        %829 = vmatpush2.bf16.msra.mxu0 %v780
        %830 = vmatprep.subr.bf16.mxu0 0
        %831 = vmatpush2.bf16.msra.mxu0 %v779
        %832 = vmatprep.subr.bf16.mxu0 0
        %833 = vmatpush2.bf16.msra.mxu0 %v778
        %834 = vmatprep.mubr.bf16.mxu0 %v643
        %835 = vmatmul.mubr.bf16.gmra.mxu0 %v642
        %v836 = vpop.f32.mrf.mxu0
        %v837 = vadd.f32 0.0, %v836
        %v838 = vpop.f32.mrf.mxu0
        %v839 = vpop.f32.mrf.mxu0
        %v840 = vadd.f32 0.0, %v839
        %v841 = vpop.f32.mrf.mxu0
        %842 = vmatprep.mubr.bf16.mxu0 %v645
        %843 = vmatmul.mubr.bf16.gmra.mxu0 %v644
        %v844 = vpop.f32.mrf.mxu0
        %v845 = vadd.f32 0.0, %v844
        %v846 = vpop.f32.mrf.mxu0
        %v847 = vpop.f32.mrf.mxu0
        %v848 = vadd.f32 0.0, %v847
        %v849 = vpop.f32.mrf.mxu0
        %850 = vmatprep.mubr.bf16.mxu0 %v647
        %851 = vmatmul.mubr.bf16.gmra.mxu0 %v646
        %v852 = vpop.f32.mrf.mxu0
        %v853 = vadd.f32 0.0, %v852
        %v854 = vpop.f32.mrf.mxu0
        %v855 = vpop.f32.mrf.mxu0
        %v856 = vadd.f32 0.0, %v855
        %v857 = vpop.f32.mrf.mxu0
        %858 = vmatprep.mubr.bf16.mxu0 %v649
        %859 = vmatmul.mubr.bf16.gmra.mxu0 %v648
        %v860 = vpop.f32.mrf.mxu0
        %v861 = vadd.f32 0.0, %v860
        %v862 = vpop.f32.mrf.mxu0
        %v863 = vpop.f32.mrf.mxu0
        %v864 = vadd.f32 0.0, %v863
        %v865 = vpop.f32.mrf.mxu0
        %866 = vmatprep.mubr.bf16.mxu0 %v651
        %867 = vmatmul.mubr.bf16.gmra.mxu0 %v650
        %v868 = vpop.f32.mrf.mxu0
        %v869 = vadd.f32 0.0, %v868
        %v870 = vpop.f32.mrf.mxu0
        %v871 = vpop.f32.mrf.mxu0
        %v872 = vadd.f32 0.0, %v871
        %v873 = vpop.f32.mrf.mxu0
        %874 = vmatprep.mubr.bf16.mxu0 %v653
        %875 = vmatmul.mubr.bf16.gmra.mxu0 %v652
        %v876 = vpop.f32.mrf.mxu0
        %v877 = vadd.f32 0.0, %v876
        %v878 = vpop.f32.mrf.mxu0
        %v879 = vpop.f32.mrf.mxu0
        %v880 = vadd.f32 0.0, %v879
        %v881 = vpop.f32.mrf.mxu0
        %882 = vmatprep.mubr.bf16.mxu0 %v655
        %883 = vmatmul.mubr.bf16.gmra.mxu0 %v654
        %v884 = vpop.f32.mrf.mxu0
        %v885 = vadd.f32 0.0, %v884
        %v886 = vpop.f32.mrf.mxu0
        %v887 = vpop.f32.mrf.mxu0
        %v888 = vadd.f32 0.0, %v887
        %v889 = vpop.f32.mrf.mxu0
        %890 = vmatprep.mubr.bf16.mxu0 %v657
        %891 = vmatmul.mubr.bf16.gmra.mxu0 %v656
        %v892 = vpop.f32.mrf.mxu0
        %v893 = vadd.f32 0.0, %v892
        %v894 = vpop.f32.mrf.mxu0
        %v895 = vpop.f32.mrf.mxu0
        %v896 = vadd.f32 0.0, %v895
        %v897 = vpop.f32.mrf.mxu0
        %898 = vmatprep.mubr.bf16.mxu0 %v659
        %899 = vmatmul.mubr.bf16.gmra.mxu0 %v658
        %v900 = vpop.f32.mrf.mxu0
        %v901 = vadd.f32 0.0, %v900
        %v902 = vpop.f32.mrf.mxu0
        %v903 = vpop.f32.mrf.mxu0
        %v904 = vadd.f32 0.0, %v903
        %v905 = vpop.f32.mrf.mxu0
        %906 = vmatprep.mubr.bf16.mxu0 %v661
        %907 = vmatmul.mubr.bf16.gmra.mxu0 %v660
        %v908 = vpop.f32.mrf.mxu0
        %v909 = vadd.f32 0.0, %v908
        %v910 = vpop.f32.mrf.mxu0
        %v911 = vpop.f32.mrf.mxu0
        %v912 = vadd.f32 0.0, %v911
        %v913 = vpop.f32.mrf.mxu0
        %914 = vmatprep.mubr.bf16.mxu0 %v663
        %915 = vmatmul.mubr.bf16.gmra.mxu0 %v662
        %v916 = vpop.f32.mrf.mxu0
        %v917 = vadd.f32 0.0, %v916
        %v918 = vpop.f32.mrf.mxu0
        %v919 = vpop.f32.mrf.mxu0
        %v920 = vadd.f32 0.0, %v919
        %v921 = vpop.f32.mrf.mxu0
        %922 = vmatprep.mubr.bf16.mxu0 %v665
        %923 = vmatmul.mubr.bf16.gmra.mxu0 %v664
        %v924 = vpop.f32.mrf.mxu0
        %v925 = vadd.f32 0.0, %v924
        %v926 = vpop.f32.mrf.mxu0
        %v927 = vpop.f32.mrf.mxu0
        %v928 = vadd.f32 0.0, %v927
        %v929 = vpop.f32.mrf.mxu0
        %930 = vmatprep.mubr.bf16.mxu0 %v667
        %931 = vmatmul.mubr.bf16.gmra.mxu0 %v666
        %v932 = vpop.f32.mrf.mxu0
        %v933 = vadd.f32 0.0, %v932
        %v934 = vpop.f32.mrf.mxu0
        %v935 = vpop.f32.mrf.mxu0
        %v936 = vadd.f32 0.0, %v935
        %v937 = vpop.f32.mrf.mxu0
        %938 = vmatprep.mubr.bf16.mxu0 %v669
        %939 = vmatmul.mubr.bf16.gmra.mxu0 %v668
        %v940 = vpop.f32.mrf.mxu0
        %v941 = vadd.f32 0.0, %v940
        %v942 = vpop.f32.mrf.mxu0
        %v943 = vpop.f32.mrf.mxu0
        %v944 = vadd.f32 0.0, %v943
        %v945 = vpop.f32.mrf.mxu0
        %946 = vmatprep.mubr.bf16.mxu0 %v671
        %947 = vmatmul.mubr.bf16.gmra.mxu0 %v670
        %v948 = vpop.f32.mrf.mxu0
        %v949 = vadd.f32 0.0, %v948
        %v950 = vpop.f32.mrf.mxu0
        %v951 = vpop.f32.mrf.mxu0
        %v952 = vadd.f32 0.0, %v951
        %v953 = vpop.f32.mrf.mxu0
        %954 = vmatprep.mubr.bf16.mxu0 %v673
        %955 = vmatmul.mubr.bf16.gmra.mxu0 %v672
        %v956 = vpop.f32.mrf.mxu0
        %v957 = vadd.f32 0.0, %v956
        %v958 = vpop.f32.mrf.mxu0
        %v959 = vpop.f32.mrf.mxu0
        %v960 = vadd.f32 0.0, %v959
        %v961 = vpop.f32.mrf.mxu0
        %962 = vdwg.mxu0
        %v963 = vadd.f32 %v450, %v837
        %v964 = vadd.f32 %v451, %v840
        %v965 = vadd.f32 %v452, %v845
        %v966 = vadd.f32 %v453, %v848
        %v967 = vadd.f32 %v454, %v853
        %v968 = vadd.f32 %v455, %v856
        %v969 = vadd.f32 %v456, %v861
        %v970 = vadd.f32 %v457, %v864
        %v971 = vadd.f32 %v458, %v869
        %v972 = vadd.f32 %v459, %v872
        %v973 = vadd.f32 %v460, %v877
        %v974 = vadd.f32 %v461, %v880
        %v975 = vadd.f32 %v462, %v885
        %v976 = vadd.f32 %v463, %v888
        %v977 = vadd.f32 %v464, %v893
        %v978 = vadd.f32 %v465, %v896
        %v979 = vadd.f32 %v466, %v901
        %v980 = vadd.f32 %v467, %v904
        %v981 = vadd.f32 %v468, %v909
        %v982 = vadd.f32 %v469, %v912
        %v983 = vadd.f32 %v470, %v917
        %v984 = vadd.f32 %v471, %v920
        %v985 = vadd.f32 %v472, %v925
        %v986 = vadd.f32 %v473, %v928
        %v987 = vadd.f32 %v474, %v933
        %v988 = vadd.f32 %v475, %v936
        %v989 = vadd.f32 %v476, %v941
        %v990 = vadd.f32 %v477, %v944
        %v991 = vadd.f32 %v478, %v949
        %v992 = vadd.f32 %v479, %v952
        %v993 = vadd.f32 %v480, %v957
        %v994 = vadd.f32 %v481, %v960
        %995 = vst [vmem:[#allocation2] sm:$0xff] %v963
        %996 = vst [vmem:[#allocation2 + $0x8] sm:$0xff] %v964
        %997 = vst [vmem:[#allocation2 + $0x10] sm:$0xff] %v965
        %998 = vst [vmem:[#allocation2 + $0x18] sm:$0xff] %v966
        %999 = vst [vmem:[#allocation2 + $0x20] sm:$0xff] %v967
        %1000 = vst [vmem:[#allocation2 + $0x28] sm:$0xff] %v968
        %1001 = vst [vmem:[#allocation2 + $0x30] sm:$0xff] %v969
        %1002 = vst [vmem:[#allocation2 + $0x38] sm:$0xff] %v970
        %1003 = vst [vmem:[#allocation2 + $0x40] sm:$0xff] %v971
        %1004 = vst [vmem:[#allocation2 + $0x48] sm:$0xff] %v972
        %1005 = vst [vmem:[#allocation2 + $0x50] sm:$0xff] %v973
        %1006 = vst [vmem:[#allocation2 + $0x58] sm:$0xff] %v974
        %1007 = vst [vmem:[#allocation2 + $0x60] sm:$0xff] %v975
        %1008 = vst [vmem:[#allocation2 + $0x68] sm:$0xff] %v976
        %1009 = vst [vmem:[#allocation2 + $0x70] sm:$0xff] %v977
        %1010 = vst [vmem:[#allocation2 + $0x78] sm:$0xff] %v978
        %1011 = vst [vmem:[#allocation2 + $0x80] sm:$0xff] %v979
        %1012 = vst [vmem:[#allocation2 + $0x88] sm:$0xff] %v980
        %1013 = vst [vmem:[#allocation2 + $0x90] sm:$0xff] %v981
        %1014 = vst [vmem:[#allocation2 + $0x98] sm:$0xff] %v982
        %1015 = vst [vmem:[#allocation2 + $0xa0] sm:$0xff] %v983
        %1016 = vst [vmem:[#allocation2 + $0xa8] sm:$0xff] %v984
        %1017 = vst [vmem:[#allocation2 + $0xb0] sm:$0xff] %v985
        %1018 = vst [vmem:[#allocation2 + $0xb8] sm:$0xff] %v986
        %1019 = vst [vmem:[#allocation2 + $0xc0] sm:$0xff] %v987
        %1020 = vst [vmem:[#allocation2 + $0xc8] sm:$0xff] %v988
        %1021 = vst [vmem:[#allocation2 + $0xd0] sm:$0xff] %v989
        %1022 = vst [vmem:[#allocation2 + $0xd8] sm:$0xff] %v990
        %1023 = vst [vmem:[#allocation2 + $0xe0] sm:$0xff] %v991
        %1024 = vst [vmem:[#allocation2 + $0xe8] sm:$0xff] %v992
        %1025 = vst [vmem:[#allocation2 + $0xf0] sm:$0xff] %v993
        %1026 = vst [vmem:[#allocation2 + $0xf8] sm:$0xff] %v994
        %p1027 = scmp.eq.s32.totalorder %s21, 6
        // Predicated region
        $region75: #{_lambda_.11} parent=65 // pred_check
          %p1028 = pneg %p1027
        $region76: #{_lambda_.11} parent=65 // pred_check_branch
          %1030 = sbr.rel (%p1028) target = $region78
        $region77: #{_lambda_.11} parent=65 // pred_region
          %v1031 = vld [vmem:[#allocation2] sm:$0xff]
          %v1032 = vld [vmem:[#allocation2 + $0x8] sm:$0xff]
          %v1033 = vld [vmem:[#allocation2 + $0x10] sm:$0xff]
          %v1034 = vld [vmem:[#allocation2 + $0x18] sm:$0xff]
          %v1035 = vld [vmem:[#allocation2 + $0x20] sm:$0xff]
          %v1036 = vld [vmem:[#allocation2 + $0x28] sm:$0xff]
          %v1037 = vld [vmem:[#allocation2 + $0x30] sm:$0xff]
          %v1038 = vld [vmem:[#allocation2 + $0x38] sm:$0xff]
          %v1039 = vld [vmem:[#allocation2 + $0x40] sm:$0xff]
          %v1040 = vld [vmem:[#allocation2 + $0x48] sm:$0xff]
          %v1041 = vld [vmem:[#allocation2 + $0x50] sm:$0xff]
          %v1042 = vld [vmem:[#allocation2 + $0x58] sm:$0xff]
          %v1043 = vld [vmem:[#allocation2 + $0x60] sm:$0xff]
          %v1044 = vld [vmem:[#allocation2 + $0x68] sm:$0xff]
          %v1045 = vld [vmem:[#allocation2 + $0x70] sm:$0xff]
          %v1046 = vld [vmem:[#allocation2 + $0x78] sm:$0xff]
          %v1047 = vld [vmem:[#allocation2 + $0x80] sm:$0xff]
          %v1048 = vld [vmem:[#allocation2 + $0x88] sm:$0xff]
          %v1049 = vld [vmem:[#allocation2 + $0x90] sm:$0xff]
          %v1050 = vld [vmem:[#allocation2 + $0x98] sm:$0xff]
          %v1051 = vld [vmem:[#allocation2 + $0xa0] sm:$0xff]
          %v1052 = vld [vmem:[#allocation2 + $0xa8] sm:$0xff]
          %v1053 = vld [vmem:[#allocation2 + $0xb0] sm:$0xff]
          %v1054 = vld [vmem:[#allocation2 + $0xb8] sm:$0xff]
          %v1055 = vld [vmem:[#allocation2 + $0xc0] sm:$0xff]
          %v1056 = vld [vmem:[#allocation2 + $0xc8] sm:$0xff]
          %v1057 = vld [vmem:[#allocation2 + $0xd0] sm:$0xff]
          %v1058 = vld [vmem:[#allocation2 + $0xd8] sm:$0xff]
          %v1059 = vld [vmem:[#allocation2 + $0xe0] sm:$0xff]
          %v1060 = vld [vmem:[#allocation2 + $0xe8] sm:$0xff]
          %v1061 = vld [vmem:[#allocation2 + $0xf0] sm:$0xff]
          %v1062 = vld [vmem:[#allocation2 + $0xf8] sm:$0xff]
          %v1063 = vld [vmem:[%s403] sm:$0x1]
          %v1065 = vlaneseq
          %v1066 = vshrl.u32 %v1065, 7
          %v1067 = vsub.s32 0, %v1066
          %v1068 = vrot.slane %v1063, %v1067
          %v1070 = vadd.f32 %v1031, %v1068
          %v1071 = vadd.f32 %v1032, %v1068
          %v1072 = vadd.f32 %v1033, %v1068
          %v1073 = vadd.f32 %v1034, %v1068
          %v1074 = vadd.f32 %v1035, %v1068
          %v1075 = vadd.f32 %v1036, %v1068
          %v1076 = vadd.f32 %v1037, %v1068
          %v1077 = vadd.f32 %v1038, %v1068
          %v1078 = vadd.f32 %v1039, %v1068
          %v1079 = vadd.f32 %v1040, %v1068
          %v1080 = vadd.f32 %v1041, %v1068
          %v1081 = vadd.f32 %v1042, %v1068
          %v1082 = vadd.f32 %v1043, %v1068
          %v1083 = vadd.f32 %v1044, %v1068
          %v1084 = vadd.f32 %v1045, %v1068
          %v1085 = vadd.f32 %v1046, %v1068
          %v1086 = vadd.f32 %v1047, %v1068
          %v1087 = vadd.f32 %v1048, %v1068
          %v1088 = vadd.f32 %v1049, %v1068
          %v1089 = vadd.f32 %v1050, %v1068
          %v1090 = vadd.f32 %v1051, %v1068
          %v1091 = vadd.f32 %v1052, %v1068
          %v1092 = vadd.f32 %v1053, %v1068
          %v1093 = vadd.f32 %v1054, %v1068
          %v1094 = vadd.f32 %v1055, %v1068
          %v1095 = vadd.f32 %v1056, %v1068
          %v1096 = vadd.f32 %v1057, %v1068
          %v1097 = vadd.f32 %v1058, %v1068
          %v1098 = vadd.f32 %v1059, %v1068
          %v1099 = vadd.f32 %v1060, %v1068
          %v1100 = vadd.f32 %v1061, %v1068
          %v1101 = vadd.f32 %v1062, %v1068
          %v1102 = vmax.f32 %v1070, 0.0
          %v1103 = vmax.f32 %v1071, 0.0
          %v1104 = vmax.f32 %v1072, 0.0
          %v1105 = vmax.f32 %v1073, 0.0
          %v1106 = vmax.f32 %v1074, 0.0
          %v1107 = vmax.f32 %v1075, 0.0
          %v1108 = vmax.f32 %v1076, 0.0
          %v1109 = vmax.f32 %v1077, 0.0
          %v1110 = vmax.f32 %v1078, 0.0
          %v1111 = vmax.f32 %v1079, 0.0
          %v1112 = vmax.f32 %v1080, 0.0
          %v1113 = vmax.f32 %v1081, 0.0
          %v1114 = vmax.f32 %v1082, 0.0
          %v1115 = vmax.f32 %v1083, 0.0
          %v1116 = vmax.f32 %v1084, 0.0
          %v1117 = vmax.f32 %v1085, 0.0
          %v1118 = vmax.f32 %v1086, 0.0
          %v1119 = vmax.f32 %v1087, 0.0
          %v1120 = vmax.f32 %v1088, 0.0
          %v1121 = vmax.f32 %v1089, 0.0
          %v1122 = vmax.f32 %v1090, 0.0
          %v1123 = vmax.f32 %v1091, 0.0
          %v1124 = vmax.f32 %v1092, 0.0
          %v1125 = vmax.f32 %v1093, 0.0
          %v1126 = vmax.f32 %v1094, 0.0
          %v1127 = vmax.f32 %v1095, 0.0
          %v1128 = vmax.f32 %v1096, 0.0
          %v1129 = vmax.f32 %v1097, 0.0
          %v1130 = vmax.f32 %v1098, 0.0
          %v1131 = vmax.f32 %v1099, 0.0
          %v1132 = vmax.f32 %v1100, 0.0
          %v1133 = vmax.f32 %v1101, 0.0
          %v1134 = vpack.c.bf16 %v1103, %v1102
          %v1135 = vpack.c.bf16 %v1105, %v1104
          %v1136 = vpack.c.bf16 %v1107, %v1106
          %v1137 = vpack.c.bf16 %v1109, %v1108
          %v1138 = vpack.c.bf16 %v1111, %v1110
          %v1139 = vpack.c.bf16 %v1113, %v1112
          %v1140 = vpack.c.bf16 %v1115, %v1114
          %v1141 = vpack.c.bf16 %v1117, %v1116
          %v1142 = vpack.c.bf16 %v1119, %v1118
          %v1143 = vpack.c.bf16 %v1121, %v1120
          %v1144 = vpack.c.bf16 %v1123, %v1122
          %v1145 = vpack.c.bf16 %v1125, %v1124
          %v1146 = vpack.c.bf16 %v1127, %v1126
          %v1147 = vpack.c.bf16 %v1129, %v1128
          %v1148 = vpack.c.bf16 %v1131, %v1130
          %v1149 = vpack.c.bf16 %v1133, %v1132
          %v1166 = vunpack.c.l.b16 %v1134
          %v1167 = vunpack.c.h.b16 %v1134
          %v1168 = vunpack.c.l.b16 %v1135
          %v1169 = vunpack.c.h.b16 %v1135
          %v1170 = vunpack.c.l.b16 %v1136
          %v1171 = vunpack.c.h.b16 %v1136
          %v1172 = vunpack.c.l.b16 %v1137
          %v1173 = vunpack.c.h.b16 %v1137
          %v1174 = vunpack.c.l.b16 %v1138
          %v1175 = vunpack.c.h.b16 %v1138
          %v1176 = vunpack.c.l.b16 %v1139
          %v1177 = vunpack.c.h.b16 %v1139
          %v1178 = vunpack.c.l.b16 %v1140
          %v1179 = vunpack.c.h.b16 %v1140
          %v1180 = vunpack.c.l.b16 %v1141
          %v1181 = vunpack.c.h.b16 %v1141
          %v1182 = vunpack.c.l.b16 %v1142
          %v1183 = vunpack.c.h.b16 %v1142
          %v1184 = vunpack.c.l.b16 %v1143
          %v1185 = vunpack.c.h.b16 %v1143
          %v1186 = vunpack.c.l.b16 %v1144
          %v1187 = vunpack.c.h.b16 %v1144
          %v1188 = vunpack.c.l.b16 %v1145
          %v1189 = vunpack.c.h.b16 %v1145
          %v1190 = vunpack.c.l.b16 %v1146
          %v1191 = vunpack.c.h.b16 %v1146
          %v1192 = vunpack.c.l.b16 %v1147
          %v1193 = vunpack.c.h.b16 %v1147
          %v1194 = vunpack.c.l.b16 %v1148
          %v1195 = vunpack.c.h.b16 %v1148
          %v1196 = vunpack.c.l.b16 %v1149
          %v1197 = vunpack.c.h.b16 %v1149
          %v1198 = vpack.c.b16 %v1166, %v1166
          %v1199 = vpack.c.b16 %v1167, %v1167
          %v1200 = vpack.c.b16 %v1168, %v1168
          %v1201 = vpack.c.b16 %v1169, %v1169
          %v1202 = vpack.c.b16 %v1170, %v1170
          %v1203 = vpack.c.b16 %v1171, %v1171
          %v1204 = vpack.c.b16 %v1172, %v1172
          %v1205 = vpack.c.b16 %v1173, %v1173
          %v1206 = vpack.c.b16 %v1174, %v1174
          %v1207 = vpack.c.b16 %v1175, %v1175
          %v1208 = vpack.c.b16 %v1176, %v1176
          %v1209 = vpack.c.b16 %v1177, %v1177
          %v1210 = vpack.c.b16 %v1178, %v1178
          %v1211 = vpack.c.b16 %v1179, %v1179
          %v1212 = vpack.c.b16 %v1180, %v1180
          %v1213 = vpack.c.b16 %v1181, %v1181
          %v1214 = vpack.c.b16 %v1182, %v1182
          %v1215 = vpack.c.b16 %v1183, %v1183
          %v1216 = vpack.c.b16 %v1184, %v1184
          %v1217 = vpack.c.b16 %v1185, %v1185
          %v1218 = vpack.c.b16 %v1186, %v1186
          %v1219 = vpack.c.b16 %v1187, %v1187
          %v1220 = vpack.c.b16 %v1188, %v1188
          %v1221 = vpack.c.b16 %v1189, %v1189
          %v1222 = vpack.c.b16 %v1190, %v1190
          %v1223 = vpack.c.b16 %v1191, %v1191
          %v1224 = vpack.c.b16 %v1192, %v1192
          %v1225 = vpack.c.b16 %v1193, %v1193
          %v1226 = vpack.c.b16 %v1194, %v1194
          %v1227 = vpack.c.b16 %v1195, %v1195
          %v1228 = vpack.c.b16 %v1196, %v1196
          %v1229 = vpack.c.b16 %v1197, %v1197
          %1262 = vst [vmem:[%s411] sm:$0xf] %v1198
          %1263 = vst [vmem:[%s411 + $0x4] sm:$0xf] %v1199
          %1264 = vst [vmem:[%s411 + $0x8] sm:$0xf] %v1200
          %1265 = vst [vmem:[%s411 + $0xc] sm:$0xf] %v1201
          %1266 = vst [vmem:[%s411 + $0x10] sm:$0xf] %v1202
          %1267 = vst [vmem:[%s411 + $0x14] sm:$0xf] %v1203
          %1268 = vst [vmem:[%s411 + $0x18] sm:$0xf] %v1204
          %1269 = vst [vmem:[%s411 + $0x1c] sm:$0xf] %v1205
          %1270 = vst [vmem:[%s411 + $0x20] sm:$0xf] %v1206
          %1271 = vst [vmem:[%s411 + $0x24] sm:$0xf] %v1207
          %1272 = vst [vmem:[%s411 + $0x28] sm:$0xf] %v1208
          %1273 = vst [vmem:[%s411 + $0x2c] sm:$0xf] %v1209
          %1274 = vst [vmem:[%s411 + $0x30] sm:$0xf] %v1210
          %1275 = vst [vmem:[%s411 + $0x34] sm:$0xf] %v1211
          %1276 = vst [vmem:[%s411 + $0x38] sm:$0xf] %v1212
          %1277 = vst [vmem:[%s411 + $0x3c] sm:$0xf] %v1213
          %1278 = vst [vmem:[%s411 + $0x40] sm:$0xf] %v1214
          %1279 = vst [vmem:[%s411 + $0x44] sm:$0xf] %v1215
          %1280 = vst [vmem:[%s411 + $0x48] sm:$0xf] %v1216
          %1281 = vst [vmem:[%s411 + $0x4c] sm:$0xf] %v1217
          %1282 = vst [vmem:[%s411 + $0x50] sm:$0xf] %v1218
          %1283 = vst [vmem:[%s411 + $0x54] sm:$0xf] %v1219
          %1284 = vst [vmem:[%s411 + $0x58] sm:$0xf] %v1220
          %1285 = vst [vmem:[%s411 + $0x5c] sm:$0xf] %v1221
          %1286 = vst [vmem:[%s411 + $0x60] sm:$0xf] %v1222
          %1287 = vst [vmem:[%s411 + $0x64] sm:$0xf] %v1223
          %1288 = vst [vmem:[%s411 + $0x68] sm:$0xf] %v1224
          %1289 = vst [vmem:[%s411 + $0x6c] sm:$0xf] %v1225
          %1290 = vst [vmem:[%s411 + $0x70] sm:$0xf] %v1226
          %1291 = vst [vmem:[%s411 + $0x74] sm:$0xf] %v1227
          %1292 = vst [vmem:[%s411 + $0x78] sm:$0xf] %v1228
          %1293 = vst [vmem:[%s411 + $0x7c] sm:$0xf] %v1229
        $region78: #{_lambda_.11} parent=65 // pred_fallthru
          _
        %s1294 = smul.u32 32, %s19
        %p1295 = scmp.lt.s32.totalorder %s1294, 31
        %s1296 = scalar_select %p1295, %s1294, 31
        %p1297 = scmp.lt.s32.totalorder %s20, 0
        %s1298 = scalar_select %p1297, %s20, 0
        %s1299 = sadd.s32 %s1298, %s1296
        %s1300 = smul.addr %s1299, 4
        %s1301 = scalar_lea.vmem %s3, %s1300
        // Predicated region
        $region79: #{_lambda_.11} parent=65 // pred_check
          %p1302 = pneg %p135
        $region80: #{_lambda_.11} parent=65 // pred_check_branch
          %1304 = sbr.rel (%p1302) target = $region82
        $region81: #{_lambda_.11} parent=65 // pred_region
          %s1305 = smul.u32 32, %s19
        $region82: #{_lambda_.11} parent=65 // pred_fallthru
          _
        // Predicated region
        $region83: #{_lambda_.11} parent=65 // pred_check
          %p1306 = pneg %p135
        $region84: #{_lambda_.11} parent=65 // pred_check_branch
          %1308 = sbr.rel (%p1306) target = $region86
        $region85: #{_lambda_.11} parent=65 // pred_region
          %s1309 = smul.u32 32, %s19
          %p1310 = scmp.lt.s32.totalorder %s1309, 31
          %s1311 = scalar_select %p1310, %s1309, 31
          %p1312 = scmp.lt.s32.totalorder %s20, 0
          %s1313 = scalar_select %p1312, %s20, 0
          %s1314 = sadd.s32 %s1313, %s1311
          %s1315 = smul.addr %s1314, 4
          %s1316 = scalar_lea.vmem %s3, %s1315
        $region86: #{_lambda_.11} parent=65 // pred_fallthru
          _
      $region66: #{_lambda_.11} parent=5 // pred_fallthru
        _
      %p1317 = scmp.le.s32.totalorder 2, %s9
      // Predicated region
      $region87: #{_lambda_.11} parent=5 // pred_check
        %p1318 = pneg %p1317
      $region88: #{_lambda_.11} parent=5 // pred_check_branch
        %1320 = sbr.rel (%p1318) target = $region90
      $region89: #{_lambda_.11} parent=5 // pred_region
        %s1321 = ssub.s32 %s9, 2
      $region90: #{_lambda_.11} parent=5 // pred_fallthru
        _
    $region6: #{_lambda_.11} parent=1 // loop_footer
      %s13 = sadd.s32 1, %s9
    $region7: #{_lambda_.11} parent=1 // loop_footer_branch
      %8 = sbr.rel target = $region3
    $region8: #{_lambda_.11} parent=1 // loop_exit
      _

// kernel: _lambda_.12
$region0: #{_lambda_.12}
  #allocation0 [shape = 'u32[]', space=smem, size = 0x4, offset = 0x4, fixed_abs, tag = 'smem constant byte address 0x4 - core index']
  #allocation1 [shape = 'u32[144,128]{1,0:T(1,128)}', space=vmem, size = 0x12000, scoped, tag = 'internal scratch']
  %s0 = inlined_call_operand.vmem [shape: bf16[6,2,3,2,3,256], index: 0, kind: input, shape index: {}]
  %s1 = inlined_call_operand.vmem [shape: bf16[6,3,3,128], index: 1, kind: output, shape index: {}]
  %s2 = sld [smem:[#allocation0]]
  $region14: #{_lambda_.12} parent=0
    _
  %s4 = ssub.s32 1, %s2
  %s5 = scalar_select 0, %s4, %s2
  // Predicated region
  $region2: #{_lambda_.12} parent=0 // pred_check
    _
  $region3: #{_lambda_.12} parent=0 // pred_check_branch
    %7 = sbr.rel (0) target = $region5
  $region4: #{_lambda_.12} parent=0 // pred_region
    _
  $region5: #{_lambda_.12} parent=0 // pred_fallthru
    _
  %v8 = vld [vmem:[%s0] sm:$0xf]
  %v9 = vld [vmem:[%s0 + $0x4] sm:$0xf]
  %v10 = vld [vmem:[%s0 + $0x8] sm:$0xf]
  %v11 = vld [vmem:[%s0 + $0xc] sm:$0xf]
  %v12 = vld [vmem:[%s0 + $0x10] sm:$0xf]
  %v13 = vld [vmem:[%s0 + $0x14] sm:$0xf]
  %v14 = vld [vmem:[%s0 + $0x18] sm:$0xf]
  %v15 = vld [vmem:[%s0 + $0x1c] sm:$0xf]
  %v16 = vld [vmem:[%s0 + $0x20] sm:$0xf]
  %v17 = vld [vmem:[%s0 + $0x24] sm:$0xf]
  %v18 = vld [vmem:[%s0 + $0x28] sm:$0xf]
  %v19 = vld [vmem:[%s0 + $0x2c] sm:$0xf]
  %v20 = vld [vmem:[%s0 + $0x30] sm:$0xf]
  %v21 = vld [vmem:[%s0 + $0x34] sm:$0xf]
  %v22 = vld [vmem:[%s0 + $0x38] sm:$0xf]
  %v23 = vld [vmem:[%s0 + $0x3c] sm:$0xf]
  %v24 = vld [vmem:[%s0 + $0x40] sm:$0xf]
  %v25 = vld [vmem:[%s0 + $0x44] sm:$0xf]
  %v26 = vld [vmem:[%s0 + $0x48] sm:$0xf]
  %v27 = vld [vmem:[%s0 + $0x4c] sm:$0xf]
  %v28 = vld [vmem:[%s0 + $0x50] sm:$0xf]
  %v29 = vld [vmem:[%s0 + $0x54] sm:$0xf]
  %v30 = vld [vmem:[%s0 + $0x58] sm:$0xf]
  %v31 = vld [vmem:[%s0 + $0x5c] sm:$0xf]
  %v32 = vld [vmem:[%s0 + $0x60] sm:$0xf]
  %v33 = vld [vmem:[%s0 + $0x64] sm:$0xf]
  %v34 = vld [vmem:[%s0 + $0x68] sm:$0xf]
  %v35 = vld [vmem:[%s0 + $0x6c] sm:$0xf]
  %v36 = vld [vmem:[%s0 + $0x70] sm:$0xf]
  %v37 = vld [vmem:[%s0 + $0x74] sm:$0xf]
  %v38 = vld [vmem:[%s0 + $0x78] sm:$0xf]
  %v39 = vld [vmem:[%s0 + $0x7c] sm:$0xf]
  %v40 = vld [vmem:[%s0 + $0x80] sm:$0xf]
  %v41 = vld [vmem:[%s0 + $0x84] sm:$0xf]
  %v42 = vld [vmem:[%s0 + $0x88] sm:$0xf]
  %v43 = vld [vmem:[%s0 + $0x8c] sm:$0xf]
  %v44 = vld [vmem:[%s0 + $0x90] sm:$0xf]
  %v45 = vld [vmem:[%s0 + $0x94] sm:$0xf]
  %v46 = vld [vmem:[%s0 + $0x98] sm:$0xf]
  %v47 = vld [vmem:[%s0 + $0x9c] sm:$0xf]
  %v48 = vld [vmem:[%s0 + $0xa0] sm:$0xf]
  %v49 = vld [vmem:[%s0 + $0xa4] sm:$0xf]
  %v50 = vld [vmem:[%s0 + $0xa8] sm:$0xf]
  %v51 = vld [vmem:[%s0 + $0xac] sm:$0xf]
  %v52 = vld [vmem:[%s0 + $0xb0] sm:$0xf]
  %v53 = vld [vmem:[%s0 + $0xb4] sm:$0xf]
  %v54 = vld [vmem:[%s0 + $0xb8] sm:$0xf]
  %v55 = vld [vmem:[%s0 + $0xbc] sm:$0xf]
  %v56 = vld [vmem:[%s0 + $0xc0] sm:$0xf]
  %v57 = vld [vmem:[%s0 + $0xc4] sm:$0xf]
  %v58 = vld [vmem:[%s0 + $0xc8] sm:$0xf]
  %v59 = vld [vmem:[%s0 + $0xcc] sm:$0xf]
  %v60 = vld [vmem:[%s0 + $0xd0] sm:$0xf]
  %v61 = vld [vmem:[%s0 + $0xd4] sm:$0xf]
  %v62 = vld [vmem:[%s0 + $0xd8] sm:$0xf]
  %v63 = vld [vmem:[%s0 + $0xdc] sm:$0xf]
  %v64 = vld [vmem:[%s0 + $0xe0] sm:$0xf]
  %v65 = vld [vmem:[%s0 + $0xe4] sm:$0xf]
  %v66 = vld [vmem:[%s0 + $0xe8] sm:$0xf]
  %v67 = vld [vmem:[%s0 + $0xec] sm:$0xf]
  %v68 = vld [vmem:[%s0 + $0xf0] sm:$0xf]
  %v69 = vld [vmem:[%s0 + $0xf4] sm:$0xf]
  %v70 = vld [vmem:[%s0 + $0xf8] sm:$0xf]
  %v71 = vld [vmem:[%s0 + $0xfc] sm:$0xf]
  %v72 = vld [vmem:[%s0 + $0x100] sm:$0xf]
  %v73 = vld [vmem:[%s0 + $0x104] sm:$0xf]
  %v74 = vld [vmem:[%s0 + $0x108] sm:$0xf]
  %v75 = vld [vmem:[%s0 + $0x10c] sm:$0xf]
  %v76 = vld [vmem:[%s0 + $0x110] sm:$0xf]
  %v77 = vld [vmem:[%s0 + $0x114] sm:$0xf]
  %v78 = vld [vmem:[%s0 + $0x118] sm:$0xf]
  %v79 = vld [vmem:[%s0 + $0x11c] sm:$0xf]
  %v80 = vmax.bf16 %v8, %v14
  %v81 = vmax.bf16 %v9, %v15
  %v82 = vmax.bf16 %v10, %v16
  %v83 = vmax.bf16 %v11, %v17
  %v84 = vmax.bf16 %v12, %v18
  %v85 = vmax.bf16 %v13, %v19
  %v86 = vmax.bf16 %v20, %v26
  %v87 = vmax.bf16 %v21, %v27
  %v88 = vmax.bf16 %v22, %v28
  %v89 = vmax.bf16 %v23, %v29
  %v90 = vmax.bf16 %v24, %v30
  %v91 = vmax.bf16 %v25, %v31
  %v92 = vmax.bf16 %v32, %v38
  %v93 = vmax.bf16 %v33, %v39
  %v94 = vmax.bf16 %v34, %v40
  %v95 = vmax.bf16 %v35, %v41
  %v96 = vmax.bf16 %v36, %v42
  %v97 = vmax.bf16 %v37, %v43
  %v98 = vmax.bf16 %v44, %v50
  %v99 = vmax.bf16 %v45, %v51
  %v100 = vmax.bf16 %v46, %v52
  %v101 = vmax.bf16 %v47, %v53
  %v102 = vmax.bf16 %v48, %v54
  %v103 = vmax.bf16 %v49, %v55
  %v104 = vmax.bf16 %v56, %v62
  %v105 = vmax.bf16 %v57, %v63
  %v106 = vmax.bf16 %v58, %v64
  %v107 = vmax.bf16 %v59, %v65
  %v108 = vmax.bf16 %v60, %v66
  %v109 = vmax.bf16 %v61, %v67
  %v110 = vmax.bf16 %v68, %v74
  %v111 = vmax.bf16 %v69, %v75
  %v112 = vmax.bf16 %v70, %v76
  %v113 = vmax.bf16 %v71, %v77
  %v114 = vmax.bf16 %v72, %v78
  %v115 = vmax.bf16 %v73, %v79
  %v116 = vmax.bf16 %v80, %v81
  %v117 = vmax.bf16 %v82, %v83
  %v118 = vmax.bf16 %v84, %v85
  %v119 = vmax.bf16 %v86, %v87
  %v120 = vmax.bf16 %v88, %v89
  %v121 = vmax.bf16 %v90, %v91
  %v122 = vmax.bf16 %v92, %v93
  %v123 = vmax.bf16 %v94, %v95
  %v124 = vmax.bf16 %v96, %v97
  %v125 = vmax.bf16 %v98, %v99
  %v126 = vmax.bf16 %v100, %v101
  %v127 = vmax.bf16 %v102, %v103
  %v128 = vmax.bf16 %v104, %v105
  %v129 = vmax.bf16 %v106, %v107
  %v130 = vmax.bf16 %v108, %v109
  %v131 = vmax.bf16 %v110, %v111
  %v132 = vmax.bf16 %v112, %v113
  %v133 = vmax.bf16 %v114, %v115
  %v152 = vrot.slane %v116, 2
  %v153 = vrot.slane %v117, 2
  %v154 = vrot.slane %v118, 2
  %v155 = vrot.slane %v119, 2
  %v156 = vrot.slane %v120, 2
  %v157 = vrot.slane %v121, 2
  %v158 = vrot.slane %v122, 2
  %v159 = vrot.slane %v123, 2
  %v160 = vrot.slane %v124, 2
  %v161 = vrot.slane %v125, 2
  %v162 = vrot.slane %v126, 2
  %v163 = vrot.slane %v127, 2
  %v164 = vrot.slane %v128, 2
  %v165 = vrot.slane %v129, 2
  %v166 = vrot.slane %v130, 2
  %v167 = vrot.slane %v131, 2
  %v168 = vrot.slane %v132, 2
  %v169 = vrot.slane %v133, 2
  %v188 = vmax.bf16 %v116, %v152
  %v189 = vmax.bf16 %v117, %v153
  %v190 = vmax.bf16 %v118, %v154
  %v191 = vmax.bf16 %v119, %v155
  %v192 = vmax.bf16 %v120, %v156
  %v193 = vmax.bf16 %v121, %v157
  %v194 = vmax.bf16 %v122, %v158
  %v195 = vmax.bf16 %v123, %v159
  %v196 = vmax.bf16 %v124, %v160
  %v197 = vmax.bf16 %v125, %v161
  %v198 = vmax.bf16 %v126, %v162
  %v199 = vmax.bf16 %v127, %v163
  %v200 = vmax.bf16 %v128, %v164
  %v201 = vmax.bf16 %v129, %v165
  %v202 = vmax.bf16 %v130, %v166
  %v203 = vmax.bf16 %v131, %v167
  %v204 = vmax.bf16 %v132, %v168
  %v205 = vmax.bf16 %v133, %v169
  %vm206 = vcmask 1041408
  %vm207 = vsmask.f32 1280
  %vm208 = vmand %vm206, %vm207
  %v209 = vld [vmem:[%s1] sm:$0x3]
  %v210 = vsel %vm208, %v188, %v209
  %211 = vst [vmem:[%s1] sm:$0x3] %v210
  %v212 = vld [vmem:[%s1 + $0x2] sm:$0x3]
  %v213 = vsel %vm208, %v189, %v212
  %214 = vst [vmem:[%s1 + $0x2] sm:$0x3] %v213
  %v215 = vld [vmem:[%s1 + $0x4] sm:$0x3]
  %v216 = vsel %vm208, %v190, %v215
  %217 = vst [vmem:[%s1 + $0x4] sm:$0x3] %v216
  %v218 = vld [vmem:[%s1 + $0x6] sm:$0x3]
  %v219 = vsel %vm208, %v191, %v218
  %220 = vst [vmem:[%s1 + $0x6] sm:$0x3] %v219
  %v221 = vld [vmem:[%s1 + $0x8] sm:$0x3]
  %v222 = vsel %vm208, %v192, %v221
  %223 = vst [vmem:[%s1 + $0x8] sm:$0x3] %v222
  %v224 = vld [vmem:[%s1 + $0xa] sm:$0x3]
  %v225 = vsel %vm208, %v193, %v224
  %226 = vst [vmem:[%s1 + $0xa] sm:$0x3] %v225
  %v227 = vld [vmem:[%s1 + $0xc] sm:$0x3]
  %v228 = vsel %vm208, %v194, %v227
  %229 = vst [vmem:[%s1 + $0xc] sm:$0x3] %v228
  %v230 = vld [vmem:[%s1 + $0xe] sm:$0x3]
  %v231 = vsel %vm208, %v195, %v230
  %232 = vst [vmem:[%s1 + $0xe] sm:$0x3] %v231
  %v233 = vld [vmem:[%s1 + $0x10] sm:$0x3]
  %v234 = vsel %vm208, %v196, %v233
  %235 = vst [vmem:[%s1 + $0x10] sm:$0x3] %v234
  %v236 = vld [vmem:[%s1 + $0x12] sm:$0x3]
  %v237 = vsel %vm208, %v197, %v236
  %238 = vst [vmem:[%s1 + $0x12] sm:$0x3] %v237
  %v239 = vld [vmem:[%s1 + $0x14] sm:$0x3]
  %v240 = vsel %vm208, %v198, %v239
  %241 = vst [vmem:[%s1 + $0x14] sm:$0x3] %v240
  %v242 = vld [vmem:[%s1 + $0x16] sm:$0x3]
  %v243 = vsel %vm208, %v199, %v242
  %244 = vst [vmem:[%s1 + $0x16] sm:$0x3] %v243
  %v245 = vld [vmem:[%s1 + $0x18] sm:$0x3]
  %v246 = vsel %vm208, %v200, %v245
  %247 = vst [vmem:[%s1 + $0x18] sm:$0x3] %v246
  %v248 = vld [vmem:[%s1 + $0x1a] sm:$0x3]
  %v249 = vsel %vm208, %v201, %v248
  %250 = vst [vmem:[%s1 + $0x1a] sm:$0x3] %v249
  %v251 = vld [vmem:[%s1 + $0x1c] sm:$0x3]
  %v252 = vsel %vm208, %v202, %v251
  %253 = vst [vmem:[%s1 + $0x1c] sm:$0x3] %v252
  %v254 = vld [vmem:[%s1 + $0x1e] sm:$0x3]
  %v255 = vsel %vm208, %v203, %v254
  %256 = vst [vmem:[%s1 + $0x1e] sm:$0x3] %v255
  %v257 = vld [vmem:[%s1 + $0x20] sm:$0x3]
  %v258 = vsel %vm208, %v204, %v257
  %259 = vst [vmem:[%s1 + $0x20] sm:$0x3] %v258
  %v260 = vld [vmem:[%s1 + $0x22] sm:$0x3]
  %v261 = vsel %vm208, %v205, %v260
  %262 = vst [vmem:[%s1 + $0x22] sm:$0x3] %v261
  // Predicated region
  $region6: #{_lambda_.12} parent=0 // pred_check
    _
  $region7: #{_lambda_.12} parent=0 // pred_check_branch
    %264 = sbr.rel (0) target = $region9
  $region8: #{_lambda_.12} parent=0 // pred_region
    _
  $region9: #{_lambda_.12} parent=0 // pred_fallthru
    _
  // Predicated region
  $region10: #{_lambda_.12} parent=0 // pred_check
    _
  $region11: #{_lambda_.12} parent=0 // pred_check_branch
    %266 = sbr.rel (0) target = $region13
  $region12: #{_lambda_.12} parent=0 // pred_region
    _
  $region13: #{_lambda_.12} parent=0 // pred_fallthru
    _

// kernel: _lambda_.13
$region0: #{_lambda_.13}
  #allocation0 [shape = 'u32[]', space=smem, size = 0x4, offset = 0x4, fixed_abs, tag = 'smem constant byte address 0x4 - core index']
  #allocation1 [shape = 'u32[144,128]{1,0:T(1,128)}', space=vmem, size = 0x12000, scoped, tag = 'internal scratch']
  #allocation2 [shape = 'f32[56,256]{1,0:T(8,128)}', space=vmem, size = 0xe000, scoped, tag = 'scratch operand']
  %s0 = inlined_call_operand.vmem [shape: bf16[56,3456], index: 0, kind: input, shape index: {}]
  %s1 = inlined_call_operand.vmem [shape: bf16[3456,256], index: 1, kind: input, shape index: {}]
  %s2 = inlined_call_operand.vmem [shape: f32[1,256], index: 2, kind: input, shape index: {}]
  %s3 = inlined_call_operand.vmem [shape: bf16[56,256], index: 3, kind: output, shape index: {}]
  %s4 = sld [smem:[#allocation0]]
  $region94: #{_lambda_.13} parent=0
    _
  %s6 = ssub.s32 1, %s4
  %s7 = scalar_select 0, %s6, %s4
  $region1: #{_lambda_.13} parent=0
    #allocation3 [shape = 'u8[28672]{0}', space=vmem, size = 0x7000, scoped, tag = 'input window, operand 0']
    loop: start=0, step=1, limit=29
    $region2: #{_lambda_.13} parent=1 // loop_pre_header
      _
    $region3: #{_lambda_.13} parent=1 // loop_header
      %s9 = sphi 0, %s13
      %p10 = scmp.ge.s32.totalorder %s9, 29
      %s16 = sphi 0, %s35
      %s17 = sphi 0, %s31
      %s18 = sphi 0, %s27
      %s19 = sphi 0, %s16
      %s20 = sphi 0, %s17
      %s21 = sphi 0, %s18
      %s22 = sphi 0, %s19
      %s23 = sphi 0, %s20
      %s24 = sphi 0, %s21
      %s40 = sphi 0, %s42
      %s43 = sphi 0, %s40
      %s44 = sphi 0, %s43
      %s60 = sphi 0, %s44
      %s68 = sphi 0, %s70
      %s71 = sphi 0, %s68
      %s72 = sphi 0, %s71
      %s88 = sphi 0, %s72
      %s94 = sphi 0, %s96
      %s97 = sphi 0, %s94
      %s98 = sphi 0, %s97
      %s114 = sphi 0, %s98
      %s122 = sphi 0, %s124
      %s125 = sphi 0, %s122
      %s126 = sphi 0, %s125
      %s142 = sphi 0, %s126
    $region4: #{_lambda_.13} parent=1 // loop_header_branch
      %12 = sbr.rel (%p10) target = $region8
    $region5: #{_lambda_.13} parent=1 // loop_body
      %s14 = ssub.s32 %s9, 1
      %s15 = ssub.s32 %s9, 2
      %s25 = sadd.s32 1, %s18
      %p26 = scmp.ge.s32.totalorder %s25, 27
      %s27 = scalar_select %p26, 0, %s25
      %s28 = sadd.s32 1, %s17
      %s29 = scalar_select %p26, %s28, %s17
      %p30 = scmp.ge.s32.totalorder %s29, 1
      %s31 = scalar_select %p30, 0, %s29
      %s32 = sadd.s32 1, %s16
      %s33 = scalar_select %p30, %s32, %s16
      %p34 = scmp.ge.s32.totalorder %s33, 1
      %s35 = scalar_select %p34, 0, %s33
      %s36 = ssub.s32 %s16, %s35
      %s37 = ssub.s32 %s18, %s27
      %s38 = sor.u32 %s36, %s37
      %p39 = scmp.eq.s32.totalorder %s38, 0
      %s41 = sadd.s32 %s40, 1
      %s42 = scalar_select %p39, %s40, %s41
      %p45 = pneg %p39
      %p46 = scmp.eq.s32.totalorder %s9, 26
      %p47 = por %p45, %p46
      %p48 = scmp.ne.s32.totalorder %s40, %s43
      %p49 = scmp.eq.s32.totalorder %s9, 0
      %p50 = por %p48, %p49
      %p51 = scmp.ne.s32.totalorder %s40, %s43
      %p52 = scmp.eq.s32.totalorder %s14, 26
      %p53 = por %p51, %p52
      %p54 = scmp.ne.s32.totalorder %s43, %s44
      %p55 = scmp.eq.s32.totalorder %s14, 0
      %p56 = por %p54, %p55
      %p57 = scmp.ne.s32.totalorder %s43, %s44
      %p58 = scmp.eq.s32.totalorder %s15, 26
      %p59 = por %p57, %p58
      %p61 = scmp.ne.s32.totalorder %s44, %s60
      %p62 = scmp.eq.s32.totalorder %s15, 0
      %p63 = por %p61, %p62
      %s64 = ssub.s32 %s18, %s27
      %s65 = ssub.s32 %s17, %s31
      %s66 = sor.u32 %s64, %s65
      %p67 = scmp.eq.s32.totalorder %s66, 0
      %s69 = sadd.s32 %s68, 1
      %s70 = scalar_select %p67, %s68, %s69
      %p73 = pneg %p67
      %p74 = scmp.eq.s32.totalorder %s9, 26
      %p75 = por %p73, %p74
      %p76 = scmp.ne.s32.totalorder %s68, %s71
      %p77 = scmp.eq.s32.totalorder %s9, 0
      %p78 = por %p76, %p77
      %p79 = scmp.ne.s32.totalorder %s68, %s71
      %p80 = scmp.eq.s32.totalorder %s14, 26
      %p81 = por %p79, %p80
      %p82 = scmp.ne.s32.totalorder %s71, %s72
      %p83 = scmp.eq.s32.totalorder %s14, 0
      %p84 = por %p82, %p83
      %p85 = scmp.ne.s32.totalorder %s71, %s72
      %p86 = scmp.eq.s32.totalorder %s15, 26
      %p87 = por %p85, %p86
      %p89 = scmp.ne.s32.totalorder %s72, %s88
      %p90 = scmp.eq.s32.totalorder %s15, 0
      %p91 = por %p89, %p90
      %s92 = ssub.s32 %s17, %s31
      %p93 = scmp.eq.s32.totalorder %s92, 0
      %s95 = sadd.s32 %s94, 1
      %s96 = scalar_select %p93, %s94, %s95
      %p99 = pneg %p93
      %p100 = scmp.eq.s32.totalorder %s9, 26
      %p101 = por %p99, %p100
      %p102 = scmp.ne.s32.totalorder %s94, %s97
      %p103 = scmp.eq.s32.totalorder %s9, 0
      %p104 = por %p102, %p103
      %p105 = scmp.ne.s32.totalorder %s94, %s97
      %p106 = scmp.eq.s32.totalorder %s14, 26
      %p107 = por %p105, %p106
      %p108 = scmp.ne.s32.totalorder %s97, %s98
      %p109 = scmp.eq.s32.totalorder %s14, 0
      %p110 = por %p108, %p109
      %p111 = scmp.ne.s32.totalorder %s97, %s98
      %p112 = scmp.eq.s32.totalorder %s15, 26
      %p113 = por %p111, %p112
      %p115 = scmp.ne.s32.totalorder %s98, %s114
      %p116 = scmp.eq.s32.totalorder %s15, 0
      %p117 = por %p115, %p116
      %s118 = ssub.s32 %s16, %s35
      %s119 = ssub.s32 %s17, %s31
      %s120 = sor.u32 %s118, %s119
      %p121 = scmp.eq.s32.totalorder %s120, 0
      %s123 = sadd.s32 %s122, 1
      %s124 = scalar_select %p121, %s122, %s123
      %p127 = pneg %p121
      %p128 = scmp.eq.s32.totalorder %s9, 26
      %p129 = por %p127, %p128
      %p130 = scmp.ne.s32.totalorder %s122, %s125
      %p131 = scmp.eq.s32.totalorder %s9, 0
      %p132 = por %p130, %p131
      %p133 = scmp.ne.s32.totalorder %s122, %s125
      %p134 = scmp.eq.s32.totalorder %s14, 26
      %p135 = por %p133, %p134
      %p136 = scmp.ne.s32.totalorder %s125, %s126
      %p137 = scmp.eq.s32.totalorder %s14, 0
      %p138 = por %p136, %p137
      %p139 = scmp.ne.s32.totalorder %s125, %s126
      %p140 = scmp.eq.s32.totalorder %s15, 26
      %p141 = por %p139, %p140
      %p143 = scmp.ne.s32.totalorder %s126, %s142
      %p144 = scmp.eq.s32.totalorder %s15, 0
      %p145 = por %p143, %p144
      %p146 = scmp.le.s32.totalorder 1, %s9
      %p147 = scmp.lt.s32.totalorder %s9, 28
      %p148 = pnand %p146, %p147
      %p149 = pneg %p148
      // Predicated region
      $region9: #{_lambda_.13} parent=5 // pred_check
        _
      $region10: #{_lambda_.13} parent=5 // pred_check_branch
        %151 = sbr.rel (%p148) target = $region12
      $region11: #{_lambda_.13} parent=5 // pred_region
        %s152 = ssub.s32 %s9, 1
        // Predicated region
        $region13: #{_lambda_.13} parent=11 // pred_check
          %p153 = pneg %p110
        $region14: #{_lambda_.13} parent=11 // pred_check_branch
          %155 = sbr.rel (%p153) target = $region16
        $region15: #{_lambda_.13} parent=11 // pred_region
          %s156 = smul.u32 2, %s20
          %p157 = scmp.lt.s32.totalorder %s156, 1
          %s158 = scalar_select %p157, %s156, 1
          %s159 = scalar_lea.vmem %s2, %s158
          %s160 = smul.u32 2, %s20
        $region16: #{_lambda_.13} parent=11 // pred_fallthru
          _
      $region12: #{_lambda_.13} parent=5 // pred_fallthru
        _
      %p161 = scmp.lt.s32.totalorder %s9, 27
      // Predicated region
      $region17: #{_lambda_.13} parent=5 // pred_check
        %p162 = pneg %p161
      $region18: #{_lambda_.13} parent=5 // pred_check_branch
        %164 = sbr.rel (%p162) target = $region20
      $region19: #{_lambda_.13} parent=5 // pred_region
        // Predicated region
        $region21: #{_lambda_.13} parent=19 // pred_check
          %p165 = pneg %p50
        $region22: #{_lambda_.13} parent=19 // pred_check_branch
          %167 = sbr.rel (%p165) target = $region24
        $region23: #{_lambda_.13} parent=19 // pred_region
          %s168 = sand.u32 %s40, 1
          %s169 = sand.u32 %s40, 1
          %s170 = smul.addr %s169, 28
          %s171 = scalar_lea.vmem [#allocation3], %s170
          %s172 = smul.u32 7, %s16
          %s173 = smul.addr %s172, 27
          %s174 = sadd.s32 %s18, %s173
          %s175 = smul.addr %s174, 4
          %s176 = scalar_lea.vmem %s0, %s175
          // Predicated region
          $region25: #{_lambda_.13} parent=23 // pred_check
            _
          $region26: #{_lambda_.13} parent=23 // pred_check_branch
            %178 = sbr.rel (0) target = $region28
          $region27: #{_lambda_.13} parent=23 // pred_region
            // Predicated region
            $region29: #{_lambda_.13} parent=27 // pred_check
              _
            $region30: #{_lambda_.13} parent=27 // pred_check_branch
              %180 = sbr.rel target = $region32
            $region31: #{_lambda_.13} parent=27 // pred_region
              // Predicated region
              $region44: #{_lambda_.13} parent=31 // pred_check
                _
              $region45: #{_lambda_.13} parent=31 // pred_check_branch
                %208 = sbr.rel (0) target = $region47
              $region46: #{_lambda_.13} parent=31 // pred_region
                loop: start=0, step=1, limit=1
                $region48: #{_lambda_.13} parent=46 // loop_pre_header
                  _
                $region49: #{_lambda_.13} parent=46 // loop_header
                  %s210 = sphi 0, %s214
                  %p211 = scmp.ge.s32.totalorder %s210, 1
                  %s215 = sphi %s176, %s176
                  %s216 = sphi %s171, %s171
                $region50: #{_lambda_.13} parent=46 // loop_header_branch
                  %213 = sbr.rel (%p211) target = $region54
                $region51: #{_lambda_.13} parent=46 // loop_body
                  _
                $region52: #{_lambda_.13} parent=46 // loop_footer
                  %s214 = sadd.s32 1, %s210
                $region53: #{_lambda_.13} parent=46 // loop_footer_branch
                  %209 = sbr.rel target = $region49
                $region54: #{_lambda_.13} parent=46 // loop_exit
                  _
                %s218 = ssub.s32 16, 1
                loop: start=0, step=1, limit=1
                $region55: #{_lambda_.13} parent=46 // loop_pre_header
                  _
                $region56: #{_lambda_.13} parent=46 // loop_header
                  %s220 = sphi 0, %s224
                  %p221 = scmp.ge.s32.totalorder %s220, 1
                  %s225 = sphi %s176, %s176
                  %s226 = sphi %s171, %s171
                $region57: #{_lambda_.13} parent=46 // loop_header_branch
                  %223 = sbr.rel (%p221) target = $region61
                $region58: #{_lambda_.13} parent=46 // loop_body
                  %v227 = vld [vmem:[%s225] sm:%s218]
                  %228 = vst [vmem:[%s226] sm:%s218] %v227
                  %v229 = vld [vmem:[%s225 + $0x6c] sm:%s218]
                  %230 = vst [vmem:[%s226 + $0x4] sm:%s218] %v229
                  %v231 = vld [vmem:[%s225 + $0xd8] sm:%s218]
                  %232 = vst [vmem:[%s226 + $0x8] sm:%s218] %v231
                  %v233 = vld [vmem:[%s225 + $0x144] sm:%s218]
                  %234 = vst [vmem:[%s226 + $0xc] sm:%s218] %v233
                  %v235 = vld [vmem:[%s225 + $0x1b0] sm:%s218]
                  %236 = vst [vmem:[%s226 + $0x10] sm:%s218] %v235
                  %v237 = vld [vmem:[%s225 + $0x21c] sm:%s218]
                  %238 = vst [vmem:[%s226 + $0x14] sm:%s218] %v237
                  %v239 = vld [vmem:[%s225 + $0x288] sm:%s218]
                  %240 = vst [vmem:[%s226 + $0x18] sm:%s218] %v239
                $region59: #{_lambda_.13} parent=46 // loop_footer
                  %s224 = sadd.s32 1, %s220
                $region60: #{_lambda_.13} parent=46 // loop_footer_branch
                  %219 = sbr.rel target = $region56
                $region61: #{_lambda_.13} parent=46 // loop_exit
                  _
              $region47: #{_lambda_.13} parent=31 // pred_fallthru
                _
            $region32: #{_lambda_.13} parent=27 // pred_fallthru
              _
            // Predicated region
            $region33: #{_lambda_.13} parent=27 // pred_check
              _
            $region34: #{_lambda_.13} parent=27 // pred_check_branch
              %182 = sbr.rel (0) target = $region36
            $region35: #{_lambda_.13} parent=27 // pred_region
              %s184 = ssub.s32 16, 1
              loop: start=0, step=1, limit=1
              $region37: #{_lambda_.13} parent=35 // loop_pre_header
                _
              $region38: #{_lambda_.13} parent=35 // loop_header
                %s186 = sphi 0, %s190
                %p187 = scmp.ge.s32.totalorder %s186, 1
                %s191 = sphi %s176, %s176
                %s192 = sphi %s171, %s171
              $region39: #{_lambda_.13} parent=35 // loop_header_branch
                %189 = sbr.rel (%p187) target = $region43
              $region40: #{_lambda_.13} parent=35 // loop_body
                %v193 = vld [vmem:[%s191] sm:%s184]
                %194 = vst [vmem:[%s192] sm:%s184] %v193
                %v195 = vld [vmem:[%s191 + $0x6c] sm:%s184]
                %196 = vst [vmem:[%s192 + $0x4] sm:%s184] %v195
                %v197 = vld [vmem:[%s191 + $0xd8] sm:%s184]
                %198 = vst [vmem:[%s192 + $0x8] sm:%s184] %v197
                %v199 = vld [vmem:[%s191 + $0x144] sm:%s184]
                %200 = vst [vmem:[%s192 + $0xc] sm:%s184] %v199
                %v201 = vld [vmem:[%s191 + $0x1b0] sm:%s184]
                %202 = vst [vmem:[%s192 + $0x10] sm:%s184] %v201
                %v203 = vld [vmem:[%s191 + $0x21c] sm:%s184]
                %204 = vst [vmem:[%s192 + $0x14] sm:%s184] %v203
                %v205 = vld [vmem:[%s191 + $0x288] sm:%s184]
                %206 = vst [vmem:[%s192 + $0x18] sm:%s184] %v205
              $region41: #{_lambda_.13} parent=35 // loop_footer
                %s190 = sadd.s32 1, %s186
              $region42: #{_lambda_.13} parent=35 // loop_footer_branch
                %185 = sbr.rel target = $region38
              $region43: #{_lambda_.13} parent=35 // loop_exit
                _
            $region36: #{_lambda_.13} parent=27 // pred_fallthru
              _
          $region28: #{_lambda_.13} parent=23 // pred_fallthru
            _
          %241 = vnop
        $region24: #{_lambda_.13} parent=19 // pred_fallthru
          _
        // Predicated region
        $region62: #{_lambda_.13} parent=19 // pred_check
          %p242 = pneg %p78
        $region63: #{_lambda_.13} parent=19 // pred_check_branch
          %244 = sbr.rel (%p242) target = $region65
        $region64: #{_lambda_.13} parent=19 // pred_region
          %s245 = smul.u32 16, %s18
          %s246 = smul.u32 2, %s17
          %p247 = scmp.lt.s32.totalorder %s245, 431
          %s248 = scalar_select %p247, %s245, 431
          %p249 = scmp.lt.s32.totalorder %s246, 1
          %s250 = scalar_select %p249, %s246, 1
          %s251 = smul.addr %s248, 2
          %s252 = sadd.s32 %s250, %s251
          %s253 = smul.addr %s252, 4
          %s254 = scalar_lea.vmem %s1, %s253
          %s255 = smul.u32 16, %s18
          %s256 = smul.u32 2, %s17
        $region65: #{_lambda_.13} parent=19 // pred_fallthru
          _
      $region20: #{_lambda_.13} parent=5 // pred_fallthru
        _
      %p257 = scmp.le.s32.totalorder 1, %s9
      %p258 = scmp.lt.s32.totalorder %s9, 28
      %p259 = pnand %p257, %p258
      %p260 = pneg %p259
      // Predicated region
      $region66: #{_lambda_.13} parent=5 // pred_check
        _
      $region67: #{_lambda_.13} parent=5 // pred_check_branch
        %262 = sbr.rel (%p259) target = $region69
      $region68: #{_lambda_.13} parent=5 // pred_region
        %s263 = ssub.s32 %s9, 1
        %s264 = sand.u32 %s43, 1
        %s265 = sand.u32 %s43, 1
        %s266 = smul.addr %s265, 28
        %s267 = scalar_lea.vmem [#allocation3], %s266
        // Predicated region
        $region70: #{_lambda_.13} parent=68 // pred_check
          %p268 = pneg %p56
        $region71: #{_lambda_.13} parent=68 // pred_check_branch
          %270 = sbr.rel (%p268) target = $region73
        $region72: #{_lambda_.13} parent=68 // pred_region
          _
        $region73: #{_lambda_.13} parent=68 // pred_fallthru
          _
        %s271 = sand.u32 %s43, 1
        %s272 = sand.u32 %s43, 1
        %s273 = smul.addr %s272, 28
        %s274 = scalar_lea.vmem [#allocation3], %s273
        %p275 = pneg %p56
        %p276 = pneg %p53
        %s277 = smul.u32 16, %s21
        %s278 = smul.u32 2, %s20
        %p279 = scmp.lt.s32.totalorder %s277, 431
        %s280 = scalar_select %p279, %s277, 431
        %p281 = scmp.lt.s32.totalorder %s278, 1
        %s282 = scalar_select %p281, %s278, 1
        %s283 = smul.addr %s280, 2
        %s284 = sadd.s32 %s282, %s283
        %s285 = smul.addr %s284, 4
        %s286 = scalar_lea.vmem %s1, %s285
        %p287 = pneg %p84
        %p288 = pneg %p81
        %s289 = smul.u32 2, %s20
        %p290 = scmp.lt.s32.totalorder %s289, 1
        %s291 = scalar_select %p290, %s289, 1
        %s292 = scalar_lea.vmem %s2, %s291
        %p293 = pneg %p110
        %p294 = pneg %p107
        %p295 = pneg %p138
        %p296 = pneg %p135
        %s297 = smul.u32 7, %s19
        %s298 = smul.u32 2, %s20
        %p299 = scmp.lt.s32.totalorder %s297, 6
        %s300 = scalar_select %p299, %s297, 6
        %p301 = scmp.lt.s32.totalorder %s298, 1
        %s302 = scalar_select %p301, %s298, 1
        %s303 = smul.addr %s300, 2
        %s304 = sadd.s32 %s302, %s303
        %s305 = smul.addr %s304, 4
        %s306 = scalar_lea.vmem %s3, %s305
        %s307 = smul.u32 7, %s19
        %s308 = smul.u32 16, %s21
        %s309 = smul.u32 2, %s20
        %p310 = scmp.lt.s32.totalorder %s308, 431
        %s311 = scalar_select %p310, %s308, 431
        %p312 = scmp.lt.s32.totalorder %s309, 1
        %s313 = scalar_select %p312, %s309, 1
        %s314 = smul.addr %s311, 2
        %s315 = sadd.s32 %s313, %s314
        %s316 = smul.addr %s315, 4
        %s317 = scalar_lea.vmem %s1, %s316
        %s318 = smul.u32 16, %s21
        %s319 = smul.u32 2, %s20
        %s320 = smul.u32 2, %s20
        %p321 = scmp.lt.s32.totalorder %s320, 1
        %s322 = scalar_select %p321, %s320, 1
        %s323 = scalar_lea.vmem %s2, %s322
        %s324 = smul.u32 2, %s20
        %s325 = smul.u32 7, %s19
        %s326 = smul.u32 2, %s20
        %p327 = scmp.lt.s32.totalorder %s325, 6
        %s328 = scalar_select %p327, %s325, 6
        %p329 = scmp.lt.s32.totalorder %s326, 1
        %s330 = scalar_select %p329, %s326, 1
        %s331 = smul.addr %s328, 2
        %s332 = sadd.s32 %s330, %s331
        %s333 = smul.addr %s332, 4
        %s334 = scalar_lea.vmem %s3, %s333
        %s335 = smul.u32 7, %s19
        %s336 = smul.u32 2, %s20
        %p338 = scmp.eq.s32.totalorder %s21, 0
        // Predicated region
        $region74: #{_lambda_.13} parent=68 // pred_check
          %p339 = pneg %p338
        $region75: #{_lambda_.13} parent=68 // pred_check_branch
          %341 = sbr.rel (%p339) target = $region77
        $region76: #{_lambda_.13} parent=68 // pred_region
          %342 = vst [vmem:[#allocation2] sm:$0xff] 0.0
          %343 = vst [vmem:[#allocation2 + $0x8] sm:$0xff] 0.0
          %344 = vst [vmem:[#allocation2 + $0x10] sm:$0xff] 0.0
          %345 = vst [vmem:[#allocation2 + $0x18] sm:$0xff] 0.0
          %346 = vst [vmem:[#allocation2 + $0x20] sm:$0xff] 0.0
          %347 = vst [vmem:[#allocation2 + $0x28] sm:$0xff] 0.0
          %348 = vst [vmem:[#allocation2 + $0x30] sm:$0xff] 0.0
          %349 = vst [vmem:[#allocation2 + $0x38] sm:$0xff] 0.0
          %350 = vst [vmem:[#allocation2 + $0x40] sm:$0xff] 0.0
          %351 = vst [vmem:[#allocation2 + $0x48] sm:$0xff] 0.0
          %352 = vst [vmem:[#allocation2 + $0x50] sm:$0xff] 0.0
          %353 = vst [vmem:[#allocation2 + $0x58] sm:$0xff] 0.0
          %354 = vst [vmem:[#allocation2 + $0x60] sm:$0xff] 0.0
          %355 = vst [vmem:[#allocation2 + $0x68] sm:$0xff] 0.0
        $region77: #{_lambda_.13} parent=68 // pred_fallthru
          _
        %v356 = vld [vmem:[#allocation2] sm:$0xff]
        %v357 = vld [vmem:[#allocation2 + $0x8] sm:$0xff]
        %v358 = vld [vmem:[#allocation2 + $0x10] sm:$0xff]
        %v359 = vld [vmem:[#allocation2 + $0x18] sm:$0xff]
        %v360 = vld [vmem:[#allocation2 + $0x20] sm:$0xff]
        %v361 = vld [vmem:[#allocation2 + $0x28] sm:$0xff]
        %v362 = vld [vmem:[#allocation2 + $0x30] sm:$0xff]
        %v363 = vld [vmem:[#allocation2 + $0x38] sm:$0xff]
        %v364 = vld [vmem:[#allocation2 + $0x40] sm:$0xff]
        %v365 = vld [vmem:[#allocation2 + $0x48] sm:$0xff]
        %v366 = vld [vmem:[#allocation2 + $0x50] sm:$0xff]
        %v367 = vld [vmem:[#allocation2 + $0x58] sm:$0xff]
        %v368 = vld [vmem:[#allocation2 + $0x60] sm:$0xff]
        %v369 = vld [vmem:[#allocation2 + $0x68] sm:$0xff]
        %v370 = vld [vmem:[%s267] sm:$0xf]
        %v371 = vld [vmem:[%s267 + $0x4] sm:$0xf]
        %v372 = vld [vmem:[%s267 + $0x8] sm:$0xf]
        %v373 = vld [vmem:[%s267 + $0xc] sm:$0xf]
        %v374 = vld [vmem:[%s267 + $0x10] sm:$0xf]
        %v375 = vld [vmem:[%s267 + $0x14] sm:$0xf]
        %v376 = vld [vmem:[%s267 + $0x18] sm:$0xf]
        %v377 = vld [vmem:[%s317] sm:$0xff]
        %v378 = vld [vmem:[%s317 + $0x8] sm:$0xff]
        %v379 = vld [vmem:[%s317 + $0x10] sm:$0xff]
        %v380 = vld [vmem:[%s317 + $0x18] sm:$0xff]
        %v381 = vld [vmem:[%s317 + $0x20] sm:$0xff]
        %v382 = vld [vmem:[%s317 + $0x28] sm:$0xff]
        %v383 = vld [vmem:[%s317 + $0x30] sm:$0xff]
        %v384 = vld [vmem:[%s317 + $0x38] sm:$0xff]
        %v385 = vld [vmem:[%s317 + $0x40] sm:$0xff]
        %v386 = vld [vmem:[%s317 + $0x48] sm:$0xff]
        %v387 = vld [vmem:[%s317 + $0x50] sm:$0xff]
        %v388 = vld [vmem:[%s317 + $0x58] sm:$0xff]
        %v389 = vld [vmem:[%s317 + $0x60] sm:$0xff]
        %v390 = vld [vmem:[%s317 + $0x68] sm:$0xff]
        %v391 = vld [vmem:[%s317 + $0x70] sm:$0xff]
        %v392 = vld [vmem:[%s317 + $0x78] sm:$0xff]
        %v400 = vunpack.c.l.b16 %v370
        %v401 = vunpack.c.l.b16 %v371
        %v402 = vunpack.c.l.b16 %v372
        %v403 = vunpack.c.l.b16 %v373
        %v404 = vunpack.c.l.b16 %v374
        %v405 = vunpack.c.l.b16 %v375
        %v406 = vunpack.c.l.b16 %v376
        %v407 = vpack.c.b16 %v401, %v400
        %v408 = vpack.c.b16 %v403, %v402
        %v409 = vpack.c.b16 %v405, %v404
        %v410 = vpack.c.b16 %v406, %v406
        %v431 = vunpack.c.l.b16 %v377
        %v432 = vunpack.c.h.b16 %v377
        %v433 = vunpack.c.l.b16 %v378
        %v434 = vunpack.c.h.b16 %v378
        %v435 = vunpack.c.l.b16 %v379
        %v436 = vunpack.c.h.b16 %v379
        %v437 = vunpack.c.l.b16 %v380
        %v438 = vunpack.c.h.b16 %v380
        %v439 = vunpack.c.l.b16 %v381
        %v440 = vunpack.c.h.b16 %v381
        %v441 = vunpack.c.l.b16 %v382
        %v442 = vunpack.c.h.b16 %v382
        %v443 = vunpack.c.l.b16 %v383
        %v444 = vunpack.c.h.b16 %v383
        %v445 = vunpack.c.l.b16 %v384
        %v446 = vunpack.c.h.b16 %v384
        %v447 = vunpack.c.l.b16 %v385
        %v448 = vunpack.c.h.b16 %v385
        %v449 = vunpack.c.l.b16 %v386
        %v450 = vunpack.c.h.b16 %v386
        %v451 = vunpack.c.l.b16 %v387
        %v452 = vunpack.c.h.b16 %v387
        %v453 = vunpack.c.l.b16 %v388
        %v454 = vunpack.c.h.b16 %v388
        %v455 = vunpack.c.l.b16 %v389
        %v456 = vunpack.c.h.b16 %v389
        %v457 = vunpack.c.l.b16 %v390
        %v458 = vunpack.c.h.b16 %v390
        %v459 = vunpack.c.l.b16 %v391
        %v460 = vunpack.c.h.b16 %v391
        %v461 = vunpack.c.l.b16 %v392
        %v462 = vunpack.c.h.b16 %v392
        %v463 = vpack.c.b16 %v433, %v431
        %v464 = vpack.c.b16 %v434, %v432
        %v465 = vpack.c.b16 %v437, %v435
        %v466 = vpack.c.b16 %v438, %v436
        %v467 = vpack.c.b16 %v441, %v439
        %v468 = vpack.c.b16 %v442, %v440
        %v469 = vpack.c.b16 %v445, %v443
        %v470 = vpack.c.b16 %v446, %v444
        %v471 = vpack.c.b16 %v449, %v447
        %v472 = vpack.c.b16 %v450, %v448
        %v473 = vpack.c.b16 %v453, %v451
        %v474 = vpack.c.b16 %v454, %v452
        %v475 = vpack.c.b16 %v457, %v455
        %v476 = vpack.c.b16 %v458, %v456
        %v477 = vpack.c.b16 %v461, %v459
        %v478 = vpack.c.b16 %v462, %v460
        %495 = vmatprep.subr.bf16.mxu0 %v478
        %496 = vmatpush1.bf16.msra.mxu0 %v477
        %497 = vmatprep.subr.bf16.mxu0 %v476
        %498 = vmatpush1.bf16.msra.mxu0 %v475
        %499 = vmatprep.subr.bf16.mxu0 %v474
        %500 = vmatpush1.bf16.msra.mxu0 %v473
        %501 = vmatprep.subr.bf16.mxu0 %v472
        %502 = vmatpush1.bf16.msra.mxu0 %v471
        %503 = vmatprep.subr.bf16.mxu0 %v470
        %504 = vmatpush1.bf16.msra.mxu0 %v469
        %505 = vmatprep.subr.bf16.mxu0 %v468
        %506 = vmatpush1.bf16.msra.mxu0 %v467
        %507 = vmatprep.subr.bf16.mxu0 %v466
        %508 = vmatpush1.bf16.msra.mxu0 %v465
        %509 = vmatprep.subr.bf16.mxu0 %v464
        %510 = vmatpush1.bf16.msra.mxu0 %v463
        %511 = vmatprep.subr.bf16.mxu0 0
        %512 = vmatpush2.bf16.msra.mxu0 0
        %513 = vmatprep.subr.bf16.mxu0 0
        %514 = vmatpush2.bf16.msra.mxu0 0
        %515 = vmatprep.subr.bf16.mxu0 0
        %516 = vmatpush2.bf16.msra.mxu0 0
        %517 = vmatprep.subr.bf16.mxu0 0
        %518 = vmatpush2.bf16.msra.mxu0 0
        %519 = vmatprep.subr.bf16.mxu0 0
        %520 = vmatpush2.bf16.msra.mxu0 0
        %521 = vmatprep.subr.bf16.mxu0 0
        %522 = vmatpush2.bf16.msra.mxu0 0
        %523 = vmatprep.subr.bf16.mxu0 0
        %524 = vmatpush2.bf16.msra.mxu0 0
        %525 = vmatprep.subr.bf16.mxu0 0
        %526 = vmatpush2.bf16.msra.mxu0 0
        %527 = vmatprep.mubr.bf16.mxu0 0
        %528 = vmatmul.mubr.bf16.gmra.mxu0 %v407
        %v529 = vpop.f32.mrf.mxu0
        %v530 = vadd.f32 0.0, %v529
        %v531 = vpop.f32.mrf.mxu0
        %v532 = vadd.f32 0.0, %v531
        %v533 = vpop.f32.mrf.mxu0
        %v534 = vadd.f32 0.0, %v533
        %v535 = vpop.f32.mrf.mxu0
        %v536 = vadd.f32 0.0, %v535
        %537 = vmatprep.mubr.bf16.mxu0 0
        %538 = vmatmul.mubr.bf16.gmra.mxu0 %v408
        %v539 = vpop.f32.mrf.mxu0
        %v540 = vadd.f32 0.0, %v539
        %v541 = vpop.f32.mrf.mxu0
        %v542 = vadd.f32 0.0, %v541
        %v543 = vpop.f32.mrf.mxu0
        %v544 = vadd.f32 0.0, %v543
        %v545 = vpop.f32.mrf.mxu0
        %v546 = vadd.f32 0.0, %v545
        %547 = vmatprep.mubr.bf16.mxu0 0
        %548 = vmatmul.mubr.bf16.gmra.mxu0 %v409
        %v549 = vpop.f32.mrf.mxu0
        %v550 = vadd.f32 0.0, %v549
        %v551 = vpop.f32.mrf.mxu0
        %v552 = vadd.f32 0.0, %v551
        %v553 = vpop.f32.mrf.mxu0
        %v554 = vadd.f32 0.0, %v553
        %v555 = vpop.f32.mrf.mxu0
        %v556 = vadd.f32 0.0, %v555
        %557 = vmatprep.mubr.bf16.mxu0 0
        %558 = vmatmul.mubr.bf16.gmra.mxu0 %v410
        %v559 = vpop.f32.mrf.mxu0
        %v560 = vadd.f32 0.0, %v559
        %v561 = vpop.f32.mrf.mxu0
        %v562 = vadd.f32 0.0, %v561
        %v563 = vpop.f32.mrf.mxu0
        %v564 = vpop.f32.mrf.mxu0
        %565 = vdwg.mxu0
        %v566 = vadd.f32 %v356, %v530
        %v567 = vadd.f32 %v357, %v532
        %v568 = vadd.f32 %v358, %v534
        %v569 = vadd.f32 %v359, %v536
        %v570 = vadd.f32 %v360, %v540
        %v571 = vadd.f32 %v361, %v542
        %v572 = vadd.f32 %v362, %v544
        %v573 = vadd.f32 %v363, %v546
        %v574 = vadd.f32 %v364, %v550
        %v575 = vadd.f32 %v365, %v552
        %v576 = vadd.f32 %v366, %v554
        %v577 = vadd.f32 %v367, %v556
        %v578 = vadd.f32 %v368, %v560
        %v579 = vadd.f32 %v369, %v562
        %580 = vst [vmem:[#allocation2] sm:$0xff] %v566
        %581 = vst [vmem:[#allocation2 + $0x8] sm:$0xff] %v567
        %582 = vst [vmem:[#allocation2 + $0x10] sm:$0xff] %v568
        %583 = vst [vmem:[#allocation2 + $0x18] sm:$0xff] %v569
        %584 = vst [vmem:[#allocation2 + $0x20] sm:$0xff] %v570
        %585 = vst [vmem:[#allocation2 + $0x28] sm:$0xff] %v571
        %586 = vst [vmem:[#allocation2 + $0x30] sm:$0xff] %v572
        %587 = vst [vmem:[#allocation2 + $0x38] sm:$0xff] %v573
        %588 = vst [vmem:[#allocation2 + $0x40] sm:$0xff] %v574
        %589 = vst [vmem:[#allocation2 + $0x48] sm:$0xff] %v575
        %590 = vst [vmem:[#allocation2 + $0x50] sm:$0xff] %v576
        %591 = vst [vmem:[#allocation2 + $0x58] sm:$0xff] %v577
        %592 = vst [vmem:[#allocation2 + $0x60] sm:$0xff] %v578
        %593 = vst [vmem:[#allocation2 + $0x68] sm:$0xff] %v579
        %p594 = scmp.eq.s32.totalorder %s21, 26
        // Predicated region
        $region78: #{_lambda_.13} parent=68 // pred_check
          %p595 = pneg %p594
        $region79: #{_lambda_.13} parent=68 // pred_check_branch
          %597 = sbr.rel (%p595) target = $region81
        $region80: #{_lambda_.13} parent=68 // pred_region
          %v598 = vld [vmem:[#allocation2] sm:$0xff]
          %v599 = vld [vmem:[#allocation2 + $0x8] sm:$0xff]
          %v600 = vld [vmem:[#allocation2 + $0x10] sm:$0xff]
          %v601 = vld [vmem:[#allocation2 + $0x18] sm:$0xff]
          %v602 = vld [vmem:[#allocation2 + $0x20] sm:$0xff]
          %v603 = vld [vmem:[#allocation2 + $0x28] sm:$0xff]
          %v604 = vld [vmem:[#allocation2 + $0x30] sm:$0xff]
          %v605 = vld [vmem:[#allocation2 + $0x38] sm:$0xff]
          %v606 = vld [vmem:[#allocation2 + $0x40] sm:$0xff]
          %v607 = vld [vmem:[#allocation2 + $0x48] sm:$0xff]
          %v608 = vld [vmem:[#allocation2 + $0x50] sm:$0xff]
          %v609 = vld [vmem:[#allocation2 + $0x58] sm:$0xff]
          %v610 = vld [vmem:[#allocation2 + $0x60] sm:$0xff]
          %v611 = vld [vmem:[#allocation2 + $0x68] sm:$0xff]
          %v612 = vld [vmem:[%s323] sm:$0x3]
          %v614 = vlaneseq
          %v615 = vshrl.u32 %v614, 7
          %v616 = vsub.s32 0, %v615
          %v617 = vrot.slane %v612, %v616
          %v618 = vlaneseq
          %v619 = vshrl.u32 %v618, 7
          %v620 = vsub.s32 1, %v619
          %v621 = vrot.slane %v612, %v620
          %v624 = vadd.f32 %v598, %v617
          %v625 = vadd.f32 %v599, %v621
          %v626 = vadd.f32 %v600, %v617
          %v627 = vadd.f32 %v601, %v621
          %v628 = vadd.f32 %v602, %v617
          %v629 = vadd.f32 %v603, %v621
          %v630 = vadd.f32 %v604, %v617
          %v631 = vadd.f32 %v605, %v621
          %v632 = vadd.f32 %v606, %v617
          %v633 = vadd.f32 %v607, %v621
          %v634 = vadd.f32 %v608, %v617
          %v635 = vadd.f32 %v609, %v621
          %v636 = vadd.f32 %v610, %v617
          %v637 = vadd.f32 %v611, %v621
          %v638 = vmax.f32 %v624, 0.0
          %v639 = vmax.f32 %v625, 0.0
          %v640 = vmax.f32 %v626, 0.0
          %v641 = vmax.f32 %v627, 0.0
          %v642 = vmax.f32 %v628, 0.0
          %v643 = vmax.f32 %v629, 0.0
          %v644 = vmax.f32 %v630, 0.0
          %v645 = vmax.f32 %v631, 0.0
          %v646 = vmax.f32 %v632, 0.0
          %v647 = vmax.f32 %v633, 0.0
          %v648 = vmax.f32 %v634, 0.0
          %v649 = vmax.f32 %v635, 0.0
          %v650 = vmax.f32 %v636, 0.0
          %v651 = vmax.f32 %v637, 0.0
          %v652 = vpack.c.bf16 %v640, %v638
          %v653 = vpack.c.bf16 %v641, %v639
          %v654 = vpack.c.bf16 %v644, %v642
          %v655 = vpack.c.bf16 %v645, %v643
          %v656 = vpack.c.bf16 %v648, %v646
          %v657 = vpack.c.bf16 %v649, %v647
          %v658 = vpack.c.bf16 %v650, %v650
          %v659 = vpack.c.bf16 %v651, %v651
          %v668 = vunpack.c.l.b16 %v652
          %v669 = vunpack.c.l.b16 %v653
          %v670 = vunpack.c.h.b16 %v652
          %v671 = vunpack.c.h.b16 %v653
          %v672 = vunpack.c.l.b16 %v654
          %v673 = vunpack.c.l.b16 %v655
          %v674 = vunpack.c.h.b16 %v654
          %v675 = vunpack.c.h.b16 %v655
          %v676 = vunpack.c.l.b16 %v656
          %v677 = vunpack.c.l.b16 %v657
          %v678 = vunpack.c.h.b16 %v656
          %v679 = vunpack.c.h.b16 %v657
          %v680 = vunpack.c.l.b16 %v658
          %v681 = vunpack.c.l.b16 %v659
          %v682 = vpack.c.b16 %v669, %v668
          %v683 = vpack.c.b16 %v671, %v670
          %v684 = vpack.c.b16 %v673, %v672
          %v685 = vpack.c.b16 %v675, %v674
          %v686 = vpack.c.b16 %v677, %v676
          %v687 = vpack.c.b16 %v679, %v678
          %v688 = vpack.c.b16 %v681, %v680
          %696 = vst [vmem:[%s334] sm:$0xff] %v682
          %697 = vst [vmem:[%s334 + $0x8] sm:$0xff] %v683
          %698 = vst [vmem:[%s334 + $0x10] sm:$0xff] %v684
          %699 = vst [vmem:[%s334 + $0x18] sm:$0xff] %v685
          %700 = vst [vmem:[%s334 + $0x20] sm:$0xff] %v686
          %701 = vst [vmem:[%s334 + $0x28] sm:$0xff] %v687
          %702 = vst [vmem:[%s334 + $0x30] sm:$0xff] %v688
        $region81: #{_lambda_.13} parent=68 // pred_fallthru
          _
        %s703 = smul.u32 7, %s19
        %s704 = smul.u32 2, %s20
        %p705 = scmp.lt.s32.totalorder %s703, 6
        %s706 = scalar_select %p705, %s703, 6
        %p707 = scmp.lt.s32.totalorder %s704, 1
        %s708 = scalar_select %p707, %s704, 1
        %s709 = smul.addr %s706, 2
        %s710 = sadd.s32 %s708, %s709
        %s711 = smul.addr %s710, 4
        %s712 = scalar_lea.vmem %s3, %s711
        // Predicated region
        $region82: #{_lambda_.13} parent=68 // pred_check
          %p713 = pneg %p135
        $region83: #{_lambda_.13} parent=68 // pred_check_branch
          %715 = sbr.rel (%p713) target = $region85
        $region84: #{_lambda_.13} parent=68 // pred_region
          %s716 = smul.u32 7, %s19
          %s717 = smul.u32 2, %s20
        $region85: #{_lambda_.13} parent=68 // pred_fallthru
          _
        // Predicated region
        $region86: #{_lambda_.13} parent=68 // pred_check
          %p718 = pneg %p135
        $region87: #{_lambda_.13} parent=68 // pred_check_branch
          %720 = sbr.rel (%p718) target = $region89
        $region88: #{_lambda_.13} parent=68 // pred_region
          %s721 = smul.u32 7, %s19
          %s722 = smul.u32 2, %s20
          %p723 = scmp.lt.s32.totalorder %s721, 6
          %s724 = scalar_select %p723, %s721, 6
          %p725 = scmp.lt.s32.totalorder %s722, 1
          %s726 = scalar_select %p725, %s722, 1
          %s727 = smul.addr %s724, 2
          %s728 = sadd.s32 %s726, %s727
          %s729 = smul.addr %s728, 4
          %s730 = scalar_lea.vmem %s3, %s729
        $region89: #{_lambda_.13} parent=68 // pred_fallthru
          _
      $region69: #{_lambda_.13} parent=5 // pred_fallthru
        _
      %p731 = scmp.le.s32.totalorder 2, %s9
      // Predicated region
      $region90: #{_lambda_.13} parent=5 // pred_check
        %p732 = pneg %p731
      $region91: #{_lambda_.13} parent=5 // pred_check_branch
        %734 = sbr.rel (%p732) target = $region93
      $region92: #{_lambda_.13} parent=5 // pred_region
        %s735 = ssub.s32 %s9, 2
      $region93: #{_lambda_.13} parent=5 // pred_fallthru
        _
    $region6: #{_lambda_.13} parent=1 // loop_footer
      %s13 = sadd.s32 1, %s9
    $region7: #{_lambda_.13} parent=1 // loop_footer_branch
      %8 = sbr.rel target = $region3
    $region8: #{_lambda_.13} parent=1 // loop_exit
      _

// kernel: _lambda_.14
$region0: #{_lambda_.14}
  #allocation0 [shape = 'u32[]', space=smem, size = 0x4, offset = 0x4, fixed_abs, tag = 'smem constant byte address 0x4 - core index']
  #allocation1 [shape = 'u32[144,128]{1,0:T(1,128)}', space=vmem, size = 0x12000, scoped, tag = 'internal scratch']
  %s0 = inlined_call_operand.vmem [shape: bf16[4,2,2,2,2,512], index: 0, kind: input, shape index: {}]
  %s1 = inlined_call_operand.vmem [shape: bf16[4,2,2,256], index: 1, kind: output, shape index: {}]
  %s2 = sld [smem:[#allocation0]]
  $region14: #{_lambda_.14} parent=0
    _
  %s4 = ssub.s32 1, %s2
  %s5 = scalar_select 0, %s4, %s2
  // Predicated region
  $region2: #{_lambda_.14} parent=0 // pred_check
    _
  $region3: #{_lambda_.14} parent=0 // pred_check_branch
    %7 = sbr.rel (0) target = $region5
  $region4: #{_lambda_.14} parent=0 // pred_region
    _
  $region5: #{_lambda_.14} parent=0 // pred_fallthru
    _
  %v8 = vld [vmem:[%s0] sm:$0xf]
  %v9 = vld [vmem:[%s0 + $0x4] sm:$0xf]
  %v10 = vld [vmem:[%s0 + $0x8] sm:$0xf]
  %v11 = vld [vmem:[%s0 + $0xc] sm:$0xf]
  %v12 = vld [vmem:[%s0 + $0x10] sm:$0xf]
  %v13 = vld [vmem:[%s0 + $0x14] sm:$0xf]
  %v14 = vld [vmem:[%s0 + $0x18] sm:$0xf]
  %v15 = vld [vmem:[%s0 + $0x1c] sm:$0xf]
  %v16 = vld [vmem:[%s0 + $0x20] sm:$0xf]
  %v17 = vld [vmem:[%s0 + $0x24] sm:$0xf]
  %v18 = vld [vmem:[%s0 + $0x28] sm:$0xf]
  %v19 = vld [vmem:[%s0 + $0x2c] sm:$0xf]
  %v20 = vld [vmem:[%s0 + $0x30] sm:$0xf]
  %v21 = vld [vmem:[%s0 + $0x34] sm:$0xf]
  %v22 = vld [vmem:[%s0 + $0x38] sm:$0xf]
  %v23 = vld [vmem:[%s0 + $0x3c] sm:$0xf]
  %v24 = vld [vmem:[%s0 + $0x40] sm:$0xf]
  %v25 = vld [vmem:[%s0 + $0x44] sm:$0xf]
  %v26 = vld [vmem:[%s0 + $0x48] sm:$0xf]
  %v27 = vld [vmem:[%s0 + $0x4c] sm:$0xf]
  %v28 = vld [vmem:[%s0 + $0x50] sm:$0xf]
  %v29 = vld [vmem:[%s0 + $0x54] sm:$0xf]
  %v30 = vld [vmem:[%s0 + $0x58] sm:$0xf]
  %v31 = vld [vmem:[%s0 + $0x5c] sm:$0xf]
  %v32 = vld [vmem:[%s0 + $0x60] sm:$0xf]
  %v33 = vld [vmem:[%s0 + $0x64] sm:$0xf]
  %v34 = vld [vmem:[%s0 + $0x68] sm:$0xf]
  %v35 = vld [vmem:[%s0 + $0x6c] sm:$0xf]
  %v36 = vld [vmem:[%s0 + $0x70] sm:$0xf]
  %v37 = vld [vmem:[%s0 + $0x74] sm:$0xf]
  %v38 = vld [vmem:[%s0 + $0x78] sm:$0xf]
  %v39 = vld [vmem:[%s0 + $0x7c] sm:$0xf]
  %v40 = vmax.bf16 %v8, %v12
  %v41 = vmax.bf16 %v9, %v13
  %v42 = vmax.bf16 %v10, %v14
  %v43 = vmax.bf16 %v11, %v15
  %v44 = vmax.bf16 %v16, %v20
  %v45 = vmax.bf16 %v17, %v21
  %v46 = vmax.bf16 %v18, %v22
  %v47 = vmax.bf16 %v19, %v23
  %v48 = vmax.bf16 %v24, %v28
  %v49 = vmax.bf16 %v25, %v29
  %v50 = vmax.bf16 %v26, %v30
  %v51 = vmax.bf16 %v27, %v31
  %v52 = vmax.bf16 %v32, %v36
  %v53 = vmax.bf16 %v33, %v37
  %v54 = vmax.bf16 %v34, %v38
  %v55 = vmax.bf16 %v35, %v39
  %v56 = vmax.bf16 %v40, %v41
  %v57 = vmax.bf16 %v42, %v43
  %v58 = vmax.bf16 %v44, %v45
  %v59 = vmax.bf16 %v46, %v47
  %v60 = vmax.bf16 %v48, %v49
  %v61 = vmax.bf16 %v50, %v51
  %v62 = vmax.bf16 %v52, %v53
  %v63 = vmax.bf16 %v54, %v55
  %v72 = vrot.slane %v56, 2
  %v73 = vrot.slane %v57, 2
  %v74 = vrot.slane %v58, 2
  %v75 = vrot.slane %v59, 2
  %v76 = vrot.slane %v60, 2
  %v77 = vrot.slane %v61, 2
  %v78 = vrot.slane %v62, 2
  %v79 = vrot.slane %v63, 2
  %v88 = vmax.bf16 %v56, %v72
  %v89 = vmax.bf16 %v57, %v73
  %v90 = vmax.bf16 %v58, %v74
  %v91 = vmax.bf16 %v59, %v75
  %v92 = vmax.bf16 %v60, %v76
  %v93 = vmax.bf16 %v61, %v77
  %v94 = vmax.bf16 %v62, %v78
  %v95 = vmax.bf16 %v63, %v79
  %96 = vst [vmem:[%s1] sm:$0x3] %v88
  %97 = vst [vmem:[%s1 + $0x2] sm:$0x3] %v89
  %98 = vst [vmem:[%s1 + $0x4] sm:$0x3] %v90
  %99 = vst [vmem:[%s1 + $0x6] sm:$0x3] %v91
  %100 = vst [vmem:[%s1 + $0x8] sm:$0x3] %v92
  %101 = vst [vmem:[%s1 + $0xa] sm:$0x3] %v93
  %102 = vst [vmem:[%s1 + $0xc] sm:$0x3] %v94
  %103 = vst [vmem:[%s1 + $0xe] sm:$0x3] %v95
  // Predicated region
  $region6: #{_lambda_.14} parent=0 // pred_check
    _
  $region7: #{_lambda_.14} parent=0 // pred_check_branch
    %105 = sbr.rel (0) target = $region9
  $region8: #{_lambda_.14} parent=0 // pred_region
    _
  $region9: #{_lambda_.14} parent=0 // pred_fallthru
    _
  // Predicated region
  $region10: #{_lambda_.14} parent=0 // pred_check
    _
  $region11: #{_lambda_.14} parent=0 // pred_check_branch
    %107 = sbr.rel (0) target = $region13
  $region12: #{_lambda_.14} parent=0 // pred_region
    _
  $region13: #{_lambda_.14} parent=0 // pred_fallthru
    _

// kernel: _lambda_.15
$region0: #{_lambda_.15}
  #allocation0 [shape = 'u32[]', space=smem, size = 0x4, offset = 0x4, fixed_abs, tag = 'smem constant byte address 0x4 - core index']
  #allocation1 [shape = 'u32[144,128]{1,0:T(1,128)}', space=vmem, size = 0x12000, scoped, tag = 'internal scratch']
  #allocation2 [shape = 'f32[16,256]{1,0:T(8,128)}', space=vmem, size = 0x4000, scoped, tag = 'scratch operand']
  %s0 = inlined_call_operand.vmem [shape: bf16[16,6912], index: 0, kind: input, shape index: {}]
  %s1 = inlined_call_operand.vmem [shape: bf16[6912,512], index: 1, kind: input, shape index: {}]
  %s2 = inlined_call_operand.vmem [shape: f32[1,512], index: 2, kind: input, shape index: {}]
  %s3 = inlined_call_operand.vmem [shape: bf16[16,512], index: 3, kind: output, shape index: {}]
  %s4 = sld [smem:[#allocation0]]
  $region163: #{_lambda_.15} parent=0
    _
  %s6 = ssub.s32 1, %s4
  %s7 = scalar_select 0, %s6, %s4
  $region1: #{_lambda_.15} parent=0
    #allocation3 [shape = 'u8[16384]{0}', space=vmem, size = 0x4000, scoped, tag = 'input window, operand 0']
    #allocation4 [shape = 'u8[262144]{0}', space=vmem, size = 0x40000, scoped, tag = 'input window, operand 1']
    #allocation5 [shape = 'u8[16384]{0}', space=vmem, size = 0x4000, scoped, tag = 'output window, operand 0']
    loop: start=0, step=1, limit=56
    $region2: #{_lambda_.15} parent=1 // loop_pre_header
      _
    $region3: #{_lambda_.15} parent=1 // loop_header
      %s9 = sphi 0, %s13
      %p10 = scmp.ge.s32.totalorder %s9, 56
      %s16 = sphi 0, %s35
      %s17 = sphi 0, %s31
      %s18 = sphi 0, %s27
      %s19 = sphi 0, %s16
      %s20 = sphi 0, %s17
      %s21 = sphi 0, %s18
      %s22 = sphi 0, %s19
      %s23 = sphi 0, %s20
      %s24 = sphi 0, %s21
      %s40 = sphi 0, %s42
      %s43 = sphi 0, %s40
      %s44 = sphi 0, %s43
      %s60 = sphi 0, %s44
      %s68 = sphi 0, %s70
      %s71 = sphi 0, %s68
      %s72 = sphi 0, %s71
      %s88 = sphi 0, %s72
      %s94 = sphi 0, %s96
      %s97 = sphi 0, %s94
      %s98 = sphi 0, %s97
      %s114 = sphi 0, %s98
      %s122 = sphi 0, %s124
      %s125 = sphi 0, %s122
      %s126 = sphi 0, %s125
      %s142 = sphi 0, %s126
    $region4: #{_lambda_.15} parent=1 // loop_header_branch
      %12 = sbr.rel (%p10) target = $region8
    $region5: #{_lambda_.15} parent=1 // loop_body
      %s14 = ssub.s32 %s9, 1
      %s15 = ssub.s32 %s9, 2
      %s25 = sadd.s32 1, %s18
      %p26 = scmp.ge.s32.totalorder %s25, 27
      %s27 = scalar_select %p26, 0, %s25
      %s28 = sadd.s32 1, %s17
      %s29 = scalar_select %p26, %s28, %s17
      %p30 = scmp.ge.s32.totalorder %s29, 2
      %s31 = scalar_select %p30, 0, %s29
      %s32 = sadd.s32 1, %s16
      %s33 = scalar_select %p30, %s32, %s16
      %p34 = scmp.ge.s32.totalorder %s33, 1
      %s35 = scalar_select %p34, 0, %s33
      %s36 = ssub.s32 %s16, %s35
      %s37 = ssub.s32 %s18, %s27
      %s38 = sor.u32 %s36, %s37
      %p39 = scmp.eq.s32.totalorder %s38, 0
      %s41 = sadd.s32 %s40, 1
      %s42 = scalar_select %p39, %s40, %s41
      %p45 = pneg %p39
      %p46 = scmp.eq.s32.totalorder %s9, 53
      %p47 = por %p45, %p46
      %p48 = scmp.ne.s32.totalorder %s40, %s43
      %p49 = scmp.eq.s32.totalorder %s9, 0
      %p50 = por %p48, %p49
      %p51 = scmp.ne.s32.totalorder %s40, %s43
      %p52 = scmp.eq.s32.totalorder %s14, 53
      %p53 = por %p51, %p52
      %p54 = scmp.ne.s32.totalorder %s43, %s44
      %p55 = scmp.eq.s32.totalorder %s14, 0
      %p56 = por %p54, %p55
      %p57 = scmp.ne.s32.totalorder %s43, %s44
      %p58 = scmp.eq.s32.totalorder %s15, 53
      %p59 = por %p57, %p58
      %p61 = scmp.ne.s32.totalorder %s44, %s60
      %p62 = scmp.eq.s32.totalorder %s15, 0
      %p63 = por %p61, %p62
      %s64 = ssub.s32 %s18, %s27
      %s65 = ssub.s32 %s17, %s31
      %s66 = sor.u32 %s64, %s65
      %p67 = scmp.eq.s32.totalorder %s66, 0
      %s69 = sadd.s32 %s68, 1
      %s70 = scalar_select %p67, %s68, %s69
      %p73 = pneg %p67
      %p74 = scmp.eq.s32.totalorder %s9, 53
      %p75 = por %p73, %p74
      %p76 = scmp.ne.s32.totalorder %s68, %s71
      %p77 = scmp.eq.s32.totalorder %s9, 0
      %p78 = por %p76, %p77
      %p79 = scmp.ne.s32.totalorder %s68, %s71
      %p80 = scmp.eq.s32.totalorder %s14, 53
      %p81 = por %p79, %p80
      %p82 = scmp.ne.s32.totalorder %s71, %s72
      %p83 = scmp.eq.s32.totalorder %s14, 0
      %p84 = por %p82, %p83
      %p85 = scmp.ne.s32.totalorder %s71, %s72
      %p86 = scmp.eq.s32.totalorder %s15, 53
      %p87 = por %p85, %p86
      %p89 = scmp.ne.s32.totalorder %s72, %s88
      %p90 = scmp.eq.s32.totalorder %s15, 0
      %p91 = por %p89, %p90
      %s92 = ssub.s32 %s17, %s31
      %p93 = scmp.eq.s32.totalorder %s92, 0
      %s95 = sadd.s32 %s94, 1
      %s96 = scalar_select %p93, %s94, %s95
      %p99 = pneg %p93
      %p100 = scmp.eq.s32.totalorder %s9, 53
      %p101 = por %p99, %p100
      %p102 = scmp.ne.s32.totalorder %s94, %s97
      %p103 = scmp.eq.s32.totalorder %s9, 0
      %p104 = por %p102, %p103
      %p105 = scmp.ne.s32.totalorder %s94, %s97
      %p106 = scmp.eq.s32.totalorder %s14, 53
      %p107 = por %p105, %p106
      %p108 = scmp.ne.s32.totalorder %s97, %s98
      %p109 = scmp.eq.s32.totalorder %s14, 0
      %p110 = por %p108, %p109
      %p111 = scmp.ne.s32.totalorder %s97, %s98
      %p112 = scmp.eq.s32.totalorder %s15, 53
      %p113 = por %p111, %p112
      %p115 = scmp.ne.s32.totalorder %s98, %s114
      %p116 = scmp.eq.s32.totalorder %s15, 0
      %p117 = por %p115, %p116
      %s118 = ssub.s32 %s16, %s35
      %s119 = ssub.s32 %s17, %s31
      %s120 = sor.u32 %s118, %s119
      %p121 = scmp.eq.s32.totalorder %s120, 0
      %s123 = sadd.s32 %s122, 1
      %s124 = scalar_select %p121, %s122, %s123
      %p127 = pneg %p121
      %p128 = scmp.eq.s32.totalorder %s9, 53
      %p129 = por %p127, %p128
      %p130 = scmp.ne.s32.totalorder %s122, %s125
      %p131 = scmp.eq.s32.totalorder %s9, 0
      %p132 = por %p130, %p131
      %p133 = scmp.ne.s32.totalorder %s122, %s125
      %p134 = scmp.eq.s32.totalorder %s14, 53
      %p135 = por %p133, %p134
      %p136 = scmp.ne.s32.totalorder %s125, %s126
      %p137 = scmp.eq.s32.totalorder %s14, 0
      %p138 = por %p136, %p137
      %p139 = scmp.ne.s32.totalorder %s125, %s126
      %p140 = scmp.eq.s32.totalorder %s15, 53
      %p141 = por %p139, %p140
      %p143 = scmp.ne.s32.totalorder %s126, %s142
      %p144 = scmp.eq.s32.totalorder %s15, 0
      %p145 = por %p143, %p144
      %p146 = scmp.le.s32.totalorder 1, %s9
      %p147 = scmp.lt.s32.totalorder %s9, 55
      %p148 = pnand %p146, %p147
      %p149 = pneg %p148
      // Predicated region
      $region9: #{_lambda_.15} parent=5 // pred_check
        _
      $region10: #{_lambda_.15} parent=5 // pred_check_branch
        %151 = sbr.rel (%p148) target = $region12
      $region11: #{_lambda_.15} parent=5 // pred_region
        %s152 = ssub.s32 %s9, 1
      $region12: #{_lambda_.15} parent=5 // pred_fallthru
        _
      %p153 = scmp.lt.s32.totalorder %s9, 54
      // Predicated region
      $region13: #{_lambda_.15} parent=5 // pred_check
        %p154 = pneg %p153
      $region14: #{_lambda_.15} parent=5 // pred_check_branch
        %156 = sbr.rel (%p154) target = $region16
      $region15: #{_lambda_.15} parent=5 // pred_region
        // Predicated region
        $region17: #{_lambda_.15} parent=15 // pred_check
          %p157 = pneg %p50
        $region18: #{_lambda_.15} parent=15 // pred_check_branch
          %159 = sbr.rel (%p157) target = $region20
        $region19: #{_lambda_.15} parent=15 // pred_region
          %s160 = sand.u32 %s40, 1
          %s161 = sand.u32 %s40, 1
          %s162 = smul.addr %s161, 16
          %s163 = scalar_lea.vmem [#allocation3], %s162
          %s164 = smul.u32 2, %s16
          %s165 = smul.u32 2, %s18
          %s166 = smul.addr %s164, 54
          %s167 = sadd.s32 %s165, %s166
          %s168 = smul.addr %s167, 4
          %s169 = scalar_lea.vmem %s0, %s168
          // Predicated region
          $region21: #{_lambda_.15} parent=19 // pred_check
            _
          $region22: #{_lambda_.15} parent=19 // pred_check_branch
            %171 = sbr.rel (0) target = $region24
          $region23: #{_lambda_.15} parent=19 // pred_region
            // Predicated region
            $region25: #{_lambda_.15} parent=23 // pred_check
              _
            $region26: #{_lambda_.15} parent=23 // pred_check_branch
              %173 = sbr.rel (0) target = $region28
            $region27: #{_lambda_.15} parent=23 // pred_region
              // Predicated region
              $region40: #{_lambda_.15} parent=27 // pred_check
                _
              $region41: #{_lambda_.15} parent=27 // pred_check_branch
                %191 = sbr.rel (0) target = $region43
              $region42: #{_lambda_.15} parent=27 // pred_region
                loop: start=0, step=1, limit=1
                $region44: #{_lambda_.15} parent=42 // loop_pre_header
                  _
                $region45: #{_lambda_.15} parent=42 // loop_header
                  %s193 = sphi 0, %s197
                  %p194 = scmp.ge.s32.totalorder %s193, 1
                  %s198 = sphi %s169, %s169
                  %s199 = sphi %s163, %s163
                $region46: #{_lambda_.15} parent=42 // loop_header_branch
                  %196 = sbr.rel (%p194) target = $region50
                $region47: #{_lambda_.15} parent=42 // loop_body
                  %v200 = vld [vmem:[%s198] sm:$0xff]
                  %201 = vst [vmem:[%s199] sm:$0xff] %v200
                  %v202 = vld [vmem:[%s198 + $0xd8] sm:$0xff]
                  %203 = vst [vmem:[%s199 + $0x8] sm:$0xff] %v202
                $region48: #{_lambda_.15} parent=42 // loop_footer
                  %s197 = sadd.s32 1, %s193
                $region49: #{_lambda_.15} parent=42 // loop_footer_branch
                  %192 = sbr.rel target = $region45
                $region50: #{_lambda_.15} parent=42 // loop_exit
                  _
              $region43: #{_lambda_.15} parent=27 // pred_fallthru
                _
              // Predicated region
              $region51: #{_lambda_.15} parent=27 // pred_check
                _
              $region52: #{_lambda_.15} parent=27 // pred_check_branch
                %205 = sbr.rel target = $region54
              $region53: #{_lambda_.15} parent=27 // pred_region
                _
              $region54: #{_lambda_.15} parent=27 // pred_fallthru
                _
            $region28: #{_lambda_.15} parent=23 // pred_fallthru
              _
            // Predicated region
            $region29: #{_lambda_.15} parent=23 // pred_check
              _
            $region30: #{_lambda_.15} parent=23 // pred_check_branch
              %175 = sbr.rel target = $region32
            $region31: #{_lambda_.15} parent=23 // pred_region
              %s177 = ssub.s32 256, 1
              loop: start=0, step=1, limit=1
              $region33: #{_lambda_.15} parent=31 // loop_pre_header
                _
              $region34: #{_lambda_.15} parent=31 // loop_header
                %s179 = sphi 0, %s183
                %p180 = scmp.ge.s32.totalorder %s179, 1
                %s184 = sphi %s169, %s169
                %s185 = sphi %s163, %s163
              $region35: #{_lambda_.15} parent=31 // loop_header_branch
                %182 = sbr.rel (%p180) target = $region39
              $region36: #{_lambda_.15} parent=31 // loop_body
                %v186 = vld [vmem:[%s184] sm:%s177]
                %187 = vst [vmem:[%s185] sm:%s177] %v186
                %v188 = vld [vmem:[%s184 + $0xd8] sm:%s177]
                %189 = vst [vmem:[%s185 + $0x8] sm:%s177] %v188
              $region37: #{_lambda_.15} parent=31 // loop_footer
                %s183 = sadd.s32 1, %s179
              $region38: #{_lambda_.15} parent=31 // loop_footer_branch
                %178 = sbr.rel target = $region34
              $region39: #{_lambda_.15} parent=31 // loop_exit
                _
            $region32: #{_lambda_.15} parent=23 // pred_fallthru
              _
          $region24: #{_lambda_.15} parent=19 // pred_fallthru
            _
          %206 = vnop
        $region20: #{_lambda_.15} parent=15 // pred_fallthru
          _
        // Predicated region
        $region55: #{_lambda_.15} parent=15 // pred_check
          %p207 = pneg %p78
        $region56: #{_lambda_.15} parent=15 // pred_check_branch
          %209 = sbr.rel (%p207) target = $region58
        $region57: #{_lambda_.15} parent=15 // pred_region
          %s210 = sand.u32 %s68, 1
          %s211 = sand.u32 %s68, 1
          %s212 = smul.addr %s211, 256
          %s213 = scalar_lea.vmem [#allocation4], %s212
          %s214 = smul.u32 32, %s18
          %s215 = smul.u32 2, %s17
          %s216 = smul.addr %s214, 4
          %s217 = sadd.s32 %s215, %s216
          %s218 = smul.addr %s217, 4
          %s219 = scalar_lea.vmem %s1, %s218
          // Predicated region
          $region59: #{_lambda_.15} parent=57 // pred_check
            _
          $region60: #{_lambda_.15} parent=57 // pred_check_branch
            %221 = sbr.rel (0) target = $region62
          $region61: #{_lambda_.15} parent=57 // pred_region
            // Predicated region
            $region63: #{_lambda_.15} parent=61 // pred_check
              _
            $region64: #{_lambda_.15} parent=61 // pred_check_branch
              %223 = sbr.rel (0) target = $region66
            $region65: #{_lambda_.15} parent=61 // pred_region
              // Predicated region
              $region78: #{_lambda_.15} parent=65 // pred_check
                _
              $region79: #{_lambda_.15} parent=65 // pred_check_branch
                %301 = sbr.rel (0) target = $region81
              $region80: #{_lambda_.15} parent=65 // pred_region
                loop: start=0, step=1, limit=1
                $region82: #{_lambda_.15} parent=80 // loop_pre_header
                  _
                $region83: #{_lambda_.15} parent=80 // loop_header
                  %s303 = sphi 0, %s307
                  %p304 = scmp.ge.s32.totalorder %s303, 1
                  %s308 = sphi %s219, %s219
                  %s309 = sphi %s213, %s213
                $region84: #{_lambda_.15} parent=80 // loop_header_branch
                  %306 = sbr.rel (%p304) target = $region88
                $region85: #{_lambda_.15} parent=80 // loop_body
                  %v310 = vld [vmem:[%s308] sm:$0xff]
                  %311 = vst [vmem:[%s309] sm:$0xff] %v310
                  %v312 = vld [vmem:[%s308 + $0x10] sm:$0xff]
                  %313 = vst [vmem:[%s309 + $0x8] sm:$0xff] %v312
                  %v314 = vld [vmem:[%s308 + $0x20] sm:$0xff]
                  %315 = vst [vmem:[%s309 + $0x10] sm:$0xff] %v314
                  %v316 = vld [vmem:[%s308 + $0x30] sm:$0xff]
                  %317 = vst [vmem:[%s309 + $0x18] sm:$0xff] %v316
                  %v318 = vld [vmem:[%s308 + $0x40] sm:$0xff]
                  %319 = vst [vmem:[%s309 + $0x20] sm:$0xff] %v318
                  %v320 = vld [vmem:[%s308 + $0x50] sm:$0xff]
                  %321 = vst [vmem:[%s309 + $0x28] sm:$0xff] %v320
                  %v322 = vld [vmem:[%s308 + $0x60] sm:$0xff]
                  %323 = vst [vmem:[%s309 + $0x30] sm:$0xff] %v322
                  %v324 = vld [vmem:[%s308 + $0x70] sm:$0xff]
                  %325 = vst [vmem:[%s309 + $0x38] sm:$0xff] %v324
                  %v326 = vld [vmem:[%s308 + $0x80] sm:$0xff]
                  %327 = vst [vmem:[%s309 + $0x40] sm:$0xff] %v326
                  %v328 = vld [vmem:[%s308 + $0x90] sm:$0xff]
                  %329 = vst [vmem:[%s309 + $0x48] sm:$0xff] %v328
                  %v330 = vld [vmem:[%s308 + $0xa0] sm:$0xff]
                  %331 = vst [vmem:[%s309 + $0x50] sm:$0xff] %v330
                  %v332 = vld [vmem:[%s308 + $0xb0] sm:$0xff]
                  %333 = vst [vmem:[%s309 + $0x58] sm:$0xff] %v332
                  %v334 = vld [vmem:[%s308 + $0xc0] sm:$0xff]
                  %335 = vst [vmem:[%s309 + $0x60] sm:$0xff] %v334
                  %v336 = vld [vmem:[%s308 + $0xd0] sm:$0xff]
                  %337 = vst [vmem:[%s309 + $0x68] sm:$0xff] %v336
                  %v338 = vld [vmem:[%s308 + $0xe0] sm:$0xff]
                  %339 = vst [vmem:[%s309 + $0x70] sm:$0xff] %v338
                  %v340 = vld [vmem:[%s308 + $0xf0] sm:$0xff]
                  %341 = vst [vmem:[%s309 + $0x78] sm:$0xff] %v340
                  %v342 = vld [vmem:[%s308 + $0x100] sm:$0xff]
                  %343 = vst [vmem:[%s309 + $0x80] sm:$0xff] %v342
                  %v344 = vld [vmem:[%s308 + $0x110] sm:$0xff]
                  %345 = vst [vmem:[%s309 + $0x88] sm:$0xff] %v344
                  %v346 = vld [vmem:[%s308 + $0x120] sm:$0xff]
                  %347 = vst [vmem:[%s309 + $0x90] sm:$0xff] %v346
                  %v348 = vld [vmem:[%s308 + $0x130] sm:$0xff]
                  %349 = vst [vmem:[%s309 + $0x98] sm:$0xff] %v348
                  %v350 = vld [vmem:[%s308 + $0x140] sm:$0xff]
                  %351 = vst [vmem:[%s309 + $0xa0] sm:$0xff] %v350
                  %v352 = vld [vmem:[%s308 + $0x150] sm:$0xff]
                  %353 = vst [vmem:[%s309 + $0xa8] sm:$0xff] %v352
                  %v354 = vld [vmem:[%s308 + $0x160] sm:$0xff]
                  %355 = vst [vmem:[%s309 + $0xb0] sm:$0xff] %v354
                  %v356 = vld [vmem:[%s308 + $0x170] sm:$0xff]
                  %357 = vst [vmem:[%s309 + $0xb8] sm:$0xff] %v356
                  %v358 = vld [vmem:[%s308 + $0x180] sm:$0xff]
                  %359 = vst [vmem:[%s309 + $0xc0] sm:$0xff] %v358
                  %v360 = vld [vmem:[%s308 + $0x190] sm:$0xff]
                  %361 = vst [vmem:[%s309 + $0xc8] sm:$0xff] %v360
                  %v362 = vld [vmem:[%s308 + $0x1a0] sm:$0xff]
                  %363 = vst [vmem:[%s309 + $0xd0] sm:$0xff] %v362
                  %v364 = vld [vmem:[%s308 + $0x1b0] sm:$0xff]
                  %365 = vst [vmem:[%s309 + $0xd8] sm:$0xff] %v364
                  %v366 = vld [vmem:[%s308 + $0x1c0] sm:$0xff]
                  %367 = vst [vmem:[%s309 + $0xe0] sm:$0xff] %v366
                  %v368 = vld [vmem:[%s308 + $0x1d0] sm:$0xff]
                  %369 = vst [vmem:[%s309 + $0xe8] sm:$0xff] %v368
                  %v370 = vld [vmem:[%s308 + $0x1e0] sm:$0xff]
                  %371 = vst [vmem:[%s309 + $0xf0] sm:$0xff] %v370
                  %v372 = vld [vmem:[%s308 + $0x1f0] sm:$0xff]
                  %373 = vst [vmem:[%s309 + $0xf8] sm:$0xff] %v372
                $region86: #{_lambda_.15} parent=80 // loop_footer
                  %s307 = sadd.s32 1, %s303
                $region87: #{_lambda_.15} parent=80 // loop_footer_branch
                  %302 = sbr.rel target = $region83
                $region88: #{_lambda_.15} parent=80 // loop_exit
                  _
              $region81: #{_lambda_.15} parent=65 // pred_fallthru
                _
              // Predicated region
              $region89: #{_lambda_.15} parent=65 // pred_check
                _
              $region90: #{_lambda_.15} parent=65 // pred_check_branch
                %375 = sbr.rel target = $region92
              $region91: #{_lambda_.15} parent=65 // pred_region
                _
              $region92: #{_lambda_.15} parent=65 // pred_fallthru
                _
            $region66: #{_lambda_.15} parent=61 // pred_fallthru
              _
            // Predicated region
            $region67: #{_lambda_.15} parent=61 // pred_check
              _
            $region68: #{_lambda_.15} parent=61 // pred_check_branch
              %225 = sbr.rel target = $region70
            $region69: #{_lambda_.15} parent=61 // pred_region
              %s227 = ssub.s32 256, 1
              loop: start=0, step=1, limit=1
              $region71: #{_lambda_.15} parent=69 // loop_pre_header
                _
              $region72: #{_lambda_.15} parent=69 // loop_header
                %s229 = sphi 0, %s233
                %p230 = scmp.ge.s32.totalorder %s229, 1
                %s234 = sphi %s219, %s219
                %s235 = sphi %s213, %s213
              $region73: #{_lambda_.15} parent=69 // loop_header_branch
                %232 = sbr.rel (%p230) target = $region77
              $region74: #{_lambda_.15} parent=69 // loop_body
                %v236 = vld [vmem:[%s234] sm:%s227]
                %237 = vst [vmem:[%s235] sm:%s227] %v236
                %v238 = vld [vmem:[%s234 + $0x10] sm:%s227]
                %239 = vst [vmem:[%s235 + $0x8] sm:%s227] %v238
                %v240 = vld [vmem:[%s234 + $0x20] sm:%s227]
                %241 = vst [vmem:[%s235 + $0x10] sm:%s227] %v240
                %v242 = vld [vmem:[%s234 + $0x30] sm:%s227]
                %243 = vst [vmem:[%s235 + $0x18] sm:%s227] %v242
                %v244 = vld [vmem:[%s234 + $0x40] sm:%s227]
                %245 = vst [vmem:[%s235 + $0x20] sm:%s227] %v244
                %v246 = vld [vmem:[%s234 + $0x50] sm:%s227]
                %247 = vst [vmem:[%s235 + $0x28] sm:%s227] %v246
                %v248 = vld [vmem:[%s234 + $0x60] sm:%s227]
                %249 = vst [vmem:[%s235 + $0x30] sm:%s227] %v248
                %v250 = vld [vmem:[%s234 + $0x70] sm:%s227]
                %251 = vst [vmem:[%s235 + $0x38] sm:%s227] %v250
                %v252 = vld [vmem:[%s234 + $0x80] sm:%s227]
                %253 = vst [vmem:[%s235 + $0x40] sm:%s227] %v252
                %v254 = vld [vmem:[%s234 + $0x90] sm:%s227]
                %255 = vst [vmem:[%s235 + $0x48] sm:%s227] %v254
                %v256 = vld [vmem:[%s234 + $0xa0] sm:%s227]
                %257 = vst [vmem:[%s235 + $0x50] sm:%s227] %v256
                %v258 = vld [vmem:[%s234 + $0xb0] sm:%s227]
                %259 = vst [vmem:[%s235 + $0x58] sm:%s227] %v258
                %v260 = vld [vmem:[%s234 + $0xc0] sm:%s227]
                %261 = vst [vmem:[%s235 + $0x60] sm:%s227] %v260
                %v262 = vld [vmem:[%s234 + $0xd0] sm:%s227]
                %263 = vst [vmem:[%s235 + $0x68] sm:%s227] %v262
                %v264 = vld [vmem:[%s234 + $0xe0] sm:%s227]
                %265 = vst [vmem:[%s235 + $0x70] sm:%s227] %v264
                %v266 = vld [vmem:[%s234 + $0xf0] sm:%s227]
                %267 = vst [vmem:[%s235 + $0x78] sm:%s227] %v266
                %v268 = vld [vmem:[%s234 + $0x100] sm:%s227]
                %269 = vst [vmem:[%s235 + $0x80] sm:%s227] %v268
                %v270 = vld [vmem:[%s234 + $0x110] sm:%s227]
                %271 = vst [vmem:[%s235 + $0x88] sm:%s227] %v270
                %v272 = vld [vmem:[%s234 + $0x120] sm:%s227]
                %273 = vst [vmem:[%s235 + $0x90] sm:%s227] %v272
                %v274 = vld [vmem:[%s234 + $0x130] sm:%s227]
                %275 = vst [vmem:[%s235 + $0x98] sm:%s227] %v274
                %v276 = vld [vmem:[%s234 + $0x140] sm:%s227]
                %277 = vst [vmem:[%s235 + $0xa0] sm:%s227] %v276
                %v278 = vld [vmem:[%s234 + $0x150] sm:%s227]
                %279 = vst [vmem:[%s235 + $0xa8] sm:%s227] %v278
                %v280 = vld [vmem:[%s234 + $0x160] sm:%s227]
                %281 = vst [vmem:[%s235 + $0xb0] sm:%s227] %v280
                %v282 = vld [vmem:[%s234 + $0x170] sm:%s227]
                %283 = vst [vmem:[%s235 + $0xb8] sm:%s227] %v282
                %v284 = vld [vmem:[%s234 + $0x180] sm:%s227]
                %285 = vst [vmem:[%s235 + $0xc0] sm:%s227] %v284
                %v286 = vld [vmem:[%s234 + $0x190] sm:%s227]
                %287 = vst [vmem:[%s235 + $0xc8] sm:%s227] %v286
                %v288 = vld [vmem:[%s234 + $0x1a0] sm:%s227]
                %289 = vst [vmem:[%s235 + $0xd0] sm:%s227] %v288
                %v290 = vld [vmem:[%s234 + $0x1b0] sm:%s227]
                %291 = vst [vmem:[%s235 + $0xd8] sm:%s227] %v290
                %v292 = vld [vmem:[%s234 + $0x1c0] sm:%s227]
                %293 = vst [vmem:[%s235 + $0xe0] sm:%s227] %v292
                %v294 = vld [vmem:[%s234 + $0x1d0] sm:%s227]
                %295 = vst [vmem:[%s235 + $0xe8] sm:%s227] %v294
                %v296 = vld [vmem:[%s234 + $0x1e0] sm:%s227]
                %297 = vst [vmem:[%s235 + $0xf0] sm:%s227] %v296
                %v298 = vld [vmem:[%s234 + $0x1f0] sm:%s227]
                %299 = vst [vmem:[%s235 + $0xf8] sm:%s227] %v298
              $region75: #{_lambda_.15} parent=69 // loop_footer
                %s233 = sadd.s32 1, %s229
              $region76: #{_lambda_.15} parent=69 // loop_footer_branch
                %228 = sbr.rel target = $region72
              $region77: #{_lambda_.15} parent=69 // loop_exit
                _
            $region70: #{_lambda_.15} parent=61 // pred_fallthru
              _
          $region62: #{_lambda_.15} parent=57 // pred_fallthru
            _
          %376 = vnop
        $region58: #{_lambda_.15} parent=15 // pred_fallthru
          _
        // Predicated region
        $region93: #{_lambda_.15} parent=15 // pred_check
          %p377 = pneg %p104
        $region94: #{_lambda_.15} parent=15 // pred_check_branch
          %379 = sbr.rel (%p377) target = $region96
        $region95: #{_lambda_.15} parent=15 // pred_region
          %s380 = smul.u32 2, %s17
          %p381 = scmp.lt.s32.totalorder %s380, 3
          %s382 = scalar_select %p381, %s380, 3
          %s383 = scalar_lea.vmem %s2, %s382
          %s384 = smul.u32 2, %s17
        $region96: #{_lambda_.15} parent=15 // pred_fallthru
          _
      $region16: #{_lambda_.15} parent=5 // pred_fallthru
        _
      %p385 = scmp.le.s32.totalorder 1, %s9
      %p386 = scmp.lt.s32.totalorder %s9, 55
      %p387 = pnand %p385, %p386
      %p388 = pneg %p387
      // Predicated region
      $region97: #{_lambda_.15} parent=5 // pred_check
        _
      $region98: #{_lambda_.15} parent=5 // pred_check_branch
        %390 = sbr.rel (%p387) target = $region100
      $region99: #{_lambda_.15} parent=5 // pred_region
        %s391 = ssub.s32 %s9, 1
        %s392 = sand.u32 %s43, 1
        %s393 = sand.u32 %s43, 1
        %s394 = smul.addr %s393, 16
        %s395 = scalar_lea.vmem [#allocation3], %s394
        // Predicated region
        $region101: #{_lambda_.15} parent=99 // pred_check
          %p396 = pneg %p56
        $region102: #{_lambda_.15} parent=99 // pred_check_branch
          %398 = sbr.rel (%p396) target = $region104
        $region103: #{_lambda_.15} parent=99 // pred_region
          _
        $region104: #{_lambda_.15} parent=99 // pred_fallthru
          _
        %s399 = sand.u32 %s71, 1
        %s400 = sand.u32 %s71, 1
        %s401 = smul.addr %s400, 256
        %s402 = scalar_lea.vmem [#allocation4], %s401
        // Predicated region
        $region105: #{_lambda_.15} parent=99 // pred_check
          %p403 = pneg %p84
        $region106: #{_lambda_.15} parent=99 // pred_check_branch
          %405 = sbr.rel (%p403) target = $region108
        $region107: #{_lambda_.15} parent=99 // pred_region
          _
        $region108: #{_lambda_.15} parent=99 // pred_fallthru
          _
        %s406 = sand.u32 %s43, 1
        %s407 = sand.u32 %s43, 1
        %s408 = smul.addr %s407, 16
        %s409 = scalar_lea.vmem [#allocation3], %s408
        %p410 = pneg %p56
        %p411 = pneg %p53
        %s412 = sand.u32 %s71, 1
        %s413 = sand.u32 %s71, 1
        %s414 = smul.addr %s413, 256
        %s415 = scalar_lea.vmem [#allocation4], %s414
        %p416 = pneg %p84
        %p417 = pneg %p81
        %s418 = smul.u32 2, %s20
        %p419 = scmp.lt.s32.totalorder %s418, 3
        %s420 = scalar_select %p419, %s418, 3
        %s421 = scalar_lea.vmem %s2, %s420
        %p422 = pneg %p110
        %p423 = pneg %p107
        %p424 = pneg %p138
        %p425 = pneg %p135
        %s426 = sand.u32 %s125, 1
        %s427 = sand.u32 %s125, 1
        %s428 = smul.addr %s427, 16
        %s429 = scalar_lea.vmem [#allocation5], %s428
        %s430 = smul.u32 2, %s19
        %s431 = smul.u32 2, %s21
        %s432 = smul.u32 32, %s21
        %s433 = smul.u32 2, %s20
        %s434 = smul.u32 2, %s20
        %p435 = scmp.lt.s32.totalorder %s434, 3
        %s436 = scalar_select %p435, %s434, 3
        %s437 = scalar_lea.vmem %s2, %s436
        %s438 = smul.u32 2, %s20
        %s439 = smul.u32 2, %s19
        %s440 = smul.u32 2, %s20
        %p441 = scmp.eq.s32.totalorder %s21, 0
        // Predicated region
        $region109: #{_lambda_.15} parent=99 // pred_check
          %p442 = pneg %p441
        $region110: #{_lambda_.15} parent=99 // pred_check_branch
          %444 = sbr.rel (%p442) target = $region112
        $region111: #{_lambda_.15} parent=99 // pred_region
          %445 = vst [vmem:[#allocation2] sm:$0xff] 0.0
          %446 = vst [vmem:[#allocation2 + $0x8] sm:$0xff] 0.0
          %447 = vst [vmem:[#allocation2 + $0x10] sm:$0xff] 0.0
          %448 = vst [vmem:[#allocation2 + $0x18] sm:$0xff] 0.0
        $region112: #{_lambda_.15} parent=99 // pred_fallthru
          _
        %v449 = vld [vmem:[#allocation2] sm:$0xff]
        %v450 = vld [vmem:[#allocation2 + $0x8] sm:$0xff]
        %v451 = vld [vmem:[#allocation2 + $0x10] sm:$0xff]
        %v452 = vld [vmem:[#allocation2 + $0x18] sm:$0xff]
        %v453 = vld [vmem:[%s395] sm:$0xff]
        %v454 = vld [vmem:[%s395 + $0x8] sm:$0xff]
        %v455 = vld [vmem:[%s402] sm:$0xff]
        %v456 = vld [vmem:[%s402 + $0x8] sm:$0xff]
        %v457 = vld [vmem:[%s402 + $0x10] sm:$0xff]
        %v458 = vld [vmem:[%s402 + $0x18] sm:$0xff]
        %v459 = vld [vmem:[%s402 + $0x20] sm:$0xff]
        %v460 = vld [vmem:[%s402 + $0x28] sm:$0xff]
        %v461 = vld [vmem:[%s402 + $0x30] sm:$0xff]
        %v462 = vld [vmem:[%s402 + $0x38] sm:$0xff]
        %v463 = vld [vmem:[%s402 + $0x40] sm:$0xff]
        %v464 = vld [vmem:[%s402 + $0x48] sm:$0xff]
        %v465 = vld [vmem:[%s402 + $0x50] sm:$0xff]
        %v466 = vld [vmem:[%s402 + $0x58] sm:$0xff]
        %v467 = vld [vmem:[%s402 + $0x60] sm:$0xff]
        %v468 = vld [vmem:[%s402 + $0x68] sm:$0xff]
        %v469 = vld [vmem:[%s402 + $0x70] sm:$0xff]
        %v470 = vld [vmem:[%s402 + $0x78] sm:$0xff]
        %v471 = vld [vmem:[%s402 + $0x80] sm:$0xff]
        %v472 = vld [vmem:[%s402 + $0x88] sm:$0xff]
        %v473 = vld [vmem:[%s402 + $0x90] sm:$0xff]
        %v474 = vld [vmem:[%s402 + $0x98] sm:$0xff]
        %v475 = vld [vmem:[%s402 + $0xa0] sm:$0xff]
        %v476 = vld [vmem:[%s402 + $0xa8] sm:$0xff]
        %v477 = vld [vmem:[%s402 + $0xb0] sm:$0xff]
        %v478 = vld [vmem:[%s402 + $0xb8] sm:$0xff]
        %v479 = vld [vmem:[%s402 + $0xc0] sm:$0xff]
        %v480 = vld [vmem:[%s402 + $0xc8] sm:$0xff]
        %v481 = vld [vmem:[%s402 + $0xd0] sm:$0xff]
        %v482 = vld [vmem:[%s402 + $0xd8] sm:$0xff]
        %v483 = vld [vmem:[%s402 + $0xe0] sm:$0xff]
        %v484 = vld [vmem:[%s402 + $0xe8] sm:$0xff]
        %v485 = vld [vmem:[%s402 + $0xf0] sm:$0xff]
        %v486 = vld [vmem:[%s402 + $0xf8] sm:$0xff]
        %v489 = vunpack.c.l.b16 %v453
        %v490 = vunpack.c.h.b16 %v453
        %v491 = vunpack.c.l.b16 %v454
        %v492 = vunpack.c.h.b16 %v454
        %v493 = vpack.c.b16 %v491, %v489
        %v494 = vpack.c.b16 %v492, %v490
        %v529 = vunpack.c.l.b16 %v455
        %v530 = vunpack.c.h.b16 %v455
        %v531 = vunpack.c.l.b16 %v456
        %v532 = vunpack.c.h.b16 %v456
        %v533 = vunpack.c.l.b16 %v457
        %v534 = vunpack.c.h.b16 %v457
        %v535 = vunpack.c.l.b16 %v458
        %v536 = vunpack.c.h.b16 %v458
        %v537 = vunpack.c.l.b16 %v459
        %v538 = vunpack.c.h.b16 %v459
        %v539 = vunpack.c.l.b16 %v460
        %v540 = vunpack.c.h.b16 %v460
        %v541 = vunpack.c.l.b16 %v461
        %v542 = vunpack.c.h.b16 %v461
        %v543 = vunpack.c.l.b16 %v462
        %v544 = vunpack.c.h.b16 %v462
        %v545 = vunpack.c.l.b16 %v463
        %v546 = vunpack.c.h.b16 %v463
        %v547 = vunpack.c.l.b16 %v464
        %v548 = vunpack.c.h.b16 %v464
        %v549 = vunpack.c.l.b16 %v465
        %v550 = vunpack.c.h.b16 %v465
        %v551 = vunpack.c.l.b16 %v466
        %v552 = vunpack.c.h.b16 %v466
        %v553 = vunpack.c.l.b16 %v467
        %v554 = vunpack.c.h.b16 %v467
        %v555 = vunpack.c.l.b16 %v468
        %v556 = vunpack.c.h.b16 %v468
        %v557 = vunpack.c.l.b16 %v469
        %v558 = vunpack.c.h.b16 %v469
        %v559 = vunpack.c.l.b16 %v470
        %v560 = vunpack.c.h.b16 %v470
        %v561 = vunpack.c.l.b16 %v471
        %v562 = vunpack.c.h.b16 %v471
        %v563 = vunpack.c.l.b16 %v472
        %v564 = vunpack.c.h.b16 %v472
        %v565 = vunpack.c.l.b16 %v473
        %v566 = vunpack.c.h.b16 %v473
        %v567 = vunpack.c.l.b16 %v474
        %v568 = vunpack.c.h.b16 %v474
        %v569 = vunpack.c.l.b16 %v475
        %v570 = vunpack.c.h.b16 %v475
        %v571 = vunpack.c.l.b16 %v476
        %v572 = vunpack.c.h.b16 %v476
        %v573 = vunpack.c.l.b16 %v477
        %v574 = vunpack.c.h.b16 %v477
        %v575 = vunpack.c.l.b16 %v478
        %v576 = vunpack.c.h.b16 %v478
        %v577 = vunpack.c.l.b16 %v479
        %v578 = vunpack.c.h.b16 %v479
        %v579 = vunpack.c.l.b16 %v480
        %v580 = vunpack.c.h.b16 %v480
        %v581 = vunpack.c.l.b16 %v481
        %v582 = vunpack.c.h.b16 %v481
        %v583 = vunpack.c.l.b16 %v482
        %v584 = vunpack.c.h.b16 %v482
        %v585 = vunpack.c.l.b16 %v483
        %v586 = vunpack.c.h.b16 %v483
        %v587 = vunpack.c.l.b16 %v484
        %v588 = vunpack.c.h.b16 %v484
        %v589 = vunpack.c.l.b16 %v485
        %v590 = vunpack.c.h.b16 %v485
        %v591 = vunpack.c.l.b16 %v486
        %v592 = vunpack.c.h.b16 %v486
        %v593 = vpack.c.b16 %v531, %v529
        %v594 = vpack.c.b16 %v532, %v530
        %v595 = vpack.c.b16 %v535, %v533
        %v596 = vpack.c.b16 %v536, %v534
        %v597 = vpack.c.b16 %v539, %v537
        %v598 = vpack.c.b16 %v540, %v538
        %v599 = vpack.c.b16 %v543, %v541
        %v600 = vpack.c.b16 %v544, %v542
        %v601 = vpack.c.b16 %v547, %v545
        %v602 = vpack.c.b16 %v548, %v546
        %v603 = vpack.c.b16 %v551, %v549
        %v604 = vpack.c.b16 %v552, %v550
        %v605 = vpack.c.b16 %v555, %v553
        %v606 = vpack.c.b16 %v556, %v554
        %v607 = vpack.c.b16 %v559, %v557
        %v608 = vpack.c.b16 %v560, %v558
        %v609 = vpack.c.b16 %v563, %v561
        %v610 = vpack.c.b16 %v564, %v562
        %v611 = vpack.c.b16 %v567, %v565
        %v612 = vpack.c.b16 %v568, %v566
        %v613 = vpack.c.b16 %v571, %v569
        %v614 = vpack.c.b16 %v572, %v570
        %v615 = vpack.c.b16 %v575, %v573
        %v616 = vpack.c.b16 %v576, %v574
        %v617 = vpack.c.b16 %v579, %v577
        %v618 = vpack.c.b16 %v580, %v578
        %v619 = vpack.c.b16 %v583, %v581
        %v620 = vpack.c.b16 %v584, %v582
        %v621 = vpack.c.b16 %v587, %v585
        %v622 = vpack.c.b16 %v588, %v586
        %v623 = vpack.c.b16 %v591, %v589
        %v624 = vpack.c.b16 %v592, %v590
        %657 = vmatprep.subr.bf16.mxu0 %v608
        %658 = vmatpush1.bf16.msra.mxu0 %v607
        %659 = vmatprep.subr.bf16.mxu0 %v606
        %660 = vmatpush1.bf16.msra.mxu0 %v605
        %661 = vmatprep.subr.bf16.mxu0 %v604
        %662 = vmatpush1.bf16.msra.mxu0 %v603
        %663 = vmatprep.subr.bf16.mxu0 %v602
        %664 = vmatpush1.bf16.msra.mxu0 %v601
        %665 = vmatprep.subr.bf16.mxu0 %v600
        %666 = vmatpush1.bf16.msra.mxu0 %v599
        %667 = vmatprep.subr.bf16.mxu0 %v598
        %668 = vmatpush1.bf16.msra.mxu0 %v597
        %669 = vmatprep.subr.bf16.mxu0 %v596
        %670 = vmatpush1.bf16.msra.mxu0 %v595
        %671 = vmatprep.subr.bf16.mxu0 %v594
        %672 = vmatpush1.bf16.msra.mxu0 %v593
        %673 = vmatprep.subr.bf16.mxu0 %v624
        %674 = vmatpush2.bf16.msra.mxu0 %v623
        %675 = vmatprep.subr.bf16.mxu0 %v622
        %676 = vmatpush2.bf16.msra.mxu0 %v621
        %677 = vmatprep.subr.bf16.mxu0 %v620
        %678 = vmatpush2.bf16.msra.mxu0 %v619
        %679 = vmatprep.subr.bf16.mxu0 %v618
        %680 = vmatpush2.bf16.msra.mxu0 %v617
        %681 = vmatprep.subr.bf16.mxu0 %v616
        %682 = vmatpush2.bf16.msra.mxu0 %v615
        %683 = vmatprep.subr.bf16.mxu0 %v614
        %684 = vmatpush2.bf16.msra.mxu0 %v613
        %685 = vmatprep.subr.bf16.mxu0 %v612
        %686 = vmatpush2.bf16.msra.mxu0 %v611
        %687 = vmatprep.subr.bf16.mxu0 %v610
        %688 = vmatpush2.bf16.msra.mxu0 %v609
        %689 = vmatprep.mubr.bf16.mxu0 %v494
        %690 = vmatmul.mubr.bf16.gmra.mxu0 %v493
        %v691 = vpop.f32.mrf.mxu0
        %v692 = vadd.f32 0.0, %v691
        %v693 = vpop.f32.mrf.mxu0
        %v694 = vadd.f32 0.0, %v693
        %v695 = vpop.f32.mrf.mxu0
        %v696 = vadd.f32 0.0, %v695
        %v697 = vpop.f32.mrf.mxu0
        %v698 = vadd.f32 0.0, %v697
        %699 = vdwg.mxu0
        %v700 = vadd.f32 %v449, %v692
        %v701 = vadd.f32 %v450, %v694
        %v702 = vadd.f32 %v451, %v696
        %v703 = vadd.f32 %v452, %v698
        %704 = vst [vmem:[#allocation2] sm:$0xff] %v700
        %705 = vst [vmem:[#allocation2 + $0x8] sm:$0xff] %v701
        %706 = vst [vmem:[#allocation2 + $0x10] sm:$0xff] %v702
        %707 = vst [vmem:[#allocation2 + $0x18] sm:$0xff] %v703
        %p708 = scmp.eq.s32.totalorder %s21, 26
        // Predicated region
        $region113: #{_lambda_.15} parent=99 // pred_check
          %p709 = pneg %p708
        $region114: #{_lambda_.15} parent=99 // pred_check_branch
          %711 = sbr.rel (%p709) target = $region116
        $region115: #{_lambda_.15} parent=99 // pred_region
          %v712 = vld [vmem:[#allocation2] sm:$0xff]
          %v713 = vld [vmem:[#allocation2 + $0x8] sm:$0xff]
          %v714 = vld [vmem:[#allocation2 + $0x10] sm:$0xff]
          %v715 = vld [vmem:[#allocation2 + $0x18] sm:$0xff]
          %v716 = vld [vmem:[%s437] sm:$0x3]
          %v718 = vlaneseq
          %v719 = vshrl.u32 %v718, 7
          %v720 = vsub.s32 0, %v719
          %v721 = vrot.slane %v716, %v720
          %v722 = vlaneseq
          %v723 = vshrl.u32 %v722, 7
          %v724 = vsub.s32 1, %v723
          %v725 = vrot.slane %v716, %v724
          %v728 = vadd.f32 %v712, %v721
          %v729 = vadd.f32 %v713, %v725
          %v730 = vadd.f32 %v714, %v721
          %v731 = vadd.f32 %v715, %v725
          %v732 = vmax.f32 %v728, 0.0
          %v733 = vmax.f32 %v729, 0.0
          %v734 = vmax.f32 %v730, 0.0
          %v735 = vmax.f32 %v731, 0.0
          %v736 = vpack.c.bf16 %v734, %v732
          %v737 = vpack.c.bf16 %v735, %v733
          %v740 = vunpack.c.l.b16 %v736
          %v741 = vunpack.c.l.b16 %v737
          %v742 = vunpack.c.h.b16 %v736
          %v743 = vunpack.c.h.b16 %v737
          %v744 = vpack.c.b16 %v741, %v740
          %v745 = vpack.c.b16 %v743, %v742
          %748 = vst [vmem:[%s429] sm:$0xff] %v744
          %749 = vst [vmem:[%s429 + $0x8] sm:$0xff] %v745
        $region116: #{_lambda_.15} parent=99 // pred_fallthru
          _
        %s750 = sand.u32 %s125, 1
        %s751 = sand.u32 %s125, 1
        %s752 = smul.addr %s751, 16
        %s753 = scalar_lea.vmem [#allocation5], %s752
        // Predicated region
        $region117: #{_lambda_.15} parent=99 // pred_check
          %p754 = pneg %p135
        $region118: #{_lambda_.15} parent=99 // pred_check_branch
          %756 = sbr.rel (%p754) target = $region120
        $region119: #{_lambda_.15} parent=99 // pred_region
          %s757 = smul.u32 2, %s19
          %s758 = smul.u32 2, %s20
          %s759 = smul.addr %s757, 4
          %s760 = sadd.s32 %s758, %s759
          %s761 = smul.addr %s760, 4
          %s762 = scalar_lea.vmem %s3, %s761
          // Predicated region
          $region121: #{_lambda_.15} parent=119 // pred_check
            _
          $region122: #{_lambda_.15} parent=119 // pred_check_branch
            %764 = sbr.rel (0) target = $region124
          $region123: #{_lambda_.15} parent=119 // pred_region
            // Predicated region
            $region125: #{_lambda_.15} parent=123 // pred_check
              _
            $region126: #{_lambda_.15} parent=123 // pred_check_branch
              %766 = sbr.rel (0) target = $region128
            $region127: #{_lambda_.15} parent=123 // pred_region
              // Predicated region
              $region140: #{_lambda_.15} parent=127 // pred_check
                _
              $region141: #{_lambda_.15} parent=127 // pred_check_branch
                %784 = sbr.rel (0) target = $region143
              $region142: #{_lambda_.15} parent=127 // pred_region
                loop: start=0, step=1, limit=1
                $region144: #{_lambda_.15} parent=142 // loop_pre_header
                  _
                $region145: #{_lambda_.15} parent=142 // loop_header
                  %s786 = sphi 0, %s790
                  %p787 = scmp.ge.s32.totalorder %s786, 1
                  %s791 = sphi %s753, %s753
                  %s792 = sphi %s762, %s762
                $region146: #{_lambda_.15} parent=142 // loop_header_branch
                  %789 = sbr.rel (%p787) target = $region150
                $region147: #{_lambda_.15} parent=142 // loop_body
                  %v793 = vld [vmem:[%s791] sm:$0xff]
                  %794 = vst [vmem:[%s792] sm:$0xff] %v793
                  %v795 = vld [vmem:[%s791 + $0x8] sm:$0xff]
                  %796 = vst [vmem:[%s792 + $0x10] sm:$0xff] %v795
                $region148: #{_lambda_.15} parent=142 // loop_footer
                  %s790 = sadd.s32 1, %s786
                $region149: #{_lambda_.15} parent=142 // loop_footer_branch
                  %785 = sbr.rel target = $region145
                $region150: #{_lambda_.15} parent=142 // loop_exit
                  _
              $region143: #{_lambda_.15} parent=127 // pred_fallthru
                _
              // Predicated region
              $region151: #{_lambda_.15} parent=127 // pred_check
                _
              $region152: #{_lambda_.15} parent=127 // pred_check_branch
                %798 = sbr.rel target = $region154
              $region153: #{_lambda_.15} parent=127 // pred_region
                _
              $region154: #{_lambda_.15} parent=127 // pred_fallthru
                _
            $region128: #{_lambda_.15} parent=123 // pred_fallthru
              _
            // Predicated region
            $region129: #{_lambda_.15} parent=123 // pred_check
              _
            $region130: #{_lambda_.15} parent=123 // pred_check_branch
              %768 = sbr.rel target = $region132
            $region131: #{_lambda_.15} parent=123 // pred_region
              %s770 = ssub.s32 256, 1
              loop: start=0, step=1, limit=1
              $region133: #{_lambda_.15} parent=131 // loop_pre_header
                _
              $region134: #{_lambda_.15} parent=131 // loop_header
                %s772 = sphi 0, %s776
                %p773 = scmp.ge.s32.totalorder %s772, 1
                %s777 = sphi %s753, %s753
                %s778 = sphi %s762, %s762
              $region135: #{_lambda_.15} parent=131 // loop_header_branch
                %775 = sbr.rel (%p773) target = $region139
              $region136: #{_lambda_.15} parent=131 // loop_body
                %v779 = vld [vmem:[%s777] sm:%s770]
                %780 = vst [vmem:[%s778] sm:%s770] %v779
                %v781 = vld [vmem:[%s777 + $0x8] sm:%s770]
                %782 = vst [vmem:[%s778 + $0x10] sm:%s770] %v781
              $region137: #{_lambda_.15} parent=131 // loop_footer
                %s776 = sadd.s32 1, %s772
              $region138: #{_lambda_.15} parent=131 // loop_footer_branch
                %771 = sbr.rel target = $region134
              $region139: #{_lambda_.15} parent=131 // loop_exit
                _
            $region132: #{_lambda_.15} parent=123 // pred_fallthru
              _
          $region124: #{_lambda_.15} parent=119 // pred_fallthru
            _
          %799 = vnop
        $region120: #{_lambda_.15} parent=99 // pred_fallthru
          _
      $region100: #{_lambda_.15} parent=5 // pred_fallthru
        _
      %p800 = scmp.le.s32.totalorder 2, %s9
      // Predicated region
      $region155: #{_lambda_.15} parent=5 // pred_check
        %p801 = pneg %p800
      $region156: #{_lambda_.15} parent=5 // pred_check_branch
        %803 = sbr.rel (%p801) target = $region158
      $region157: #{_lambda_.15} parent=5 // pred_region
        %s804 = ssub.s32 %s9, 2
        // Predicated region
        $region159: #{_lambda_.15} parent=157 // pred_check
          %p805 = pneg %p141
        $region160: #{_lambda_.15} parent=157 // pred_check_branch
          %807 = sbr.rel (%p805) target = $region162
        $region161: #{_lambda_.15} parent=157 // pred_region
          %s808 = sand.u32 %s126, 1
          %s809 = sand.u32 %s126, 1
          %s810 = smul.addr %s809, 16
          %s811 = scalar_lea.vmem [#allocation5], %s810
        $region162: #{_lambda_.15} parent=157 // pred_fallthru
          _
      $region158: #{_lambda_.15} parent=5 // pred_fallthru
        _
    $region6: #{_lambda_.15} parent=1 // loop_footer
      %s13 = sadd.s32 1, %s9
    $region7: #{_lambda_.15} parent=1 // loop_footer_branch
      %8 = sbr.rel target = $region3
    $region8: #{_lambda_.15} parent=1 // loop_exit
      _

// kernel: _lambda_.16
$region0: #{_lambda_.16}
  #allocation0 [shape = 'u32[]', space=smem, size = 0x4, offset = 0x4, fixed_abs, tag = 'smem constant byte address 0x4 - core index']
  #allocation1 [shape = 'u32[144,128]{1,0:T(1,128)}', space=vmem, size = 0x12000, scoped, tag = 'internal scratch']
  %s0 = inlined_call_operand.vmem [shape: bf16[4,2,2,2,2,1024], index: 0, kind: input, shape index: {}]
  %s1 = inlined_call_operand.vmem [shape: bf16[4,2,2,512], index: 1, kind: output, shape index: {}]
  %s2 = sld [smem:[#allocation0]]
  $region14: #{_lambda_.16} parent=0
    _
  %s4 = ssub.s32 1, %s2
  %s5 = scalar_select 0, %s4, %s2
  // Predicated region
  $region2: #{_lambda_.16} parent=0 // pred_check
    _
  $region3: #{_lambda_.16} parent=0 // pred_check_branch
    %7 = sbr.rel (0) target = $region5
  $region4: #{_lambda_.16} parent=0 // pred_region
    _
  $region5: #{_lambda_.16} parent=0 // pred_fallthru
    _
  %v8 = vld [vmem:[%s0] sm:$0xff]
  %v9 = vld [vmem:[%s0 + $0x8] sm:$0xff]
  %v10 = vld [vmem:[%s0 + $0x10] sm:$0xff]
  %v11 = vld [vmem:[%s0 + $0x18] sm:$0xff]
  %v12 = vld [vmem:[%s0 + $0x20] sm:$0xff]
  %v13 = vld [vmem:[%s0 + $0x28] sm:$0xff]
  %v14 = vld [vmem:[%s0 + $0x30] sm:$0xff]
  %v15 = vld [vmem:[%s0 + $0x38] sm:$0xff]
  %v16 = vld [vmem:[%s0 + $0x40] sm:$0xff]
  %v17 = vld [vmem:[%s0 + $0x48] sm:$0xff]
  %v18 = vld [vmem:[%s0 + $0x50] sm:$0xff]
  %v19 = vld [vmem:[%s0 + $0x58] sm:$0xff]
  %v20 = vld [vmem:[%s0 + $0x60] sm:$0xff]
  %v21 = vld [vmem:[%s0 + $0x68] sm:$0xff]
  %v22 = vld [vmem:[%s0 + $0x70] sm:$0xff]
  %v23 = vld [vmem:[%s0 + $0x78] sm:$0xff]
  %v24 = vld [vmem:[%s0 + $0x80] sm:$0xff]
  %v25 = vld [vmem:[%s0 + $0x88] sm:$0xff]
  %v26 = vld [vmem:[%s0 + $0x90] sm:$0xff]
  %v27 = vld [vmem:[%s0 + $0x98] sm:$0xff]
  %v28 = vld [vmem:[%s0 + $0xa0] sm:$0xff]
  %v29 = vld [vmem:[%s0 + $0xa8] sm:$0xff]
  %v30 = vld [vmem:[%s0 + $0xb0] sm:$0xff]
  %v31 = vld [vmem:[%s0 + $0xb8] sm:$0xff]
  %v32 = vld [vmem:[%s0 + $0xc0] sm:$0xff]
  %v33 = vld [vmem:[%s0 + $0xc8] sm:$0xff]
  %v34 = vld [vmem:[%s0 + $0xd0] sm:$0xff]
  %v35 = vld [vmem:[%s0 + $0xd8] sm:$0xff]
  %v36 = vld [vmem:[%s0 + $0xe0] sm:$0xff]
  %v37 = vld [vmem:[%s0 + $0xe8] sm:$0xff]
  %v38 = vld [vmem:[%s0 + $0xf0] sm:$0xff]
  %v39 = vld [vmem:[%s0 + $0xf8] sm:$0xff]
  %v40 = vmax.bf16 %v8, %v12
  %v41 = vmax.bf16 %v9, %v13
  %v42 = vmax.bf16 %v10, %v14
  %v43 = vmax.bf16 %v11, %v15
  %v44 = vmax.bf16 %v16, %v20
  %v45 = vmax.bf16 %v17, %v21
  %v46 = vmax.bf16 %v18, %v22
  %v47 = vmax.bf16 %v19, %v23
  %v48 = vmax.bf16 %v24, %v28
  %v49 = vmax.bf16 %v25, %v29
  %v50 = vmax.bf16 %v26, %v30
  %v51 = vmax.bf16 %v27, %v31
  %v52 = vmax.bf16 %v32, %v36
  %v53 = vmax.bf16 %v33, %v37
  %v54 = vmax.bf16 %v34, %v38
  %v55 = vmax.bf16 %v35, %v39
  %v56 = vmax.bf16 %v40, %v41
  %v57 = vmax.bf16 %v42, %v43
  %v58 = vmax.bf16 %v44, %v45
  %v59 = vmax.bf16 %v46, %v47
  %v60 = vmax.bf16 %v48, %v49
  %v61 = vmax.bf16 %v50, %v51
  %v62 = vmax.bf16 %v52, %v53
  %v63 = vmax.bf16 %v54, %v55
  %v72 = vrot.slane %v56, 4
  %v73 = vrot.slane %v57, 4
  %v74 = vrot.slane %v58, 4
  %v75 = vrot.slane %v59, 4
  %v76 = vrot.slane %v60, 4
  %v77 = vrot.slane %v61, 4
  %v78 = vrot.slane %v62, 4
  %v79 = vrot.slane %v63, 4
  %v88 = vmax.bf16 %v56, %v72
  %v89 = vmax.bf16 %v57, %v73
  %v90 = vmax.bf16 %v58, %v74
  %v91 = vmax.bf16 %v59, %v75
  %v92 = vmax.bf16 %v60, %v76
  %v93 = vmax.bf16 %v61, %v77
  %v94 = vmax.bf16 %v62, %v78
  %v95 = vmax.bf16 %v63, %v79
  %96 = vst [vmem:[%s1] sm:$0xf] %v88
  %97 = vst [vmem:[%s1 + $0x4] sm:$0xf] %v89
  %98 = vst [vmem:[%s1 + $0x8] sm:$0xf] %v90
  %99 = vst [vmem:[%s1 + $0xc] sm:$0xf] %v91
  %100 = vst [vmem:[%s1 + $0x10] sm:$0xf] %v92
  %101 = vst [vmem:[%s1 + $0x14] sm:$0xf] %v93
  %102 = vst [vmem:[%s1 + $0x18] sm:$0xf] %v94
  %103 = vst [vmem:[%s1 + $0x1c] sm:$0xf] %v95
  // Predicated region
  $region6: #{_lambda_.16} parent=0 // pred_check
    _
  $region7: #{_lambda_.16} parent=0 // pred_check_branch
    %105 = sbr.rel (0) target = $region9
  $region8: #{_lambda_.16} parent=0 // pred_region
    _
  $region9: #{_lambda_.16} parent=0 // pred_fallthru
    _
  // Predicated region
  $region10: #{_lambda_.16} parent=0 // pred_check
    _
  $region11: #{_lambda_.16} parent=0 // pred_check_branch
    %107 = sbr.rel (0) target = $region13
  $region12: #{_lambda_.16} parent=0 // pred_region
    _
  $region13: #{_lambda_.16} parent=0 // pred_fallthru
    _

// kernel: _lambda_.17
$region0: #{_lambda_.17}
  #allocation0 [shape = 'u32[]', space=smem, size = 0x4, offset = 0x4, fixed_abs, tag = 'smem constant byte address 0x4 - core index']
  #allocation1 [shape = 'u32[144,128]{1,0:T(1,128)}', space=vmem, size = 0x12000, scoped, tag = 'internal scratch']
  #allocation2 [shape = 'f32[8,128]{1,0:T(8,128)}', space=vmem, size = 0x1000, scoped, tag = 'scratch operand']
  %s0 = inlined_call_operand.vmem [shape: bf16[8,4096], index: 0, kind: input, shape index: {}]
  %s1 = inlined_call_operand.vmem [shape: bf16[4096,128], index: 1, kind: input, shape index: {}]
  %s2 = inlined_call_operand.vmem [shape: f32[1,128], index: 2, kind: input, shape index: {}]
  %s3 = inlined_call_operand.vmem [shape: f32[8,128], index: 3, kind: output, shape index: {}]
  %s4 = sld [smem:[#allocation0]]
  $region53: #{_lambda_.17} parent=0
    _
  %s6 = ssub.s32 1, %s4
  %s7 = scalar_select 0, %s6, %s4
  loop: start=0, step=1, limit=10
  $region2: #{_lambda_.17} parent=0 // loop_pre_header
    _
  $region3: #{_lambda_.17} parent=0 // loop_header
    %s9 = sphi 0, %s13
    %p10 = scmp.ge.s32.totalorder %s9, 10
    %s16 = sphi 0, %s35
    %s17 = sphi 0, %s31
    %s18 = sphi 0, %s27
    %s19 = sphi 0, %s16
    %s20 = sphi 0, %s17
    %s21 = sphi 0, %s18
    %s22 = sphi 0, %s19
    %s23 = sphi 0, %s20
    %s24 = sphi 0, %s21
    %s40 = sphi 0, %s42
    %s43 = sphi 0, %s40
    %s44 = sphi 0, %s43
    %s60 = sphi 0, %s44
    %s68 = sphi 0, %s70
    %s71 = sphi 0, %s68
    %s72 = sphi 0, %s71
    %s88 = sphi 0, %s72
    %s94 = sphi 0, %s96
    %s97 = sphi 0, %s94
    %s98 = sphi 0, %s97
    %s114 = sphi 0, %s98
    %s122 = sphi 0, %s124
    %s125 = sphi 0, %s122
    %s126 = sphi 0, %s125
    %s142 = sphi 0, %s126
  $region4: #{_lambda_.17} parent=0 // loop_header_branch
    %12 = sbr.rel (%p10) target = $region8
  $region5: #{_lambda_.17} parent=0 // loop_body
    %s14 = ssub.s32 %s9, 1
    %s15 = ssub.s32 %s9, 2
    %s25 = sadd.s32 1, %s18
    %p26 = scmp.ge.s32.totalorder %s25, 8
    %s27 = scalar_select %p26, 0, %s25
    %s28 = sadd.s32 1, %s17
    %s29 = scalar_select %p26, %s28, %s17
    %p30 = scmp.ge.s32.totalorder %s29, 1
    %s31 = scalar_select %p30, 0, %s29
    %s32 = sadd.s32 1, %s16
    %s33 = scalar_select %p30, %s32, %s16
    %p34 = scmp.ge.s32.totalorder %s33, 1
    %s35 = scalar_select %p34, 0, %s33
    %s36 = ssub.s32 %s16, %s35
    %s37 = ssub.s32 %s18, %s27
    %s38 = sor.u32 %s36, %s37
    %p39 = scmp.eq.s32.totalorder %s38, 0
    %s41 = sadd.s32 %s40, 1
    %s42 = scalar_select %p39, %s40, %s41
    %p45 = pneg %p39
    %p46 = scmp.eq.s32.totalorder %s9, 7
    %p47 = por %p45, %p46
    %p48 = scmp.ne.s32.totalorder %s40, %s43
    %p49 = scmp.eq.s32.totalorder %s9, 0
    %p50 = por %p48, %p49
    %p51 = scmp.ne.s32.totalorder %s40, %s43
    %p52 = scmp.eq.s32.totalorder %s14, 7
    %p53 = por %p51, %p52
    %p54 = scmp.ne.s32.totalorder %s43, %s44
    %p55 = scmp.eq.s32.totalorder %s14, 0
    %p56 = por %p54, %p55
    %p57 = scmp.ne.s32.totalorder %s43, %s44
    %p58 = scmp.eq.s32.totalorder %s15, 7
    %p59 = por %p57, %p58
    %p61 = scmp.ne.s32.totalorder %s44, %s60
    %p62 = scmp.eq.s32.totalorder %s15, 0
    %p63 = por %p61, %p62
    %s64 = ssub.s32 %s18, %s27
    %s65 = ssub.s32 %s17, %s31
    %s66 = sor.u32 %s64, %s65
    %p67 = scmp.eq.s32.totalorder %s66, 0
    %s69 = sadd.s32 %s68, 1
    %s70 = scalar_select %p67, %s68, %s69
    %p73 = pneg %p67
    %p74 = scmp.eq.s32.totalorder %s9, 7
    %p75 = por %p73, %p74
    %p76 = scmp.ne.s32.totalorder %s68, %s71
    %p77 = scmp.eq.s32.totalorder %s9, 0
    %p78 = por %p76, %p77
    %p79 = scmp.ne.s32.totalorder %s68, %s71
    %p80 = scmp.eq.s32.totalorder %s14, 7
    %p81 = por %p79, %p80
    %p82 = scmp.ne.s32.totalorder %s71, %s72
    %p83 = scmp.eq.s32.totalorder %s14, 0
    %p84 = por %p82, %p83
    %p85 = scmp.ne.s32.totalorder %s71, %s72
    %p86 = scmp.eq.s32.totalorder %s15, 7
    %p87 = por %p85, %p86
    %p89 = scmp.ne.s32.totalorder %s72, %s88
    %p90 = scmp.eq.s32.totalorder %s15, 0
    %p91 = por %p89, %p90
    %s92 = ssub.s32 %s17, %s31
    %p93 = scmp.eq.s32.totalorder %s92, 0
    %s95 = sadd.s32 %s94, 1
    %s96 = scalar_select %p93, %s94, %s95
    %p99 = pneg %p93
    %p100 = scmp.eq.s32.totalorder %s9, 7
    %p101 = por %p99, %p100
    %p102 = scmp.ne.s32.totalorder %s94, %s97
    %p103 = scmp.eq.s32.totalorder %s9, 0
    %p104 = por %p102, %p103
    %p105 = scmp.ne.s32.totalorder %s94, %s97
    %p106 = scmp.eq.s32.totalorder %s14, 7
    %p107 = por %p105, %p106
    %p108 = scmp.ne.s32.totalorder %s97, %s98
    %p109 = scmp.eq.s32.totalorder %s14, 0
    %p110 = por %p108, %p109
    %p111 = scmp.ne.s32.totalorder %s97, %s98
    %p112 = scmp.eq.s32.totalorder %s15, 7
    %p113 = por %p111, %p112
    %p115 = scmp.ne.s32.totalorder %s98, %s114
    %p116 = scmp.eq.s32.totalorder %s15, 0
    %p117 = por %p115, %p116
    %s118 = ssub.s32 %s16, %s35
    %s119 = ssub.s32 %s17, %s31
    %s120 = sor.u32 %s118, %s119
    %p121 = scmp.eq.s32.totalorder %s120, 0
    %s123 = sadd.s32 %s122, 1
    %s124 = scalar_select %p121, %s122, %s123
    %p127 = pneg %p121
    %p128 = scmp.eq.s32.totalorder %s9, 7
    %p129 = por %p127, %p128
    %p130 = scmp.ne.s32.totalorder %s122, %s125
    %p131 = scmp.eq.s32.totalorder %s9, 0
    %p132 = por %p130, %p131
    %p133 = scmp.ne.s32.totalorder %s122, %s125
    %p134 = scmp.eq.s32.totalorder %s14, 7
    %p135 = por %p133, %p134
    %p136 = scmp.ne.s32.totalorder %s125, %s126
    %p137 = scmp.eq.s32.totalorder %s14, 0
    %p138 = por %p136, %p137
    %p139 = scmp.ne.s32.totalorder %s125, %s126
    %p140 = scmp.eq.s32.totalorder %s15, 7
    %p141 = por %p139, %p140
    %p143 = scmp.ne.s32.totalorder %s126, %s142
    %p144 = scmp.eq.s32.totalorder %s15, 0
    %p145 = por %p143, %p144
    %p146 = scmp.le.s32.totalorder 1, %s9
    %p147 = scmp.lt.s32.totalorder %s9, 9
    %p148 = pnand %p146, %p147
    %p149 = pneg %p148
    // Predicated region
    $region9: #{_lambda_.17} parent=5 // pred_check
      _
    $region10: #{_lambda_.17} parent=5 // pred_check_branch
      %151 = sbr.rel (%p148) target = $region12
    $region11: #{_lambda_.17} parent=5 // pred_region
      %s152 = ssub.s32 %s9, 1
      // Predicated region
      $region13: #{_lambda_.17} parent=11 // pred_check
        %p153 = pneg %p110
      $region14: #{_lambda_.17} parent=11 // pred_check_branch
        %155 = sbr.rel (%p153) target = $region16
      $region15: #{_lambda_.17} parent=11 // pred_region
        %p156 = scmp.lt.s32.totalorder %s20, 0
        %s157 = scalar_select %p156, %s20, 0
        %s158 = scalar_lea.vmem %s2, %s157
      $region16: #{_lambda_.17} parent=11 // pred_fallthru
        _
    $region12: #{_lambda_.17} parent=5 // pred_fallthru
      _
    %p159 = scmp.lt.s32.totalorder %s9, 8
    // Predicated region
    $region17: #{_lambda_.17} parent=5 // pred_check
      %p160 = pneg %p159
    $region18: #{_lambda_.17} parent=5 // pred_check_branch
      %162 = sbr.rel (%p160) target = $region20
    $region19: #{_lambda_.17} parent=5 // pred_region
      // Predicated region
      $region21: #{_lambda_.17} parent=19 // pred_check
        %p163 = pneg %p50
      $region22: #{_lambda_.17} parent=19 // pred_check_branch
        %165 = sbr.rel (%p163) target = $region24
      $region23: #{_lambda_.17} parent=19 // pred_region
        %s166 = smul.u32 4, %s18
        %p167 = scmp.lt.s32.totalorder %s16, 0
        %s168 = scalar_select %p167, %s16, 0
        %p169 = scmp.lt.s32.totalorder %s166, 31
        %s170 = scalar_select %p169, %s166, 31
        %s171 = smul.addr %s168, 32
        %s172 = sadd.s32 %s170, %s171
        %s173 = smul.addr %s172, 4
        %s174 = scalar_lea.vmem %s0, %s173
        %s175 = smul.u32 4, %s18
      $region24: #{_lambda_.17} parent=19 // pred_fallthru
        _
      // Predicated region
      $region25: #{_lambda_.17} parent=19 // pred_check
        %p176 = pneg %p78
      $region26: #{_lambda_.17} parent=19 // pred_check_branch
        %178 = sbr.rel (%p176) target = $region28
      $region27: #{_lambda_.17} parent=19 // pred_region
        %s179 = smul.u32 64, %s18
        %p180 = scmp.lt.s32.totalorder %s179, 511
        %s181 = scalar_select %p180, %s179, 511
        %p182 = scmp.lt.s32.totalorder %s17, 0
        %s183 = scalar_select %p182, %s17, 0
        %s184 = sadd.s32 %s183, %s181
        %s185 = smul.addr %s184, 4
        %s186 = scalar_lea.vmem %s1, %s185
        %s187 = smul.u32 64, %s18
      $region28: #{_lambda_.17} parent=19 // pred_fallthru
        _
    $region20: #{_lambda_.17} parent=5 // pred_fallthru
      _
    %p188 = scmp.le.s32.totalorder 1, %s9
    %p189 = scmp.lt.s32.totalorder %s9, 9
    %p190 = pnand %p188, %p189
    %p191 = pneg %p190
    // Predicated region
    $region29: #{_lambda_.17} parent=5 // pred_check
      _
    $region30: #{_lambda_.17} parent=5 // pred_check_branch
      %193 = sbr.rel (%p190) target = $region32
    $region31: #{_lambda_.17} parent=5 // pred_region
      %s194 = ssub.s32 %s9, 1
      %s195 = smul.u32 4, %s21
      %p196 = scmp.lt.s32.totalorder %s19, 0
      %s197 = scalar_select %p196, %s19, 0
      %p198 = scmp.lt.s32.totalorder %s195, 31
      %s199 = scalar_select %p198, %s195, 31
      %s200 = smul.addr %s197, 32
      %s201 = sadd.s32 %s199, %s200
      %s202 = smul.addr %s201, 4
      %s203 = scalar_lea.vmem %s0, %s202
      %p204 = pneg %p56
      %p205 = pneg %p53
      %s206 = smul.u32 64, %s21
      %p207 = scmp.lt.s32.totalorder %s206, 511
      %s208 = scalar_select %p207, %s206, 511
      %p209 = scmp.lt.s32.totalorder %s20, 0
      %s210 = scalar_select %p209, %s20, 0
      %s211 = sadd.s32 %s210, %s208
      %s212 = smul.addr %s211, 4
      %s213 = scalar_lea.vmem %s1, %s212
      %p214 = pneg %p84
      %p215 = pneg %p81
      %p216 = scmp.lt.s32.totalorder %s20, 0
      %s217 = scalar_select %p216, %s20, 0
      %s218 = scalar_lea.vmem %s2, %s217
      %p219 = pneg %p110
      %p220 = pneg %p107
      %p221 = pneg %p138
      %p222 = pneg %p135
      %p223 = scmp.lt.s32.totalorder %s19, 0
      %s224 = scalar_select %p223, %s19, 0
      %p225 = scmp.lt.s32.totalorder %s20, 0
      %s226 = scalar_select %p225, %s20, 0
      %s227 = sadd.s32 %s226, %s224
      %s228 = smul.addr %s227, 8
      %s229 = scalar_lea.vmem %s3, %s228
      %s230 = smul.u32 4, %s21
      %p231 = scmp.lt.s32.totalorder %s19, 0
      %s232 = scalar_select %p231, %s19, 0
      %p233 = scmp.lt.s32.totalorder %s230, 31
      %s234 = scalar_select %p233, %s230, 31
      %s235 = smul.addr %s232, 32
      %s236 = sadd.s32 %s234, %s235
      %s237 = smul.addr %s236, 4
      %s238 = scalar_lea.vmem %s0, %s237
      %s239 = smul.u32 4, %s21
      %s240 = smul.u32 64, %s21
      %p241 = scmp.lt.s32.totalorder %s240, 511
      %s242 = scalar_select %p241, %s240, 511
      %p243 = scmp.lt.s32.totalorder %s20, 0
      %s244 = scalar_select %p243, %s20, 0
      %s245 = sadd.s32 %s244, %s242
      %s246 = smul.addr %s245, 4
      %s247 = scalar_lea.vmem %s1, %s246
      %s248 = smul.u32 64, %s21
      %p249 = scmp.lt.s32.totalorder %s20, 0
      %s250 = scalar_select %p249, %s20, 0
      %s251 = scalar_lea.vmem %s2, %s250
      %p252 = scmp.lt.s32.totalorder %s19, 0
      %s253 = scalar_select %p252, %s19, 0
      %p254 = scmp.lt.s32.totalorder %s20, 0
      %s255 = scalar_select %p254, %s20, 0
      %s256 = sadd.s32 %s255, %s253
      %s257 = smul.addr %s256, 8
      %s258 = scalar_lea.vmem %s3, %s257
      %p260 = scmp.eq.s32.totalorder %s21, 0
      // Predicated region
      $region33: #{_lambda_.17} parent=31 // pred_check
        %p261 = pneg %p260
      $region34: #{_lambda_.17} parent=31 // pred_check_branch
        %263 = sbr.rel (%p261) target = $region36
      $region35: #{_lambda_.17} parent=31 // pred_region
        %264 = vst [vmem:[#allocation2] sm:$0xff] 0.0
      $region36: #{_lambda_.17} parent=31 // pred_fallthru
        _
      %v265 = vld [vmem:[#allocation2] sm:$0xff]
      %v266 = vld [vmem:[%s238] sm:$0xff]
      %v267 = vld [vmem:[%s238 + $0x8] sm:$0xff]
      %v268 = vld [vmem:[%s247] sm:$0xf]
      %v269 = vld [vmem:[%s247 + $0x4] sm:$0xf]
      %v270 = vld [vmem:[%s247 + $0x8] sm:$0xf]
      %v271 = vld [vmem:[%s247 + $0xc] sm:$0xf]
      %v272 = vld [vmem:[%s247 + $0x10] sm:$0xf]
      %v273 = vld [vmem:[%s247 + $0x14] sm:$0xf]
      %v274 = vld [vmem:[%s247 + $0x18] sm:$0xf]
      %v275 = vld [vmem:[%s247 + $0x1c] sm:$0xf]
      %v276 = vld [vmem:[%s247 + $0x20] sm:$0xf]
      %v277 = vld [vmem:[%s247 + $0x24] sm:$0xf]
      %v278 = vld [vmem:[%s247 + $0x28] sm:$0xf]
      %v279 = vld [vmem:[%s247 + $0x2c] sm:$0xf]
      %v280 = vld [vmem:[%s247 + $0x30] sm:$0xf]
      %v281 = vld [vmem:[%s247 + $0x34] sm:$0xf]
      %v282 = vld [vmem:[%s247 + $0x38] sm:$0xf]
      %v283 = vld [vmem:[%s247 + $0x3c] sm:$0xf]
      %v284 = vld [vmem:[%s247 + $0x40] sm:$0xf]
      %v285 = vld [vmem:[%s247 + $0x44] sm:$0xf]
      %v286 = vld [vmem:[%s247 + $0x48] sm:$0xf]
      %v287 = vld [vmem:[%s247 + $0x4c] sm:$0xf]
      %v288 = vld [vmem:[%s247 + $0x50] sm:$0xf]
      %v289 = vld [vmem:[%s247 + $0x54] sm:$0xf]
      %v290 = vld [vmem:[%s247 + $0x58] sm:$0xf]
      %v291 = vld [vmem:[%s247 + $0x5c] sm:$0xf]
      %v292 = vld [vmem:[%s247 + $0x60] sm:$0xf]
      %v293 = vld [vmem:[%s247 + $0x64] sm:$0xf]
      %v294 = vld [vmem:[%s247 + $0x68] sm:$0xf]
      %v295 = vld [vmem:[%s247 + $0x6c] sm:$0xf]
      %v296 = vld [vmem:[%s247 + $0x70] sm:$0xf]
      %v297 = vld [vmem:[%s247 + $0x74] sm:$0xf]
      %v298 = vld [vmem:[%s247 + $0x78] sm:$0xf]
      %v299 = vld [vmem:[%s247 + $0x7c] sm:$0xf]
      %v300 = vld [vmem:[%s247 + $0x80] sm:$0xf]
      %v301 = vld [vmem:[%s247 + $0x84] sm:$0xf]
      %v302 = vld [vmem:[%s247 + $0x88] sm:$0xf]
      %v303 = vld [vmem:[%s247 + $0x8c] sm:$0xf]
      %v304 = vld [vmem:[%s247 + $0x90] sm:$0xf]
      %v305 = vld [vmem:[%s247 + $0x94] sm:$0xf]
      %v306 = vld [vmem:[%s247 + $0x98] sm:$0xf]
      %v307 = vld [vmem:[%s247 + $0x9c] sm:$0xf]
      %v308 = vld [vmem:[%s247 + $0xa0] sm:$0xf]
      %v309 = vld [vmem:[%s247 + $0xa4] sm:$0xf]
      %v310 = vld [vmem:[%s247 + $0xa8] sm:$0xf]
      %v311 = vld [vmem:[%s247 + $0xac] sm:$0xf]
      %v312 = vld [vmem:[%s247 + $0xb0] sm:$0xf]
      %v313 = vld [vmem:[%s247 + $0xb4] sm:$0xf]
      %v314 = vld [vmem:[%s247 + $0xb8] sm:$0xf]
      %v315 = vld [vmem:[%s247 + $0xbc] sm:$0xf]
      %v316 = vld [vmem:[%s247 + $0xc0] sm:$0xf]
      %v317 = vld [vmem:[%s247 + $0xc4] sm:$0xf]
      %v318 = vld [vmem:[%s247 + $0xc8] sm:$0xf]
      %v319 = vld [vmem:[%s247 + $0xcc] sm:$0xf]
      %v320 = vld [vmem:[%s247 + $0xd0] sm:$0xf]
      %v321 = vld [vmem:[%s247 + $0xd4] sm:$0xf]
      %v322 = vld [vmem:[%s247 + $0xd8] sm:$0xf]
      %v323 = vld [vmem:[%s247 + $0xdc] sm:$0xf]
      %v324 = vld [vmem:[%s247 + $0xe0] sm:$0xf]
      %v325 = vld [vmem:[%s247 + $0xe4] sm:$0xf]
      %v326 = vld [vmem:[%s247 + $0xe8] sm:$0xf]
      %v327 = vld [vmem:[%s247 + $0xec] sm:$0xf]
      %v328 = vld [vmem:[%s247 + $0xf0] sm:$0xf]
      %v329 = vld [vmem:[%s247 + $0xf4] sm:$0xf]
      %v330 = vld [vmem:[%s247 + $0xf8] sm:$0xf]
      %v331 = vld [vmem:[%s247 + $0xfc] sm:$0xf]
      %v334 = vunpack.c.l.b16 %v266
      %v335 = vunpack.c.h.b16 %v266
      %v336 = vunpack.c.l.b16 %v267
      %v337 = vunpack.c.h.b16 %v267
      %v338 = vpack.c.b16 %v334, %v334
      %v339 = vpack.c.b16 %v335, %v335
      %v340 = vpack.c.b16 %v336, %v336
      %v341 = vpack.c.b16 %v337, %v337
      %v410 = vunpack.c.l.b16 %v268
      %v411 = vunpack.c.l.b16 %v269
      %v412 = vunpack.c.l.b16 %v270
      %v413 = vunpack.c.l.b16 %v271
      %v414 = vunpack.c.l.b16 %v272
      %v415 = vunpack.c.l.b16 %v273
      %v416 = vunpack.c.l.b16 %v274
      %v417 = vunpack.c.l.b16 %v275
      %v418 = vunpack.c.l.b16 %v276
      %v419 = vunpack.c.l.b16 %v277
      %v420 = vunpack.c.l.b16 %v278
      %v421 = vunpack.c.l.b16 %v279
      %v422 = vunpack.c.l.b16 %v280
      %v423 = vunpack.c.l.b16 %v281
      %v424 = vunpack.c.l.b16 %v282
      %v425 = vunpack.c.l.b16 %v283
      %v426 = vunpack.c.l.b16 %v284
      %v427 = vunpack.c.l.b16 %v285
      %v428 = vunpack.c.l.b16 %v286
      %v429 = vunpack.c.l.b16 %v287
      %v430 = vunpack.c.l.b16 %v288
      %v431 = vunpack.c.l.b16 %v289
      %v432 = vunpack.c.l.b16 %v290
      %v433 = vunpack.c.l.b16 %v291
      %v434 = vunpack.c.l.b16 %v292
      %v435 = vunpack.c.l.b16 %v293
      %v436 = vunpack.c.l.b16 %v294
      %v437 = vunpack.c.l.b16 %v295
      %v438 = vunpack.c.l.b16 %v296
      %v439 = vunpack.c.l.b16 %v297
      %v440 = vunpack.c.l.b16 %v298
      %v441 = vunpack.c.l.b16 %v299
      %v442 = vunpack.c.l.b16 %v300
      %v443 = vunpack.c.l.b16 %v301
      %v444 = vunpack.c.l.b16 %v302
      %v445 = vunpack.c.l.b16 %v303
      %v446 = vunpack.c.l.b16 %v304
      %v447 = vunpack.c.l.b16 %v305
      %v448 = vunpack.c.l.b16 %v306
      %v449 = vunpack.c.l.b16 %v307
      %v450 = vunpack.c.l.b16 %v308
      %v451 = vunpack.c.l.b16 %v309
      %v452 = vunpack.c.l.b16 %v310
      %v453 = vunpack.c.l.b16 %v311
      %v454 = vunpack.c.l.b16 %v312
      %v455 = vunpack.c.l.b16 %v313
      %v456 = vunpack.c.l.b16 %v314
      %v457 = vunpack.c.l.b16 %v315
      %v458 = vunpack.c.l.b16 %v316
      %v459 = vunpack.c.l.b16 %v317
      %v460 = vunpack.c.l.b16 %v318
      %v461 = vunpack.c.l.b16 %v319
      %v462 = vunpack.c.l.b16 %v320
      %v463 = vunpack.c.l.b16 %v321
      %v464 = vunpack.c.l.b16 %v322
      %v465 = vunpack.c.l.b16 %v323
      %v466 = vunpack.c.l.b16 %v324
      %v467 = vunpack.c.l.b16 %v325
      %v468 = vunpack.c.l.b16 %v326
      %v469 = vunpack.c.l.b16 %v327
      %v470 = vunpack.c.l.b16 %v328
      %v471 = vunpack.c.l.b16 %v329
      %v472 = vunpack.c.l.b16 %v330
      %v473 = vunpack.c.l.b16 %v331
      %v474 = vpack.c.b16 %v411, %v410
      %v475 = vpack.c.b16 %v413, %v412
      %v476 = vpack.c.b16 %v415, %v414
      %v477 = vpack.c.b16 %v417, %v416
      %v478 = vpack.c.b16 %v419, %v418
      %v479 = vpack.c.b16 %v421, %v420
      %v480 = vpack.c.b16 %v423, %v422
      %v481 = vpack.c.b16 %v425, %v424
      %v482 = vpack.c.b16 %v427, %v426
      %v483 = vpack.c.b16 %v429, %v428
      %v484 = vpack.c.b16 %v431, %v430
      %v485 = vpack.c.b16 %v433, %v432
      %v486 = vpack.c.b16 %v435, %v434
      %v487 = vpack.c.b16 %v437, %v436
      %v488 = vpack.c.b16 %v439, %v438
      %v489 = vpack.c.b16 %v441, %v440
      %v490 = vpack.c.b16 %v443, %v442
      %v491 = vpack.c.b16 %v445, %v444
      %v492 = vpack.c.b16 %v447, %v446
      %v493 = vpack.c.b16 %v449, %v448
      %v494 = vpack.c.b16 %v451, %v450
      %v495 = vpack.c.b16 %v453, %v452
      %v496 = vpack.c.b16 %v455, %v454
      %v497 = vpack.c.b16 %v457, %v456
      %v498 = vpack.c.b16 %v459, %v458
      %v499 = vpack.c.b16 %v461, %v460
      %v500 = vpack.c.b16 %v463, %v462
      %v501 = vpack.c.b16 %v465, %v464
      %v502 = vpack.c.b16 %v467, %v466
      %v503 = vpack.c.b16 %v469, %v468
      %v504 = vpack.c.b16 %v471, %v470
      %v505 = vpack.c.b16 %v473, %v472
      %538 = vmatprep.subr.bf16.mxu0 0
      %539 = vmatpush1.bf16.msra.mxu0 %v481
      %540 = vmatprep.subr.bf16.mxu0 0
      %541 = vmatpush1.bf16.msra.mxu0 %v480
      %542 = vmatprep.subr.bf16.mxu0 0
      %543 = vmatpush1.bf16.msra.mxu0 %v479
      %544 = vmatprep.subr.bf16.mxu0 0
      %545 = vmatpush1.bf16.msra.mxu0 %v478
      %546 = vmatprep.subr.bf16.mxu0 0
      %547 = vmatpush1.bf16.msra.mxu0 %v477
      %548 = vmatprep.subr.bf16.mxu0 0
      %549 = vmatpush1.bf16.msra.mxu0 %v476
      %550 = vmatprep.subr.bf16.mxu0 0
      %551 = vmatpush1.bf16.msra.mxu0 %v475
      %552 = vmatprep.subr.bf16.mxu0 0
      %553 = vmatpush1.bf16.msra.mxu0 %v474
      %554 = vmatprep.subr.bf16.mxu0 0
      %555 = vmatpush2.bf16.msra.mxu0 %v489
      %556 = vmatprep.subr.bf16.mxu0 0
      %557 = vmatpush2.bf16.msra.mxu0 %v488
      %558 = vmatprep.subr.bf16.mxu0 0
      %559 = vmatpush2.bf16.msra.mxu0 %v487
      %560 = vmatprep.subr.bf16.mxu0 0
      %561 = vmatpush2.bf16.msra.mxu0 %v486
      %562 = vmatprep.subr.bf16.mxu0 0
      %563 = vmatpush2.bf16.msra.mxu0 %v485
      %564 = vmatprep.subr.bf16.mxu0 0
      %565 = vmatpush2.bf16.msra.mxu0 %v484
      %566 = vmatprep.subr.bf16.mxu0 0
      %567 = vmatpush2.bf16.msra.mxu0 %v483
      %568 = vmatprep.subr.bf16.mxu0 0
      %569 = vmatpush2.bf16.msra.mxu0 %v482
      %570 = vmatprep.mubr.bf16.mxu0 %v339
      %571 = vmatmul.mubr.bf16.gmra.mxu0 %v338
      %v572 = vpop.f32.mrf.mxu0
      %v573 = vadd.f32 0.0, %v572
      %v574 = vpop.f32.mrf.mxu0
      %v575 = vpop.f32.mrf.mxu0
      %v576 = vpop.f32.mrf.mxu0
      %577 = vdwg.mxu0
      %578 = vmatprep.subr.bf16.mxu0 0
      %579 = vmatpush1.bf16.msra.mxu0 %v497
      %580 = vmatprep.subr.bf16.mxu0 0
      %581 = vmatpush1.bf16.msra.mxu0 %v496
      %582 = vmatprep.subr.bf16.mxu0 0
      %583 = vmatpush1.bf16.msra.mxu0 %v495
      %584 = vmatprep.subr.bf16.mxu0 0
      %585 = vmatpush1.bf16.msra.mxu0 %v494
      %586 = vmatprep.subr.bf16.mxu0 0
      %587 = vmatpush1.bf16.msra.mxu0 %v493
      %588 = vmatprep.subr.bf16.mxu0 0
      %589 = vmatpush1.bf16.msra.mxu0 %v492
      %590 = vmatprep.subr.bf16.mxu0 0
      %591 = vmatpush1.bf16.msra.mxu0 %v491
      %592 = vmatprep.subr.bf16.mxu0 0
      %593 = vmatpush1.bf16.msra.mxu0 %v490
      %594 = vmatprep.subr.bf16.mxu0 0
      %595 = vmatpush2.bf16.msra.mxu0 %v505
      %596 = vmatprep.subr.bf16.mxu0 0
      %597 = vmatpush2.bf16.msra.mxu0 %v504
      %598 = vmatprep.subr.bf16.mxu0 0
      %599 = vmatpush2.bf16.msra.mxu0 %v503
      %600 = vmatprep.subr.bf16.mxu0 0
      %601 = vmatpush2.bf16.msra.mxu0 %v502
      %602 = vmatprep.subr.bf16.mxu0 0
      %603 = vmatpush2.bf16.msra.mxu0 %v501
      %604 = vmatprep.subr.bf16.mxu0 0
      %605 = vmatpush2.bf16.msra.mxu0 %v500
      %606 = vmatprep.subr.bf16.mxu0 0
      %607 = vmatpush2.bf16.msra.mxu0 %v499
      %608 = vmatprep.subr.bf16.mxu0 0
      %609 = vmatpush2.bf16.msra.mxu0 %v498
      %610 = vmatprep.mubr.bf16.mxu0 %v341
      %611 = vmatmul.mubr.bf16.gmra.mxu0 %v340
      %v612 = vpop.f32.mrf.mxu0
      %v613 = vadd.f32 %v573, %v612
      %v614 = vpop.f32.mrf.mxu0
      %v615 = vpop.f32.mrf.mxu0
      %v616 = vpop.f32.mrf.mxu0
      %617 = vdwg.mxu0
      %v618 = vadd.f32 %v265, %v613
      %619 = vst [vmem:[#allocation2] sm:$0xff] %v618
      %p620 = scmp.eq.s32.totalorder %s21, 7
      // Predicated region
      $region37: #{_lambda_.17} parent=31 // pred_check
        %p621 = pneg %p620
      $region38: #{_lambda_.17} parent=31 // pred_check_branch
        %623 = sbr.rel (%p621) target = $region40
      $region39: #{_lambda_.17} parent=31 // pred_region
        %v624 = vld [vmem:[#allocation2] sm:$0xff]
        %v625 = vld [vmem:[%s251] sm:$0x1]
        %v627 = vlaneseq
        %v628 = vshrl.u32 %v627, 7
        %v629 = vsub.s32 0, %v628
        %v630 = vrot.slane %v625, %v629
        %v632 = vadd.f32 %v624, %v630
        %633 = vst [vmem:[%s258] sm:$0xff] %v632
      $region40: #{_lambda_.17} parent=31 // pred_fallthru
        _
      %p634 = scmp.lt.s32.totalorder %s19, 0
      %s635 = scalar_select %p634, %s19, 0
      %p636 = scmp.lt.s32.totalorder %s20, 0
      %s637 = scalar_select %p636, %s20, 0
      %s638 = sadd.s32 %s637, %s635
      %s639 = smul.addr %s638, 8
      %s640 = scalar_lea.vmem %s3, %s639
      // Predicated region
      $region41: #{_lambda_.17} parent=31 // pred_check
        %p641 = pneg %p135
      $region42: #{_lambda_.17} parent=31 // pred_check_branch
        %643 = sbr.rel (%p641) target = $region44
      $region43: #{_lambda_.17} parent=31 // pred_region
        _
      $region44: #{_lambda_.17} parent=31 // pred_fallthru
        _
      // Predicated region
      $region45: #{_lambda_.17} parent=31 // pred_check
        %p644 = pneg %p135
      $region46: #{_lambda_.17} parent=31 // pred_check_branch
        %646 = sbr.rel (%p644) target = $region48
      $region47: #{_lambda_.17} parent=31 // pred_region
        %p647 = scmp.lt.s32.totalorder %s19, 0
        %s648 = scalar_select %p647, %s19, 0
        %p649 = scmp.lt.s32.totalorder %s20, 0
        %s650 = scalar_select %p649, %s20, 0
        %s651 = sadd.s32 %s650, %s648
        %s652 = smul.addr %s651, 8
        %s653 = scalar_lea.vmem %s3, %s652
      $region48: #{_lambda_.17} parent=31 // pred_fallthru
        _
    $region32: #{_lambda_.17} parent=5 // pred_fallthru
      _
    %p654 = scmp.le.s32.totalorder 2, %s9
    // Predicated region
    $region49: #{_lambda_.17} parent=5 // pred_check
      %p655 = pneg %p654
    $region50: #{_lambda_.17} parent=5 // pred_check_branch
      %657 = sbr.rel (%p655) target = $region52
    $region51: #{_lambda_.17} parent=5 // pred_region
      %s658 = ssub.s32 %s9, 2
    $region52: #{_lambda_.17} parent=5 // pred_fallthru
      _
  $region6: #{_lambda_.17} parent=0 // loop_footer
    %s13 = sadd.s32 1, %s9
  $region7: #{_lambda_.17} parent=0 // loop_footer_branch
    %8 = sbr.rel target = $region3
  $region8: #{_lambda_.17} parent=0 // loop_exit
    _

</llo_original>
